<compile_context>
chip_gen: v7x
topology: tpu7x:2x2x1
jax: 0.10.0
libtpu: 0.0.40
codegen_flags: <defaults>
</compile_context>

<pallas_src>
import jax
import jax.numpy as jnp
from jax import lax
from jax.experimental import pallas as pl
from jax.experimental.pallas import tpu as pltpu


def _round_up(v, m):
    return (v + m - 1) // m * m


def pdu_kernel(x_ref,
               ka_w1, ka_b1, ka_w2, ka_b2,
               td_w1, td_b1, td_w2, td_b2, td_w3, td_b3,
               o_ref,
               pad_c, pad_b):
    NB, H, W, C = x_ref.shape
    C8p = pad_b.shape[-1]
    HW = H * W
    M = NB * HW
    mxu_dtype = td_w1.dtype                      # f32 or bf16 (set by wrapper)

    x = x_ref[...]                               # (NB, H, W, C) f32
    xr = x.reshape(NB, HW, C)                    # (NB, H*W, C)

    # ---- a = ka(AdaptiveAvgPool2d(1)(x))  (1x1 convs == dense layers) -------
    a = jnp.sum(xr, axis=1) * (1.0 / HW)         # (NB, C) f32
    h = jnp.maximum(
        jnp.dot(a.astype(mxu_dtype), ka_w1[...],
                preferred_element_type=jnp.float32) + ka_b1[...], 0.0)
    att = jax.nn.sigmoid(
        jnp.dot(h.astype(mxu_dtype), ka_w2[...],
                preferred_element_type=jnp.float32) + ka_b2[...])   # (NB, C)

    # ---- keep the 1-px border of the pad scratches zero (interior is fully
    #      rewritten every step; border-only zeroing is cheap and core-safe) --
    def zero_border(pad):
        nb, hp, wp, c = pad.shape
        z_row = jnp.zeros((nb, 1, wp, c), pad.dtype)
        z_col = jnp.zeros((nb, hp, 1, c), pad.dtype)
        pad[:, 0:1, :, :] = z_row
        pad[:, hp - 1:hp, :, :] = z_row
        pad[:, :, 0:1, :] = z_col
        pad[:, :, wp - 1:wp, :] = z_col

    zero_border(pad_c)
    zero_border(pad_b)

    # ---- SAME 3x3 conv as a single wide-K im2col matmul ----------------------
    def conv3x3(pad_ref, w_ref, b_ref):
        pv = pad_ref[...]                        # (NB, H+2, W+2, Ci) f32
        ci = pv.shape[-1]
        taps = [pv[:, dy:dy + H, dx:dx + W, :].reshape(M, ci)
                for dy in range(3) for dx in range(3)]
        patches = jnp.concatenate(taps, axis=-1).astype(w_ref.dtype)  # (M, 9*Ci)
        return jnp.dot(patches, w_ref[...],
                       preferred_element_type=jnp.float32) + b_ref[...]

    # ---- t = td(x): conv3x3 -> conv3x3 -> ReLU -> conv3x3 -> Sigmoid ---------
    pad_c[:, 1:1 + H, 1:1 + W, :] = x
    y1 = conv3x3(pad_c, td_w1, td_b1)                              # (M, C)

    pad_c[:, 1:1 + H, 1:1 + W, :] = y1.reshape(NB, H, W, C)        # reuse scratch
    y2 = jnp.maximum(conv3x3(pad_c, td_w2, td_b2), 0.0)            # (M, C8p)

    pad_b[:, 1:1 + H, 1:1 + W, :] = y2.reshape(NB, H, W, C8p)
    t = jax.nn.sigmoid(conv3x3(pad_b, td_w3, td_b3))               # (M, C)

    # ---- j = (1 - t) * a + t * x  (elementwise blend kept in f32) ------------
    t = t.reshape(NB, HW, C)
    j = (1.0 - t) * att[:, None, :] + t * xr
    o_ref[...] = j.reshape(NB, H, W, C).astype(o_ref.dtype)


def _prepare_params(p, compute_dtype):
    """Pad the C//8 bottleneck to a multiple of 8, reshape 3x3 weights to
    im2col layout (9*Ci, Co), and cast weights to the MXU compute dtype.
    Biases stay f32 (added to the f32 accumulator)."""
    C, C8 = p["ka_w1"].shape
    C8p = max(8, _round_up(C8, 8))

    def pad_axis(w, axis):
        if w.shape[axis] == C8p:
            return w
        widths = [(0, 0)] * w.ndim
        widths[axis] = (0, C8p - w.shape[axis])
        return jnp.pad(w, widths)

    wdt = compute_dtype
    prepared = dict(
        ka_w1=pad_axis(p["ka_w1"], 1).astype(wdt),                   # (C, C8p)
        ka_b1=pad_axis(p["ka_b1"], 1),                               # (1, C8p)
        ka_w2=pad_axis(p["ka_w2"], 0).astype(wdt),                   # (C8p, C)
        ka_b2=p["ka_b2"],
        td_w1=p["td_w1"].reshape(9 * C, C).astype(wdt),              # (9C, C)
        td_b1=p["td_b1"],
        td_w2=pad_axis(p["td_w2"], 3).reshape(9 * C, C8p).astype(wdt),
        td_b2=pad_axis(p["td_b2"], 1),
        td_w3=pad_axis(p["td_w3"], 2).reshape(9 * C8p, C).astype(wdt),
        td_b3=p["td_b3"],
    )
    return prepared, C8p


def pdu_pallas(x_nhwc, params, *, batch_block=1, compute_dtype=jnp.float32,
               vmem_limit_bytes=48 * 1024 * 1024):
    N, H, W, C = x_nhwc.shape
    assert C % 8 == 0 and C >= 8, "channel count must be a multiple of 8"
    NB = batch_block
    assert N % NB == 0, "batch_block must divide the batch size"

    p, C8p = _prepare_params(params, compute_dtype)

    def full(shape):
        return pl.BlockSpec(shape, lambda b, _n=len(shape): (0,) * _n)

    grid_spec = pltpu.PrefetchScalarGridSpec(
        num_scalar_prefetch=0,
        grid=(N // NB,),
        in_specs=[
            pl.BlockSpec((NB, H, W, C), lambda b: (b, 0, 0, 0)),   # x
            full((C, C8p)), full((1, C8p)),                        # ka conv1
            full((C8p, C)), full((1, C)),                          # ka conv2
            full((9 * C, C)), full((1, C)),                        # td conv1
            full((9 * C, C8p)), full((1, C8p)),                    # td conv2
            full((9 * C8p, C)), full((1, C)),                      # td conv3
        ],
        out_specs=pl.BlockSpec((NB, H, W, C), lambda b: (b, 0, 0, 0)),
        scratch_shapes=[
            pltpu.VMEM((NB, H + 2, W + 2, C), jnp.float32),    # shared by conv1/2
            pltpu.VMEM((NB, H + 2, W + 2, C8p), jnp.float32),  # conv3 input
        ],
    )
    return pl.pallas_call(
        pdu_kernel,
        out_shape=jax.ShapeDtypeStruct((N, H, W, C), x_nhwc.dtype),
        grid_spec=grid_spec,
        compiler_params=pltpu.CompilerParams(
            dimension_semantics=("parallel",),          # batch is embarrassingly parallel
            vmem_limit_bytes=vmem_limit_bytes),
    )(x_nhwc,
      p["ka_w1"], p["ka_b1"], p["ka_w2"], p["ka_b2"],
      p["td_w1"], p["td_b1"], p["td_w2"], p["td_b2"], p["td_w3"], p["td_b3"])


def pdu_reference(x_nhwc, p, compute_dtype=jnp.float32):
    """Pure-JAX reference mirroring the forward pass.  compute_dtype applies the
    same input rounding as the kernel's MXU path (accumulation stays f32)."""
    cdt = compute_dtype
    f32 = jnp.float32

    a = jnp.mean(x_nhwc, axis=(1, 2), keepdims=True)                 # (N,1,1,C)
    h = jax.nn.relu(
        jnp.einsum("nijc,cd->nijd", a.astype(cdt), p["ka_w1"].astype(cdt),
                   preferred_element_type=f32) + p["ka_b1"])
    att = jax.nn.sigmoid(
        jnp.einsum("nijc,cd->nijd", h.astype(cdt), p["ka_w2"].astype(cdt),
                   preferred_element_type=f32) + p["ka_b2"])

    def conv(v, w, b):
        return lax.conv_general_dilated(
            v.astype(cdt), w.astype(cdt), window_strides=(1, 1), padding="SAME",
            dimension_numbers=("NHWC", "HWIO", "NHWC"),
            preferred_element_type=f32) + b

    t = conv(x_nhwc, p["td_w1"], p["td_b1"])
    t = jax.nn.relu(conv(t, p["td_w2"], p["td_b2"]))
    t = jax.nn.sigmoid(conv(t, p["td_w3"], p["td_b3"]))
    return (1.0 - t) * att + t * x_nhwc


def init_params(key, C):
    C8 = C // 8
    ks = jax.random.split(key, 10)

    def w(k, shape, scale):
        return jax.random.normal(k, shape, jnp.float32) * scale

    return {
        "ka_w1": w(ks[0], (C, C8), 0.3),  "ka_b1": w(ks[1], (1, C8), 0.1),
        "ka_w2": w(ks[2], (C8, C), 0.3),  "ka_b2": w(ks[3], (1, C), 0.1),
        "td_w1": w(ks[4], (3, 3, C, C), 0.15),  "td_b1": w(ks[5], (1, C), 0.1),
        "td_w2": w(ks[6], (3, 3, C, C8), 0.15), "td_b2": w(ks[7], (1, C8), 0.1),
        "td_w3": w(ks[8], (3, 3, C8, C), 0.15), "td_b3": w(ks[9], (1, C), 0.1),
    }


if __name__ == "__main__":
    key = jax.random.PRNGKey(0)
    kx, kp = jax.random.split(key)

    N, C, H, W = 2, 16, 16, 16                    # channels must be >= 8 (C//8)
    x_nchw = jax.random.normal(kx, (N, C, H, W), jnp.float32)   # PyTorch layout
    x_nhwc = jnp.transpose(x_nchw, (0, 2, 3, 1))                # glue: NCHW->NHWC
    params = init_params(kp, C)

    # f32 MXU path: tight check against the pure-JAX reference.
    out = jax.block_until_ready(
        pdu_pallas(x_nhwc, params, batch_block=N, compute_dtype=jnp.float32))
    ref = pdu_reference(x_nhwc, params, compute_dtype=jnp.float32)
    assert out.shape == (N, H, W, C)
    assert jnp.allclose(out, ref, atol=1e-4, rtol=1e-4), float(
        jnp.max(jnp.abs(out - ref)))

    # bf16 MXU path (v6e/v7x-native matmul dtype, f32 accumulation), checked
    # against a reference that applies the same bf16 input rounding.
    out_bf = jax.block_until_ready(
        pdu_pallas(x_nhwc, params, batch_block=N, compute_dtype=jnp.bfloat16))
    ref_bf = pdu_reference(x_nhwc, params, compute_dtype=jnp.bfloat16)
    assert jnp.allclose(out_bf, ref_bf, atol=5e-3, rtol=5e-3), float(
        jnp.max(jnp.abs(out_bf - ref_bf)))

    print("KERNEL_OK")
</pallas_src>

<mosaic_0001>
module attributes {stable_mosaic.version = 11 : i64} {
  func.func @pdu_kernel(%arg0: i32, %arg1: memref<2x16x16x16xf32, #tpu.memory_space<vmem>>, %arg2: memref<16x8xf32, #tpu.memory_space<vmem>>, %arg3: memref<1x8xf32, #tpu.memory_space<vmem>>, %arg4: memref<8x16xf32, #tpu.memory_space<vmem>>, %arg5: memref<1x16xf32, #tpu.memory_space<vmem>>, %arg6: memref<144x16xf32, #tpu.memory_space<vmem>>, %arg7: memref<1x16xf32, #tpu.memory_space<vmem>>, %arg8: memref<144x8xf32, #tpu.memory_space<vmem>>, %arg9: memref<1x8xf32, #tpu.memory_space<vmem>>, %arg10: memref<72x16xf32, #tpu.memory_space<vmem>>, %arg11: memref<1x16xf32, #tpu.memory_space<vmem>>, %arg12: memref<2x16x16x16xf32, #tpu.memory_space<vmem>>, %arg13: memref<2x18x18x16xf32, #tpu.memory_space<vmem>>, %arg14: memref<2x18x18x8xf32, #tpu.memory_space<vmem>>) attributes {dimension_semantics = [#tpu.dimension_semantics<parallel>], iteration_bounds = array<i64: 1>, scalar_prefetch = 0 : i64, scratch_operands = 2 : i64, tpu.core_type = #tpu.core_type<tc>, window_params = [{transform_indices = @transform_0, window_bounds = array<i64: 2, 16, 16, 16>}, {pipeline_mode = #tpu.pipeline_mode<synchronous>, transform_indices = @transform_1, window_bounds = array<i64: 16, 8>}, {pipeline_mode = #tpu.pipeline_mode<synchronous>, transform_indices = @transform_2, window_bounds = array<i64: 1, 8>}, {pipeline_mode = #tpu.pipeline_mode<synchronous>, transform_indices = @transform_3, window_bounds = array<i64: 8, 16>}, {pipeline_mode = #tpu.pipeline_mode<synchronous>, transform_indices = @transform_4, window_bounds = array<i64: 1, 16>}, {pipeline_mode = #tpu.pipeline_mode<synchronous>, transform_indices = @transform_5, window_bounds = array<i64: 144, 16>}, {pipeline_mode = #tpu.pipeline_mode<synchronous>, transform_indices = @transform_6, window_bounds = array<i64: 1, 16>}, {pipeline_mode = #tpu.pipeline_mode<synchronous>, transform_indices = @transform_7, window_bounds = array<i64: 144, 8>}, {pipeline_mode = #tpu.pipeline_mode<synchronous>, transform_indices = @transform_8, window_bounds = array<i64: 1, 8>}, {pipeline_mode = #tpu.pipeline_mode<synchronous>, transform_indices = @transform_9, window_bounds = array<i64: 72, 16>}, {pipeline_mode = #tpu.pipeline_mode<synchronous>, transform_indices = @transform_10, window_bounds = array<i64: 1, 16>}, {transform_indices = @transform_11, window_bounds = array<i64: 2, 16, 16, 16>}]} {
    %c0 = arith.constant 0 : index
    %c0_0 = arith.constant 0 : index
    %c0_1 = arith.constant 0 : index
    %c0_2 = arith.constant 0 : index
    %0 = vector.load %arg1[%c0, %c0_0, %c0_1, %c0_2] : memref<2x16x16x16xf32, #tpu.memory_space<vmem>>, vector<2x16x16x16xf32>
    %1 = vector.shape_cast %0 : vector<2x16x16x16xf32> to vector<2x256x16xf32>
    %cst = arith.constant dense<0.000000e+00> : vector<2x16xf32>
    %2 = vector.multi_reduction <add>, %1, %cst [1] : vector<2x256x16xf32> to vector<2x16xf32>
    %cst_3 = arith.constant 3.906250e-03 : f32
    %3 = vector.broadcast %cst_3 : f32 to vector<2x16xf32>
    %4 = arith.mulf %2, %3 : vector<2x16xf32>
    %c0_4 = arith.constant 0 : index
    %c0_5 = arith.constant 0 : index
    %5 = vector.load %arg2[%c0_4, %c0_5] : memref<16x8xf32, #tpu.memory_space<vmem>>, vector<16x8xf32>
    %cst_6 = arith.constant dense<0.000000e+00> : vector<2x8xf32>
    %6 = tpu.matmul %4, %5, %cst_6 {dimension_numbers = #tpu.dot_dimension_numbers<[1], [0], [0], [1], [0, 0, 1, 1], [], []>} : vector<2x16xf32>, vector<16x8xf32>, vector<2x8xf32> -> vector<2x8xf32>
    %c0_7 = arith.constant 0 : index
    %c0_8 = arith.constant 0 : index
    %7 = vector.load %arg3[%c0_7, %c0_8] : memref<1x8xf32, #tpu.memory_space<vmem>>, vector<1x8xf32>
    %8 = vector.broadcast %7 : vector<1x8xf32> to vector<2x8xf32>
    %9 = arith.addf %6, %8 : vector<2x8xf32>
    %cst_9 = arith.constant 0.000000e+00 : f32
    %10 = vector.broadcast %cst_9 : f32 to vector<2x8xf32>
    %11 = arith.maximumf %9, %10 : vector<2x8xf32>
    %c0_10 = arith.constant 0 : index
    %c0_11 = arith.constant 0 : index
    %12 = vector.load %arg4[%c0_10, %c0_11] : memref<8x16xf32, #tpu.memory_space<vmem>>, vector<8x16xf32>
    %cst_12 = arith.constant dense<0.000000e+00> : vector<2x16xf32>
    %13 = tpu.matmul %11, %12, %cst_12 {dimension_numbers = #tpu.dot_dimension_numbers<[1], [0], [0], [1], [0, 0, 1, 1], [], []>} : vector<2x8xf32>, vector<8x16xf32>, vector<2x16xf32> -> vector<2x16xf32>
    %c0_13 = arith.constant 0 : index
    %c0_14 = arith.constant 0 : index
    %14 = vector.load %arg5[%c0_13, %c0_14] : memref<1x16xf32, #tpu.memory_space<vmem>>, vector<1x16xf32>
    %15 = vector.broadcast %14 : vector<1x16xf32> to vector<2x16xf32>
    %16 = arith.addf %13, %15 : vector<2x16xf32>
    %17 = arith.negf %16 : vector<2x16xf32>
    %18 = math.exp %17 : vector<2x16xf32>
    %cst_15 = arith.constant 1.000000e+00 : f32
    %19 = vector.broadcast %cst_15 : f32 to vector<2x16xf32>
    %20 = arith.addf %19, %18 : vector<2x16xf32>
    %21 = arith.divf %19, %20 : vector<2x16xf32>
    %cst_16 = arith.constant 0.000000e+00 : f32
    %22 = vector.broadcast %cst_16 : f32 to vector<2x1x18x16xf32>
    %cst_17 = arith.constant 0.000000e+00 : f32
    %23 = vector.broadcast %cst_17 : f32 to vector<2x18x1x16xf32>
    %c0_18 = arith.constant 0 : index
    %c0_19 = arith.constant 0 : index
    %c0_20 = arith.constant 0 : index
    %c0_21 = arith.constant 0 : index
    %24 = vector.load %arg13[%c0_18, %c0_19, %c0_20, %c0_21] : memref<2x18x18x16xf32, #tpu.memory_space<vmem>>, vector<2x1x18x16xf32>
    tpu.vector_store %arg13[%c0_18, %c0_19, %c0_20, %c0_21], %22 {strides = array<i32>} : memref<2x18x18x16xf32, #tpu.memory_space<vmem>>, vector<2x1x18x16xf32>,
    %c0_22 = arith.constant 0 : index
    %c17 = arith.constant 17 : index
    %c0_23 = arith.constant 0 : index
    %c0_24 = arith.constant 0 : index
    %25 = vector.load %arg13[%c0_22, %c17, %c0_23, %c0_24] : memref<2x18x18x16xf32, #tpu.memory_space<vmem>>, vector<2x1x18x16xf32>
    tpu.vector_store %arg13[%c0_22, %c17, %c0_23, %c0_24], %22 {strides = array<i32>} : memref<2x18x18x16xf32, #tpu.memory_space<vmem>>, vector<2x1x18x16xf32>,
    %c0_25 = arith.constant 0 : index
    %c0_26 = arith.constant 0 : index
    %c0_27 = arith.constant 0 : index
    %c0_28 = arith.constant 0 : index
    %26 = vector.load %arg13[%c0_25, %c0_26, %c0_27, %c0_28] : memref<2x18x18x16xf32, #tpu.memory_space<vmem>>, vector<2x18x1x16xf32>
    tpu.vector_store %arg13[%c0_25, %c0_26, %c0_27, %c0_28], %23 {strides = array<i32>} : memref<2x18x18x16xf32, #tpu.memory_space<vmem>>, vector<2x18x1x16xf32>,
    %c0_29 = arith.constant 0 : index
    %c0_30 = arith.constant 0 : index
    %c17_31 = arith.constant 17 : index
    %c0_32 = arith.constant 0 : index
    %27 = vector.load %arg13[%c0_29, %c0_30, %c17_31, %c0_32] : memref<2x18x18x16xf32, #tpu.memory_space<vmem>>, vector<2x18x1x16xf32>
    tpu.vector_store %arg13[%c0_29, %c0_30, %c17_31, %c0_32], %23 {strides = array<i32>} : memref<2x18x18x16xf32, #tpu.memory_space<vmem>>, vector<2x18x1x16xf32>,
    %cst_33 = arith.constant 0.000000e+00 : f32
    %28 = vector.broadcast %cst_33 : f32 to vector<2x1x18x8xf32>
    %cst_34 = arith.constant 0.000000e+00 : f32
    %29 = vector.broadcast %cst_34 : f32 to vector<2x18x1x8xf32>
    %c0_35 = arith.constant 0 : index
    %c0_36 = arith.constant 0 : index
    %c0_37 = arith.constant 0 : index
    %c0_38 = arith.constant 0 : index
    %30 = vector.load %arg14[%c0_35, %c0_36, %c0_37, %c0_38] : memref<2x18x18x8xf32, #tpu.memory_space<vmem>>, vector<2x1x18x8xf32>
    tpu.vector_store %arg14[%c0_35, %c0_36, %c0_37, %c0_38], %28 {strides = array<i32>} : memref<2x18x18x8xf32, #tpu.memory_space<vmem>>, vector<2x1x18x8xf32>,
    %c0_39 = arith.constant 0 : index
    %c17_40 = arith.constant 17 : index
    %c0_41 = arith.constant 0 : index
    %c0_42 = arith.constant 0 : index
    %31 = vector.load %arg14[%c0_39, %c17_40, %c0_41, %c0_42] : memref<2x18x18x8xf32, #tpu.memory_space<vmem>>, vector<2x1x18x8xf32>
    tpu.vector_store %arg14[%c0_39, %c17_40, %c0_41, %c0_42], %28 {strides = array<i32>} : memref<2x18x18x8xf32, #tpu.memory_space<vmem>>, vector<2x1x18x8xf32>,
    %c0_43 = arith.constant 0 : index
    %c0_44 = arith.constant 0 : index
    %c0_45 = arith.constant 0 : index
    %c0_46 = arith.constant 0 : index
    %32 = vector.load %arg14[%c0_43, %c0_44, %c0_45, %c0_46] : memref<2x18x18x8xf32, #tpu.memory_space<vmem>>, vector<2x18x1x8xf32>
    tpu.vector_store %arg14[%c0_43, %c0_44, %c0_45, %c0_46], %29 {strides = array<i32>} : memref<2x18x18x8xf32, #tpu.memory_space<vmem>>, vector<2x18x1x8xf32>,
    %c0_47 = arith.constant 0 : index
    %c0_48 = arith.constant 0 : index
    %c17_49 = arith.constant 17 : index
    %c0_50 = arith.constant 0 : index
    %33 = vector.load %arg14[%c0_47, %c0_48, %c17_49, %c0_50] : memref<2x18x18x8xf32, #tpu.memory_space<vmem>>, vector<2x18x1x8xf32>
    tpu.vector_store %arg14[%c0_47, %c0_48, %c17_49, %c0_50], %29 {strides = array<i32>} : memref<2x18x18x8xf32, #tpu.memory_space<vmem>>, vector<2x18x1x8xf32>,
    %c0_51 = arith.constant 0 : index
    %c1 = arith.constant 1 : index
    %c1_52 = arith.constant 1 : index
    %c0_53 = arith.constant 0 : index
    %34 = vector.load %arg13[%c0_51, %c1, %c1_52, %c0_53] : memref<2x18x18x16xf32, #tpu.memory_space<vmem>>, vector<2x16x16x16xf32>
    tpu.vector_store %arg13[%c0_51, %c1, %c1_52, %c0_53], %0 {strides = array<i32>} : memref<2x18x18x16xf32, #tpu.memory_space<vmem>>, vector<2x16x16x16xf32>,
    %c0_54 = arith.constant 0 : index
    %c0_55 = arith.constant 0 : index
    %c0_56 = arith.constant 0 : index
    %c0_57 = arith.constant 0 : index
    %35 = vector.load %arg13[%c0_54, %c0_55, %c0_56, %c0_57] : memref<2x18x18x16xf32, #tpu.memory_space<vmem>>, vector<2x18x18x16xf32>
    %36 = vector.extract_strided_slice %35 {offsets = [0, 0, 0, 0], sizes = [2, 16, 16, 16], strides = [1, 1, 1, 1]} : vector<2x18x18x16xf32> to vector<2x16x16x16xf32>
    %37 = vector.shape_cast %36 : vector<2x16x16x16xf32> to vector<512x16xf32>
    %38 = vector.extract_strided_slice %35 {offsets = [0, 0, 1, 0], sizes = [2, 16, 16, 16], strides = [1, 1, 1, 1]} : vector<2x18x18x16xf32> to vector<2x16x16x16xf32>
    %39 = vector.shape_cast %38 : vector<2x16x16x16xf32> to vector<512x16xf32>
    %40 = vector.extract_strided_slice %35 {offsets = [0, 0, 2, 0], sizes = [2, 16, 16, 16], strides = [1, 1, 1, 1]} : vector<2x18x18x16xf32> to vector<2x16x16x16xf32>
    %41 = vector.shape_cast %40 : vector<2x16x16x16xf32> to vector<512x16xf32>
    %42 = vector.extract_strided_slice %35 {offsets = [0, 1, 0, 0], sizes = [2, 16, 16, 16], strides = [1, 1, 1, 1]} : vector<2x18x18x16xf32> to vector<2x16x16x16xf32>
    %43 = vector.shape_cast %42 : vector<2x16x16x16xf32> to vector<512x16xf32>
    %44 = vector.extract_strided_slice %35 {offsets = [0, 1, 1, 0], sizes = [2, 16, 16, 16], strides = [1, 1, 1, 1]} : vector<2x18x18x16xf32> to vector<2x16x16x16xf32>
    %45 = vector.shape_cast %44 : vector<2x16x16x16xf32> to vector<512x16xf32>
    %46 = vector.extract_strided_slice %35 {offsets = [0, 1, 2, 0], sizes = [2, 16, 16, 16], strides = [1, 1, 1, 1]} : vector<2x18x18x16xf32> to vector<2x16x16x16xf32>
    %47 = vector.shape_cast %46 : vector<2x16x16x16xf32> to vector<512x16xf32>
    %48 = vector.extract_strided_slice %35 {offsets = [0, 2, 0, 0], sizes = [2, 16, 16, 16], strides = [1, 1, 1, 1]} : vector<2x18x18x16xf32> to vector<2x16x16x16xf32>
    %49 = vector.shape_cast %48 : vector<2x16x16x16xf32> to vector<512x16xf32>
    %50 = vector.extract_strided_slice %35 {offsets = [0, 2, 1, 0], sizes = [2, 16, 16, 16], strides = [1, 1, 1, 1]} : vector<2x18x18x16xf32> to vector<2x16x16x16xf32>
    %51 = vector.shape_cast %50 : vector<2x16x16x16xf32> to vector<512x16xf32>
    %52 = vector.extract_strided_slice %35 {offsets = [0, 2, 2, 0], sizes = [2, 16, 16, 16], strides = [1, 1, 1, 1]} : vector<2x18x18x16xf32> to vector<2x16x16x16xf32>
    %53 = vector.shape_cast %52 : vector<2x16x16x16xf32> to vector<512x16xf32>
    %54 = tpu.concatenate %37, %39, %41, %43, %45, %47, %49, %51, %53 in 1 : vector<512x16xf32>, vector<512x16xf32>, vector<512x16xf32>, vector<512x16xf32>, vector<512x16xf32>, vector<512x16xf32>, vector<512x16xf32>, vector<512x16xf32>, vector<512x16xf32> -> vector<512x144xf32>
    %c0_58 = arith.constant 0 : index
    %c0_59 = arith.constant 0 : index
    %55 = vector.load %arg6[%c0_58, %c0_59] : memref<144x16xf32, #tpu.memory_space<vmem>>, vector<144x16xf32>
    %cst_60 = arith.constant dense<0.000000e+00> : vector<512x16xf32>
    %56 = tpu.matmul %54, %55, %cst_60 {dimension_numbers = #tpu.dot_dimension_numbers<[1], [0], [0], [1], [0, 0, 1, 1], [], []>} : vector<512x144xf32>, vector<144x16xf32>, vector<512x16xf32> -> vector<512x16xf32>
    %c0_61 = arith.constant 0 : index
    %c0_62 = arith.constant 0 : index
    %57 = vector.load %arg7[%c0_61, %c0_62] : memref<1x16xf32, #tpu.memory_space<vmem>>, vector<1x16xf32>
    %58 = vector.broadcast %57 : vector<1x16xf32> to vector<512x16xf32>
    %59 = arith.addf %56, %58 : vector<512x16xf32>
    %60 = vector.shape_cast %59 : vector<512x16xf32> to vector<2x16x16x16xf32>
    %c0_63 = arith.constant 0 : index
    %c1_64 = arith.constant 1 : index
    %c1_65 = arith.constant 1 : index
    %c0_66 = arith.constant 0 : index
    %61 = vector.load %arg13[%c0_63, %c1_64, %c1_65, %c0_66] : memref<2x18x18x16xf32, #tpu.memory_space<vmem>>, vector<2x16x16x16xf32>
    tpu.vector_store %arg13[%c0_63, %c1_64, %c1_65, %c0_66], %60 {strides = array<i32>} : memref<2x18x18x16xf32, #tpu.memory_space<vmem>>, vector<2x16x16x16xf32>,
    %c0_67 = arith.constant 0 : index
    %c0_68 = arith.constant 0 : index
    %c0_69 = arith.constant 0 : index
    %c0_70 = arith.constant 0 : index
    %62 = vector.load %arg13[%c0_67, %c0_68, %c0_69, %c0_70] : memref<2x18x18x16xf32, #tpu.memory_space<vmem>>, vector<2x18x18x16xf32>
    %63 = vector.extract_strided_slice %62 {offsets = [0, 0, 0, 0], sizes = [2, 16, 16, 16], strides = [1, 1, 1, 1]} : vector<2x18x18x16xf32> to vector<2x16x16x16xf32>
    %64 = vector.shape_cast %63 : vector<2x16x16x16xf32> to vector<512x16xf32>
    %65 = vector.extract_strided_slice %62 {offsets = [0, 0, 1, 0], sizes = [2, 16, 16, 16], strides = [1, 1, 1, 1]} : vector<2x18x18x16xf32> to vector<2x16x16x16xf32>
    %66 = vector.shape_cast %65 : vector<2x16x16x16xf32> to vector<512x16xf32>
    %67 = vector.extract_strided_slice %62 {offsets = [0, 0, 2, 0], sizes = [2, 16, 16, 16], strides = [1, 1, 1, 1]} : vector<2x18x18x16xf32> to vector<2x16x16x16xf32>
    %68 = vector.shape_cast %67 : vector<2x16x16x16xf32> to vector<512x16xf32>
    %69 = vector.extract_strided_slice %62 {offsets = [0, 1, 0, 0], sizes = [2, 16, 16, 16], strides = [1, 1, 1, 1]} : vector<2x18x18x16xf32> to vector<2x16x16x16xf32>
    %70 = vector.shape_cast %69 : vector<2x16x16x16xf32> to vector<512x16xf32>
    %71 = vector.extract_strided_slice %62 {offsets = [0, 1, 1, 0], sizes = [2, 16, 16, 16], strides = [1, 1, 1, 1]} : vector<2x18x18x16xf32> to vector<2x16x16x16xf32>
    %72 = vector.shape_cast %71 : vector<2x16x16x16xf32> to vector<512x16xf32>
    %73 = vector.extract_strided_slice %62 {offsets = [0, 1, 2, 0], sizes = [2, 16, 16, 16], strides = [1, 1, 1, 1]} : vector<2x18x18x16xf32> to vector<2x16x16x16xf32>
    %74 = vector.shape_cast %73 : vector<2x16x16x16xf32> to vector<512x16xf32>
    %75 = vector.extract_strided_slice %62 {offsets = [0, 2, 0, 0], sizes = [2, 16, 16, 16], strides = [1, 1, 1, 1]} : vector<2x18x18x16xf32> to vector<2x16x16x16xf32>
    %76 = vector.shape_cast %75 : vector<2x16x16x16xf32> to vector<512x16xf32>
    %77 = vector.extract_strided_slice %62 {offsets = [0, 2, 1, 0], sizes = [2, 16, 16, 16], strides = [1, 1, 1, 1]} : vector<2x18x18x16xf32> to vector<2x16x16x16xf32>
    %78 = vector.shape_cast %77 : vector<2x16x16x16xf32> to vector<512x16xf32>
    %79 = vector.extract_strided_slice %62 {offsets = [0, 2, 2, 0], sizes = [2, 16, 16, 16], strides = [1, 1, 1, 1]} : vector<2x18x18x16xf32> to vector<2x16x16x16xf32>
    %80 = vector.shape_cast %79 : vector<2x16x16x16xf32> to vector<512x16xf32>
    %81 = tpu.concatenate %64, %66, %68, %70, %72, %74, %76, %78, %80 in 1 : vector<512x16xf32>, vector<512x16xf32>, vector<512x16xf32>, vector<512x16xf32>, vector<512x16xf32>, vector<512x16xf32>, vector<512x16xf32>, vector<512x16xf32>, vector<512x16xf32> -> vector<512x144xf32>
    %c0_71 = arith.constant 0 : index
    %c0_72 = arith.constant 0 : index
    %82 = vector.load %arg8[%c0_71, %c0_72] : memref<144x8xf32, #tpu.memory_space<vmem>>, vector<144x8xf32>
    %cst_73 = arith.constant dense<0.000000e+00> : vector<512x8xf32>
    %83 = tpu.matmul %81, %82, %cst_73 {dimension_numbers = #tpu.dot_dimension_numbers<[1], [0], [0], [1], [0, 0, 1, 1], [], []>} : vector<512x144xf32>, vector<144x8xf32>, vector<512x8xf32> -> vector<512x8xf32>
    %c0_74 = arith.constant 0 : index
    %c0_75 = arith.constant 0 : index
    %84 = vector.load %arg9[%c0_74, %c0_75] : memref<1x8xf32, #tpu.memory_space<vmem>>, vector<1x8xf32>
    %85 = vector.broadcast %84 : vector<1x8xf32> to vector<512x8xf32>
    %86 = arith.addf %83, %85 : vector<512x8xf32>
    %cst_76 = arith.constant 0.000000e+00 : f32
    %87 = vector.broadcast %cst_76 : f32 to vector<512x8xf32>
    %88 = arith.maximumf %86, %87 : vector<512x8xf32>
    %89 = vector.shape_cast %88 : vector<512x8xf32> to vector<2x16x16x8xf32>
    %c0_77 = arith.constant 0 : index
    %c1_78 = arith.constant 1 : index
    %c1_79 = arith.constant 1 : index
    %c0_80 = arith.constant 0 : index
    %90 = vector.load %arg14[%c0_77, %c1_78, %c1_79, %c0_80] : memref<2x18x18x8xf32, #tpu.memory_space<vmem>>, vector<2x16x16x8xf32>
    tpu.vector_store %arg14[%c0_77, %c1_78, %c1_79, %c0_80], %89 {strides = array<i32>} : memref<2x18x18x8xf32, #tpu.memory_space<vmem>>, vector<2x16x16x8xf32>,
    %c0_81 = arith.constant 0 : index
    %c0_82 = arith.constant 0 : index
    %c0_83 = arith.constant 0 : index
    %c0_84 = arith.constant 0 : index
    %91 = vector.load %arg14[%c0_81, %c0_82, %c0_83, %c0_84] : memref<2x18x18x8xf32, #tpu.memory_space<vmem>>, vector<2x18x18x8xf32>
    %92 = vector.extract_strided_slice %91 {offsets = [0, 0, 0, 0], sizes = [2, 16, 16, 8], strides = [1, 1, 1, 1]} : vector<2x18x18x8xf32> to vector<2x16x16x8xf32>
    %93 = vector.shape_cast %92 : vector<2x16x16x8xf32> to vector<512x8xf32>
    %94 = vector.extract_strided_slice %91 {offsets = [0, 0, 1, 0], sizes = [2, 16, 16, 8], strides = [1, 1, 1, 1]} : vector<2x18x18x8xf32> to vector<2x16x16x8xf32>
    %95 = vector.shape_cast %94 : vector<2x16x16x8xf32> to vector<512x8xf32>
    %96 = vector.extract_strided_slice %91 {offsets = [0, 0, 2, 0], sizes = [2, 16, 16, 8], strides = [1, 1, 1, 1]} : vector<2x18x18x8xf32> to vector<2x16x16x8xf32>
    %97 = vector.shape_cast %96 : vector<2x16x16x8xf32> to vector<512x8xf32>
    %98 = vector.extract_strided_slice %91 {offsets = [0, 1, 0, 0], sizes = [2, 16, 16, 8], strides = [1, 1, 1, 1]} : vector<2x18x18x8xf32> to vector<2x16x16x8xf32>
    %99 = vector.shape_cast %98 : vector<2x16x16x8xf32> to vector<512x8xf32>
    %100 = vector.extract_strided_slice %91 {offsets = [0, 1, 1, 0], sizes = [2, 16, 16, 8], strides = [1, 1, 1, 1]} : vector<2x18x18x8xf32> to vector<2x16x16x8xf32>
    %101 = vector.shape_cast %100 : vector<2x16x16x8xf32> to vector<512x8xf32>
    %102 = vector.extract_strided_slice %91 {offsets = [0, 1, 2, 0], sizes = [2, 16, 16, 8], strides = [1, 1, 1, 1]} : vector<2x18x18x8xf32> to vector<2x16x16x8xf32>
    %103 = vector.shape_cast %102 : vector<2x16x16x8xf32> to vector<512x8xf32>
    %104 = vector.extract_strided_slice %91 {offsets = [0, 2, 0, 0], sizes = [2, 16, 16, 8], strides = [1, 1, 1, 1]} : vector<2x18x18x8xf32> to vector<2x16x16x8xf32>
    %105 = vector.shape_cast %104 : vector<2x16x16x8xf32> to vector<512x8xf32>
    %106 = vector.extract_strided_slice %91 {offsets = [0, 2, 1, 0], sizes = [2, 16, 16, 8], strides = [1, 1, 1, 1]} : vector<2x18x18x8xf32> to vector<2x16x16x8xf32>
    %107 = vector.shape_cast %106 : vector<2x16x16x8xf32> to vector<512x8xf32>
    %108 = vector.extract_strided_slice %91 {offsets = [0, 2, 2, 0], sizes = [2, 16, 16, 8], strides = [1, 1, 1, 1]} : vector<2x18x18x8xf32> to vector<2x16x16x8xf32>
    %109 = vector.shape_cast %108 : vector<2x16x16x8xf32> to vector<512x8xf32>
    %110 = tpu.concatenate %93, %95, %97, %99, %101, %103, %105, %107, %109 in 1 : vector<512x8xf32>, vector<512x8xf32>, vector<512x8xf32>, vector<512x8xf32>, vector<512x8xf32>, vector<512x8xf32>, vector<512x8xf32>, vector<512x8xf32>, vector<512x8xf32> -> vector<512x72xf32>
    %c0_85 = arith.constant 0 : index
    %c0_86 = arith.constant 0 : index
    %111 = vector.load %arg10[%c0_85, %c0_86] : memref<72x16xf32, #tpu.memory_space<vmem>>, vector<72x16xf32>
    %cst_87 = arith.constant dense<0.000000e+00> : vector<512x16xf32>
    %112 = tpu.matmul %110, %111, %cst_87 {dimension_numbers = #tpu.dot_dimension_numbers<[1], [0], [0], [1], [0, 0, 1, 1], [], []>} : vector<512x72xf32>, vector<72x16xf32>, vector<512x16xf32> -> vector<512x16xf32>
    %c0_88 = arith.constant 0 : index
    %c0_89 = arith.constant 0 : index
    %113 = vector.load %arg11[%c0_88, %c0_89] : memref<1x16xf32, #tpu.memory_space<vmem>>, vector<1x16xf32>
    %114 = vector.broadcast %113 : vector<1x16xf32> to vector<512x16xf32>
    %115 = arith.addf %112, %114 : vector<512x16xf32>
    %116 = arith.negf %115 : vector<512x16xf32>
    %117 = math.exp %116 : vector<512x16xf32>
    %cst_90 = arith.constant 1.000000e+00 : f32
    %118 = vector.broadcast %cst_90 : f32 to vector<512x16xf32>
    %119 = arith.addf %118, %117 : vector<512x16xf32>
    %120 = arith.divf %118, %119 : vector<512x16xf32>
    %121 = vector.shape_cast %120 : vector<512x16xf32> to vector<2x256x16xf32>
    %cst_91 = arith.constant 1.000000e+00 : f32
    %122 = vector.broadcast %cst_91 : f32 to vector<2x256x16xf32>
    %123 = arith.subf %122, %121 : vector<2x256x16xf32>
    %124 = vector.shape_cast %21 : vector<2x16xf32> to vector<2x1x16xf32>
    %125 = vector.broadcast %124 : vector<2x1x16xf32> to vector<2x256x16xf32>
    %126 = arith.mulf %123, %125 : vector<2x256x16xf32>
    %127 = arith.mulf %121, %1 : vector<2x256x16xf32>
    %128 = arith.addf %126, %127 : vector<2x256x16xf32>
    %129 = vector.shape_cast %128 : vector<2x256x16xf32> to vector<2x16x16x16xf32>
    %c0_92 = arith.constant 0 : index
    %c0_93 = arith.constant 0 : index
    %c0_94 = arith.constant 0 : index
    %c0_95 = arith.constant 0 : index
    %130 = vector.load %arg12[%c0_92, %c0_93, %c0_94, %c0_95] : memref<2x16x16x16xf32, #tpu.memory_space<vmem>>, vector<2x16x16x16xf32>
    tpu.vector_store %arg12[%c0_92, %c0_93, %c0_94, %c0_95], %129 {strides = array<i32>} : memref<2x16x16x16xf32, #tpu.memory_space<vmem>>, vector<2x16x16x16xf32>,
    return
  }
  func.func @transform_0(%arg0: i32) -> (i32, i32, i32, i32) {
    %c0_i32 = arith.constant 0 : i32
    %c0_i32_0 = arith.constant 0 : i32
    %c0_i32_1 = arith.constant 0 : i32
    %c0_i32_2 = arith.constant 0 : i32
    return %arg0, %c0_i32, %c0_i32_0, %c0_i32_1 : i32, i32, i32, i32
  }
  func.func @transform_1(%arg0: i32) -> (i32, i32) {
    %c0_i32 = arith.constant 0 : i32
    %c0_i32_0 = arith.constant 0 : i32
    %c0_i32_1 = arith.constant 0 : i32
    return %c0_i32, %c0_i32_0 : i32, i32
  }
  func.func @transform_2(%arg0: i32) -> (i32, i32) {
    %c0_i32 = arith.constant 0 : i32
    %c0_i32_0 = arith.constant 0 : i32
    %c0_i32_1 = arith.constant 0 : i32
    return %c0_i32, %c0_i32_0 : i32, i32
  }
  func.func @transform_3(%arg0: i32) -> (i32, i32) {
    %c0_i32 = arith.constant 0 : i32
    %c0_i32_0 = arith.constant 0 : i32
    %c0_i32_1 = arith.constant 0 : i32
    return %c0_i32, %c0_i32_0 : i32, i32
  }
  func.func @transform_4(%arg0: i32) -> (i32, i32) {
    %c0_i32 = arith.constant 0 : i32
    %c0_i32_0 = arith.constant 0 : i32
    %c0_i32_1 = arith.constant 0 : i32
    return %c0_i32, %c0_i32_0 : i32, i32
  }
  func.func @transform_5(%arg0: i32) -> (i32, i32) {
    %c0_i32 = arith.constant 0 : i32
    %c0_i32_0 = arith.constant 0 : i32
    %c0_i32_1 = arith.constant 0 : i32
    return %c0_i32, %c0_i32_0 : i32, i32
  }
  func.func @transform_6(%arg0: i32) -> (i32, i32) {
    %c0_i32 = arith.constant 0 : i32
    %c0_i32_0 = arith.constant 0 : i32
    %c0_i32_1 = arith.constant 0 : i32
    return %c0_i32, %c0_i32_0 : i32, i32
  }
  func.func @transform_7(%arg0: i32) -> (i32, i32) {
    %c0_i32 = arith.constant 0 : i32
    %c0_i32_0 = arith.constant 0 : i32
    %c0_i32_1 = arith.constant 0 : i32
    return %c0_i32, %c0_i32_0 : i32, i32
  }
  func.func @transform_8(%arg0: i32) -> (i32, i32) {
    %c0_i32 = arith.constant 0 : i32
    %c0_i32_0 = arith.constant 0 : i32
    %c0_i32_1 = arith.constant 0 : i32
    return %c0_i32, %c0_i32_0 : i32, i32
  }
  func.func @transform_9(%arg0: i32) -> (i32, i32) {
    %c0_i32 = arith.constant 0 : i32
    %c0_i32_0 = arith.constant 0 : i32
    %c0_i32_1 = arith.constant 0 : i32
    return %c0_i32, %c0_i32_0 : i32, i32
  }
  func.func @transform_10(%arg0: i32) -> (i32, i32) {
    %c0_i32 = arith.constant 0 : i32
    %c0_i32_0 = arith.constant 0 : i32
    %c0_i32_1 = arith.constant 0 : i32
    return %c0_i32, %c0_i32_0 : i32, i32
  }
  func.func @transform_11(%arg0: i32) -> (i32, i32, i32, i32) {
    %c0_i32 = arith.constant 0 : i32
    %c0_i32_0 = arith.constant 0 : i32
    %c0_i32_1 = arith.constant 0 : i32
    %c0_i32_2 = arith.constant 0 : i32
    return %arg0, %c0_i32, %c0_i32_0, %c0_i32_1 : i32, i32, i32, i32
  }
}

</mosaic_0001>

<llo_original>
// kernel: tpu_custom_call.1
$region0: #{tpu_custom_call.1}
  #allocation0 [shape = 'u32[]', space=smem, size = 0x4, offset = 0x4, fixed_abs, tag = 'smem constant byte address 0x4 - core index']
  #allocation1 [shape = 'u32[144,128]{1,0:T(1,128)}', space=vmem, size = 0x12000, scoped, tag = 'internal scratch']
  #allocation2 [shape = 'f32[2,18,18,16]{3,2,1,0:T(8,128)}', space=vmem, size = 0x6c000, scoped, tag = 'scratch operand']
  #allocation3 [shape = 'f32[2,18,18,8]{3,2,1,0:T(8,128)}', space=vmem, size = 0x6c000, scoped, tag = 'scratch operand']
  %s0 = inlined_call_operand.hbm [shape: f32[2,16,16,16], index: 0, kind: input, shape index: {}]
  %s1 = inlined_call_operand.vmem [shape: f32[16,8], index: 1, kind: input, shape index: {}]
  %s2 = inlined_call_operand.vmem [shape: f32[1,8], index: 2, kind: input, shape index: {}]
  %s3 = inlined_call_operand.vmem [shape: f32[8,16], index: 3, kind: input, shape index: {}]
  %s4 = inlined_call_operand.vmem [shape: f32[1,16], index: 4, kind: input, shape index: {}]
  %s5 = inlined_call_operand.vmem [shape: f32[144,16], index: 5, kind: input, shape index: {}]
  %s6 = inlined_call_operand.vmem [shape: f32[1,16], index: 6, kind: input, shape index: {}]
  %s7 = inlined_call_operand.vmem [shape: f32[144,8], index: 7, kind: input, shape index: {}]
  %s8 = inlined_call_operand.vmem [shape: f32[1,8], index: 8, kind: input, shape index: {}]
  %s9 = inlined_call_operand.vmem [shape: f32[72,16], index: 9, kind: input, shape index: {}]
  %s10 = inlined_call_operand.vmem [shape: f32[1,16], index: 10, kind: input, shape index: {}]
  %s11 = inlined_call_operand.hbm [shape: f32[2,16,16,16], index: 11, kind: output, shape index: {}]
  %s12 = sld [smem:[#allocation0]]
  $region58: #{tpu_custom_call.1} parent=0
    _
  %s14 = ssub.s32 1, %s12
  %s15 = scalar_select 0, %s14, %s12
  $region1: #{tpu_custom_call.1} parent=0
    #allocation4 [shape = 'u8[262144]{0}', space=vmem, size = 0x40000, scoped, tag = 'input window, operand 0, single buffered']
    #allocation5 [shape = 's32[1]{0}', space=sflag, size = 0x4, scoped, tag = 'scoped memory for tpu_custom_call.1']
    #allocation6 [shape = 's32[1]{0}', space=sflag, size = 0x4, scoped, tag = 'scoped memory for tpu_custom_call.1']
    #allocation7 [shape = 'u8[262144]{0}', space=vmem, size = 0x40000, scoped, tag = 'output window, operand 0, single buffered']
    %16 = vsyncpa [#allocation5], 0
    %17 = vsyncpa [#allocation6], 0
    // Predicated region
    $region2: #{tpu_custom_call.1} parent=1 // pred_check
      _
    $region3: #{tpu_custom_call.1} parent=1 // pred_check_branch
      %19 = sbr.rel (0) target = $region5
    $region4: #{tpu_custom_call.1} parent=1 // pred_region
      %s21 = ssub.s32 8192, 8192
      %22 = vsyncadd [#allocation5], %s21
      %s23 = sshll.u32 [#allocation4], 4
      %s24 = int_to_ptr.vmem [resolvable:$true] %s23
      %29 = dma.hbm_to_vmem [thread:$0]  %s0, 8192, %s24, [#allocation5], 128, 128, 8
    $region5: #{tpu_custom_call.1} parent=1 // pred_fallthru
      _
    // Predicated region
    $region6: #{tpu_custom_call.1} parent=1 // pred_check
      _
    $region7: #{tpu_custom_call.1} parent=1 // pred_check_branch
      %31 = sbr.rel (0) target = $region9
    $region8: #{tpu_custom_call.1} parent=1 // pred_region
      _
    $region9: #{tpu_custom_call.1} parent=1 // pred_fallthru
      _
    // Predicated region
    $region10: #{tpu_custom_call.1} parent=1 // pred_check
      _
    $region11: #{tpu_custom_call.1} parent=1 // pred_check_branch
      %33 = sbr.rel (0) target = $region13
    $region12: #{tpu_custom_call.1} parent=1 // pred_region
      _
    $region13: #{tpu_custom_call.1} parent=1 // pred_fallthru
      _
    // Predicated region
    $region14: #{tpu_custom_call.1} parent=1 // pred_check
      _
    $region15: #{tpu_custom_call.1} parent=1 // pred_check_branch
      %35 = sbr.rel (0) target = $region17
    $region16: #{tpu_custom_call.1} parent=1 // pred_region
      _
    $region17: #{tpu_custom_call.1} parent=1 // pred_fallthru
      _
    // Predicated region
    $region18: #{tpu_custom_call.1} parent=1 // pred_check
      _
    $region19: #{tpu_custom_call.1} parent=1 // pred_check_branch
      %37 = sbr.rel (0) target = $region21
    $region20: #{tpu_custom_call.1} parent=1 // pred_region
      _
    $region21: #{tpu_custom_call.1} parent=1 // pred_fallthru
      _
    // Predicated region
    $region22: #{tpu_custom_call.1} parent=1 // pred_check
      _
    $region23: #{tpu_custom_call.1} parent=1 // pred_check_branch
      %39 = sbr.rel (0) target = $region25
    $region24: #{tpu_custom_call.1} parent=1 // pred_region
      _
    $region25: #{tpu_custom_call.1} parent=1 // pred_fallthru
      _
    // Predicated region
    $region26: #{tpu_custom_call.1} parent=1 // pred_check
      _
    $region27: #{tpu_custom_call.1} parent=1 // pred_check_branch
      %41 = sbr.rel (0) target = $region29
    $region28: #{tpu_custom_call.1} parent=1 // pred_region
      _
    $region29: #{tpu_custom_call.1} parent=1 // pred_fallthru
      _
    // Predicated region
    $region30: #{tpu_custom_call.1} parent=1 // pred_check
      _
    $region31: #{tpu_custom_call.1} parent=1 // pred_check_branch
      %43 = sbr.rel (0) target = $region33
    $region32: #{tpu_custom_call.1} parent=1 // pred_region
      _
    $region33: #{tpu_custom_call.1} parent=1 // pred_fallthru
      _
    // Predicated region
    $region34: #{tpu_custom_call.1} parent=1 // pred_check
      _
    $region35: #{tpu_custom_call.1} parent=1 // pred_check_branch
      %45 = sbr.rel (0) target = $region37
    $region36: #{tpu_custom_call.1} parent=1 // pred_region
      _
    $region37: #{tpu_custom_call.1} parent=1 // pred_fallthru
      _
    // Predicated region
    $region38: #{tpu_custom_call.1} parent=1 // pred_check
      _
    $region39: #{tpu_custom_call.1} parent=1 // pred_check_branch
      %47 = sbr.rel (0) target = $region41
    $region40: #{tpu_custom_call.1} parent=1 // pred_region
      _
    $region41: #{tpu_custom_call.1} parent=1 // pred_fallthru
      _
    // Predicated region
    $region42: #{tpu_custom_call.1} parent=1 // pred_check
      _
    $region43: #{tpu_custom_call.1} parent=1 // pred_check_branch
      %49 = sbr.rel (0) target = $region45
    $region44: #{tpu_custom_call.1} parent=1 // pred_region
      _
    $region45: #{tpu_custom_call.1} parent=1 // pred_fallthru
      _
    // Predicated region
    $region46: #{tpu_custom_call.1} parent=1 // pred_check
      _
    $region47: #{tpu_custom_call.1} parent=1 // pred_check_branch
      %51 = sbr.rel (0) target = $region49
    $region48: #{tpu_custom_call.1} parent=1 // pred_region
      %52 = dma.done [#allocation5], 8192
    $region49: #{tpu_custom_call.1} parent=1 // pred_fallthru
      _
    %v53 = vld [vmem:[#allocation4] sm:$0xff]
    %v54 = vld [vmem:[#allocation4 + $0x8] sm:$0xff]
    %v55 = vld [vmem:[#allocation4 + $0x10] sm:$0xff]
    %v56 = vld [vmem:[#allocation4 + $0x18] sm:$0xff]
    %v57 = vld [vmem:[#allocation4 + $0x20] sm:$0xff]
    %v58 = vld [vmem:[#allocation4 + $0x28] sm:$0xff]
    %v59 = vld [vmem:[#allocation4 + $0x30] sm:$0xff]
    %v60 = vld [vmem:[#allocation4 + $0x38] sm:$0xff]
    %v61 = vld [vmem:[#allocation4 + $0x40] sm:$0xff]
    %v62 = vld [vmem:[#allocation4 + $0x48] sm:$0xff]
    %v63 = vld [vmem:[#allocation4 + $0x50] sm:$0xff]
    %v64 = vld [vmem:[#allocation4 + $0x58] sm:$0xff]
    %v65 = vld [vmem:[#allocation4 + $0x60] sm:$0xff]
    %v66 = vld [vmem:[#allocation4 + $0x68] sm:$0xff]
    %v67 = vld [vmem:[#allocation4 + $0x70] sm:$0xff]
    %v68 = vld [vmem:[#allocation4 + $0x78] sm:$0xff]
    %v69 = vld [vmem:[#allocation4 + $0x80] sm:$0xff]
    %v70 = vld [vmem:[#allocation4 + $0x88] sm:$0xff]
    %v71 = vld [vmem:[#allocation4 + $0x90] sm:$0xff]
    %v72 = vld [vmem:[#allocation4 + $0x98] sm:$0xff]
    %v73 = vld [vmem:[#allocation4 + $0xa0] sm:$0xff]
    %v74 = vld [vmem:[#allocation4 + $0xa8] sm:$0xff]
    %v75 = vld [vmem:[#allocation4 + $0xb0] sm:$0xff]
    %v76 = vld [vmem:[#allocation4 + $0xb8] sm:$0xff]
    %v77 = vld [vmem:[#allocation4 + $0xc0] sm:$0xff]
    %v78 = vld [vmem:[#allocation4 + $0xc8] sm:$0xff]
    %v79 = vld [vmem:[#allocation4 + $0xd0] sm:$0xff]
    %v80 = vld [vmem:[#allocation4 + $0xd8] sm:$0xff]
    %v81 = vld [vmem:[#allocation4 + $0xe0] sm:$0xff]
    %v82 = vld [vmem:[#allocation4 + $0xe8] sm:$0xff]
    %v83 = vld [vmem:[#allocation4 + $0xf0] sm:$0xff]
    %v84 = vld [vmem:[#allocation4 + $0xf8] sm:$0xff]
    %v85 = vld [vmem:[#allocation4 + $0x100] sm:$0xff]
    %v86 = vld [vmem:[#allocation4 + $0x108] sm:$0xff]
    %v87 = vld [vmem:[#allocation4 + $0x110] sm:$0xff]
    %v88 = vld [vmem:[#allocation4 + $0x118] sm:$0xff]
    %v89 = vld [vmem:[#allocation4 + $0x120] sm:$0xff]
    %v90 = vld [vmem:[#allocation4 + $0x128] sm:$0xff]
    %v91 = vld [vmem:[#allocation4 + $0x130] sm:$0xff]
    %v92 = vld [vmem:[#allocation4 + $0x138] sm:$0xff]
    %v93 = vld [vmem:[#allocation4 + $0x140] sm:$0xff]
    %v94 = vld [vmem:[#allocation4 + $0x148] sm:$0xff]
    %v95 = vld [vmem:[#allocation4 + $0x150] sm:$0xff]
    %v96 = vld [vmem:[#allocation4 + $0x158] sm:$0xff]
    %v97 = vld [vmem:[#allocation4 + $0x160] sm:$0xff]
    %v98 = vld [vmem:[#allocation4 + $0x168] sm:$0xff]
    %v99 = vld [vmem:[#allocation4 + $0x170] sm:$0xff]
    %v100 = vld [vmem:[#allocation4 + $0x178] sm:$0xff]
    %v101 = vld [vmem:[#allocation4 + $0x180] sm:$0xff]
    %v102 = vld [vmem:[#allocation4 + $0x188] sm:$0xff]
    %v103 = vld [vmem:[#allocation4 + $0x190] sm:$0xff]
    %v104 = vld [vmem:[#allocation4 + $0x198] sm:$0xff]
    %v105 = vld [vmem:[#allocation4 + $0x1a0] sm:$0xff]
    %v106 = vld [vmem:[#allocation4 + $0x1a8] sm:$0xff]
    %v107 = vld [vmem:[#allocation4 + $0x1b0] sm:$0xff]
    %v108 = vld [vmem:[#allocation4 + $0x1b8] sm:$0xff]
    %v109 = vld [vmem:[#allocation4 + $0x1c0] sm:$0xff]
    %v110 = vld [vmem:[#allocation4 + $0x1c8] sm:$0xff]
    %v111 = vld [vmem:[#allocation4 + $0x1d0] sm:$0xff]
    %v112 = vld [vmem:[#allocation4 + $0x1d8] sm:$0xff]
    %v113 = vld [vmem:[#allocation4 + $0x1e0] sm:$0xff]
    %v114 = vld [vmem:[#allocation4 + $0x1e8] sm:$0xff]
    %v115 = vld [vmem:[#allocation4 + $0x1f0] sm:$0xff]
    %v116 = vld [vmem:[#allocation4 + $0x1f8] sm:$0xff]
    %vm117 = vcmask 130048
    %v118 = vsel %vm117, %v53, 0.0
    %v119 = vsel %vm117, %v54, 0.0
    %v120 = vadd.f32 %v118, %v119
    %v121 = vsel %vm117, %v55, 0.0
    %v122 = vadd.f32 %v120, %v121
    %v123 = vsel %vm117, %v56, 0.0
    %v124 = vadd.f32 %v122, %v123
    %v125 = vsel %vm117, %v57, 0.0
    %v126 = vadd.f32 %v124, %v125
    %v127 = vsel %vm117, %v58, 0.0
    %v128 = vadd.f32 %v126, %v127
    %v129 = vsel %vm117, %v59, 0.0
    %v130 = vadd.f32 %v128, %v129
    %v131 = vsel %vm117, %v60, 0.0
    %v132 = vadd.f32 %v130, %v131
    %v133 = vsel %vm117, %v61, 0.0
    %v134 = vadd.f32 %v132, %v133
    %v135 = vsel %vm117, %v62, 0.0
    %v136 = vadd.f32 %v134, %v135
    %v137 = vsel %vm117, %v63, 0.0
    %v138 = vadd.f32 %v136, %v137
    %v139 = vsel %vm117, %v64, 0.0
    %v140 = vadd.f32 %v138, %v139
    %v141 = vsel %vm117, %v65, 0.0
    %v142 = vadd.f32 %v140, %v141
    %v143 = vsel %vm117, %v66, 0.0
    %v144 = vadd.f32 %v142, %v143
    %v145 = vsel %vm117, %v67, 0.0
    %v146 = vadd.f32 %v144, %v145
    %v147 = vsel %vm117, %v68, 0.0
    %v148 = vadd.f32 %v146, %v147
    %v149 = vsel %vm117, %v69, 0.0
    %v150 = vadd.f32 %v148, %v149
    %v151 = vsel %vm117, %v70, 0.0
    %v152 = vadd.f32 %v150, %v151
    %v153 = vsel %vm117, %v71, 0.0
    %v154 = vadd.f32 %v152, %v153
    %v155 = vsel %vm117, %v72, 0.0
    %v156 = vadd.f32 %v154, %v155
    %v157 = vsel %vm117, %v73, 0.0
    %v158 = vadd.f32 %v156, %v157
    %v159 = vsel %vm117, %v74, 0.0
    %v160 = vadd.f32 %v158, %v159
    %v161 = vsel %vm117, %v75, 0.0
    %v162 = vadd.f32 %v160, %v161
    %v163 = vsel %vm117, %v76, 0.0
    %v164 = vadd.f32 %v162, %v163
    %v165 = vsel %vm117, %v77, 0.0
    %v166 = vadd.f32 %v164, %v165
    %v167 = vsel %vm117, %v78, 0.0
    %v168 = vadd.f32 %v166, %v167
    %v169 = vsel %vm117, %v79, 0.0
    %v170 = vadd.f32 %v168, %v169
    %v171 = vsel %vm117, %v80, 0.0
    %v172 = vadd.f32 %v170, %v171
    %v173 = vsel %vm117, %v81, 0.0
    %v174 = vadd.f32 %v172, %v173
    %v175 = vsel %vm117, %v82, 0.0
    %v176 = vadd.f32 %v174, %v175
    %v177 = vsel %vm117, %v83, 0.0
    %v178 = vadd.f32 %v176, %v177
    %v179 = vsel %vm117, %v84, 0.0
    %v180 = vadd.f32 %v178, %v179
    %v181 = vrot.slane %v180, 4
    %v182 = vadd.f32 %v180, %v181
    %v183 = vrot.slane %v182, 2
    %v184 = vadd.f32 %v182, %v183
    %v185 = vrot.slane %v184, 1
    %v186 = vadd.f32 %v184, %v185
    %v187 = vsel %vm117, %v85, 0.0
    %v188 = vsel %vm117, %v86, 0.0
    %v189 = vadd.f32 %v187, %v188
    %v190 = vsel %vm117, %v87, 0.0
    %v191 = vadd.f32 %v189, %v190
    %v192 = vsel %vm117, %v88, 0.0
    %v193 = vadd.f32 %v191, %v192
    %v194 = vsel %vm117, %v89, 0.0
    %v195 = vadd.f32 %v193, %v194
    %v196 = vsel %vm117, %v90, 0.0
    %v197 = vadd.f32 %v195, %v196
    %v198 = vsel %vm117, %v91, 0.0
    %v199 = vadd.f32 %v197, %v198
    %v200 = vsel %vm117, %v92, 0.0
    %v201 = vadd.f32 %v199, %v200
    %v202 = vsel %vm117, %v93, 0.0
    %v203 = vadd.f32 %v201, %v202
    %v204 = vsel %vm117, %v94, 0.0
    %v205 = vadd.f32 %v203, %v204
    %v206 = vsel %vm117, %v95, 0.0
    %v207 = vadd.f32 %v205, %v206
    %v208 = vsel %vm117, %v96, 0.0
    %v209 = vadd.f32 %v207, %v208
    %v210 = vsel %vm117, %v97, 0.0
    %v211 = vadd.f32 %v209, %v210
    %v212 = vsel %vm117, %v98, 0.0
    %v213 = vadd.f32 %v211, %v212
    %v214 = vsel %vm117, %v99, 0.0
    %v215 = vadd.f32 %v213, %v214
    %v216 = vsel %vm117, %v100, 0.0
    %v217 = vadd.f32 %v215, %v216
    %v218 = vsel %vm117, %v101, 0.0
    %v219 = vadd.f32 %v217, %v218
    %v220 = vsel %vm117, %v102, 0.0
    %v221 = vadd.f32 %v219, %v220
    %v222 = vsel %vm117, %v103, 0.0
    %v223 = vadd.f32 %v221, %v222
    %v224 = vsel %vm117, %v104, 0.0
    %v225 = vadd.f32 %v223, %v224
    %v226 = vsel %vm117, %v105, 0.0
    %v227 = vadd.f32 %v225, %v226
    %v228 = vsel %vm117, %v106, 0.0
    %v229 = vadd.f32 %v227, %v228
    %v230 = vsel %vm117, %v107, 0.0
    %v231 = vadd.f32 %v229, %v230
    %v232 = vsel %vm117, %v108, 0.0
    %v233 = vadd.f32 %v231, %v232
    %v234 = vsel %vm117, %v109, 0.0
    %v235 = vadd.f32 %v233, %v234
    %v236 = vsel %vm117, %v110, 0.0
    %v237 = vadd.f32 %v235, %v236
    %v238 = vsel %vm117, %v111, 0.0
    %v239 = vadd.f32 %v237, %v238
    %v240 = vsel %vm117, %v112, 0.0
    %v241 = vadd.f32 %v239, %v240
    %v242 = vsel %vm117, %v113, 0.0
    %v243 = vadd.f32 %v241, %v242
    %v244 = vsel %vm117, %v114, 0.0
    %v245 = vadd.f32 %v243, %v244
    %v246 = vsel %vm117, %v115, 0.0
    %v247 = vadd.f32 %v245, %v246
    %v248 = vsel %vm117, %v116, 0.0
    %v249 = vadd.f32 %v247, %v248
    %v250 = vrot.slane %v249, 4
    %v251 = vadd.f32 %v249, %v250
    %v252 = vrot.slane %v251, 2
    %v253 = vadd.f32 %v251, %v252
    %v254 = vrot.slane %v253, 1
    %v255 = vadd.f32 %v253, %v254
    %v256 = vmul.f32 %v186, 0.00390625
    %v257 = vmul.f32 %v255, 0.00390625
    %v258 = vld [vmem:[%s1] sm:$0xff]
    %v259 = vld [vmem:[%s1 + $0x8] sm:$0xff]
    %v260 = vld [vmem:[%s2] sm:$0x1]
    %v262 = vlaneseq
    %v263 = vshrl.u32 %v262, 7
    %v264 = vsub.s32 0, %v263
    %v265 = vrot.slane %v260, %v264
    %vm269 = vcmask 1041409
    %v270 = vsel %vm269, %v257, %v256
    %v271 = vsel %vm117, %v270, 0
    %273 = vmatprep.subr.mxu0 0.0
    %274 = vmatpush1.msra.mxu0 %v258
    %275 = vmatprep.subr.mxu0 0.0
    %276 = vmatpush1.msra.mxu0 %v259
    %277 = vmatprep.subr.mxu0 0.0
    %278 = vmatpush1.msra.mxu0 0.0
    %279 = vmatprep.subr.mxu0 0.0
    %280 = vmatpush1.msra.mxu0 0.0
    %281 = vmatprep.subr.mxu0 0.0
    %282 = vmatpush1.msra.mxu0 0.0
    %283 = vmatprep.subr.mxu0 0.0
    %284 = vmatpush1.msra.mxu0 0.0
    %285 = vmatprep.subr.mxu0 0.0
    %286 = vmatpush1.msra.mxu0 0.0
    %287 = vmatprep.subr.mxu0 0.0
    %288 = vmatpush1.msra.mxu0 0.0
    %289 = vmatprep.subr.mxu0 0.0
    %290 = vmatpush1.msra.mxu0 0.0
    %291 = vmatprep.subr.mxu0 0.0
    %292 = vmatpush1.msra.mxu0 0.0
    %293 = vmatprep.subr.mxu0 0.0
    %294 = vmatpush1.msra.mxu0 0.0
    %295 = vmatprep.subr.mxu0 0.0
    %296 = vmatpush1.msra.mxu0 0.0
    %297 = vmatprep.subr.mxu0 0.0
    %298 = vmatpush1.msra.mxu0 0.0
    %299 = vmatprep.subr.mxu0 0.0
    %300 = vmatpush1.msra.mxu0 0.0
    %301 = vmatprep.subr.mxu0 0.0
    %302 = vmatpush1.msra.mxu0 0.0
    %303 = vmatprep.subr.mxu0 0.0
    %304 = vmatpush1.msra.mxu0 0.0
    %305 = vmatprep.subr.mxu0 0.0
    %306 = vmatpush1.msra.mxu0 0.0
    %307 = vmatprep.subr.mxu0 0.0
    %308 = vmatpush1.msra.mxu0 0.0
    %309 = vmatprep.subr.mxu0 0.0
    %310 = vmatpush1.msra.mxu0 0.0
    %311 = vmatprep.subr.mxu0 0.0
    %312 = vmatpush1.msra.mxu0 0.0
    %313 = vmatprep.subr.mxu0 0.0
    %314 = vmatpush1.msra.mxu0 0.0
    %315 = vmatprep.subr.mxu0 0.0
    %316 = vmatpush1.msra.mxu0 0.0
    %317 = vmatprep.subr.mxu0 0.0
    %318 = vmatpush1.msra.mxu0 0.0
    %319 = vmatprep.subr.mxu0 0.0
    %320 = vmatpush1.msra.mxu0 0.0
    %321 = vmatprep.subr.mxu0 0.0
    %322 = vmatpush1.msra.mxu0 0.0
    %323 = vmatprep.subr.mxu0 0.0
    %324 = vmatpush1.msra.mxu0 0.0
    %325 = vmatprep.subr.mxu0 0.0
    %326 = vmatpush1.msra.mxu0 0.0
    %327 = vmatprep.subr.mxu0 0.0
    %328 = vmatpush1.msra.mxu0 0.0
    %329 = vmatprep.subr.mxu0 0.0
    %330 = vmatpush1.msra.mxu0 0.0
    %331 = vmatprep.subr.mxu0 0.0
    %332 = vmatpush1.msra.mxu0 0.0
    %333 = vmatprep.subr.mxu0 0.0
    %334 = vmatpush1.msra.mxu0 0.0
    %335 = vmatprep.subr.mxu0 0.0
    %336 = vmatpush1.msra.mxu0 0.0
    %337 = vmatprep.mubr.f32.mxu0 0.0
    %338 = vmatmul.mubr.f32.gmra.mrb[0].mxu0 %v271
    %v339 = vpop.f32.mrb[0].mxu0
    %v340 = vadd.f32 %v265, %v339
    %v341 = vpop.f32.mrb[0].mxu0
    %342 = vdwg.mxu0
    %v343 = vmax.f32 %v340, 0.0
    %v344 = vld [vmem:[%s3] sm:$0xff]
    %v345 = vld [vmem:[%s4] sm:$0x1]
    %v347 = vlaneseq
    %v348 = vshrl.u32 %v347, 7
    %v349 = vsub.s32 0, %v348
    %v350 = vrot.slane %v345, %v349
    %vm352 = vcmask 64512
    %v354 = vsel %vm352, %v343, 0
    %356 = vmatprep.subr.mxu0 0.0
    %357 = vmatpush1.msra.mxu0 %v344
    %358 = vmatprep.subr.mxu0 0.0
    %359 = vmatpush1.msra.mxu0 0.0
    %360 = vmatprep.subr.mxu0 0.0
    %361 = vmatpush1.msra.mxu0 0.0
    %362 = vmatprep.subr.mxu0 0.0
    %363 = vmatpush1.msra.mxu0 0.0
    %364 = vmatprep.subr.mxu0 0.0
    %365 = vmatpush1.msra.mxu0 0.0
    %366 = vmatprep.subr.mxu0 0.0
    %367 = vmatpush1.msra.mxu0 0.0
    %368 = vmatprep.subr.mxu0 0.0
    %369 = vmatpush1.msra.mxu0 0.0
    %370 = vmatprep.subr.mxu0 0.0
    %371 = vmatpush1.msra.mxu0 0.0
    %372 = vmatprep.subr.mxu0 0.0
    %373 = vmatpush1.msra.mxu0 0.0
    %374 = vmatprep.subr.mxu0 0.0
    %375 = vmatpush1.msra.mxu0 0.0
    %376 = vmatprep.subr.mxu0 0.0
    %377 = vmatpush1.msra.mxu0 0.0
    %378 = vmatprep.subr.mxu0 0.0
    %379 = vmatpush1.msra.mxu0 0.0
    %380 = vmatprep.subr.mxu0 0.0
    %381 = vmatpush1.msra.mxu0 0.0
    %382 = vmatprep.subr.mxu0 0.0
    %383 = vmatpush1.msra.mxu0 0.0
    %384 = vmatprep.subr.mxu0 0.0
    %385 = vmatpush1.msra.mxu0 0.0
    %386 = vmatprep.subr.mxu0 0.0
    %387 = vmatpush1.msra.mxu0 0.0
    %388 = vmatprep.subr.mxu0 0.0
    %389 = vmatpush1.msra.mxu0 0.0
    %390 = vmatprep.subr.mxu0 0.0
    %391 = vmatpush1.msra.mxu0 0.0
    %392 = vmatprep.subr.mxu0 0.0
    %393 = vmatpush1.msra.mxu0 0.0
    %394 = vmatprep.subr.mxu0 0.0
    %395 = vmatpush1.msra.mxu0 0.0
    %396 = vmatprep.subr.mxu0 0.0
    %397 = vmatpush1.msra.mxu0 0.0
    %398 = vmatprep.subr.mxu0 0.0
    %399 = vmatpush1.msra.mxu0 0.0
    %400 = vmatprep.subr.mxu0 0.0
    %401 = vmatpush1.msra.mxu0 0.0
    %402 = vmatprep.subr.mxu0 0.0
    %403 = vmatpush1.msra.mxu0 0.0
    %404 = vmatprep.subr.mxu0 0.0
    %405 = vmatpush1.msra.mxu0 0.0
    %406 = vmatprep.subr.mxu0 0.0
    %407 = vmatpush1.msra.mxu0 0.0
    %408 = vmatprep.subr.mxu0 0.0
    %409 = vmatpush1.msra.mxu0 0.0
    %410 = vmatprep.subr.mxu0 0.0
    %411 = vmatpush1.msra.mxu0 0.0
    %412 = vmatprep.subr.mxu0 0.0
    %413 = vmatpush1.msra.mxu0 0.0
    %414 = vmatprep.subr.mxu0 0.0
    %415 = vmatpush1.msra.mxu0 0.0
    %416 = vmatprep.subr.mxu0 0.0
    %417 = vmatpush1.msra.mxu0 0.0
    %418 = vmatprep.subr.mxu0 0.0
    %419 = vmatpush1.msra.mxu0 0.0
    %420 = vmatprep.mubr.f32.mxu0 0.0
    %421 = vmatmul.mubr.f32.gmra.mrb[0].mxu0 %v354
    %v422 = vpop.f32.mrb[0].mxu0
    %v423 = vadd.f32 %v350, %v422
    %v424 = vpop.f32.mrb[0].mxu0
    %425 = vdwg.mxu0
    %v426 = vxor.u32 %v423, 2147483648
    %v427 = vmul.f32 %v426, 1.442695
    %v428 = vpow.pop %v427
    %v429 = vadd.f32 %v428, 1.0
    %v430 = vrcp.pop %v429
    %v431 = vmul.f32 1.0, %v430
    %432 = vst.msk [vmem:[#allocation2] sm:$0xff] %vm117, 0.0
    %433 = vst.msk [vmem:[#allocation2 + $0x8] sm:$0xff] %vm117, 0.0
    %vm434 = vcmask 123904
    %435 = vst.msk [vmem:[#allocation2 + $0x10] sm:$0x3] %vm434, 0.0
    %436 = vst.msk [vmem:[#allocation2 + $0x1b0] sm:$0xff] %vm117, 0.0
    %437 = vst.msk [vmem:[#allocation2 + $0x1b8] sm:$0xff] %vm117, 0.0
    %438 = vst.msk [vmem:[#allocation2 + $0x1c0] sm:$0x3] %vm434, 0.0
    %s439 = scalar_lea.vmem [#allocation2], 408
    %440 = vst.msk [vmem:[%s439] sm:$0xff] %vm117, 0.0
    %441 = vst.msk [vmem:[%s439 + $0x8] sm:$0xff] %vm117, 0.0
    %442 = vst.msk [vmem:[%s439 + $0x10] sm:$0x3] %vm434, 0.0
    %443 = vst.msk [vmem:[%s439 + $0x1b0] sm:$0xff] %vm117, 0.0
    %444 = vst.msk [vmem:[%s439 + $0x1b8] sm:$0xff] %vm117, 0.0
    %445 = vst.msk [vmem:[%s439 + $0x1c0] sm:$0x3] %vm434, 0.0
    %vm446 = vcmask 122880
    %447 = vst.msk [vmem:[#allocation2] sm:$0x1] %vm446, 0.0
    %448 = vst.msk [vmem:[#allocation2 + $0x18] sm:$0x1] %vm446, 0.0
    %449 = vst.msk [vmem:[#allocation2 + $0x30] sm:$0x1] %vm446, 0.0
    %450 = vst.msk [vmem:[#allocation2 + $0x48] sm:$0x1] %vm446, 0.0
    %451 = vst.msk [vmem:[#allocation2 + $0x60] sm:$0x1] %vm446, 0.0
    %452 = vst.msk [vmem:[#allocation2 + $0x78] sm:$0x1] %vm446, 0.0
    %453 = vst.msk [vmem:[#allocation2 + $0x90] sm:$0x1] %vm446, 0.0
    %454 = vst.msk [vmem:[#allocation2 + $0xa8] sm:$0x1] %vm446, 0.0
    %455 = vst.msk [vmem:[#allocation2 + $0xc0] sm:$0x1] %vm446, 0.0
    %456 = vst.msk [vmem:[#allocation2 + $0xd8] sm:$0x1] %vm446, 0.0
    %457 = vst.msk [vmem:[#allocation2 + $0xf0] sm:$0x1] %vm446, 0.0
    %458 = vst.msk [vmem:[#allocation2 + $0x108] sm:$0x1] %vm446, 0.0
    %459 = vst.msk [vmem:[#allocation2 + $0x120] sm:$0x1] %vm446, 0.0
    %460 = vst.msk [vmem:[#allocation2 + $0x138] sm:$0x1] %vm446, 0.0
    %461 = vst.msk [vmem:[#allocation2 + $0x150] sm:$0x1] %vm446, 0.0
    %462 = vst.msk [vmem:[#allocation2 + $0x168] sm:$0x1] %vm446, 0.0
    %463 = vst.msk [vmem:[#allocation2 + $0x180] sm:$0x1] %vm446, 0.0
    %464 = vst.msk [vmem:[#allocation2 + $0x198] sm:$0x1] %vm446, 0.0
    %465 = vst.msk [vmem:[#allocation2 + $0x1b0] sm:$0x1] %vm446, 0.0
    %466 = vst.msk [vmem:[#allocation2 + $0x1c8] sm:$0x1] %vm446, 0.0
    %467 = vst.msk [vmem:[#allocation2 + $0x1e0] sm:$0x1] %vm446, 0.0
    %468 = vst.msk [vmem:[#allocation2 + $0x1f8] sm:$0x1] %vm446, 0.0
    %469 = vst.msk [vmem:[#allocation2 + $0x210] sm:$0x1] %vm446, 0.0
    %470 = vst.msk [vmem:[#allocation2 + $0x228] sm:$0x1] %vm446, 0.0
    %471 = vst.msk [vmem:[#allocation2 + $0x240] sm:$0x1] %vm446, 0.0
    %472 = vst.msk [vmem:[#allocation2 + $0x258] sm:$0x1] %vm446, 0.0
    %473 = vst.msk [vmem:[#allocation2 + $0x270] sm:$0x1] %vm446, 0.0
    %474 = vst.msk [vmem:[#allocation2 + $0x288] sm:$0x1] %vm446, 0.0
    %475 = vst.msk [vmem:[#allocation2 + $0x2a0] sm:$0x1] %vm446, 0.0
    %476 = vst.msk [vmem:[#allocation2 + $0x2b8] sm:$0x1] %vm446, 0.0
    %477 = vst.msk [vmem:[#allocation2 + $0x2d0] sm:$0x1] %vm446, 0.0
    %478 = vst.msk [vmem:[#allocation2 + $0x2e8] sm:$0x1] %vm446, 0.0
    %479 = vst.msk [vmem:[#allocation2 + $0x300] sm:$0x1] %vm446, 0.0
    %480 = vst.msk [vmem:[#allocation2 + $0x318] sm:$0x1] %vm446, 0.0
    %481 = vst.msk [vmem:[#allocation2 + $0x330] sm:$0x1] %vm446, 0.0
    %482 = vst.msk [vmem:[#allocation2 + $0x348] sm:$0x1] %vm446, 0.0
    %483 = vst.msk [vmem:[#allocation2 + $0x11] sm:$0x1] %vm446, 0.0
    %484 = vst.msk [vmem:[#allocation2 + $0x29] sm:$0x1] %vm446, 0.0
    %485 = vst.msk [vmem:[#allocation2 + $0x41] sm:$0x1] %vm446, 0.0
    %486 = vst.msk [vmem:[#allocation2 + $0x59] sm:$0x1] %vm446, 0.0
    %487 = vst.msk [vmem:[#allocation2 + $0x71] sm:$0x1] %vm446, 0.0
    %488 = vst.msk [vmem:[#allocation2 + $0x89] sm:$0x1] %vm446, 0.0
    %489 = vst.msk [vmem:[#allocation2 + $0xa1] sm:$0x1] %vm446, 0.0
    %490 = vst.msk [vmem:[#allocation2 + $0xb9] sm:$0x1] %vm446, 0.0
    %491 = vst.msk [vmem:[#allocation2 + $0xd1] sm:$0x1] %vm446, 0.0
    %492 = vst.msk [vmem:[#allocation2 + $0xe9] sm:$0x1] %vm446, 0.0
    %493 = vst.msk [vmem:[#allocation2 + $0x101] sm:$0x1] %vm446, 0.0
    %494 = vst.msk [vmem:[#allocation2 + $0x119] sm:$0x1] %vm446, 0.0
    %495 = vst.msk [vmem:[#allocation2 + $0x131] sm:$0x1] %vm446, 0.0
    %496 = vst.msk [vmem:[#allocation2 + $0x149] sm:$0x1] %vm446, 0.0
    %497 = vst.msk [vmem:[#allocation2 + $0x161] sm:$0x1] %vm446, 0.0
    %498 = vst.msk [vmem:[#allocation2 + $0x179] sm:$0x1] %vm446, 0.0
    %499 = vst.msk [vmem:[#allocation2 + $0x191] sm:$0x1] %vm446, 0.0
    %500 = vst.msk [vmem:[#allocation2 + $0x1a9] sm:$0x1] %vm446, 0.0
    %501 = vst.msk [vmem:[#allocation2 + $0x1c1] sm:$0x1] %vm446, 0.0
    %502 = vst.msk [vmem:[#allocation2 + $0x1d9] sm:$0x1] %vm446, 0.0
    %503 = vst.msk [vmem:[#allocation2 + $0x1f1] sm:$0x1] %vm446, 0.0
    %504 = vst.msk [vmem:[#allocation2 + $0x209] sm:$0x1] %vm446, 0.0
    %505 = vst.msk [vmem:[#allocation2 + $0x221] sm:$0x1] %vm446, 0.0
    %506 = vst.msk [vmem:[#allocation2 + $0x239] sm:$0x1] %vm446, 0.0
    %507 = vst.msk [vmem:[#allocation2 + $0x251] sm:$0x1] %vm446, 0.0
    %508 = vst.msk [vmem:[#allocation2 + $0x269] sm:$0x1] %vm446, 0.0
    %509 = vst.msk [vmem:[#allocation2 + $0x281] sm:$0x1] %vm446, 0.0
    %510 = vst.msk [vmem:[#allocation2 + $0x299] sm:$0x1] %vm446, 0.0
    %511 = vst.msk [vmem:[#allocation2 + $0x2b1] sm:$0x1] %vm446, 0.0
    %512 = vst.msk [vmem:[#allocation2 + $0x2c9] sm:$0x1] %vm446, 0.0
    %513 = vst.msk [vmem:[#allocation2 + $0x2e1] sm:$0x1] %vm446, 0.0
    %514 = vst.msk [vmem:[#allocation2 + $0x2f9] sm:$0x1] %vm446, 0.0
    %515 = vst.msk [vmem:[#allocation2 + $0x311] sm:$0x1] %vm446, 0.0
    %516 = vst.msk [vmem:[#allocation2 + $0x329] sm:$0x1] %vm446, 0.0
    %517 = vst.msk [vmem:[#allocation2 + $0x341] sm:$0x1] %vm446, 0.0
    %518 = vst.msk [vmem:[#allocation2 + $0x359] sm:$0x1] %vm446, 0.0
    %519 = vst.msk [vmem:[#allocation3] sm:$0xff] %vm352, 0.0
    %520 = vst.msk [vmem:[#allocation3 + $0x8] sm:$0xff] %vm352, 0.0
    %vm521 = vcmask 58368
    %522 = vst.msk [vmem:[#allocation3 + $0x10] sm:$0x3] %vm521, 0.0
    %523 = vst.msk [vmem:[#allocation3 + $0x1b0] sm:$0xff] %vm352, 0.0
    %524 = vst.msk [vmem:[#allocation3 + $0x1b8] sm:$0xff] %vm352, 0.0
    %525 = vst.msk [vmem:[#allocation3 + $0x1c0] sm:$0x3] %vm521, 0.0
    %s526 = scalar_lea.vmem [#allocation3], 408
    %527 = vst.msk [vmem:[%s526] sm:$0xff] %vm352, 0.0
    %528 = vst.msk [vmem:[%s526 + $0x8] sm:$0xff] %vm352, 0.0
    %529 = vst.msk [vmem:[%s526 + $0x10] sm:$0x3] %vm521, 0.0
    %530 = vst.msk [vmem:[%s526 + $0x1b0] sm:$0xff] %vm352, 0.0
    %531 = vst.msk [vmem:[%s526 + $0x1b8] sm:$0xff] %vm352, 0.0
    %532 = vst.msk [vmem:[%s526 + $0x1c0] sm:$0x3] %vm521, 0.0
    %vm533 = vcmask 57344
    %534 = vst.msk [vmem:[#allocation3] sm:$0x1] %vm533, 0.0
    %535 = vst.msk [vmem:[#allocation3 + $0x18] sm:$0x1] %vm533, 0.0
    %536 = vst.msk [vmem:[#allocation3 + $0x30] sm:$0x1] %vm533, 0.0
    %537 = vst.msk [vmem:[#allocation3 + $0x48] sm:$0x1] %vm533, 0.0
    %538 = vst.msk [vmem:[#allocation3 + $0x60] sm:$0x1] %vm533, 0.0
    %539 = vst.msk [vmem:[#allocation3 + $0x78] sm:$0x1] %vm533, 0.0
    %540 = vst.msk [vmem:[#allocation3 + $0x90] sm:$0x1] %vm533, 0.0
    %541 = vst.msk [vmem:[#allocation3 + $0xa8] sm:$0x1] %vm533, 0.0
    %542 = vst.msk [vmem:[#allocation3 + $0xc0] sm:$0x1] %vm533, 0.0
    %543 = vst.msk [vmem:[#allocation3 + $0xd8] sm:$0x1] %vm533, 0.0
    %544 = vst.msk [vmem:[#allocation3 + $0xf0] sm:$0x1] %vm533, 0.0
    %545 = vst.msk [vmem:[#allocation3 + $0x108] sm:$0x1] %vm533, 0.0
    %546 = vst.msk [vmem:[#allocation3 + $0x120] sm:$0x1] %vm533, 0.0
    %547 = vst.msk [vmem:[#allocation3 + $0x138] sm:$0x1] %vm533, 0.0
    %548 = vst.msk [vmem:[#allocation3 + $0x150] sm:$0x1] %vm533, 0.0
    %549 = vst.msk [vmem:[#allocation3 + $0x168] sm:$0x1] %vm533, 0.0
    %550 = vst.msk [vmem:[#allocation3 + $0x180] sm:$0x1] %vm533, 0.0
    %551 = vst.msk [vmem:[#allocation3 + $0x198] sm:$0x1] %vm533, 0.0
    %552 = vst.msk [vmem:[#allocation3 + $0x1b0] sm:$0x1] %vm533, 0.0
    %553 = vst.msk [vmem:[#allocation3 + $0x1c8] sm:$0x1] %vm533, 0.0
    %554 = vst.msk [vmem:[#allocation3 + $0x1e0] sm:$0x1] %vm533, 0.0
    %555 = vst.msk [vmem:[#allocation3 + $0x1f8] sm:$0x1] %vm533, 0.0
    %556 = vst.msk [vmem:[#allocation3 + $0x210] sm:$0x1] %vm533, 0.0
    %557 = vst.msk [vmem:[#allocation3 + $0x228] sm:$0x1] %vm533, 0.0
    %558 = vst.msk [vmem:[#allocation3 + $0x240] sm:$0x1] %vm533, 0.0
    %559 = vst.msk [vmem:[#allocation3 + $0x258] sm:$0x1] %vm533, 0.0
    %560 = vst.msk [vmem:[#allocation3 + $0x270] sm:$0x1] %vm533, 0.0
    %561 = vst.msk [vmem:[#allocation3 + $0x288] sm:$0x1] %vm533, 0.0
    %562 = vst.msk [vmem:[#allocation3 + $0x2a0] sm:$0x1] %vm533, 0.0
    %563 = vst.msk [vmem:[#allocation3 + $0x2b8] sm:$0x1] %vm533, 0.0
    %564 = vst.msk [vmem:[#allocation3 + $0x2d0] sm:$0x1] %vm533, 0.0
    %565 = vst.msk [vmem:[#allocation3 + $0x2e8] sm:$0x1] %vm533, 0.0
    %566 = vst.msk [vmem:[#allocation3 + $0x300] sm:$0x1] %vm533, 0.0
    %567 = vst.msk [vmem:[#allocation3 + $0x318] sm:$0x1] %vm533, 0.0
    %568 = vst.msk [vmem:[#allocation3 + $0x330] sm:$0x1] %vm533, 0.0
    %569 = vst.msk [vmem:[#allocation3 + $0x348] sm:$0x1] %vm533, 0.0
    %570 = vst.msk [vmem:[#allocation3 + $0x11] sm:$0x1] %vm533, 0.0
    %571 = vst.msk [vmem:[#allocation3 + $0x29] sm:$0x1] %vm533, 0.0
    %572 = vst.msk [vmem:[#allocation3 + $0x41] sm:$0x1] %vm533, 0.0
    %573 = vst.msk [vmem:[#allocation3 + $0x59] sm:$0x1] %vm533, 0.0
    %574 = vst.msk [vmem:[#allocation3 + $0x71] sm:$0x1] %vm533, 0.0
    %575 = vst.msk [vmem:[#allocation3 + $0x89] sm:$0x1] %vm533, 0.0
    %576 = vst.msk [vmem:[#allocation3 + $0xa1] sm:$0x1] %vm533, 0.0
    %577 = vst.msk [vmem:[#allocation3 + $0xb9] sm:$0x1] %vm533, 0.0
    %578 = vst.msk [vmem:[#allocation3 + $0xd1] sm:$0x1] %vm533, 0.0
    %579 = vst.msk [vmem:[#allocation3 + $0xe9] sm:$0x1] %vm533, 0.0
    %580 = vst.msk [vmem:[#allocation3 + $0x101] sm:$0x1] %vm533, 0.0
    %581 = vst.msk [vmem:[#allocation3 + $0x119] sm:$0x1] %vm533, 0.0
    %582 = vst.msk [vmem:[#allocation3 + $0x131] sm:$0x1] %vm533, 0.0
    %583 = vst.msk [vmem:[#allocation3 + $0x149] sm:$0x1] %vm533, 0.0
    %584 = vst.msk [vmem:[#allocation3 + $0x161] sm:$0x1] %vm533, 0.0
    %585 = vst.msk [vmem:[#allocation3 + $0x179] sm:$0x1] %vm533, 0.0
    %586 = vst.msk [vmem:[#allocation3 + $0x191] sm:$0x1] %vm533, 0.0
    %587 = vst.msk [vmem:[#allocation3 + $0x1a9] sm:$0x1] %vm533, 0.0
    %588 = vst.msk [vmem:[#allocation3 + $0x1c1] sm:$0x1] %vm533, 0.0
    %589 = vst.msk [vmem:[#allocation3 + $0x1d9] sm:$0x1] %vm533, 0.0
    %590 = vst.msk [vmem:[#allocation3 + $0x1f1] sm:$0x1] %vm533, 0.0
    %591 = vst.msk [vmem:[#allocation3 + $0x209] sm:$0x1] %vm533, 0.0
    %592 = vst.msk [vmem:[#allocation3 + $0x221] sm:$0x1] %vm533, 0.0
    %593 = vst.msk [vmem:[#allocation3 + $0x239] sm:$0x1] %vm533, 0.0
    %594 = vst.msk [vmem:[#allocation3 + $0x251] sm:$0x1] %vm533, 0.0
    %595 = vst.msk [vmem:[#allocation3 + $0x269] sm:$0x1] %vm533, 0.0
    %596 = vst.msk [vmem:[#allocation3 + $0x281] sm:$0x1] %vm533, 0.0
    %597 = vst.msk [vmem:[#allocation3 + $0x299] sm:$0x1] %vm533, 0.0
    %598 = vst.msk [vmem:[#allocation3 + $0x2b1] sm:$0x1] %vm533, 0.0
    %599 = vst.msk [vmem:[#allocation3 + $0x2c9] sm:$0x1] %vm533, 0.0
    %600 = vst.msk [vmem:[#allocation3 + $0x2e1] sm:$0x1] %vm533, 0.0
    %601 = vst.msk [vmem:[#allocation3 + $0x2f9] sm:$0x1] %vm533, 0.0
    %602 = vst.msk [vmem:[#allocation3 + $0x311] sm:$0x1] %vm533, 0.0
    %603 = vst.msk [vmem:[#allocation3 + $0x329] sm:$0x1] %vm533, 0.0
    %604 = vst.msk [vmem:[#allocation3 + $0x341] sm:$0x1] %vm533, 0.0
    %605 = vst.msk [vmem:[#allocation3 + $0x359] sm:$0x1] %vm533, 0.0
    %s606 = scalar_lea.vmem [#allocation2], 24
    %607 = vst.msk [vmem:[%s606 + $0x1] sm:$0xff] %vm117, %v53
    %608 = vst.msk [vmem:[%s606 + $0x9] sm:$0xff] %vm117, %v54
    %609 = vst.msk [vmem:[%s606 + $0x19] sm:$0xff] %vm117, %v55
    %610 = vst.msk [vmem:[%s606 + $0x21] sm:$0xff] %vm117, %v56
    %611 = vst.msk [vmem:[%s606 + $0x31] sm:$0xff] %vm117, %v57
    %612 = vst.msk [vmem:[%s606 + $0x39] sm:$0xff] %vm117, %v58
    %613 = vst.msk [vmem:[%s606 + $0x49] sm:$0xff] %vm117, %v59
    %614 = vst.msk [vmem:[%s606 + $0x51] sm:$0xff] %vm117, %v60
    %615 = vst.msk [vmem:[%s606 + $0x61] sm:$0xff] %vm117, %v61
    %616 = vst.msk [vmem:[%s606 + $0x69] sm:$0xff] %vm117, %v62
    %617 = vst.msk [vmem:[%s606 + $0x79] sm:$0xff] %vm117, %v63
    %618 = vst.msk [vmem:[%s606 + $0x81] sm:$0xff] %vm117, %v64
    %619 = vst.msk [vmem:[%s606 + $0x91] sm:$0xff] %vm117, %v65
    %620 = vst.msk [vmem:[%s606 + $0x99] sm:$0xff] %vm117, %v66
    %621 = vst.msk [vmem:[%s606 + $0xa9] sm:$0xff] %vm117, %v67
    %622 = vst.msk [vmem:[%s606 + $0xb1] sm:$0xff] %vm117, %v68
    %623 = vst.msk [vmem:[%s606 + $0xc1] sm:$0xff] %vm117, %v69
    %624 = vst.msk [vmem:[%s606 + $0xc9] sm:$0xff] %vm117, %v70
    %625 = vst.msk [vmem:[%s606 + $0xd9] sm:$0xff] %vm117, %v71
    %626 = vst.msk [vmem:[%s606 + $0xe1] sm:$0xff] %vm117, %v72
    %627 = vst.msk [vmem:[%s606 + $0xf1] sm:$0xff] %vm117, %v73
    %628 = vst.msk [vmem:[%s606 + $0xf9] sm:$0xff] %vm117, %v74
    %629 = vst.msk [vmem:[%s606 + $0x109] sm:$0xff] %vm117, %v75
    %630 = vst.msk [vmem:[%s606 + $0x111] sm:$0xff] %vm117, %v76
    %631 = vst.msk [vmem:[%s606 + $0x121] sm:$0xff] %vm117, %v77
    %632 = vst.msk [vmem:[%s606 + $0x129] sm:$0xff] %vm117, %v78
    %633 = vst.msk [vmem:[%s606 + $0x139] sm:$0xff] %vm117, %v79
    %634 = vst.msk [vmem:[%s606 + $0x141] sm:$0xff] %vm117, %v80
    %635 = vst.msk [vmem:[%s606 + $0x151] sm:$0xff] %vm117, %v81
    %636 = vst.msk [vmem:[%s606 + $0x159] sm:$0xff] %vm117, %v82
    %637 = vst.msk [vmem:[%s606 + $0x169] sm:$0xff] %vm117, %v83
    %638 = vst.msk [vmem:[%s606 + $0x171] sm:$0xff] %vm117, %v84
    %639 = vst.msk [vmem:[%s606 + $0x1b1] sm:$0xff] %vm117, %v85
    %640 = vst.msk [vmem:[%s606 + $0x1b9] sm:$0xff] %vm117, %v86
    %641 = vst.msk [vmem:[%s606 + $0x1c9] sm:$0xff] %vm117, %v87
    %642 = vst.msk [vmem:[%s606 + $0x1d1] sm:$0xff] %vm117, %v88
    %643 = vst.msk [vmem:[%s606 + $0x1e1] sm:$0xff] %vm117, %v89
    %644 = vst.msk [vmem:[%s606 + $0x1e9] sm:$0xff] %vm117, %v90
    %645 = vst.msk [vmem:[%s606 + $0x1f9] sm:$0xff] %vm117, %v91
    %646 = vst.msk [vmem:[%s606 + $0x201] sm:$0xff] %vm117, %v92
    %647 = vst.msk [vmem:[%s606 + $0x211] sm:$0xff] %vm117, %v93
    %648 = vst.msk [vmem:[%s606 + $0x219] sm:$0xff] %vm117, %v94
    %649 = vst.msk [vmem:[%s606 + $0x229] sm:$0xff] %vm117, %v95
    %650 = vst.msk [vmem:[%s606 + $0x231] sm:$0xff] %vm117, %v96
    %651 = vst.msk [vmem:[%s606 + $0x241] sm:$0xff] %vm117, %v97
    %652 = vst.msk [vmem:[%s606 + $0x249] sm:$0xff] %vm117, %v98
    %653 = vst.msk [vmem:[%s606 + $0x259] sm:$0xff] %vm117, %v99
    %654 = vst.msk [vmem:[%s606 + $0x261] sm:$0xff] %vm117, %v100
    %655 = vst.msk [vmem:[%s606 + $0x271] sm:$0xff] %vm117, %v101
    %656 = vst.msk [vmem:[%s606 + $0x279] sm:$0xff] %vm117, %v102
    %657 = vst.msk [vmem:[%s606 + $0x289] sm:$0xff] %vm117, %v103
    %658 = vst.msk [vmem:[%s606 + $0x291] sm:$0xff] %vm117, %v104
    %659 = vst.msk [vmem:[%s606 + $0x2a1] sm:$0xff] %vm117, %v105
    %660 = vst.msk [vmem:[%s606 + $0x2a9] sm:$0xff] %vm117, %v106
    %661 = vst.msk [vmem:[%s606 + $0x2b9] sm:$0xff] %vm117, %v107
    %662 = vst.msk [vmem:[%s606 + $0x2c1] sm:$0xff] %vm117, %v108
    %663 = vst.msk [vmem:[%s606 + $0x2d1] sm:$0xff] %vm117, %v109
    %664 = vst.msk [vmem:[%s606 + $0x2d9] sm:$0xff] %vm117, %v110
    %665 = vst.msk [vmem:[%s606 + $0x2e9] sm:$0xff] %vm117, %v111
    %666 = vst.msk [vmem:[%s606 + $0x2f1] sm:$0xff] %vm117, %v112
    %667 = vst.msk [vmem:[%s606 + $0x301] sm:$0xff] %vm117, %v113
    %668 = vst.msk [vmem:[%s606 + $0x309] sm:$0xff] %vm117, %v114
    %669 = vst.msk [vmem:[%s606 + $0x319] sm:$0xff] %vm117, %v115
    %670 = vst.msk [vmem:[%s606 + $0x321] sm:$0xff] %vm117, %v116
    %v671 = vld [vmem:[#allocation2] sm:$0xff]
    %v672 = vld [vmem:[#allocation2 + $0x8] sm:$0xff]
    %v673 = vld [vmem:[#allocation2 + $0x10] sm:$0x3]
    %v674 = vld [vmem:[#allocation2 + $0x18] sm:$0xff]
    %v675 = vld [vmem:[#allocation2 + $0x20] sm:$0xff]
    %v676 = vld [vmem:[#allocation2 + $0x28] sm:$0x3]
    %v677 = vld [vmem:[#allocation2 + $0x30] sm:$0xff]
    %v678 = vld [vmem:[#allocation2 + $0x38] sm:$0xff]
    %v679 = vld [vmem:[#allocation2 + $0x40] sm:$0x3]
    %v680 = vld [vmem:[#allocation2 + $0x48] sm:$0xff]
    %v681 = vld [vmem:[#allocation2 + $0x50] sm:$0xff]
    %v682 = vld [vmem:[#allocation2 + $0x58] sm:$0x3]
    %v683 = vld [vmem:[#allocation2 + $0x60] sm:$0xff]
    %v684 = vld [vmem:[#allocation2 + $0x68] sm:$0xff]
    %v685 = vld [vmem:[#allocation2 + $0x70] sm:$0x3]
    %v686 = vld [vmem:[#allocation2 + $0x78] sm:$0xff]
    %v687 = vld [vmem:[#allocation2 + $0x80] sm:$0xff]
    %v688 = vld [vmem:[#allocation2 + $0x88] sm:$0x3]
    %v689 = vld [vmem:[#allocation2 + $0x90] sm:$0xff]
    %v690 = vld [vmem:[#allocation2 + $0x98] sm:$0xff]
    %v691 = vld [vmem:[#allocation2 + $0xa0] sm:$0x3]
    %v692 = vld [vmem:[#allocation2 + $0xa8] sm:$0xff]
    %v693 = vld [vmem:[#allocation2 + $0xb0] sm:$0xff]
    %v694 = vld [vmem:[#allocation2 + $0xb8] sm:$0x3]
    %v695 = vld [vmem:[#allocation2 + $0xc0] sm:$0xff]
    %v696 = vld [vmem:[#allocation2 + $0xc8] sm:$0xff]
    %v697 = vld [vmem:[#allocation2 + $0xd0] sm:$0x3]
    %v698 = vld [vmem:[#allocation2 + $0xd8] sm:$0xff]
    %v699 = vld [vmem:[#allocation2 + $0xe0] sm:$0xff]
    %v700 = vld [vmem:[#allocation2 + $0xe8] sm:$0x3]
    %v701 = vld [vmem:[#allocation2 + $0xf0] sm:$0xff]
    %v702 = vld [vmem:[#allocation2 + $0xf8] sm:$0xff]
    %v703 = vld [vmem:[#allocation2 + $0x100] sm:$0x3]
    %v704 = vld [vmem:[#allocation2 + $0x108] sm:$0xff]
    %v705 = vld [vmem:[#allocation2 + $0x110] sm:$0xff]
    %v706 = vld [vmem:[#allocation2 + $0x118] sm:$0x3]
    %v707 = vld [vmem:[#allocation2 + $0x120] sm:$0xff]
    %v708 = vld [vmem:[#allocation2 + $0x128] sm:$0xff]
    %v709 = vld [vmem:[#allocation2 + $0x130] sm:$0x3]
    %v710 = vld [vmem:[#allocation2 + $0x138] sm:$0xff]
    %v711 = vld [vmem:[#allocation2 + $0x140] sm:$0xff]
    %v712 = vld [vmem:[#allocation2 + $0x148] sm:$0x3]
    %v713 = vld [vmem:[#allocation2 + $0x150] sm:$0xff]
    %v714 = vld [vmem:[#allocation2 + $0x158] sm:$0xff]
    %v715 = vld [vmem:[#allocation2 + $0x160] sm:$0x3]
    %v716 = vld [vmem:[#allocation2 + $0x168] sm:$0xff]
    %v717 = vld [vmem:[#allocation2 + $0x170] sm:$0xff]
    %v718 = vld [vmem:[#allocation2 + $0x178] sm:$0x3]
    %v719 = vld [vmem:[#allocation2 + $0x180] sm:$0xff]
    %v720 = vld [vmem:[#allocation2 + $0x188] sm:$0xff]
    %v721 = vld [vmem:[#allocation2 + $0x190] sm:$0x3]
    %v722 = vld [vmem:[#allocation2 + $0x198] sm:$0xff]
    %v723 = vld [vmem:[#allocation2 + $0x1a0] sm:$0xff]
    %v724 = vld [vmem:[#allocation2 + $0x1a8] sm:$0x3]
    %v725 = vld [vmem:[#allocation2 + $0x1b0] sm:$0xff]
    %v726 = vld [vmem:[#allocation2 + $0x1b8] sm:$0xff]
    %v727 = vld [vmem:[#allocation2 + $0x1c0] sm:$0x3]
    %v728 = vld [vmem:[#allocation2 + $0x1c8] sm:$0xff]
    %v729 = vld [vmem:[#allocation2 + $0x1d0] sm:$0xff]
    %v730 = vld [vmem:[#allocation2 + $0x1d8] sm:$0x3]
    %v731 = vld [vmem:[#allocation2 + $0x1e0] sm:$0xff]
    %v732 = vld [vmem:[#allocation2 + $0x1e8] sm:$0xff]
    %v733 = vld [vmem:[#allocation2 + $0x1f0] sm:$0x3]
    %v734 = vld [vmem:[#allocation2 + $0x1f8] sm:$0xff]
    %v735 = vld [vmem:[#allocation2 + $0x200] sm:$0xff]
    %v736 = vld [vmem:[#allocation2 + $0x208] sm:$0x3]
    %v737 = vld [vmem:[#allocation2 + $0x210] sm:$0xff]
    %v738 = vld [vmem:[#allocation2 + $0x218] sm:$0xff]
    %v739 = vld [vmem:[#allocation2 + $0x220] sm:$0x3]
    %v740 = vld [vmem:[#allocation2 + $0x228] sm:$0xff]
    %v741 = vld [vmem:[#allocation2 + $0x230] sm:$0xff]
    %v742 = vld [vmem:[#allocation2 + $0x238] sm:$0x3]
    %v743 = vld [vmem:[#allocation2 + $0x240] sm:$0xff]
    %v744 = vld [vmem:[#allocation2 + $0x248] sm:$0xff]
    %v745 = vld [vmem:[#allocation2 + $0x250] sm:$0x3]
    %v746 = vld [vmem:[#allocation2 + $0x258] sm:$0xff]
    %v747 = vld [vmem:[#allocation2 + $0x260] sm:$0xff]
    %v748 = vld [vmem:[#allocation2 + $0x268] sm:$0x3]
    %v749 = vld [vmem:[#allocation2 + $0x270] sm:$0xff]
    %v750 = vld [vmem:[#allocation2 + $0x278] sm:$0xff]
    %v751 = vld [vmem:[#allocation2 + $0x280] sm:$0x3]
    %v752 = vld [vmem:[#allocation2 + $0x288] sm:$0xff]
    %v753 = vld [vmem:[#allocation2 + $0x290] sm:$0xff]
    %v754 = vld [vmem:[#allocation2 + $0x298] sm:$0x3]
    %v755 = vld [vmem:[#allocation2 + $0x2a0] sm:$0xff]
    %v756 = vld [vmem:[#allocation2 + $0x2a8] sm:$0xff]
    %v757 = vld [vmem:[#allocation2 + $0x2b0] sm:$0x3]
    %v758 = vld [vmem:[#allocation2 + $0x2b8] sm:$0xff]
    %v759 = vld [vmem:[#allocation2 + $0x2c0] sm:$0xff]
    %v760 = vld [vmem:[#allocation2 + $0x2c8] sm:$0x3]
    %v761 = vld [vmem:[#allocation2 + $0x2d0] sm:$0xff]
    %v762 = vld [vmem:[#allocation2 + $0x2d8] sm:$0xff]
    %v763 = vld [vmem:[#allocation2 + $0x2e0] sm:$0x3]
    %v764 = vld [vmem:[#allocation2 + $0x2e8] sm:$0xff]
    %v765 = vld [vmem:[#allocation2 + $0x2f0] sm:$0xff]
    %v766 = vld [vmem:[#allocation2 + $0x2f8] sm:$0x3]
    %v767 = vld [vmem:[#allocation2 + $0x300] sm:$0xff]
    %v768 = vld [vmem:[#allocation2 + $0x308] sm:$0xff]
    %v769 = vld [vmem:[#allocation2 + $0x310] sm:$0x3]
    %v770 = vld [vmem:[#allocation2 + $0x318] sm:$0xff]
    %v771 = vld [vmem:[#allocation2 + $0x320] sm:$0xff]
    %v772 = vld [vmem:[#allocation2 + $0x328] sm:$0x3]
    %v773 = vld [vmem:[#allocation2 + $0x330] sm:$0xff]
    %v774 = vld [vmem:[#allocation2 + $0x338] sm:$0xff]
    %v775 = vld [vmem:[#allocation2 + $0x340] sm:$0x3]
    %v776 = vld [vmem:[#allocation2 + $0x348] sm:$0xff]
    %v777 = vld [vmem:[#allocation2 + $0x350] sm:$0xff]
    %v778 = vld [vmem:[#allocation2 + $0x358] sm:$0x3]
    %vm875 = vcmask 1046528
    %v876 = vrot.slane %v671, 1
    %v877 = vrot.slane %v672, 1
    %v878 = vsel %vm875, %v876, %v877
    %v879 = vrot.slane %v673, 1
    %v880 = vsel %vm875, %v877, %v879
    %v881 = vrot.slane %v674, 1
    %v882 = vrot.slane %v675, 1
    %v883 = vsel %vm875, %v881, %v882
    %v884 = vrot.slane %v676, 1
    %v885 = vsel %vm875, %v882, %v884
    %v886 = vrot.slane %v677, 1
    %v887 = vrot.slane %v678, 1
    %v888 = vsel %vm875, %v886, %v887
    %v889 = vrot.slane %v679, 1
    %v890 = vsel %vm875, %v887, %v889
    %v891 = vrot.slane %v680, 1
    %v892 = vrot.slane %v681, 1
    %v893 = vsel %vm875, %v891, %v892
    %v894 = vrot.slane %v682, 1
    %v895 = vsel %vm875, %v892, %v894
    %v896 = vrot.slane %v683, 1
    %v897 = vrot.slane %v684, 1
    %v898 = vsel %vm875, %v896, %v897
    %v899 = vrot.slane %v685, 1
    %v900 = vsel %vm875, %v897, %v899
    %v901 = vrot.slane %v686, 1
    %v902 = vrot.slane %v687, 1
    %v903 = vsel %vm875, %v901, %v902
    %v904 = vrot.slane %v688, 1
    %v905 = vsel %vm875, %v902, %v904
    %v906 = vrot.slane %v689, 1
    %v907 = vrot.slane %v690, 1
    %v908 = vsel %vm875, %v906, %v907
    %v909 = vrot.slane %v691, 1
    %v910 = vsel %vm875, %v907, %v909
    %v911 = vrot.slane %v692, 1
    %v912 = vrot.slane %v693, 1
    %v913 = vsel %vm875, %v911, %v912
    %v914 = vrot.slane %v694, 1
    %v915 = vsel %vm875, %v912, %v914
    %v916 = vrot.slane %v695, 1
    %v917 = vrot.slane %v696, 1
    %v918 = vsel %vm875, %v916, %v917
    %v919 = vrot.slane %v697, 1
    %v920 = vsel %vm875, %v917, %v919
    %v921 = vrot.slane %v698, 1
    %v922 = vrot.slane %v699, 1
    %v923 = vsel %vm875, %v921, %v922
    %v924 = vrot.slane %v700, 1
    %v925 = vsel %vm875, %v922, %v924
    %v926 = vrot.slane %v701, 1
    %v927 = vrot.slane %v702, 1
    %v928 = vsel %vm875, %v926, %v927
    %v929 = vrot.slane %v703, 1
    %v930 = vsel %vm875, %v927, %v929
    %v931 = vrot.slane %v704, 1
    %v932 = vrot.slane %v705, 1
    %v933 = vsel %vm875, %v931, %v932
    %v934 = vrot.slane %v706, 1
    %v935 = vsel %vm875, %v932, %v934
    %v936 = vrot.slane %v707, 1
    %v937 = vrot.slane %v708, 1
    %v938 = vsel %vm875, %v936, %v937
    %v939 = vrot.slane %v709, 1
    %v940 = vsel %vm875, %v937, %v939
    %v941 = vrot.slane %v710, 1
    %v942 = vrot.slane %v711, 1
    %v943 = vsel %vm875, %v941, %v942
    %v944 = vrot.slane %v712, 1
    %v945 = vsel %vm875, %v942, %v944
    %v946 = vrot.slane %v713, 1
    %v947 = vrot.slane %v714, 1
    %v948 = vsel %vm875, %v946, %v947
    %v949 = vrot.slane %v715, 1
    %v950 = vsel %vm875, %v947, %v949
    %v951 = vrot.slane %v716, 1
    %v952 = vrot.slane %v717, 1
    %v953 = vsel %vm875, %v951, %v952
    %v954 = vrot.slane %v718, 1
    %v955 = vsel %vm875, %v952, %v954
    %v956 = vrot.slane %v725, 1
    %v957 = vrot.slane %v726, 1
    %v958 = vsel %vm875, %v956, %v957
    %v959 = vrot.slane %v727, 1
    %v960 = vsel %vm875, %v957, %v959
    %v961 = vrot.slane %v728, 1
    %v962 = vrot.slane %v729, 1
    %v963 = vsel %vm875, %v961, %v962
    %v964 = vrot.slane %v730, 1
    %v965 = vsel %vm875, %v962, %v964
    %v966 = vrot.slane %v731, 1
    %v967 = vrot.slane %v732, 1
    %v968 = vsel %vm875, %v966, %v967
    %v969 = vrot.slane %v733, 1
    %v970 = vsel %vm875, %v967, %v969
    %v971 = vrot.slane %v734, 1
    %v972 = vrot.slane %v735, 1
    %v973 = vsel %vm875, %v971, %v972
    %v974 = vrot.slane %v736, 1
    %v975 = vsel %vm875, %v972, %v974
    %v976 = vrot.slane %v737, 1
    %v977 = vrot.slane %v738, 1
    %v978 = vsel %vm875, %v976, %v977
    %v979 = vrot.slane %v739, 1
    %v980 = vsel %vm875, %v977, %v979
    %v981 = vrot.slane %v740, 1
    %v982 = vrot.slane %v741, 1
    %v983 = vsel %vm875, %v981, %v982
    %v984 = vrot.slane %v742, 1
    %v985 = vsel %vm875, %v982, %v984
    %v986 = vrot.slane %v743, 1
    %v987 = vrot.slane %v744, 1
    %v988 = vsel %vm875, %v986, %v987
    %v989 = vrot.slane %v745, 1
    %v990 = vsel %vm875, %v987, %v989
    %v991 = vrot.slane %v746, 1
    %v992 = vrot.slane %v747, 1
    %v993 = vsel %vm875, %v991, %v992
    %v994 = vrot.slane %v748, 1
    %v995 = vsel %vm875, %v992, %v994
    %v996 = vrot.slane %v749, 1
    %v997 = vrot.slane %v750, 1
    %v998 = vsel %vm875, %v996, %v997
    %v999 = vrot.slane %v751, 1
    %v1000 = vsel %vm875, %v997, %v999
    %v1001 = vrot.slane %v752, 1
    %v1002 = vrot.slane %v753, 1
    %v1003 = vsel %vm875, %v1001, %v1002
    %v1004 = vrot.slane %v754, 1
    %v1005 = vsel %vm875, %v1002, %v1004
    %v1006 = vrot.slane %v755, 1
    %v1007 = vrot.slane %v756, 1
    %v1008 = vsel %vm875, %v1006, %v1007
    %v1009 = vrot.slane %v757, 1
    %v1010 = vsel %vm875, %v1007, %v1009
    %v1011 = vrot.slane %v758, 1
    %v1012 = vrot.slane %v759, 1
    %v1013 = vsel %vm875, %v1011, %v1012
    %v1014 = vrot.slane %v760, 1
    %v1015 = vsel %vm875, %v1012, %v1014
    %v1016 = vrot.slane %v761, 1
    %v1017 = vrot.slane %v762, 1
    %v1018 = vsel %vm875, %v1016, %v1017
    %v1019 = vrot.slane %v763, 1
    %v1020 = vsel %vm875, %v1017, %v1019
    %v1021 = vrot.slane %v764, 1
    %v1022 = vrot.slane %v765, 1
    %v1023 = vsel %vm875, %v1021, %v1022
    %v1024 = vrot.slane %v766, 1
    %v1025 = vsel %vm875, %v1022, %v1024
    %v1026 = vrot.slane %v767, 1
    %v1027 = vrot.slane %v768, 1
    %v1028 = vsel %vm875, %v1026, %v1027
    %v1029 = vrot.slane %v769, 1
    %v1030 = vsel %vm875, %v1027, %v1029
    %v1031 = vrot.slane %v770, 1
    %v1032 = vrot.slane %v771, 1
    %v1033 = vsel %vm875, %v1031, %v1032
    %v1034 = vrot.slane %v772, 1
    %v1035 = vsel %vm875, %v1032, %v1034
    %vm1036 = vcmask 1045504
    %v1037 = vrot.slane %v671, 2
    %v1038 = vrot.slane %v672, 2
    %v1039 = vsel %vm1036, %v1037, %v1038
    %v1040 = vrot.slane %v673, 2
    %v1041 = vsel %vm1036, %v1038, %v1040
    %v1042 = vrot.slane %v674, 2
    %v1043 = vrot.slane %v675, 2
    %v1044 = vsel %vm1036, %v1042, %v1043
    %v1045 = vrot.slane %v676, 2
    %v1046 = vsel %vm1036, %v1043, %v1045
    %v1047 = vrot.slane %v677, 2
    %v1048 = vrot.slane %v678, 2
    %v1049 = vsel %vm1036, %v1047, %v1048
    %v1050 = vrot.slane %v679, 2
    %v1051 = vsel %vm1036, %v1048, %v1050
    %v1052 = vrot.slane %v680, 2
    %v1053 = vrot.slane %v681, 2
    %v1054 = vsel %vm1036, %v1052, %v1053
    %v1055 = vrot.slane %v682, 2
    %v1056 = vsel %vm1036, %v1053, %v1055
    %v1057 = vrot.slane %v683, 2
    %v1058 = vrot.slane %v684, 2
    %v1059 = vsel %vm1036, %v1057, %v1058
    %v1060 = vrot.slane %v685, 2
    %v1061 = vsel %vm1036, %v1058, %v1060
    %v1062 = vrot.slane %v686, 2
    %v1063 = vrot.slane %v687, 2
    %v1064 = vsel %vm1036, %v1062, %v1063
    %v1065 = vrot.slane %v688, 2
    %v1066 = vsel %vm1036, %v1063, %v1065
    %v1067 = vrot.slane %v689, 2
    %v1068 = vrot.slane %v690, 2
    %v1069 = vsel %vm1036, %v1067, %v1068
    %v1070 = vrot.slane %v691, 2
    %v1071 = vsel %vm1036, %v1068, %v1070
    %v1072 = vrot.slane %v692, 2
    %v1073 = vrot.slane %v693, 2
    %v1074 = vsel %vm1036, %v1072, %v1073
    %v1075 = vrot.slane %v694, 2
    %v1076 = vsel %vm1036, %v1073, %v1075
    %v1077 = vrot.slane %v695, 2
    %v1078 = vrot.slane %v696, 2
    %v1079 = vsel %vm1036, %v1077, %v1078
    %v1080 = vrot.slane %v697, 2
    %v1081 = vsel %vm1036, %v1078, %v1080
    %v1082 = vrot.slane %v698, 2
    %v1083 = vrot.slane %v699, 2
    %v1084 = vsel %vm1036, %v1082, %v1083
    %v1085 = vrot.slane %v700, 2
    %v1086 = vsel %vm1036, %v1083, %v1085
    %v1087 = vrot.slane %v701, 2
    %v1088 = vrot.slane %v702, 2
    %v1089 = vsel %vm1036, %v1087, %v1088
    %v1090 = vrot.slane %v703, 2
    %v1091 = vsel %vm1036, %v1088, %v1090
    %v1092 = vrot.slane %v704, 2
    %v1093 = vrot.slane %v705, 2
    %v1094 = vsel %vm1036, %v1092, %v1093
    %v1095 = vrot.slane %v706, 2
    %v1096 = vsel %vm1036, %v1093, %v1095
    %v1097 = vrot.slane %v707, 2
    %v1098 = vrot.slane %v708, 2
    %v1099 = vsel %vm1036, %v1097, %v1098
    %v1100 = vrot.slane %v709, 2
    %v1101 = vsel %vm1036, %v1098, %v1100
    %v1102 = vrot.slane %v710, 2
    %v1103 = vrot.slane %v711, 2
    %v1104 = vsel %vm1036, %v1102, %v1103
    %v1105 = vrot.slane %v712, 2
    %v1106 = vsel %vm1036, %v1103, %v1105
    %v1107 = vrot.slane %v713, 2
    %v1108 = vrot.slane %v714, 2
    %v1109 = vsel %vm1036, %v1107, %v1108
    %v1110 = vrot.slane %v715, 2
    %v1111 = vsel %vm1036, %v1108, %v1110
    %v1112 = vrot.slane %v716, 2
    %v1113 = vrot.slane %v717, 2
    %v1114 = vsel %vm1036, %v1112, %v1113
    %v1115 = vrot.slane %v718, 2
    %v1116 = vsel %vm1036, %v1113, %v1115
    %v1117 = vrot.slane %v725, 2
    %v1118 = vrot.slane %v726, 2
    %v1119 = vsel %vm1036, %v1117, %v1118
    %v1120 = vrot.slane %v727, 2
    %v1121 = vsel %vm1036, %v1118, %v1120
    %v1122 = vrot.slane %v728, 2
    %v1123 = vrot.slane %v729, 2
    %v1124 = vsel %vm1036, %v1122, %v1123
    %v1125 = vrot.slane %v730, 2
    %v1126 = vsel %vm1036, %v1123, %v1125
    %v1127 = vrot.slane %v731, 2
    %v1128 = vrot.slane %v732, 2
    %v1129 = vsel %vm1036, %v1127, %v1128
    %v1130 = vrot.slane %v733, 2
    %v1131 = vsel %vm1036, %v1128, %v1130
    %v1132 = vrot.slane %v734, 2
    %v1133 = vrot.slane %v735, 2
    %v1134 = vsel %vm1036, %v1132, %v1133
    %v1135 = vrot.slane %v736, 2
    %v1136 = vsel %vm1036, %v1133, %v1135
    %v1137 = vrot.slane %v737, 2
    %v1138 = vrot.slane %v738, 2
    %v1139 = vsel %vm1036, %v1137, %v1138
    %v1140 = vrot.slane %v739, 2
    %v1141 = vsel %vm1036, %v1138, %v1140
    %v1142 = vrot.slane %v740, 2
    %v1143 = vrot.slane %v741, 2
    %v1144 = vsel %vm1036, %v1142, %v1143
    %v1145 = vrot.slane %v742, 2
    %v1146 = vsel %vm1036, %v1143, %v1145
    %v1147 = vrot.slane %v743, 2
    %v1148 = vrot.slane %v744, 2
    %v1149 = vsel %vm1036, %v1147, %v1148
    %v1150 = vrot.slane %v745, 2
    %v1151 = vsel %vm1036, %v1148, %v1150
    %v1152 = vrot.slane %v746, 2
    %v1153 = vrot.slane %v747, 2
    %v1154 = vsel %vm1036, %v1152, %v1153
    %v1155 = vrot.slane %v748, 2
    %v1156 = vsel %vm1036, %v1153, %v1155
    %v1157 = vrot.slane %v749, 2
    %v1158 = vrot.slane %v750, 2
    %v1159 = vsel %vm1036, %v1157, %v1158
    %v1160 = vrot.slane %v751, 2
    %v1161 = vsel %vm1036, %v1158, %v1160
    %v1162 = vrot.slane %v752, 2
    %v1163 = vrot.slane %v753, 2
    %v1164 = vsel %vm1036, %v1162, %v1163
    %v1165 = vrot.slane %v754, 2
    %v1166 = vsel %vm1036, %v1163, %v1165
    %v1167 = vrot.slane %v755, 2
    %v1168 = vrot.slane %v756, 2
    %v1169 = vsel %vm1036, %v1167, %v1168
    %v1170 = vrot.slane %v757, 2
    %v1171 = vsel %vm1036, %v1168, %v1170
    %v1172 = vrot.slane %v758, 2
    %v1173 = vrot.slane %v759, 2
    %v1174 = vsel %vm1036, %v1172, %v1173
    %v1175 = vrot.slane %v760, 2
    %v1176 = vsel %vm1036, %v1173, %v1175
    %v1177 = vrot.slane %v761, 2
    %v1178 = vrot.slane %v762, 2
    %v1179 = vsel %vm1036, %v1177, %v1178
    %v1180 = vrot.slane %v763, 2
    %v1181 = vsel %vm1036, %v1178, %v1180
    %v1182 = vrot.slane %v764, 2
    %v1183 = vrot.slane %v765, 2
    %v1184 = vsel %vm1036, %v1182, %v1183
    %v1185 = vrot.slane %v766, 2
    %v1186 = vsel %vm1036, %v1183, %v1185
    %v1187 = vrot.slane %v767, 2
    %v1188 = vrot.slane %v768, 2
    %v1189 = vsel %vm1036, %v1187, %v1188
    %v1190 = vrot.slane %v769, 2
    %v1191 = vsel %vm1036, %v1188, %v1190
    %v1192 = vrot.slane %v770, 2
    %v1193 = vrot.slane %v771, 2
    %v1194 = vsel %vm1036, %v1192, %v1193
    %v1195 = vrot.slane %v772, 2
    %v1196 = vsel %vm1036, %v1193, %v1195
    %v1203 = vrot.slane %v719, 1
    %v1204 = vrot.slane %v720, 1
    %v1205 = vsel %vm875, %v1203, %v1204
    %v1206 = vrot.slane %v721, 1
    %v1207 = vsel %vm875, %v1204, %v1206
    %v1208 = vrot.slane %v773, 1
    %v1209 = vrot.slane %v774, 1
    %v1210 = vsel %vm875, %v1208, %v1209
    %v1211 = vrot.slane %v775, 1
    %v1212 = vsel %vm875, %v1209, %v1211
    %v1213 = vrot.slane %v719, 2
    %v1214 = vrot.slane %v720, 2
    %v1215 = vsel %vm1036, %v1213, %v1214
    %v1216 = vrot.slane %v721, 2
    %v1217 = vsel %vm1036, %v1214, %v1216
    %v1218 = vrot.slane %v773, 2
    %v1219 = vrot.slane %v774, 2
    %v1220 = vsel %vm1036, %v1218, %v1219
    %v1221 = vrot.slane %v775, 2
    %v1222 = vsel %vm1036, %v1219, %v1221
    %v1229 = vrot.slane %v722, 1
    %v1230 = vrot.slane %v723, 1
    %v1231 = vsel %vm875, %v1229, %v1230
    %v1232 = vrot.slane %v724, 1
    %v1233 = vsel %vm875, %v1230, %v1232
    %v1234 = vrot.slane %v776, 1
    %v1235 = vrot.slane %v777, 1
    %v1236 = vsel %vm875, %v1234, %v1235
    %v1237 = vrot.slane %v778, 1
    %v1238 = vsel %vm875, %v1235, %v1237
    %v1239 = vrot.slane %v722, 2
    %v1240 = vrot.slane %v723, 2
    %v1241 = vsel %vm1036, %v1239, %v1240
    %v1242 = vrot.slane %v724, 2
    %v1243 = vsel %vm1036, %v1240, %v1242
    %v1244 = vrot.slane %v776, 2
    %v1245 = vrot.slane %v777, 2
    %v1246 = vsel %vm1036, %v1244, %v1245
    %v1247 = vrot.slane %v778, 2
    %v1248 = vsel %vm1036, %v1245, %v1247
    %1249 = vrot.lane.b32.xlu0 %v878, 16
    %v1250 = vpop.permute.xlu0 %1249
    %1251 = vrot.lane.b32.xlu0 %v880, 16
    %v1252 = vpop.permute.xlu0 %1251
    %1253 = vrot.lane.b32.xlu0 %v883, 16
    %v1254 = vpop.permute.xlu0 %1253
    %1255 = vrot.lane.b32.xlu0 %v885, 16
    %v1256 = vpop.permute.xlu0 %1255
    %1257 = vrot.lane.b32.xlu0 %v888, 16
    %v1258 = vpop.permute.xlu0 %1257
    %1259 = vrot.lane.b32.xlu0 %v890, 16
    %v1260 = vpop.permute.xlu0 %1259
    %1261 = vrot.lane.b32.xlu0 %v893, 16
    %v1262 = vpop.permute.xlu0 %1261
    %1263 = vrot.lane.b32.xlu0 %v895, 16
    %v1264 = vpop.permute.xlu0 %1263
    %1265 = vrot.lane.b32.xlu0 %v898, 16
    %v1266 = vpop.permute.xlu0 %1265
    %1267 = vrot.lane.b32.xlu0 %v900, 16
    %v1268 = vpop.permute.xlu0 %1267
    %1269 = vrot.lane.b32.xlu0 %v903, 16
    %v1270 = vpop.permute.xlu0 %1269
    %1271 = vrot.lane.b32.xlu0 %v905, 16
    %v1272 = vpop.permute.xlu0 %1271
    %1273 = vrot.lane.b32.xlu0 %v908, 16
    %v1274 = vpop.permute.xlu0 %1273
    %1275 = vrot.lane.b32.xlu0 %v910, 16
    %v1276 = vpop.permute.xlu0 %1275
    %1277 = vrot.lane.b32.xlu0 %v913, 16
    %v1278 = vpop.permute.xlu0 %1277
    %1279 = vrot.lane.b32.xlu0 %v915, 16
    %v1280 = vpop.permute.xlu0 %1279
    %1281 = vrot.lane.b32.xlu0 %v918, 16
    %v1282 = vpop.permute.xlu0 %1281
    %1283 = vrot.lane.b32.xlu0 %v920, 16
    %v1284 = vpop.permute.xlu0 %1283
    %1285 = vrot.lane.b32.xlu0 %v923, 16
    %v1286 = vpop.permute.xlu0 %1285
    %1287 = vrot.lane.b32.xlu0 %v925, 16
    %v1288 = vpop.permute.xlu0 %1287
    %1289 = vrot.lane.b32.xlu0 %v928, 16
    %v1290 = vpop.permute.xlu0 %1289
    %1291 = vrot.lane.b32.xlu0 %v930, 16
    %v1292 = vpop.permute.xlu0 %1291
    %1293 = vrot.lane.b32.xlu0 %v933, 16
    %v1294 = vpop.permute.xlu0 %1293
    %1295 = vrot.lane.b32.xlu0 %v935, 16
    %v1296 = vpop.permute.xlu0 %1295
    %1297 = vrot.lane.b32.xlu0 %v938, 16
    %v1298 = vpop.permute.xlu0 %1297
    %1299 = vrot.lane.b32.xlu0 %v940, 16
    %v1300 = vpop.permute.xlu0 %1299
    %1301 = vrot.lane.b32.xlu0 %v943, 16
    %v1302 = vpop.permute.xlu0 %1301
    %1303 = vrot.lane.b32.xlu0 %v945, 16
    %v1304 = vpop.permute.xlu0 %1303
    %1305 = vrot.lane.b32.xlu0 %v948, 16
    %v1306 = vpop.permute.xlu0 %1305
    %1307 = vrot.lane.b32.xlu0 %v950, 16
    %v1308 = vpop.permute.xlu0 %1307
    %1309 = vrot.lane.b32.xlu0 %v953, 16
    %v1310 = vpop.permute.xlu0 %1309
    %1311 = vrot.lane.b32.xlu0 %v955, 16
    %v1312 = vpop.permute.xlu0 %1311
    %1313 = vrot.lane.b32.xlu0 %v958, 16
    %v1314 = vpop.permute.xlu0 %1313
    %1315 = vrot.lane.b32.xlu0 %v960, 16
    %v1316 = vpop.permute.xlu0 %1315
    %1317 = vrot.lane.b32.xlu0 %v963, 16
    %v1318 = vpop.permute.xlu0 %1317
    %1319 = vrot.lane.b32.xlu0 %v965, 16
    %v1320 = vpop.permute.xlu0 %1319
    %1321 = vrot.lane.b32.xlu0 %v968, 16
    %v1322 = vpop.permute.xlu0 %1321
    %1323 = vrot.lane.b32.xlu0 %v970, 16
    %v1324 = vpop.permute.xlu0 %1323
    %1325 = vrot.lane.b32.xlu0 %v973, 16
    %v1326 = vpop.permute.xlu0 %1325
    %1327 = vrot.lane.b32.xlu0 %v975, 16
    %v1328 = vpop.permute.xlu0 %1327
    %1329 = vrot.lane.b32.xlu0 %v978, 16
    %v1330 = vpop.permute.xlu0 %1329
    %1331 = vrot.lane.b32.xlu0 %v980, 16
    %v1332 = vpop.permute.xlu0 %1331
    %1333 = vrot.lane.b32.xlu0 %v983, 16
    %v1334 = vpop.permute.xlu0 %1333
    %1335 = vrot.lane.b32.xlu0 %v985, 16
    %v1336 = vpop.permute.xlu0 %1335
    %1337 = vrot.lane.b32.xlu0 %v988, 16
    %v1338 = vpop.permute.xlu0 %1337
    %1339 = vrot.lane.b32.xlu0 %v990, 16
    %v1340 = vpop.permute.xlu0 %1339
    %1341 = vrot.lane.b32.xlu0 %v993, 16
    %v1342 = vpop.permute.xlu0 %1341
    %1343 = vrot.lane.b32.xlu0 %v995, 16
    %v1344 = vpop.permute.xlu0 %1343
    %1345 = vrot.lane.b32.xlu0 %v998, 16
    %v1346 = vpop.permute.xlu0 %1345
    %1347 = vrot.lane.b32.xlu0 %v1000, 16
    %v1348 = vpop.permute.xlu0 %1347
    %1349 = vrot.lane.b32.xlu0 %v1003, 16
    %v1350 = vpop.permute.xlu0 %1349
    %1351 = vrot.lane.b32.xlu0 %v1005, 16
    %v1352 = vpop.permute.xlu0 %1351
    %1353 = vrot.lane.b32.xlu0 %v1008, 16
    %v1354 = vpop.permute.xlu0 %1353
    %1355 = vrot.lane.b32.xlu0 %v1010, 16
    %v1356 = vpop.permute.xlu0 %1355
    %1357 = vrot.lane.b32.xlu0 %v1013, 16
    %v1358 = vpop.permute.xlu0 %1357
    %1359 = vrot.lane.b32.xlu0 %v1015, 16
    %v1360 = vpop.permute.xlu0 %1359
    %1361 = vrot.lane.b32.xlu0 %v1018, 16
    %v1362 = vpop.permute.xlu0 %1361
    %1363 = vrot.lane.b32.xlu0 %v1020, 16
    %v1364 = vpop.permute.xlu0 %1363
    %1365 = vrot.lane.b32.xlu0 %v1023, 16
    %v1366 = vpop.permute.xlu0 %1365
    %1367 = vrot.lane.b32.xlu0 %v1025, 16
    %v1368 = vpop.permute.xlu0 %1367
    %1369 = vrot.lane.b32.xlu0 %v1028, 16
    %v1370 = vpop.permute.xlu0 %1369
    %1371 = vrot.lane.b32.xlu0 %v1030, 16
    %v1372 = vpop.permute.xlu0 %1371
    %1373 = vrot.lane.b32.xlu0 %v1033, 16
    %v1374 = vpop.permute.xlu0 %1373
    %1375 = vrot.lane.b32.xlu0 %v1035, 16
    %v1376 = vpop.permute.xlu0 %1375
    %1441 = vrot.lane.b32.xlu0 %v1039, 32
    %v1442 = vpop.permute.xlu0 %1441
    %1443 = vrot.lane.b32.xlu0 %v1041, 32
    %v1444 = vpop.permute.xlu0 %1443
    %1445 = vrot.lane.b32.xlu0 %v1044, 32
    %v1446 = vpop.permute.xlu0 %1445
    %1447 = vrot.lane.b32.xlu0 %v1046, 32
    %v1448 = vpop.permute.xlu0 %1447
    %1449 = vrot.lane.b32.xlu0 %v1049, 32
    %v1450 = vpop.permute.xlu0 %1449
    %1451 = vrot.lane.b32.xlu0 %v1051, 32
    %v1452 = vpop.permute.xlu0 %1451
    %1453 = vrot.lane.b32.xlu0 %v1054, 32
    %v1454 = vpop.permute.xlu0 %1453
    %1455 = vrot.lane.b32.xlu0 %v1056, 32
    %v1456 = vpop.permute.xlu0 %1455
    %1457 = vrot.lane.b32.xlu0 %v1059, 32
    %v1458 = vpop.permute.xlu0 %1457
    %1459 = vrot.lane.b32.xlu0 %v1061, 32
    %v1460 = vpop.permute.xlu0 %1459
    %1461 = vrot.lane.b32.xlu0 %v1064, 32
    %v1462 = vpop.permute.xlu0 %1461
    %1463 = vrot.lane.b32.xlu0 %v1066, 32
    %v1464 = vpop.permute.xlu0 %1463
    %1465 = vrot.lane.b32.xlu0 %v1069, 32
    %v1466 = vpop.permute.xlu0 %1465
    %1467 = vrot.lane.b32.xlu0 %v1071, 32
    %v1468 = vpop.permute.xlu0 %1467
    %1469 = vrot.lane.b32.xlu0 %v1074, 32
    %v1470 = vpop.permute.xlu0 %1469
    %1471 = vrot.lane.b32.xlu0 %v1076, 32
    %v1472 = vpop.permute.xlu0 %1471
    %1473 = vrot.lane.b32.xlu0 %v1079, 32
    %v1474 = vpop.permute.xlu0 %1473
    %1475 = vrot.lane.b32.xlu0 %v1081, 32
    %v1476 = vpop.permute.xlu0 %1475
    %1477 = vrot.lane.b32.xlu0 %v1084, 32
    %v1478 = vpop.permute.xlu0 %1477
    %1479 = vrot.lane.b32.xlu0 %v1086, 32
    %v1480 = vpop.permute.xlu0 %1479
    %1481 = vrot.lane.b32.xlu0 %v1089, 32
    %v1482 = vpop.permute.xlu0 %1481
    %1483 = vrot.lane.b32.xlu0 %v1091, 32
    %v1484 = vpop.permute.xlu0 %1483
    %1485 = vrot.lane.b32.xlu0 %v1094, 32
    %v1486 = vpop.permute.xlu0 %1485
    %1487 = vrot.lane.b32.xlu0 %v1096, 32
    %v1488 = vpop.permute.xlu0 %1487
    %1489 = vrot.lane.b32.xlu0 %v1099, 32
    %v1490 = vpop.permute.xlu0 %1489
    %1491 = vrot.lane.b32.xlu0 %v1101, 32
    %v1492 = vpop.permute.xlu0 %1491
    %1493 = vrot.lane.b32.xlu0 %v1104, 32
    %v1494 = vpop.permute.xlu0 %1493
    %1495 = vrot.lane.b32.xlu0 %v1106, 32
    %v1496 = vpop.permute.xlu0 %1495
    %1497 = vrot.lane.b32.xlu0 %v1109, 32
    %v1498 = vpop.permute.xlu0 %1497
    %1499 = vrot.lane.b32.xlu0 %v1111, 32
    %v1500 = vpop.permute.xlu0 %1499
    %1501 = vrot.lane.b32.xlu0 %v1114, 32
    %v1502 = vpop.permute.xlu0 %1501
    %1503 = vrot.lane.b32.xlu0 %v1116, 32
    %v1504 = vpop.permute.xlu0 %1503
    %1505 = vrot.lane.b32.xlu0 %v1119, 32
    %v1506 = vpop.permute.xlu0 %1505
    %1507 = vrot.lane.b32.xlu0 %v1121, 32
    %v1508 = vpop.permute.xlu0 %1507
    %1509 = vrot.lane.b32.xlu0 %v1124, 32
    %v1510 = vpop.permute.xlu0 %1509
    %1511 = vrot.lane.b32.xlu0 %v1126, 32
    %v1512 = vpop.permute.xlu0 %1511
    %1513 = vrot.lane.b32.xlu0 %v1129, 32
    %v1514 = vpop.permute.xlu0 %1513
    %1515 = vrot.lane.b32.xlu0 %v1131, 32
    %v1516 = vpop.permute.xlu0 %1515
    %1517 = vrot.lane.b32.xlu0 %v1134, 32
    %v1518 = vpop.permute.xlu0 %1517
    %1519 = vrot.lane.b32.xlu0 %v1136, 32
    %v1520 = vpop.permute.xlu0 %1519
    %1521 = vrot.lane.b32.xlu0 %v1139, 32
    %v1522 = vpop.permute.xlu0 %1521
    %1523 = vrot.lane.b32.xlu0 %v1141, 32
    %v1524 = vpop.permute.xlu0 %1523
    %1525 = vrot.lane.b32.xlu0 %v1144, 32
    %v1526 = vpop.permute.xlu0 %1525
    %1527 = vrot.lane.b32.xlu0 %v1146, 32
    %v1528 = vpop.permute.xlu0 %1527
    %1529 = vrot.lane.b32.xlu0 %v1149, 32
    %v1530 = vpop.permute.xlu0 %1529
    %1531 = vrot.lane.b32.xlu0 %v1151, 32
    %v1532 = vpop.permute.xlu0 %1531
    %1533 = vrot.lane.b32.xlu0 %v1154, 32
    %v1534 = vpop.permute.xlu0 %1533
    %1535 = vrot.lane.b32.xlu0 %v1156, 32
    %v1536 = vpop.permute.xlu0 %1535
    %1537 = vrot.lane.b32.xlu0 %v1159, 32
    %v1538 = vpop.permute.xlu0 %1537
    %1539 = vrot.lane.b32.xlu0 %v1161, 32
    %v1540 = vpop.permute.xlu0 %1539
    %1541 = vrot.lane.b32.xlu0 %v1164, 32
    %v1542 = vpop.permute.xlu0 %1541
    %1543 = vrot.lane.b32.xlu0 %v1166, 32
    %v1544 = vpop.permute.xlu0 %1543
    %1545 = vrot.lane.b32.xlu0 %v1169, 32
    %v1546 = vpop.permute.xlu0 %1545
    %1547 = vrot.lane.b32.xlu0 %v1171, 32
    %v1548 = vpop.permute.xlu0 %1547
    %1549 = vrot.lane.b32.xlu0 %v1174, 32
    %v1550 = vpop.permute.xlu0 %1549
    %1551 = vrot.lane.b32.xlu0 %v1176, 32
    %v1552 = vpop.permute.xlu0 %1551
    %1553 = vrot.lane.b32.xlu0 %v1179, 32
    %v1554 = vpop.permute.xlu0 %1553
    %1555 = vrot.lane.b32.xlu0 %v1181, 32
    %v1556 = vpop.permute.xlu0 %1555
    %1557 = vrot.lane.b32.xlu0 %v1184, 32
    %v1558 = vpop.permute.xlu0 %1557
    %1559 = vrot.lane.b32.xlu0 %v1186, 32
    %v1560 = vpop.permute.xlu0 %1559
    %1561 = vrot.lane.b32.xlu0 %v1189, 32
    %v1562 = vpop.permute.xlu0 %1561
    %1563 = vrot.lane.b32.xlu0 %v1191, 32
    %v1564 = vpop.permute.xlu0 %1563
    %1565 = vrot.lane.b32.xlu0 %v1194, 32
    %v1566 = vpop.permute.xlu0 %1565
    %1567 = vrot.lane.b32.xlu0 %v1196, 32
    %v1568 = vpop.permute.xlu0 %1567
    %1633 = vrot.lane.b32.xlu0 %v674, 48
    %v1634 = vpop.permute.xlu0 %1633
    %1635 = vrot.lane.b32.xlu0 %v675, 48
    %v1636 = vpop.permute.xlu0 %1635
    %1637 = vrot.lane.b32.xlu0 %v677, 48
    %v1638 = vpop.permute.xlu0 %1637
    %1639 = vrot.lane.b32.xlu0 %v678, 48
    %v1640 = vpop.permute.xlu0 %1639
    %1641 = vrot.lane.b32.xlu0 %v680, 48
    %v1642 = vpop.permute.xlu0 %1641
    %1643 = vrot.lane.b32.xlu0 %v681, 48
    %v1644 = vpop.permute.xlu0 %1643
    %1645 = vrot.lane.b32.xlu0 %v683, 48
    %v1646 = vpop.permute.xlu0 %1645
    %1647 = vrot.lane.b32.xlu0 %v684, 48
    %v1648 = vpop.permute.xlu0 %1647
    %1649 = vrot.lane.b32.xlu0 %v686, 48
    %v1650 = vpop.permute.xlu0 %1649
    %1651 = vrot.lane.b32.xlu0 %v687, 48
    %v1652 = vpop.permute.xlu0 %1651
    %1653 = vrot.lane.b32.xlu0 %v689, 48
    %v1654 = vpop.permute.xlu0 %1653
    %1655 = vrot.lane.b32.xlu0 %v690, 48
    %v1656 = vpop.permute.xlu0 %1655
    %1657 = vrot.lane.b32.xlu0 %v692, 48
    %v1658 = vpop.permute.xlu0 %1657
    %1659 = vrot.lane.b32.xlu0 %v693, 48
    %v1660 = vpop.permute.xlu0 %1659
    %1661 = vrot.lane.b32.xlu0 %v695, 48
    %v1662 = vpop.permute.xlu0 %1661
    %1663 = vrot.lane.b32.xlu0 %v696, 48
    %v1664 = vpop.permute.xlu0 %1663
    %1665 = vrot.lane.b32.xlu0 %v698, 48
    %v1666 = vpop.permute.xlu0 %1665
    %1667 = vrot.lane.b32.xlu0 %v699, 48
    %v1668 = vpop.permute.xlu0 %1667
    %1669 = vrot.lane.b32.xlu0 %v701, 48
    %v1670 = vpop.permute.xlu0 %1669
    %1671 = vrot.lane.b32.xlu0 %v702, 48
    %v1672 = vpop.permute.xlu0 %1671
    %1673 = vrot.lane.b32.xlu0 %v704, 48
    %v1674 = vpop.permute.xlu0 %1673
    %1675 = vrot.lane.b32.xlu0 %v705, 48
    %v1676 = vpop.permute.xlu0 %1675
    %1677 = vrot.lane.b32.xlu0 %v707, 48
    %v1678 = vpop.permute.xlu0 %1677
    %1679 = vrot.lane.b32.xlu0 %v708, 48
    %v1680 = vpop.permute.xlu0 %1679
    %1681 = vrot.lane.b32.xlu0 %v710, 48
    %v1682 = vpop.permute.xlu0 %1681
    %1683 = vrot.lane.b32.xlu0 %v711, 48
    %v1684 = vpop.permute.xlu0 %1683
    %1685 = vrot.lane.b32.xlu0 %v713, 48
    %v1686 = vpop.permute.xlu0 %1685
    %1687 = vrot.lane.b32.xlu0 %v714, 48
    %v1688 = vpop.permute.xlu0 %1687
    %1689 = vrot.lane.b32.xlu0 %v716, 48
    %v1690 = vpop.permute.xlu0 %1689
    %1691 = vrot.lane.b32.xlu0 %v717, 48
    %v1692 = vpop.permute.xlu0 %1691
    %1693 = vrot.lane.b32.xlu0 %v719, 48
    %v1694 = vpop.permute.xlu0 %1693
    %1695 = vrot.lane.b32.xlu0 %v720, 48
    %v1696 = vpop.permute.xlu0 %1695
    %1697 = vrot.lane.b32.xlu0 %v728, 48
    %v1698 = vpop.permute.xlu0 %1697
    %1699 = vrot.lane.b32.xlu0 %v729, 48
    %v1700 = vpop.permute.xlu0 %1699
    %1701 = vrot.lane.b32.xlu0 %v731, 48
    %v1702 = vpop.permute.xlu0 %1701
    %1703 = vrot.lane.b32.xlu0 %v732, 48
    %v1704 = vpop.permute.xlu0 %1703
    %1705 = vrot.lane.b32.xlu0 %v734, 48
    %v1706 = vpop.permute.xlu0 %1705
    %1707 = vrot.lane.b32.xlu0 %v735, 48
    %v1708 = vpop.permute.xlu0 %1707
    %1709 = vrot.lane.b32.xlu0 %v737, 48
    %v1710 = vpop.permute.xlu0 %1709
    %1711 = vrot.lane.b32.xlu0 %v738, 48
    %v1712 = vpop.permute.xlu0 %1711
    %1713 = vrot.lane.b32.xlu0 %v740, 48
    %v1714 = vpop.permute.xlu0 %1713
    %1715 = vrot.lane.b32.xlu0 %v741, 48
    %v1716 = vpop.permute.xlu0 %1715
    %1717 = vrot.lane.b32.xlu0 %v743, 48
    %v1718 = vpop.permute.xlu0 %1717
    %1719 = vrot.lane.b32.xlu0 %v744, 48
    %v1720 = vpop.permute.xlu0 %1719
    %1721 = vrot.lane.b32.xlu0 %v746, 48
    %v1722 = vpop.permute.xlu0 %1721
    %1723 = vrot.lane.b32.xlu0 %v747, 48
    %v1724 = vpop.permute.xlu0 %1723
    %1725 = vrot.lane.b32.xlu0 %v749, 48
    %v1726 = vpop.permute.xlu0 %1725
    %1727 = vrot.lane.b32.xlu0 %v750, 48
    %v1728 = vpop.permute.xlu0 %1727
    %1729 = vrot.lane.b32.xlu0 %v752, 48
    %v1730 = vpop.permute.xlu0 %1729
    %1731 = vrot.lane.b32.xlu0 %v753, 48
    %v1732 = vpop.permute.xlu0 %1731
    %1733 = vrot.lane.b32.xlu0 %v755, 48
    %v1734 = vpop.permute.xlu0 %1733
    %1735 = vrot.lane.b32.xlu0 %v756, 48
    %v1736 = vpop.permute.xlu0 %1735
    %1737 = vrot.lane.b32.xlu0 %v758, 48
    %v1738 = vpop.permute.xlu0 %1737
    %1739 = vrot.lane.b32.xlu0 %v759, 48
    %v1740 = vpop.permute.xlu0 %1739
    %1741 = vrot.lane.b32.xlu0 %v761, 48
    %v1742 = vpop.permute.xlu0 %1741
    %1743 = vrot.lane.b32.xlu0 %v762, 48
    %v1744 = vpop.permute.xlu0 %1743
    %1745 = vrot.lane.b32.xlu0 %v764, 48
    %v1746 = vpop.permute.xlu0 %1745
    %1747 = vrot.lane.b32.xlu0 %v765, 48
    %v1748 = vpop.permute.xlu0 %1747
    %1749 = vrot.lane.b32.xlu0 %v767, 48
    %v1750 = vpop.permute.xlu0 %1749
    %1751 = vrot.lane.b32.xlu0 %v768, 48
    %v1752 = vpop.permute.xlu0 %1751
    %1753 = vrot.lane.b32.xlu0 %v770, 48
    %v1754 = vpop.permute.xlu0 %1753
    %1755 = vrot.lane.b32.xlu0 %v771, 48
    %v1756 = vpop.permute.xlu0 %1755
    %1757 = vrot.lane.b32.xlu0 %v773, 48
    %v1758 = vpop.permute.xlu0 %1757
    %1759 = vrot.lane.b32.xlu0 %v774, 48
    %v1760 = vpop.permute.xlu0 %1759
    %1825 = vrot.lane.b32.xlu0 %v883, 64
    %v1826 = vpop.permute.xlu0 %1825
    %1827 = vrot.lane.b32.xlu0 %v885, 64
    %v1828 = vpop.permute.xlu0 %1827
    %1829 = vrot.lane.b32.xlu0 %v888, 64
    %v1830 = vpop.permute.xlu0 %1829
    %1831 = vrot.lane.b32.xlu0 %v890, 64
    %v1832 = vpop.permute.xlu0 %1831
    %1833 = vrot.lane.b32.xlu0 %v893, 64
    %v1834 = vpop.permute.xlu0 %1833
    %1835 = vrot.lane.b32.xlu0 %v895, 64
    %v1836 = vpop.permute.xlu0 %1835
    %1837 = vrot.lane.b32.xlu0 %v898, 64
    %v1838 = vpop.permute.xlu0 %1837
    %1839 = vrot.lane.b32.xlu0 %v900, 64
    %v1840 = vpop.permute.xlu0 %1839
    %1841 = vrot.lane.b32.xlu0 %v903, 64
    %v1842 = vpop.permute.xlu0 %1841
    %1843 = vrot.lane.b32.xlu0 %v905, 64
    %v1844 = vpop.permute.xlu0 %1843
    %1845 = vrot.lane.b32.xlu0 %v908, 64
    %v1846 = vpop.permute.xlu0 %1845
    %1847 = vrot.lane.b32.xlu0 %v910, 64
    %v1848 = vpop.permute.xlu0 %1847
    %1849 = vrot.lane.b32.xlu0 %v913, 64
    %v1850 = vpop.permute.xlu0 %1849
    %1851 = vrot.lane.b32.xlu0 %v915, 64
    %v1852 = vpop.permute.xlu0 %1851
    %1853 = vrot.lane.b32.xlu0 %v918, 64
    %v1854 = vpop.permute.xlu0 %1853
    %1855 = vrot.lane.b32.xlu0 %v920, 64
    %v1856 = vpop.permute.xlu0 %1855
    %1857 = vrot.lane.b32.xlu0 %v923, 64
    %v1858 = vpop.permute.xlu0 %1857
    %1859 = vrot.lane.b32.xlu0 %v925, 64
    %v1860 = vpop.permute.xlu0 %1859
    %1861 = vrot.lane.b32.xlu0 %v928, 64
    %v1862 = vpop.permute.xlu0 %1861
    %1863 = vrot.lane.b32.xlu0 %v930, 64
    %v1864 = vpop.permute.xlu0 %1863
    %1865 = vrot.lane.b32.xlu0 %v933, 64
    %v1866 = vpop.permute.xlu0 %1865
    %1867 = vrot.lane.b32.xlu0 %v935, 64
    %v1868 = vpop.permute.xlu0 %1867
    %1869 = vrot.lane.b32.xlu0 %v938, 64
    %v1870 = vpop.permute.xlu0 %1869
    %1871 = vrot.lane.b32.xlu0 %v940, 64
    %v1872 = vpop.permute.xlu0 %1871
    %1873 = vrot.lane.b32.xlu0 %v943, 64
    %v1874 = vpop.permute.xlu0 %1873
    %1875 = vrot.lane.b32.xlu0 %v945, 64
    %v1876 = vpop.permute.xlu0 %1875
    %1877 = vrot.lane.b32.xlu0 %v948, 64
    %v1878 = vpop.permute.xlu0 %1877
    %1879 = vrot.lane.b32.xlu0 %v950, 64
    %v1880 = vpop.permute.xlu0 %1879
    %1881 = vrot.lane.b32.xlu0 %v953, 64
    %v1882 = vpop.permute.xlu0 %1881
    %1883 = vrot.lane.b32.xlu0 %v955, 64
    %v1884 = vpop.permute.xlu0 %1883
    %1885 = vrot.lane.b32.xlu0 %v1205, 64
    %v1886 = vpop.permute.xlu0 %1885
    %1887 = vrot.lane.b32.xlu0 %v1207, 64
    %v1888 = vpop.permute.xlu0 %1887
    %1889 = vrot.lane.b32.xlu0 %v963, 64
    %v1890 = vpop.permute.xlu0 %1889
    %1891 = vrot.lane.b32.xlu0 %v965, 64
    %v1892 = vpop.permute.xlu0 %1891
    %1893 = vrot.lane.b32.xlu0 %v968, 64
    %v1894 = vpop.permute.xlu0 %1893
    %1895 = vrot.lane.b32.xlu0 %v970, 64
    %v1896 = vpop.permute.xlu0 %1895
    %1897 = vrot.lane.b32.xlu0 %v973, 64
    %v1898 = vpop.permute.xlu0 %1897
    %1899 = vrot.lane.b32.xlu0 %v975, 64
    %v1900 = vpop.permute.xlu0 %1899
    %1901 = vrot.lane.b32.xlu0 %v978, 64
    %v1902 = vpop.permute.xlu0 %1901
    %1903 = vrot.lane.b32.xlu0 %v980, 64
    %v1904 = vpop.permute.xlu0 %1903
    %1905 = vrot.lane.b32.xlu0 %v983, 64
    %v1906 = vpop.permute.xlu0 %1905
    %1907 = vrot.lane.b32.xlu0 %v985, 64
    %v1908 = vpop.permute.xlu0 %1907
    %1909 = vrot.lane.b32.xlu0 %v988, 64
    %v1910 = vpop.permute.xlu0 %1909
    %1911 = vrot.lane.b32.xlu0 %v990, 64
    %v1912 = vpop.permute.xlu0 %1911
    %1913 = vrot.lane.b32.xlu0 %v993, 64
    %v1914 = vpop.permute.xlu0 %1913
    %1915 = vrot.lane.b32.xlu0 %v995, 64
    %v1916 = vpop.permute.xlu0 %1915
    %1917 = vrot.lane.b32.xlu0 %v998, 64
    %v1918 = vpop.permute.xlu0 %1917
    %1919 = vrot.lane.b32.xlu0 %v1000, 64
    %v1920 = vpop.permute.xlu0 %1919
    %1921 = vrot.lane.b32.xlu0 %v1003, 64
    %v1922 = vpop.permute.xlu0 %1921
    %1923 = vrot.lane.b32.xlu0 %v1005, 64
    %v1924 = vpop.permute.xlu0 %1923
    %1925 = vrot.lane.b32.xlu0 %v1008, 64
    %v1926 = vpop.permute.xlu0 %1925
    %1927 = vrot.lane.b32.xlu0 %v1010, 64
    %v1928 = vpop.permute.xlu0 %1927
    %1929 = vrot.lane.b32.xlu0 %v1013, 64
    %v1930 = vpop.permute.xlu0 %1929
    %1931 = vrot.lane.b32.xlu0 %v1015, 64
    %v1932 = vpop.permute.xlu0 %1931
    %1933 = vrot.lane.b32.xlu0 %v1018, 64
    %v1934 = vpop.permute.xlu0 %1933
    %1935 = vrot.lane.b32.xlu0 %v1020, 64
    %v1936 = vpop.permute.xlu0 %1935
    %1937 = vrot.lane.b32.xlu0 %v1023, 64
    %v1938 = vpop.permute.xlu0 %1937
    %1939 = vrot.lane.b32.xlu0 %v1025, 64
    %v1940 = vpop.permute.xlu0 %1939
    %1941 = vrot.lane.b32.xlu0 %v1028, 64
    %v1942 = vpop.permute.xlu0 %1941
    %1943 = vrot.lane.b32.xlu0 %v1030, 64
    %v1944 = vpop.permute.xlu0 %1943
    %1945 = vrot.lane.b32.xlu0 %v1033, 64
    %v1946 = vpop.permute.xlu0 %1945
    %1947 = vrot.lane.b32.xlu0 %v1035, 64
    %v1948 = vpop.permute.xlu0 %1947
    %1949 = vrot.lane.b32.xlu0 %v1210, 64
    %v1950 = vpop.permute.xlu0 %1949
    %1951 = vrot.lane.b32.xlu0 %v1212, 64
    %v1952 = vpop.permute.xlu0 %1951
    %2017 = vrot.lane.b32.xlu0 %v1044, 80
    %v2018 = vpop.permute.xlu0 %2017
    %2019 = vrot.lane.b32.xlu0 %v1046, 80
    %v2020 = vpop.permute.xlu0 %2019
    %2021 = vrot.lane.b32.xlu0 %v1049, 80
    %v2022 = vpop.permute.xlu0 %2021
    %2023 = vrot.lane.b32.xlu0 %v1051, 80
    %v2024 = vpop.permute.xlu0 %2023
    %2025 = vrot.lane.b32.xlu0 %v1054, 80
    %v2026 = vpop.permute.xlu0 %2025
    %2027 = vrot.lane.b32.xlu0 %v1056, 80
    %v2028 = vpop.permute.xlu0 %2027
    %2029 = vrot.lane.b32.xlu0 %v1059, 80
    %v2030 = vpop.permute.xlu0 %2029
    %2031 = vrot.lane.b32.xlu0 %v1061, 80
    %v2032 = vpop.permute.xlu0 %2031
    %2033 = vrot.lane.b32.xlu0 %v1064, 80
    %v2034 = vpop.permute.xlu0 %2033
    %2035 = vrot.lane.b32.xlu0 %v1066, 80
    %v2036 = vpop.permute.xlu0 %2035
    %2037 = vrot.lane.b32.xlu0 %v1069, 80
    %v2038 = vpop.permute.xlu0 %2037
    %2039 = vrot.lane.b32.xlu0 %v1071, 80
    %v2040 = vpop.permute.xlu0 %2039
    %2041 = vrot.lane.b32.xlu0 %v1074, 80
    %v2042 = vpop.permute.xlu0 %2041
    %2043 = vrot.lane.b32.xlu0 %v1076, 80
    %v2044 = vpop.permute.xlu0 %2043
    %2045 = vrot.lane.b32.xlu0 %v1079, 80
    %v2046 = vpop.permute.xlu0 %2045
    %2047 = vrot.lane.b32.xlu0 %v1081, 80
    %v2048 = vpop.permute.xlu0 %2047
    %2049 = vrot.lane.b32.xlu0 %v1084, 80
    %v2050 = vpop.permute.xlu0 %2049
    %2051 = vrot.lane.b32.xlu0 %v1086, 80
    %v2052 = vpop.permute.xlu0 %2051
    %2053 = vrot.lane.b32.xlu0 %v1089, 80
    %v2054 = vpop.permute.xlu0 %2053
    %2055 = vrot.lane.b32.xlu0 %v1091, 80
    %v2056 = vpop.permute.xlu0 %2055
    %2057 = vrot.lane.b32.xlu0 %v1094, 80
    %v2058 = vpop.permute.xlu0 %2057
    %2059 = vrot.lane.b32.xlu0 %v1096, 80
    %v2060 = vpop.permute.xlu0 %2059
    %2061 = vrot.lane.b32.xlu0 %v1099, 80
    %v2062 = vpop.permute.xlu0 %2061
    %2063 = vrot.lane.b32.xlu0 %v1101, 80
    %v2064 = vpop.permute.xlu0 %2063
    %2065 = vrot.lane.b32.xlu0 %v1104, 80
    %v2066 = vpop.permute.xlu0 %2065
    %2067 = vrot.lane.b32.xlu0 %v1106, 80
    %v2068 = vpop.permute.xlu0 %2067
    %2069 = vrot.lane.b32.xlu0 %v1109, 80
    %v2070 = vpop.permute.xlu0 %2069
    %2071 = vrot.lane.b32.xlu0 %v1111, 80
    %v2072 = vpop.permute.xlu0 %2071
    %2073 = vrot.lane.b32.xlu0 %v1114, 80
    %v2074 = vpop.permute.xlu0 %2073
    %2075 = vrot.lane.b32.xlu0 %v1116, 80
    %v2076 = vpop.permute.xlu0 %2075
    %2077 = vrot.lane.b32.xlu0 %v1215, 80
    %v2078 = vpop.permute.xlu0 %2077
    %2079 = vrot.lane.b32.xlu0 %v1217, 80
    %v2080 = vpop.permute.xlu0 %2079
    %2081 = vrot.lane.b32.xlu0 %v1124, 80
    %v2082 = vpop.permute.xlu0 %2081
    %2083 = vrot.lane.b32.xlu0 %v1126, 80
    %v2084 = vpop.permute.xlu0 %2083
    %2085 = vrot.lane.b32.xlu0 %v1129, 80
    %v2086 = vpop.permute.xlu0 %2085
    %2087 = vrot.lane.b32.xlu0 %v1131, 80
    %v2088 = vpop.permute.xlu0 %2087
    %2089 = vrot.lane.b32.xlu0 %v1134, 80
    %v2090 = vpop.permute.xlu0 %2089
    %2091 = vrot.lane.b32.xlu0 %v1136, 80
    %v2092 = vpop.permute.xlu0 %2091
    %2093 = vrot.lane.b32.xlu0 %v1139, 80
    %v2094 = vpop.permute.xlu0 %2093
    %2095 = vrot.lane.b32.xlu0 %v1141, 80
    %v2096 = vpop.permute.xlu0 %2095
    %2097 = vrot.lane.b32.xlu0 %v1144, 80
    %v2098 = vpop.permute.xlu0 %2097
    %2099 = vrot.lane.b32.xlu0 %v1146, 80
    %v2100 = vpop.permute.xlu0 %2099
    %2101 = vrot.lane.b32.xlu0 %v1149, 80
    %v2102 = vpop.permute.xlu0 %2101
    %2103 = vrot.lane.b32.xlu0 %v1151, 80
    %v2104 = vpop.permute.xlu0 %2103
    %2105 = vrot.lane.b32.xlu0 %v1154, 80
    %v2106 = vpop.permute.xlu0 %2105
    %2107 = vrot.lane.b32.xlu0 %v1156, 80
    %v2108 = vpop.permute.xlu0 %2107
    %2109 = vrot.lane.b32.xlu0 %v1159, 80
    %v2110 = vpop.permute.xlu0 %2109
    %2111 = vrot.lane.b32.xlu0 %v1161, 80
    %v2112 = vpop.permute.xlu0 %2111
    %2113 = vrot.lane.b32.xlu0 %v1164, 80
    %v2114 = vpop.permute.xlu0 %2113
    %2115 = vrot.lane.b32.xlu0 %v1166, 80
    %v2116 = vpop.permute.xlu0 %2115
    %2117 = vrot.lane.b32.xlu0 %v1169, 80
    %v2118 = vpop.permute.xlu0 %2117
    %2119 = vrot.lane.b32.xlu0 %v1171, 80
    %v2120 = vpop.permute.xlu0 %2119
    %2121 = vrot.lane.b32.xlu0 %v1174, 80
    %v2122 = vpop.permute.xlu0 %2121
    %2123 = vrot.lane.b32.xlu0 %v1176, 80
    %v2124 = vpop.permute.xlu0 %2123
    %2125 = vrot.lane.b32.xlu0 %v1179, 80
    %v2126 = vpop.permute.xlu0 %2125
    %2127 = vrot.lane.b32.xlu0 %v1181, 80
    %v2128 = vpop.permute.xlu0 %2127
    %2129 = vrot.lane.b32.xlu0 %v1184, 80
    %v2130 = vpop.permute.xlu0 %2129
    %2131 = vrot.lane.b32.xlu0 %v1186, 80
    %v2132 = vpop.permute.xlu0 %2131
    %2133 = vrot.lane.b32.xlu0 %v1189, 80
    %v2134 = vpop.permute.xlu0 %2133
    %2135 = vrot.lane.b32.xlu0 %v1191, 80
    %v2136 = vpop.permute.xlu0 %2135
    %2137 = vrot.lane.b32.xlu0 %v1194, 80
    %v2138 = vpop.permute.xlu0 %2137
    %2139 = vrot.lane.b32.xlu0 %v1196, 80
    %v2140 = vpop.permute.xlu0 %2139
    %2141 = vrot.lane.b32.xlu0 %v1220, 80
    %v2142 = vpop.permute.xlu0 %2141
    %2143 = vrot.lane.b32.xlu0 %v1222, 80
    %v2144 = vpop.permute.xlu0 %2143
    %2209 = vrot.lane.b32.xlu0 %v677, 96
    %v2210 = vpop.permute.xlu0 %2209
    %2211 = vrot.lane.b32.xlu0 %v678, 96
    %v2212 = vpop.permute.xlu0 %2211
    %2213 = vrot.lane.b32.xlu0 %v680, 96
    %v2214 = vpop.permute.xlu0 %2213
    %2215 = vrot.lane.b32.xlu0 %v681, 96
    %v2216 = vpop.permute.xlu0 %2215
    %2217 = vrot.lane.b32.xlu0 %v683, 96
    %v2218 = vpop.permute.xlu0 %2217
    %2219 = vrot.lane.b32.xlu0 %v684, 96
    %v2220 = vpop.permute.xlu0 %2219
    %2221 = vrot.lane.b32.xlu0 %v686, 96
    %v2222 = vpop.permute.xlu0 %2221
    %2223 = vrot.lane.b32.xlu0 %v687, 96
    %v2224 = vpop.permute.xlu0 %2223
    %2225 = vrot.lane.b32.xlu0 %v689, 96
    %v2226 = vpop.permute.xlu0 %2225
    %2227 = vrot.lane.b32.xlu0 %v690, 96
    %v2228 = vpop.permute.xlu0 %2227
    %2229 = vrot.lane.b32.xlu0 %v692, 96
    %v2230 = vpop.permute.xlu0 %2229
    %2231 = vrot.lane.b32.xlu0 %v693, 96
    %v2232 = vpop.permute.xlu0 %2231
    %2233 = vrot.lane.b32.xlu0 %v695, 96
    %v2234 = vpop.permute.xlu0 %2233
    %2235 = vrot.lane.b32.xlu0 %v696, 96
    %v2236 = vpop.permute.xlu0 %2235
    %2237 = vrot.lane.b32.xlu0 %v698, 96
    %v2238 = vpop.permute.xlu0 %2237
    %2239 = vrot.lane.b32.xlu0 %v699, 96
    %v2240 = vpop.permute.xlu0 %2239
    %2241 = vrot.lane.b32.xlu0 %v701, 96
    %v2242 = vpop.permute.xlu0 %2241
    %2243 = vrot.lane.b32.xlu0 %v702, 96
    %v2244 = vpop.permute.xlu0 %2243
    %2245 = vrot.lane.b32.xlu0 %v704, 96
    %v2246 = vpop.permute.xlu0 %2245
    %2247 = vrot.lane.b32.xlu0 %v705, 96
    %v2248 = vpop.permute.xlu0 %2247
    %2249 = vrot.lane.b32.xlu0 %v707, 96
    %v2250 = vpop.permute.xlu0 %2249
    %2251 = vrot.lane.b32.xlu0 %v708, 96
    %v2252 = vpop.permute.xlu0 %2251
    %2253 = vrot.lane.b32.xlu0 %v710, 96
    %v2254 = vpop.permute.xlu0 %2253
    %2255 = vrot.lane.b32.xlu0 %v711, 96
    %v2256 = vpop.permute.xlu0 %2255
    %2257 = vrot.lane.b32.xlu0 %v713, 96
    %v2258 = vpop.permute.xlu0 %2257
    %2259 = vrot.lane.b32.xlu0 %v714, 96
    %v2260 = vpop.permute.xlu0 %2259
    %2261 = vrot.lane.b32.xlu0 %v716, 96
    %v2262 = vpop.permute.xlu0 %2261
    %2263 = vrot.lane.b32.xlu0 %v717, 96
    %v2264 = vpop.permute.xlu0 %2263
    %2265 = vrot.lane.b32.xlu0 %v719, 96
    %v2266 = vpop.permute.xlu0 %2265
    %2267 = vrot.lane.b32.xlu0 %v720, 96
    %v2268 = vpop.permute.xlu0 %2267
    %2269 = vrot.lane.b32.xlu0 %v722, 96
    %v2270 = vpop.permute.xlu0 %2269
    %2271 = vrot.lane.b32.xlu0 %v723, 96
    %v2272 = vpop.permute.xlu0 %2271
    %2273 = vrot.lane.b32.xlu0 %v731, 96
    %v2274 = vpop.permute.xlu0 %2273
    %2275 = vrot.lane.b32.xlu0 %v732, 96
    %v2276 = vpop.permute.xlu0 %2275
    %2277 = vrot.lane.b32.xlu0 %v734, 96
    %v2278 = vpop.permute.xlu0 %2277
    %2279 = vrot.lane.b32.xlu0 %v735, 96
    %v2280 = vpop.permute.xlu0 %2279
    %2281 = vrot.lane.b32.xlu0 %v737, 96
    %v2282 = vpop.permute.xlu0 %2281
    %2283 = vrot.lane.b32.xlu0 %v738, 96
    %v2284 = vpop.permute.xlu0 %2283
    %2285 = vrot.lane.b32.xlu0 %v740, 96
    %v2286 = vpop.permute.xlu0 %2285
    %2287 = vrot.lane.b32.xlu0 %v741, 96
    %v2288 = vpop.permute.xlu0 %2287
    %2289 = vrot.lane.b32.xlu0 %v743, 96
    %v2290 = vpop.permute.xlu0 %2289
    %2291 = vrot.lane.b32.xlu0 %v744, 96
    %v2292 = vpop.permute.xlu0 %2291
    %2293 = vrot.lane.b32.xlu0 %v746, 96
    %v2294 = vpop.permute.xlu0 %2293
    %2295 = vrot.lane.b32.xlu0 %v747, 96
    %v2296 = vpop.permute.xlu0 %2295
    %2297 = vrot.lane.b32.xlu0 %v749, 96
    %v2298 = vpop.permute.xlu0 %2297
    %2299 = vrot.lane.b32.xlu0 %v750, 96
    %v2300 = vpop.permute.xlu0 %2299
    %2301 = vrot.lane.b32.xlu0 %v752, 96
    %v2302 = vpop.permute.xlu0 %2301
    %2303 = vrot.lane.b32.xlu0 %v753, 96
    %v2304 = vpop.permute.xlu0 %2303
    %2305 = vrot.lane.b32.xlu0 %v755, 96
    %v2306 = vpop.permute.xlu0 %2305
    %2307 = vrot.lane.b32.xlu0 %v756, 96
    %v2308 = vpop.permute.xlu0 %2307
    %2309 = vrot.lane.b32.xlu0 %v758, 96
    %v2310 = vpop.permute.xlu0 %2309
    %2311 = vrot.lane.b32.xlu0 %v759, 96
    %v2312 = vpop.permute.xlu0 %2311
    %2313 = vrot.lane.b32.xlu0 %v761, 96
    %v2314 = vpop.permute.xlu0 %2313
    %2315 = vrot.lane.b32.xlu0 %v762, 96
    %v2316 = vpop.permute.xlu0 %2315
    %2317 = vrot.lane.b32.xlu0 %v764, 96
    %v2318 = vpop.permute.xlu0 %2317
    %2319 = vrot.lane.b32.xlu0 %v765, 96
    %v2320 = vpop.permute.xlu0 %2319
    %2321 = vrot.lane.b32.xlu0 %v767, 96
    %v2322 = vpop.permute.xlu0 %2321
    %2323 = vrot.lane.b32.xlu0 %v768, 96
    %v2324 = vpop.permute.xlu0 %2323
    %2325 = vrot.lane.b32.xlu0 %v770, 96
    %v2326 = vpop.permute.xlu0 %2325
    %2327 = vrot.lane.b32.xlu0 %v771, 96
    %v2328 = vpop.permute.xlu0 %2327
    %2329 = vrot.lane.b32.xlu0 %v773, 96
    %v2330 = vpop.permute.xlu0 %2329
    %2331 = vrot.lane.b32.xlu0 %v774, 96
    %v2332 = vpop.permute.xlu0 %2331
    %2333 = vrot.lane.b32.xlu0 %v776, 96
    %v2334 = vpop.permute.xlu0 %2333
    %2335 = vrot.lane.b32.xlu0 %v777, 96
    %v2336 = vpop.permute.xlu0 %2335
    %2401 = vrot.lane.b32.xlu0 %v888, 112
    %v2402 = vpop.permute.xlu0 %2401
    %2403 = vrot.lane.b32.xlu0 %v890, 112
    %v2404 = vpop.permute.xlu0 %2403
    %2405 = vrot.lane.b32.xlu0 %v893, 112
    %v2406 = vpop.permute.xlu0 %2405
    %2407 = vrot.lane.b32.xlu0 %v895, 112
    %v2408 = vpop.permute.xlu0 %2407
    %2409 = vrot.lane.b32.xlu0 %v898, 112
    %v2410 = vpop.permute.xlu0 %2409
    %2411 = vrot.lane.b32.xlu0 %v900, 112
    %v2412 = vpop.permute.xlu0 %2411
    %2413 = vrot.lane.b32.xlu0 %v903, 112
    %v2414 = vpop.permute.xlu0 %2413
    %2415 = vrot.lane.b32.xlu0 %v905, 112
    %v2416 = vpop.permute.xlu0 %2415
    %2417 = vrot.lane.b32.xlu0 %v908, 112
    %v2418 = vpop.permute.xlu0 %2417
    %2419 = vrot.lane.b32.xlu0 %v910, 112
    %v2420 = vpop.permute.xlu0 %2419
    %2421 = vrot.lane.b32.xlu0 %v913, 112
    %v2422 = vpop.permute.xlu0 %2421
    %2423 = vrot.lane.b32.xlu0 %v915, 112
    %v2424 = vpop.permute.xlu0 %2423
    %2425 = vrot.lane.b32.xlu0 %v918, 112
    %v2426 = vpop.permute.xlu0 %2425
    %2427 = vrot.lane.b32.xlu0 %v920, 112
    %v2428 = vpop.permute.xlu0 %2427
    %2429 = vrot.lane.b32.xlu0 %v923, 112
    %v2430 = vpop.permute.xlu0 %2429
    %2431 = vrot.lane.b32.xlu0 %v925, 112
    %v2432 = vpop.permute.xlu0 %2431
    %2433 = vrot.lane.b32.xlu0 %v928, 112
    %v2434 = vpop.permute.xlu0 %2433
    %2435 = vrot.lane.b32.xlu0 %v930, 112
    %v2436 = vpop.permute.xlu0 %2435
    %2437 = vrot.lane.b32.xlu0 %v933, 112
    %v2438 = vpop.permute.xlu0 %2437
    %2439 = vrot.lane.b32.xlu0 %v935, 112
    %v2440 = vpop.permute.xlu0 %2439
    %2441 = vrot.lane.b32.xlu0 %v938, 112
    %v2442 = vpop.permute.xlu0 %2441
    %2443 = vrot.lane.b32.xlu0 %v940, 112
    %v2444 = vpop.permute.xlu0 %2443
    %2445 = vrot.lane.b32.xlu0 %v943, 112
    %v2446 = vpop.permute.xlu0 %2445
    %2447 = vrot.lane.b32.xlu0 %v945, 112
    %v2448 = vpop.permute.xlu0 %2447
    %2449 = vrot.lane.b32.xlu0 %v948, 112
    %v2450 = vpop.permute.xlu0 %2449
    %2451 = vrot.lane.b32.xlu0 %v950, 112
    %v2452 = vpop.permute.xlu0 %2451
    %2453 = vrot.lane.b32.xlu0 %v953, 112
    %v2454 = vpop.permute.xlu0 %2453
    %2455 = vrot.lane.b32.xlu0 %v955, 112
    %v2456 = vpop.permute.xlu0 %2455
    %2457 = vrot.lane.b32.xlu0 %v1205, 112
    %v2458 = vpop.permute.xlu0 %2457
    %2459 = vrot.lane.b32.xlu0 %v1207, 112
    %v2460 = vpop.permute.xlu0 %2459
    %2461 = vrot.lane.b32.xlu0 %v1231, 112
    %v2462 = vpop.permute.xlu0 %2461
    %2463 = vrot.lane.b32.xlu0 %v1233, 112
    %v2464 = vpop.permute.xlu0 %2463
    %2465 = vrot.lane.b32.xlu0 %v968, 112
    %v2466 = vpop.permute.xlu0 %2465
    %2467 = vrot.lane.b32.xlu0 %v970, 112
    %v2468 = vpop.permute.xlu0 %2467
    %2469 = vrot.lane.b32.xlu0 %v973, 112
    %v2470 = vpop.permute.xlu0 %2469
    %2471 = vrot.lane.b32.xlu0 %v975, 112
    %v2472 = vpop.permute.xlu0 %2471
    %2473 = vrot.lane.b32.xlu0 %v978, 112
    %v2474 = vpop.permute.xlu0 %2473
    %2475 = vrot.lane.b32.xlu0 %v980, 112
    %v2476 = vpop.permute.xlu0 %2475
    %2477 = vrot.lane.b32.xlu0 %v983, 112
    %v2478 = vpop.permute.xlu0 %2477
    %2479 = vrot.lane.b32.xlu0 %v985, 112
    %v2480 = vpop.permute.xlu0 %2479
    %2481 = vrot.lane.b32.xlu0 %v988, 112
    %v2482 = vpop.permute.xlu0 %2481
    %2483 = vrot.lane.b32.xlu0 %v990, 112
    %v2484 = vpop.permute.xlu0 %2483
    %2485 = vrot.lane.b32.xlu0 %v993, 112
    %v2486 = vpop.permute.xlu0 %2485
    %2487 = vrot.lane.b32.xlu0 %v995, 112
    %v2488 = vpop.permute.xlu0 %2487
    %2489 = vrot.lane.b32.xlu0 %v998, 112
    %v2490 = vpop.permute.xlu0 %2489
    %2491 = vrot.lane.b32.xlu0 %v1000, 112
    %v2492 = vpop.permute.xlu0 %2491
    %2493 = vrot.lane.b32.xlu0 %v1003, 112
    %v2494 = vpop.permute.xlu0 %2493
    %2495 = vrot.lane.b32.xlu0 %v1005, 112
    %v2496 = vpop.permute.xlu0 %2495
    %2497 = vrot.lane.b32.xlu0 %v1008, 112
    %v2498 = vpop.permute.xlu0 %2497
    %2499 = vrot.lane.b32.xlu0 %v1010, 112
    %v2500 = vpop.permute.xlu0 %2499
    %2501 = vrot.lane.b32.xlu0 %v1013, 112
    %v2502 = vpop.permute.xlu0 %2501
    %2503 = vrot.lane.b32.xlu0 %v1015, 112
    %v2504 = vpop.permute.xlu0 %2503
    %2505 = vrot.lane.b32.xlu0 %v1018, 112
    %v2506 = vpop.permute.xlu0 %2505
    %2507 = vrot.lane.b32.xlu0 %v1020, 112
    %v2508 = vpop.permute.xlu0 %2507
    %2509 = vrot.lane.b32.xlu0 %v1023, 112
    %v2510 = vpop.permute.xlu0 %2509
    %2511 = vrot.lane.b32.xlu0 %v1025, 112
    %v2512 = vpop.permute.xlu0 %2511
    %2513 = vrot.lane.b32.xlu0 %v1028, 112
    %v2514 = vpop.permute.xlu0 %2513
    %2515 = vrot.lane.b32.xlu0 %v1030, 112
    %v2516 = vpop.permute.xlu0 %2515
    %2517 = vrot.lane.b32.xlu0 %v1033, 112
    %v2518 = vpop.permute.xlu0 %2517
    %2519 = vrot.lane.b32.xlu0 %v1035, 112
    %v2520 = vpop.permute.xlu0 %2519
    %2521 = vrot.lane.b32.xlu0 %v1210, 112
    %v2522 = vpop.permute.xlu0 %2521
    %2523 = vrot.lane.b32.xlu0 %v1212, 112
    %v2524 = vpop.permute.xlu0 %2523
    %2525 = vrot.lane.b32.xlu0 %v1236, 112
    %v2526 = vpop.permute.xlu0 %2525
    %2527 = vrot.lane.b32.xlu0 %v1238, 112
    %v2528 = vpop.permute.xlu0 %2527
    %v2593 = vsel %vm117, %v671, %v1250
    %v2594 = vsel %vm117, %v672, %v1252
    %v2595 = vsel %vm117, %v674, %v1254
    %v2596 = vsel %vm117, %v675, %v1256
    %v2597 = vsel %vm117, %v677, %v1258
    %v2598 = vsel %vm117, %v678, %v1260
    %v2599 = vsel %vm117, %v680, %v1262
    %v2600 = vsel %vm117, %v681, %v1264
    %v2601 = vsel %vm117, %v683, %v1266
    %v2602 = vsel %vm117, %v684, %v1268
    %v2603 = vsel %vm117, %v686, %v1270
    %v2604 = vsel %vm117, %v687, %v1272
    %v2605 = vsel %vm117, %v689, %v1274
    %v2606 = vsel %vm117, %v690, %v1276
    %v2607 = vsel %vm117, %v692, %v1278
    %v2608 = vsel %vm117, %v693, %v1280
    %v2609 = vsel %vm117, %v695, %v1282
    %v2610 = vsel %vm117, %v696, %v1284
    %v2611 = vsel %vm117, %v698, %v1286
    %v2612 = vsel %vm117, %v699, %v1288
    %v2613 = vsel %vm117, %v701, %v1290
    %v2614 = vsel %vm117, %v702, %v1292
    %v2615 = vsel %vm117, %v704, %v1294
    %v2616 = vsel %vm117, %v705, %v1296
    %v2617 = vsel %vm117, %v707, %v1298
    %v2618 = vsel %vm117, %v708, %v1300
    %v2619 = vsel %vm117, %v710, %v1302
    %v2620 = vsel %vm117, %v711, %v1304
    %v2621 = vsel %vm117, %v713, %v1306
    %v2622 = vsel %vm117, %v714, %v1308
    %v2623 = vsel %vm117, %v716, %v1310
    %v2624 = vsel %vm117, %v717, %v1312
    %v2625 = vsel %vm117, %v725, %v1314
    %v2626 = vsel %vm117, %v726, %v1316
    %v2627 = vsel %vm117, %v728, %v1318
    %v2628 = vsel %vm117, %v729, %v1320
    %v2629 = vsel %vm117, %v731, %v1322
    %v2630 = vsel %vm117, %v732, %v1324
    %v2631 = vsel %vm117, %v734, %v1326
    %v2632 = vsel %vm117, %v735, %v1328
    %v2633 = vsel %vm117, %v737, %v1330
    %v2634 = vsel %vm117, %v738, %v1332
    %v2635 = vsel %vm117, %v740, %v1334
    %v2636 = vsel %vm117, %v741, %v1336
    %v2637 = vsel %vm117, %v743, %v1338
    %v2638 = vsel %vm117, %v744, %v1340
    %v2639 = vsel %vm117, %v746, %v1342
    %v2640 = vsel %vm117, %v747, %v1344
    %v2641 = vsel %vm117, %v749, %v1346
    %v2642 = vsel %vm117, %v750, %v1348
    %v2643 = vsel %vm117, %v752, %v1350
    %v2644 = vsel %vm117, %v753, %v1352
    %v2645 = vsel %vm117, %v755, %v1354
    %v2646 = vsel %vm117, %v756, %v1356
    %v2647 = vsel %vm117, %v758, %v1358
    %v2648 = vsel %vm117, %v759, %v1360
    %v2649 = vsel %vm117, %v761, %v1362
    %v2650 = vsel %vm117, %v762, %v1364
    %v2651 = vsel %vm117, %v764, %v1366
    %v2652 = vsel %vm117, %v765, %v1368
    %v2653 = vsel %vm117, %v767, %v1370
    %v2654 = vsel %vm117, %v768, %v1372
    %v2655 = vsel %vm117, %v770, %v1374
    %v2656 = vsel %vm117, %v771, %v1376
    %vm2657 = vcmask 261120
    %v2658 = vsel %vm2657, %v2593, %v1442
    %v2659 = vsel %vm2657, %v2594, %v1444
    %v2660 = vsel %vm2657, %v2595, %v1446
    %v2661 = vsel %vm2657, %v2596, %v1448
    %v2662 = vsel %vm2657, %v2597, %v1450
    %v2663 = vsel %vm2657, %v2598, %v1452
    %v2664 = vsel %vm2657, %v2599, %v1454
    %v2665 = vsel %vm2657, %v2600, %v1456
    %v2666 = vsel %vm2657, %v2601, %v1458
    %v2667 = vsel %vm2657, %v2602, %v1460
    %v2668 = vsel %vm2657, %v2603, %v1462
    %v2669 = vsel %vm2657, %v2604, %v1464
    %v2670 = vsel %vm2657, %v2605, %v1466
    %v2671 = vsel %vm2657, %v2606, %v1468
    %v2672 = vsel %vm2657, %v2607, %v1470
    %v2673 = vsel %vm2657, %v2608, %v1472
    %v2674 = vsel %vm2657, %v2609, %v1474
    %v2675 = vsel %vm2657, %v2610, %v1476
    %v2676 = vsel %vm2657, %v2611, %v1478
    %v2677 = vsel %vm2657, %v2612, %v1480
    %v2678 = vsel %vm2657, %v2613, %v1482
    %v2679 = vsel %vm2657, %v2614, %v1484
    %v2680 = vsel %vm2657, %v2615, %v1486
    %v2681 = vsel %vm2657, %v2616, %v1488
    %v2682 = vsel %vm2657, %v2617, %v1490
    %v2683 = vsel %vm2657, %v2618, %v1492
    %v2684 = vsel %vm2657, %v2619, %v1494
    %v2685 = vsel %vm2657, %v2620, %v1496
    %v2686 = vsel %vm2657, %v2621, %v1498
    %v2687 = vsel %vm2657, %v2622, %v1500
    %v2688 = vsel %vm2657, %v2623, %v1502
    %v2689 = vsel %vm2657, %v2624, %v1504
    %v2690 = vsel %vm2657, %v2625, %v1506
    %v2691 = vsel %vm2657, %v2626, %v1508
    %v2692 = vsel %vm2657, %v2627, %v1510
    %v2693 = vsel %vm2657, %v2628, %v1512
    %v2694 = vsel %vm2657, %v2629, %v1514
    %v2695 = vsel %vm2657, %v2630, %v1516
    %v2696 = vsel %vm2657, %v2631, %v1518
    %v2697 = vsel %vm2657, %v2632, %v1520
    %v2698 = vsel %vm2657, %v2633, %v1522
    %v2699 = vsel %vm2657, %v2634, %v1524
    %v2700 = vsel %vm2657, %v2635, %v1526
    %v2701 = vsel %vm2657, %v2636, %v1528
    %v2702 = vsel %vm2657, %v2637, %v1530
    %v2703 = vsel %vm2657, %v2638, %v1532
    %v2704 = vsel %vm2657, %v2639, %v1534
    %v2705 = vsel %vm2657, %v2640, %v1536
    %v2706 = vsel %vm2657, %v2641, %v1538
    %v2707 = vsel %vm2657, %v2642, %v1540
    %v2708 = vsel %vm2657, %v2643, %v1542
    %v2709 = vsel %vm2657, %v2644, %v1544
    %v2710 = vsel %vm2657, %v2645, %v1546
    %v2711 = vsel %vm2657, %v2646, %v1548
    %v2712 = vsel %vm2657, %v2647, %v1550
    %v2713 = vsel %vm2657, %v2648, %v1552
    %v2714 = vsel %vm2657, %v2649, %v1554
    %v2715 = vsel %vm2657, %v2650, %v1556
    %v2716 = vsel %vm2657, %v2651, %v1558
    %v2717 = vsel %vm2657, %v2652, %v1560
    %v2718 = vsel %vm2657, %v2653, %v1562
    %v2719 = vsel %vm2657, %v2654, %v1564
    %v2720 = vsel %vm2657, %v2655, %v1566
    %v2721 = vsel %vm2657, %v2656, %v1568
    %vm2722 = vcmask 392192
    %v2723 = vsel %vm2722, %v2658, %v1634
    %v2724 = vsel %vm2722, %v2659, %v1636
    %v2725 = vsel %vm2722, %v2660, %v1638
    %v2726 = vsel %vm2722, %v2661, %v1640
    %v2727 = vsel %vm2722, %v2662, %v1642
    %v2728 = vsel %vm2722, %v2663, %v1644
    %v2729 = vsel %vm2722, %v2664, %v1646
    %v2730 = vsel %vm2722, %v2665, %v1648
    %v2731 = vsel %vm2722, %v2666, %v1650
    %v2732 = vsel %vm2722, %v2667, %v1652
    %v2733 = vsel %vm2722, %v2668, %v1654
    %v2734 = vsel %vm2722, %v2669, %v1656
    %v2735 = vsel %vm2722, %v2670, %v1658
    %v2736 = vsel %vm2722, %v2671, %v1660
    %v2737 = vsel %vm2722, %v2672, %v1662
    %v2738 = vsel %vm2722, %v2673, %v1664
    %v2739 = vsel %vm2722, %v2674, %v1666
    %v2740 = vsel %vm2722, %v2675, %v1668
    %v2741 = vsel %vm2722, %v2676, %v1670
    %v2742 = vsel %vm2722, %v2677, %v1672
    %v2743 = vsel %vm2722, %v2678, %v1674
    %v2744 = vsel %vm2722, %v2679, %v1676
    %v2745 = vsel %vm2722, %v2680, %v1678
    %v2746 = vsel %vm2722, %v2681, %v1680
    %v2747 = vsel %vm2722, %v2682, %v1682
    %v2748 = vsel %vm2722, %v2683, %v1684
    %v2749 = vsel %vm2722, %v2684, %v1686
    %v2750 = vsel %vm2722, %v2685, %v1688
    %v2751 = vsel %vm2722, %v2686, %v1690
    %v2752 = vsel %vm2722, %v2687, %v1692
    %v2753 = vsel %vm2722, %v2688, %v1694
    %v2754 = vsel %vm2722, %v2689, %v1696
    %v2755 = vsel %vm2722, %v2690, %v1698
    %v2756 = vsel %vm2722, %v2691, %v1700
    %v2757 = vsel %vm2722, %v2692, %v1702
    %v2758 = vsel %vm2722, %v2693, %v1704
    %v2759 = vsel %vm2722, %v2694, %v1706
    %v2760 = vsel %vm2722, %v2695, %v1708
    %v2761 = vsel %vm2722, %v2696, %v1710
    %v2762 = vsel %vm2722, %v2697, %v1712
    %v2763 = vsel %vm2722, %v2698, %v1714
    %v2764 = vsel %vm2722, %v2699, %v1716
    %v2765 = vsel %vm2722, %v2700, %v1718
    %v2766 = vsel %vm2722, %v2701, %v1720
    %v2767 = vsel %vm2722, %v2702, %v1722
    %v2768 = vsel %vm2722, %v2703, %v1724
    %v2769 = vsel %vm2722, %v2704, %v1726
    %v2770 = vsel %vm2722, %v2705, %v1728
    %v2771 = vsel %vm2722, %v2706, %v1730
    %v2772 = vsel %vm2722, %v2707, %v1732
    %v2773 = vsel %vm2722, %v2708, %v1734
    %v2774 = vsel %vm2722, %v2709, %v1736
    %v2775 = vsel %vm2722, %v2710, %v1738
    %v2776 = vsel %vm2722, %v2711, %v1740
    %v2777 = vsel %vm2722, %v2712, %v1742
    %v2778 = vsel %vm2722, %v2713, %v1744
    %v2779 = vsel %vm2722, %v2714, %v1746
    %v2780 = vsel %vm2722, %v2715, %v1748
    %v2781 = vsel %vm2722, %v2716, %v1750
    %v2782 = vsel %vm2722, %v2717, %v1752
    %v2783 = vsel %vm2722, %v2718, %v1754
    %v2784 = vsel %vm2722, %v2719, %v1756
    %v2785 = vsel %vm2722, %v2720, %v1758
    %v2786 = vsel %vm2722, %v2721, %v1760
    %vm2787 = vcmask 523264
    %v2788 = vsel %vm2787, %v2723, %v1826
    %v2789 = vsel %vm2787, %v2724, %v1828
    %v2790 = vsel %vm2787, %v2725, %v1830
    %v2791 = vsel %vm2787, %v2726, %v1832
    %v2792 = vsel %vm2787, %v2727, %v1834
    %v2793 = vsel %vm2787, %v2728, %v1836
    %v2794 = vsel %vm2787, %v2729, %v1838
    %v2795 = vsel %vm2787, %v2730, %v1840
    %v2796 = vsel %vm2787, %v2731, %v1842
    %v2797 = vsel %vm2787, %v2732, %v1844
    %v2798 = vsel %vm2787, %v2733, %v1846
    %v2799 = vsel %vm2787, %v2734, %v1848
    %v2800 = vsel %vm2787, %v2735, %v1850
    %v2801 = vsel %vm2787, %v2736, %v1852
    %v2802 = vsel %vm2787, %v2737, %v1854
    %v2803 = vsel %vm2787, %v2738, %v1856
    %v2804 = vsel %vm2787, %v2739, %v1858
    %v2805 = vsel %vm2787, %v2740, %v1860
    %v2806 = vsel %vm2787, %v2741, %v1862
    %v2807 = vsel %vm2787, %v2742, %v1864
    %v2808 = vsel %vm2787, %v2743, %v1866
    %v2809 = vsel %vm2787, %v2744, %v1868
    %v2810 = vsel %vm2787, %v2745, %v1870
    %v2811 = vsel %vm2787, %v2746, %v1872
    %v2812 = vsel %vm2787, %v2747, %v1874
    %v2813 = vsel %vm2787, %v2748, %v1876
    %v2814 = vsel %vm2787, %v2749, %v1878
    %v2815 = vsel %vm2787, %v2750, %v1880
    %v2816 = vsel %vm2787, %v2751, %v1882
    %v2817 = vsel %vm2787, %v2752, %v1884
    %v2818 = vsel %vm2787, %v2753, %v1886
    %v2819 = vsel %vm2787, %v2754, %v1888
    %v2820 = vsel %vm2787, %v2755, %v1890
    %v2821 = vsel %vm2787, %v2756, %v1892
    %v2822 = vsel %vm2787, %v2757, %v1894
    %v2823 = vsel %vm2787, %v2758, %v1896
    %v2824 = vsel %vm2787, %v2759, %v1898
    %v2825 = vsel %vm2787, %v2760, %v1900
    %v2826 = vsel %vm2787, %v2761, %v1902
    %v2827 = vsel %vm2787, %v2762, %v1904
    %v2828 = vsel %vm2787, %v2763, %v1906
    %v2829 = vsel %vm2787, %v2764, %v1908
    %v2830 = vsel %vm2787, %v2765, %v1910
    %v2831 = vsel %vm2787, %v2766, %v1912
    %v2832 = vsel %vm2787, %v2767, %v1914
    %v2833 = vsel %vm2787, %v2768, %v1916
    %v2834 = vsel %vm2787, %v2769, %v1918
    %v2835 = vsel %vm2787, %v2770, %v1920
    %v2836 = vsel %vm2787, %v2771, %v1922
    %v2837 = vsel %vm2787, %v2772, %v1924
    %v2838 = vsel %vm2787, %v2773, %v1926
    %v2839 = vsel %vm2787, %v2774, %v1928
    %v2840 = vsel %vm2787, %v2775, %v1930
    %v2841 = vsel %vm2787, %v2776, %v1932
    %v2842 = vsel %vm2787, %v2777, %v1934
    %v2843 = vsel %vm2787, %v2778, %v1936
    %v2844 = vsel %vm2787, %v2779, %v1938
    %v2845 = vsel %vm2787, %v2780, %v1940
    %v2846 = vsel %vm2787, %v2781, %v1942
    %v2847 = vsel %vm2787, %v2782, %v1944
    %v2848 = vsel %vm2787, %v2783, %v1946
    %v2849 = vsel %vm2787, %v2784, %v1948
    %v2850 = vsel %vm2787, %v2785, %v1950
    %v2851 = vsel %vm2787, %v2786, %v1952
    %vm2852 = vcmask 654336
    %v2853 = vsel %vm2852, %v2788, %v2018
    %v2854 = vsel %vm2852, %v2789, %v2020
    %v2855 = vsel %vm2852, %v2790, %v2022
    %v2856 = vsel %vm2852, %v2791, %v2024
    %v2857 = vsel %vm2852, %v2792, %v2026
    %v2858 = vsel %vm2852, %v2793, %v2028
    %v2859 = vsel %vm2852, %v2794, %v2030
    %v2860 = vsel %vm2852, %v2795, %v2032
    %v2861 = vsel %vm2852, %v2796, %v2034
    %v2862 = vsel %vm2852, %v2797, %v2036
    %v2863 = vsel %vm2852, %v2798, %v2038
    %v2864 = vsel %vm2852, %v2799, %v2040
    %v2865 = vsel %vm2852, %v2800, %v2042
    %v2866 = vsel %vm2852, %v2801, %v2044
    %v2867 = vsel %vm2852, %v2802, %v2046
    %v2868 = vsel %vm2852, %v2803, %v2048
    %v2869 = vsel %vm2852, %v2804, %v2050
    %v2870 = vsel %vm2852, %v2805, %v2052
    %v2871 = vsel %vm2852, %v2806, %v2054
    %v2872 = vsel %vm2852, %v2807, %v2056
    %v2873 = vsel %vm2852, %v2808, %v2058
    %v2874 = vsel %vm2852, %v2809, %v2060
    %v2875 = vsel %vm2852, %v2810, %v2062
    %v2876 = vsel %vm2852, %v2811, %v2064
    %v2877 = vsel %vm2852, %v2812, %v2066
    %v2878 = vsel %vm2852, %v2813, %v2068
    %v2879 = vsel %vm2852, %v2814, %v2070
    %v2880 = vsel %vm2852, %v2815, %v2072
    %v2881 = vsel %vm2852, %v2816, %v2074
    %v2882 = vsel %vm2852, %v2817, %v2076
    %v2883 = vsel %vm2852, %v2818, %v2078
    %v2884 = vsel %vm2852, %v2819, %v2080
    %v2885 = vsel %vm2852, %v2820, %v2082
    %v2886 = vsel %vm2852, %v2821, %v2084
    %v2887 = vsel %vm2852, %v2822, %v2086
    %v2888 = vsel %vm2852, %v2823, %v2088
    %v2889 = vsel %vm2852, %v2824, %v2090
    %v2890 = vsel %vm2852, %v2825, %v2092
    %v2891 = vsel %vm2852, %v2826, %v2094
    %v2892 = vsel %vm2852, %v2827, %v2096
    %v2893 = vsel %vm2852, %v2828, %v2098
    %v2894 = vsel %vm2852, %v2829, %v2100
    %v2895 = vsel %vm2852, %v2830, %v2102
    %v2896 = vsel %vm2852, %v2831, %v2104
    %v2897 = vsel %vm2852, %v2832, %v2106
    %v2898 = vsel %vm2852, %v2833, %v2108
    %v2899 = vsel %vm2852, %v2834, %v2110
    %v2900 = vsel %vm2852, %v2835, %v2112
    %v2901 = vsel %vm2852, %v2836, %v2114
    %v2902 = vsel %vm2852, %v2837, %v2116
    %v2903 = vsel %vm2852, %v2838, %v2118
    %v2904 = vsel %vm2852, %v2839, %v2120
    %v2905 = vsel %vm2852, %v2840, %v2122
    %v2906 = vsel %vm2852, %v2841, %v2124
    %v2907 = vsel %vm2852, %v2842, %v2126
    %v2908 = vsel %vm2852, %v2843, %v2128
    %v2909 = vsel %vm2852, %v2844, %v2130
    %v2910 = vsel %vm2852, %v2845, %v2132
    %v2911 = vsel %vm2852, %v2846, %v2134
    %v2912 = vsel %vm2852, %v2847, %v2136
    %v2913 = vsel %vm2852, %v2848, %v2138
    %v2914 = vsel %vm2852, %v2849, %v2140
    %v2915 = vsel %vm2852, %v2850, %v2142
    %v2916 = vsel %vm2852, %v2851, %v2144
    %vm2917 = vcmask 785408
    %v2918 = vsel %vm2917, %v2853, %v2210
    %v2919 = vsel %vm2917, %v2854, %v2212
    %v2920 = vsel %vm2917, %v2855, %v2214
    %v2921 = vsel %vm2917, %v2856, %v2216
    %v2922 = vsel %vm2917, %v2857, %v2218
    %v2923 = vsel %vm2917, %v2858, %v2220
    %v2924 = vsel %vm2917, %v2859, %v2222
    %v2925 = vsel %vm2917, %v2860, %v2224
    %v2926 = vsel %vm2917, %v2861, %v2226
    %v2927 = vsel %vm2917, %v2862, %v2228
    %v2928 = vsel %vm2917, %v2863, %v2230
    %v2929 = vsel %vm2917, %v2864, %v2232
    %v2930 = vsel %vm2917, %v2865, %v2234
    %v2931 = vsel %vm2917, %v2866, %v2236
    %v2932 = vsel %vm2917, %v2867, %v2238
    %v2933 = vsel %vm2917, %v2868, %v2240
    %v2934 = vsel %vm2917, %v2869, %v2242
    %v2935 = vsel %vm2917, %v2870, %v2244
    %v2936 = vsel %vm2917, %v2871, %v2246
    %v2937 = vsel %vm2917, %v2872, %v2248
    %v2938 = vsel %vm2917, %v2873, %v2250
    %v2939 = vsel %vm2917, %v2874, %v2252
    %v2940 = vsel %vm2917, %v2875, %v2254
    %v2941 = vsel %vm2917, %v2876, %v2256
    %v2942 = vsel %vm2917, %v2877, %v2258
    %v2943 = vsel %vm2917, %v2878, %v2260
    %v2944 = vsel %vm2917, %v2879, %v2262
    %v2945 = vsel %vm2917, %v2880, %v2264
    %v2946 = vsel %vm2917, %v2881, %v2266
    %v2947 = vsel %vm2917, %v2882, %v2268
    %v2948 = vsel %vm2917, %v2883, %v2270
    %v2949 = vsel %vm2917, %v2884, %v2272
    %v2950 = vsel %vm2917, %v2885, %v2274
    %v2951 = vsel %vm2917, %v2886, %v2276
    %v2952 = vsel %vm2917, %v2887, %v2278
    %v2953 = vsel %vm2917, %v2888, %v2280
    %v2954 = vsel %vm2917, %v2889, %v2282
    %v2955 = vsel %vm2917, %v2890, %v2284
    %v2956 = vsel %vm2917, %v2891, %v2286
    %v2957 = vsel %vm2917, %v2892, %v2288
    %v2958 = vsel %vm2917, %v2893, %v2290
    %v2959 = vsel %vm2917, %v2894, %v2292
    %v2960 = vsel %vm2917, %v2895, %v2294
    %v2961 = vsel %vm2917, %v2896, %v2296
    %v2962 = vsel %vm2917, %v2897, %v2298
    %v2963 = vsel %vm2917, %v2898, %v2300
    %v2964 = vsel %vm2917, %v2899, %v2302
    %v2965 = vsel %vm2917, %v2900, %v2304
    %v2966 = vsel %vm2917, %v2901, %v2306
    %v2967 = vsel %vm2917, %v2902, %v2308
    %v2968 = vsel %vm2917, %v2903, %v2310
    %v2969 = vsel %vm2917, %v2904, %v2312
    %v2970 = vsel %vm2917, %v2905, %v2314
    %v2971 = vsel %vm2917, %v2906, %v2316
    %v2972 = vsel %vm2917, %v2907, %v2318
    %v2973 = vsel %vm2917, %v2908, %v2320
    %v2974 = vsel %vm2917, %v2909, %v2322
    %v2975 = vsel %vm2917, %v2910, %v2324
    %v2976 = vsel %vm2917, %v2911, %v2326
    %v2977 = vsel %vm2917, %v2912, %v2328
    %v2978 = vsel %vm2917, %v2913, %v2330
    %v2979 = vsel %vm2917, %v2914, %v2332
    %v2980 = vsel %vm2917, %v2915, %v2334
    %v2981 = vsel %vm2917, %v2916, %v2336
    %vm2982 = vcmask 916480
    %v2983 = vsel %vm2982, %v2918, %v2402
    %v2984 = vsel %vm2982, %v2919, %v2404
    %v2985 = vsel %vm2982, %v2920, %v2406
    %v2986 = vsel %vm2982, %v2921, %v2408
    %v2987 = vsel %vm2982, %v2922, %v2410
    %v2988 = vsel %vm2982, %v2923, %v2412
    %v2989 = vsel %vm2982, %v2924, %v2414
    %v2990 = vsel %vm2982, %v2925, %v2416
    %v2991 = vsel %vm2982, %v2926, %v2418
    %v2992 = vsel %vm2982, %v2927, %v2420
    %v2993 = vsel %vm2982, %v2928, %v2422
    %v2994 = vsel %vm2982, %v2929, %v2424
    %v2995 = vsel %vm2982, %v2930, %v2426
    %v2996 = vsel %vm2982, %v2931, %v2428
    %v2997 = vsel %vm2982, %v2932, %v2430
    %v2998 = vsel %vm2982, %v2933, %v2432
    %v2999 = vsel %vm2982, %v2934, %v2434
    %v3000 = vsel %vm2982, %v2935, %v2436
    %v3001 = vsel %vm2982, %v2936, %v2438
    %v3002 = vsel %vm2982, %v2937, %v2440
    %v3003 = vsel %vm2982, %v2938, %v2442
    %v3004 = vsel %vm2982, %v2939, %v2444
    %v3005 = vsel %vm2982, %v2940, %v2446
    %v3006 = vsel %vm2982, %v2941, %v2448
    %v3007 = vsel %vm2982, %v2942, %v2450
    %v3008 = vsel %vm2982, %v2943, %v2452
    %v3009 = vsel %vm2982, %v2944, %v2454
    %v3010 = vsel %vm2982, %v2945, %v2456
    %v3011 = vsel %vm2982, %v2946, %v2458
    %v3012 = vsel %vm2982, %v2947, %v2460
    %v3013 = vsel %vm2982, %v2948, %v2462
    %v3014 = vsel %vm2982, %v2949, %v2464
    %v3015 = vsel %vm2982, %v2950, %v2466
    %v3016 = vsel %vm2982, %v2951, %v2468
    %v3017 = vsel %vm2982, %v2952, %v2470
    %v3018 = vsel %vm2982, %v2953, %v2472
    %v3019 = vsel %vm2982, %v2954, %v2474
    %v3020 = vsel %vm2982, %v2955, %v2476
    %v3021 = vsel %vm2982, %v2956, %v2478
    %v3022 = vsel %vm2982, %v2957, %v2480
    %v3023 = vsel %vm2982, %v2958, %v2482
    %v3024 = vsel %vm2982, %v2959, %v2484
    %v3025 = vsel %vm2982, %v2960, %v2486
    %v3026 = vsel %vm2982, %v2961, %v2488
    %v3027 = vsel %vm2982, %v2962, %v2490
    %v3028 = vsel %vm2982, %v2963, %v2492
    %v3029 = vsel %vm2982, %v2964, %v2494
    %v3030 = vsel %vm2982, %v2965, %v2496
    %v3031 = vsel %vm2982, %v2966, %v2498
    %v3032 = vsel %vm2982, %v2967, %v2500
    %v3033 = vsel %vm2982, %v2968, %v2502
    %v3034 = vsel %vm2982, %v2969, %v2504
    %v3035 = vsel %vm2982, %v2970, %v2506
    %v3036 = vsel %vm2982, %v2971, %v2508
    %v3037 = vsel %vm2982, %v2972, %v2510
    %v3038 = vsel %vm2982, %v2973, %v2512
    %v3039 = vsel %vm2982, %v2974, %v2514
    %v3040 = vsel %vm2982, %v2975, %v2516
    %v3041 = vsel %vm2982, %v2976, %v2518
    %v3042 = vsel %vm2982, %v2977, %v2520
    %v3043 = vsel %vm2982, %v2978, %v2522
    %v3044 = vsel %vm2982, %v2979, %v2524
    %v3045 = vsel %vm2982, %v2980, %v2526
    %v3046 = vsel %vm2982, %v2981, %v2528
    %v3047 = vld [vmem:[%s5] sm:$0xff]
    %v3048 = vld [vmem:[%s5 + $0x8] sm:$0xff]
    %v3049 = vld [vmem:[%s5 + $0x10] sm:$0xff]
    %v3050 = vld [vmem:[%s5 + $0x18] sm:$0xff]
    %v3051 = vld [vmem:[%s5 + $0x20] sm:$0xff]
    %v3052 = vld [vmem:[%s5 + $0x28] sm:$0xff]
    %v3053 = vld [vmem:[%s5 + $0x30] sm:$0xff]
    %v3054 = vld [vmem:[%s5 + $0x38] sm:$0xff]
    %v3055 = vld [vmem:[%s5 + $0x40] sm:$0xff]
    %v3056 = vld [vmem:[%s5 + $0x48] sm:$0xff]
    %v3057 = vld [vmem:[%s5 + $0x50] sm:$0xff]
    %v3058 = vld [vmem:[%s5 + $0x58] sm:$0xff]
    %v3059 = vld [vmem:[%s5 + $0x60] sm:$0xff]
    %v3060 = vld [vmem:[%s5 + $0x68] sm:$0xff]
    %v3061 = vld [vmem:[%s5 + $0x70] sm:$0xff]
    %v3062 = vld [vmem:[%s5 + $0x78] sm:$0xff]
    %v3063 = vld [vmem:[%s5 + $0x80] sm:$0xff]
    %v3064 = vld [vmem:[%s5 + $0x88] sm:$0xff]
    %v3065 = vld [vmem:[%s6] sm:$0x1]
    %v3067 = vlaneseq
    %v3068 = vshrl.u32 %v3067, 7
    %v3069 = vsub.s32 0, %v3068
    %v3070 = vrot.slane %v3065, %v3069
    %v3072 = vsel %vm117, %v1049, 0
    %v3074 = vsel %vm117, %v1051, 0
    %v3076 = vsel %vm117, %v1054, 0
    %v3078 = vsel %vm117, %v1056, 0
    %v3080 = vsel %vm117, %v1059, 0
    %v3082 = vsel %vm117, %v1061, 0
    %v3084 = vsel %vm117, %v1064, 0
    %v3086 = vsel %vm117, %v1066, 0
    %v3088 = vsel %vm117, %v1069, 0
    %v3090 = vsel %vm117, %v1071, 0
    %v3092 = vsel %vm117, %v1074, 0
    %v3094 = vsel %vm117, %v1076, 0
    %v3096 = vsel %vm117, %v1079, 0
    %v3098 = vsel %vm117, %v1081, 0
    %v3100 = vsel %vm117, %v1084, 0
    %v3102 = vsel %vm117, %v1086, 0
    %v3104 = vsel %vm117, %v1089, 0
    %v3106 = vsel %vm117, %v1091, 0
    %v3108 = vsel %vm117, %v1094, 0
    %v3110 = vsel %vm117, %v1096, 0
    %v3112 = vsel %vm117, %v1099, 0
    %v3114 = vsel %vm117, %v1101, 0
    %v3116 = vsel %vm117, %v1104, 0
    %v3118 = vsel %vm117, %v1106, 0
    %v3120 = vsel %vm117, %v1109, 0
    %v3122 = vsel %vm117, %v1111, 0
    %v3124 = vsel %vm117, %v1114, 0
    %v3126 = vsel %vm117, %v1116, 0
    %v3128 = vsel %vm117, %v1215, 0
    %v3130 = vsel %vm117, %v1217, 0
    %v3132 = vsel %vm117, %v1241, 0
    %v3134 = vsel %vm117, %v1243, 0
    %v3136 = vsel %vm117, %v1129, 0
    %v3138 = vsel %vm117, %v1131, 0
    %v3140 = vsel %vm117, %v1134, 0
    %v3142 = vsel %vm117, %v1136, 0
    %v3144 = vsel %vm117, %v1139, 0
    %v3146 = vsel %vm117, %v1141, 0
    %v3148 = vsel %vm117, %v1144, 0
    %v3150 = vsel %vm117, %v1146, 0
    %v3152 = vsel %vm117, %v1149, 0
    %v3154 = vsel %vm117, %v1151, 0
    %v3156 = vsel %vm117, %v1154, 0
    %v3158 = vsel %vm117, %v1156, 0
    %v3160 = vsel %vm117, %v1159, 0
    %v3162 = vsel %vm117, %v1161, 0
    %v3164 = vsel %vm117, %v1164, 0
    %v3166 = vsel %vm117, %v1166, 0
    %v3168 = vsel %vm117, %v1169, 0
    %v3170 = vsel %vm117, %v1171, 0
    %v3172 = vsel %vm117, %v1174, 0
    %v3174 = vsel %vm117, %v1176, 0
    %v3176 = vsel %vm117, %v1179, 0
    %v3178 = vsel %vm117, %v1181, 0
    %v3180 = vsel %vm117, %v1184, 0
    %v3182 = vsel %vm117, %v1186, 0
    %v3184 = vsel %vm117, %v1189, 0
    %v3186 = vsel %vm117, %v1191, 0
    %v3188 = vsel %vm117, %v1194, 0
    %v3190 = vsel %vm117, %v1196, 0
    %v3192 = vsel %vm117, %v1220, 0
    %v3194 = vsel %vm117, %v1222, 0
    %v3196 = vsel %vm117, %v1246, 0
    %v3198 = vsel %vm117, %v1248, 0
    %3200 = vmatprep.subr.mxu0 0.0
    %3201 = vmatpush1.msra.mxu0 %v3047
    %3202 = vmatprep.subr.mxu0 0.0
    %3203 = vmatpush1.msra.mxu0 %v3048
    %3204 = vmatprep.subr.mxu0 0.0
    %3205 = vmatpush1.msra.mxu0 %v3049
    %3206 = vmatprep.subr.mxu0 0.0
    %3207 = vmatpush1.msra.mxu0 %v3050
    %3208 = vmatprep.subr.mxu0 0.0
    %3209 = vmatpush1.msra.mxu0 %v3051
    %3210 = vmatprep.subr.mxu0 0.0
    %3211 = vmatpush1.msra.mxu0 %v3052
    %3212 = vmatprep.subr.mxu0 0.0
    %3213 = vmatpush1.msra.mxu0 %v3053
    %3214 = vmatprep.subr.mxu0 0.0
    %3215 = vmatpush1.msra.mxu0 %v3054
    %3216 = vmatprep.subr.mxu0 0.0
    %3217 = vmatpush1.msra.mxu0 %v3055
    %3218 = vmatprep.subr.mxu0 0.0
    %3219 = vmatpush1.msra.mxu0 %v3056
    %3220 = vmatprep.subr.mxu0 0.0
    %3221 = vmatpush1.msra.mxu0 %v3057
    %3222 = vmatprep.subr.mxu0 0.0
    %3223 = vmatpush1.msra.mxu0 %v3058
    %3224 = vmatprep.subr.mxu0 0.0
    %3225 = vmatpush1.msra.mxu0 %v3059
    %3226 = vmatprep.subr.mxu0 0.0
    %3227 = vmatpush1.msra.mxu0 %v3060
    %3228 = vmatprep.subr.mxu0 0.0
    %3229 = vmatpush1.msra.mxu0 %v3061
    %3230 = vmatprep.subr.mxu0 0.0
    %3231 = vmatpush1.msra.mxu0 %v3062
    %3232 = vmatprep.subr.mxu0 0.0
    %3233 = vmatpush1.msra.mxu0 %v3063
    %3234 = vmatprep.subr.mxu0 0.0
    %3235 = vmatpush1.msra.mxu0 %v3064
    %3236 = vmatprep.subr.mxu0 0.0
    %3237 = vmatpush1.msra.mxu0 0.0
    %3238 = vmatprep.subr.mxu0 0.0
    %3239 = vmatpush1.msra.mxu0 0.0
    %3240 = vmatprep.subr.mxu0 0.0
    %3241 = vmatpush1.msra.mxu0 0.0
    %3242 = vmatprep.subr.mxu0 0.0
    %3243 = vmatpush1.msra.mxu0 0.0
    %3244 = vmatprep.subr.mxu0 0.0
    %3245 = vmatpush1.msra.mxu0 0.0
    %3246 = vmatprep.subr.mxu0 0.0
    %3247 = vmatpush1.msra.mxu0 0.0
    %3248 = vmatprep.subr.mxu0 0.0
    %3249 = vmatpush1.msra.mxu0 0.0
    %3250 = vmatprep.subr.mxu0 0.0
    %3251 = vmatpush1.msra.mxu0 0.0
    %3252 = vmatprep.subr.mxu0 0.0
    %3253 = vmatpush1.msra.mxu0 0.0
    %3254 = vmatprep.subr.mxu0 0.0
    %3255 = vmatpush1.msra.mxu0 0.0
    %3256 = vmatprep.subr.mxu0 0.0
    %3257 = vmatpush1.msra.mxu0 0.0
    %3258 = vmatprep.subr.mxu0 0.0
    %3259 = vmatpush1.msra.mxu0 0.0
    %3260 = vmatprep.subr.mxu0 0.0
    %3261 = vmatpush1.msra.mxu0 0.0
    %3262 = vmatprep.subr.mxu0 0.0
    %3263 = vmatpush1.msra.mxu0 0.0
    %3264 = vmatprep.mubr.f32.mxu0 %v3072
    %3265 = vmatmul.mubr.f32.gmra.mrb[0].mxu0 %v2983
    %v3266 = vpop.f32.mrb[0].mxu0
    %v3267 = vadd.f32 %v3070, %v3266
    %v3268 = vpop.f32.mrb[0].mxu0
    %3269 = vmatprep.mubr.f32.mxu0 %v3074
    %3270 = vmatmul.mubr.f32.gmra.mrb[0].mxu0 %v2984
    %v3271 = vpop.f32.mrb[0].mxu0
    %v3272 = vadd.f32 %v3070, %v3271
    %v3273 = vpop.f32.mrb[0].mxu0
    %3274 = vmatprep.mubr.f32.mxu0 %v3076
    %3275 = vmatmul.mubr.f32.gmra.mrb[0].mxu0 %v2985
    %v3276 = vpop.f32.mrb[0].mxu0
    %v3277 = vadd.f32 %v3070, %v3276
    %v3278 = vpop.f32.mrb[0].mxu0
    %3279 = vmatprep.mubr.f32.mxu0 %v3078
    %3280 = vmatmul.mubr.f32.gmra.mrb[0].mxu0 %v2986
    %v3281 = vpop.f32.mrb[0].mxu0
    %v3282 = vadd.f32 %v3070, %v3281
    %v3283 = vpop.f32.mrb[0].mxu0
    %3284 = vmatprep.mubr.f32.mxu0 %v3080
    %3285 = vmatmul.mubr.f32.gmra.mrb[0].mxu0 %v2987
    %v3286 = vpop.f32.mrb[0].mxu0
    %v3287 = vadd.f32 %v3070, %v3286
    %v3288 = vpop.f32.mrb[0].mxu0
    %3289 = vmatprep.mubr.f32.mxu0 %v3082
    %3290 = vmatmul.mubr.f32.gmra.mrb[0].mxu0 %v2988
    %v3291 = vpop.f32.mrb[0].mxu0
    %v3292 = vadd.f32 %v3070, %v3291
    %v3293 = vpop.f32.mrb[0].mxu0
    %3294 = vmatprep.mubr.f32.mxu0 %v3084
    %3295 = vmatmul.mubr.f32.gmra.mrb[0].mxu0 %v2989
    %v3296 = vpop.f32.mrb[0].mxu0
    %v3297 = vadd.f32 %v3070, %v3296
    %v3298 = vpop.f32.mrb[0].mxu0
    %3299 = vmatprep.mubr.f32.mxu0 %v3086
    %3300 = vmatmul.mubr.f32.gmra.mrb[0].mxu0 %v2990
    %v3301 = vpop.f32.mrb[0].mxu0
    %v3302 = vadd.f32 %v3070, %v3301
    %v3303 = vpop.f32.mrb[0].mxu0
    %3304 = vmatprep.mubr.f32.mxu0 %v3088
    %3305 = vmatmul.mubr.f32.gmra.mrb[0].mxu0 %v2991
    %v3306 = vpop.f32.mrb[0].mxu0
    %v3307 = vadd.f32 %v3070, %v3306
    %v3308 = vpop.f32.mrb[0].mxu0
    %3309 = vmatprep.mubr.f32.mxu0 %v3090
    %3310 = vmatmul.mubr.f32.gmra.mrb[0].mxu0 %v2992
    %v3311 = vpop.f32.mrb[0].mxu0
    %v3312 = vadd.f32 %v3070, %v3311
    %v3313 = vpop.f32.mrb[0].mxu0
    %3314 = vmatprep.mubr.f32.mxu0 %v3092
    %3315 = vmatmul.mubr.f32.gmra.mrb[0].mxu0 %v2993
    %v3316 = vpop.f32.mrb[0].mxu0
    %v3317 = vadd.f32 %v3070, %v3316
    %v3318 = vpop.f32.mrb[0].mxu0
    %3319 = vmatprep.mubr.f32.mxu0 %v3094
    %3320 = vmatmul.mubr.f32.gmra.mrb[0].mxu0 %v2994
    %v3321 = vpop.f32.mrb[0].mxu0
    %v3322 = vadd.f32 %v3070, %v3321
    %v3323 = vpop.f32.mrb[0].mxu0
    %3324 = vmatprep.mubr.f32.mxu0 %v3096
    %3325 = vmatmul.mubr.f32.gmra.mrb[0].mxu0 %v2995
    %v3326 = vpop.f32.mrb[0].mxu0
    %v3327 = vadd.f32 %v3070, %v3326
    %v3328 = vpop.f32.mrb[0].mxu0
    %3329 = vmatprep.mubr.f32.mxu0 %v3098
    %3330 = vmatmul.mubr.f32.gmra.mrb[0].mxu0 %v2996
    %v3331 = vpop.f32.mrb[0].mxu0
    %v3332 = vadd.f32 %v3070, %v3331
    %v3333 = vpop.f32.mrb[0].mxu0
    %3334 = vmatprep.mubr.f32.mxu0 %v3100
    %3335 = vmatmul.mubr.f32.gmra.mrb[0].mxu0 %v2997
    %v3336 = vpop.f32.mrb[0].mxu0
    %v3337 = vadd.f32 %v3070, %v3336
    %v3338 = vpop.f32.mrb[0].mxu0
    %3339 = vmatprep.mubr.f32.mxu0 %v3102
    %3340 = vmatmul.mubr.f32.gmra.mrb[0].mxu0 %v2998
    %v3341 = vpop.f32.mrb[0].mxu0
    %v3342 = vadd.f32 %v3070, %v3341
    %v3343 = vpop.f32.mrb[0].mxu0
    %3344 = vmatprep.mubr.f32.mxu0 %v3104
    %3345 = vmatmul.mubr.f32.gmra.mrb[0].mxu0 %v2999
    %v3346 = vpop.f32.mrb[0].mxu0
    %v3347 = vadd.f32 %v3070, %v3346
    %v3348 = vpop.f32.mrb[0].mxu0
    %3349 = vmatprep.mubr.f32.mxu0 %v3106
    %3350 = vmatmul.mubr.f32.gmra.mrb[0].mxu0 %v3000
    %v3351 = vpop.f32.mrb[0].mxu0
    %v3352 = vadd.f32 %v3070, %v3351
    %v3353 = vpop.f32.mrb[0].mxu0
    %3354 = vmatprep.mubr.f32.mxu0 %v3108
    %3355 = vmatmul.mubr.f32.gmra.mrb[0].mxu0 %v3001
    %v3356 = vpop.f32.mrb[0].mxu0
    %v3357 = vadd.f32 %v3070, %v3356
    %v3358 = vpop.f32.mrb[0].mxu0
    %3359 = vmatprep.mubr.f32.mxu0 %v3110
    %3360 = vmatmul.mubr.f32.gmra.mrb[0].mxu0 %v3002
    %v3361 = vpop.f32.mrb[0].mxu0
    %v3362 = vadd.f32 %v3070, %v3361
    %v3363 = vpop.f32.mrb[0].mxu0
    %3364 = vmatprep.mubr.f32.mxu0 %v3112
    %3365 = vmatmul.mubr.f32.gmra.mrb[0].mxu0 %v3003
    %v3366 = vpop.f32.mrb[0].mxu0
    %v3367 = vadd.f32 %v3070, %v3366
    %v3368 = vpop.f32.mrb[0].mxu0
    %3369 = vmatprep.mubr.f32.mxu0 %v3114
    %3370 = vmatmul.mubr.f32.gmra.mrb[0].mxu0 %v3004
    %v3371 = vpop.f32.mrb[0].mxu0
    %v3372 = vadd.f32 %v3070, %v3371
    %v3373 = vpop.f32.mrb[0].mxu0
    %3374 = vmatprep.mubr.f32.mxu0 %v3116
    %3375 = vmatmul.mubr.f32.gmra.mrb[0].mxu0 %v3005
    %v3376 = vpop.f32.mrb[0].mxu0
    %v3377 = vadd.f32 %v3070, %v3376
    %v3378 = vpop.f32.mrb[0].mxu0
    %3379 = vmatprep.mubr.f32.mxu0 %v3118
    %3380 = vmatmul.mubr.f32.gmra.mrb[0].mxu0 %v3006
    %v3381 = vpop.f32.mrb[0].mxu0
    %v3382 = vadd.f32 %v3070, %v3381
    %v3383 = vpop.f32.mrb[0].mxu0
    %3384 = vmatprep.mubr.f32.mxu0 %v3120
    %3385 = vmatmul.mubr.f32.gmra.mrb[0].mxu0 %v3007
    %v3386 = vpop.f32.mrb[0].mxu0
    %v3387 = vadd.f32 %v3070, %v3386
    %v3388 = vpop.f32.mrb[0].mxu0
    %3389 = vmatprep.mubr.f32.mxu0 %v3122
    %3390 = vmatmul.mubr.f32.gmra.mrb[0].mxu0 %v3008
    %v3391 = vpop.f32.mrb[0].mxu0
    %v3392 = vadd.f32 %v3070, %v3391
    %v3393 = vpop.f32.mrb[0].mxu0
    %3394 = vmatprep.mubr.f32.mxu0 %v3124
    %3395 = vmatmul.mubr.f32.gmra.mrb[0].mxu0 %v3009
    %v3396 = vpop.f32.mrb[0].mxu0
    %v3397 = vadd.f32 %v3070, %v3396
    %v3398 = vpop.f32.mrb[0].mxu0
    %3399 = vmatprep.mubr.f32.mxu0 %v3126
    %3400 = vmatmul.mubr.f32.gmra.mrb[0].mxu0 %v3010
    %v3401 = vpop.f32.mrb[0].mxu0
    %v3402 = vadd.f32 %v3070, %v3401
    %v3403 = vpop.f32.mrb[0].mxu0
    %3404 = vmatprep.mubr.f32.mxu0 %v3128
    %3405 = vmatmul.mubr.f32.gmra.mrb[0].mxu0 %v3011
    %v3406 = vpop.f32.mrb[0].mxu0
    %v3407 = vadd.f32 %v3070, %v3406
    %v3408 = vpop.f32.mrb[0].mxu0
    %3409 = vmatprep.mubr.f32.mxu0 %v3130
    %3410 = vmatmul.mubr.f32.gmra.mrb[0].mxu0 %v3012
    %v3411 = vpop.f32.mrb[0].mxu0
    %v3412 = vadd.f32 %v3070, %v3411
    %v3413 = vpop.f32.mrb[0].mxu0
    %3414 = vmatprep.mubr.f32.mxu0 %v3132
    %3415 = vmatmul.mubr.f32.gmra.mrb[0].mxu0 %v3013
    %v3416 = vpop.f32.mrb[0].mxu0
    %v3417 = vadd.f32 %v3070, %v3416
    %v3418 = vpop.f32.mrb[0].mxu0
    %3419 = vmatprep.mubr.f32.mxu0 %v3134
    %3420 = vmatmul.mubr.f32.gmra.mrb[0].mxu0 %v3014
    %v3421 = vpop.f32.mrb[0].mxu0
    %v3422 = vadd.f32 %v3070, %v3421
    %v3423 = vpop.f32.mrb[0].mxu0
    %3424 = vmatprep.mubr.f32.mxu0 %v3136
    %3425 = vmatmul.mubr.f32.gmra.mrb[0].mxu0 %v3015
    %v3426 = vpop.f32.mrb[0].mxu0
    %v3427 = vadd.f32 %v3070, %v3426
    %v3428 = vpop.f32.mrb[0].mxu0
    %3429 = vmatprep.mubr.f32.mxu0 %v3138
    %3430 = vmatmul.mubr.f32.gmra.mrb[0].mxu0 %v3016
    %v3431 = vpop.f32.mrb[0].mxu0
    %v3432 = vadd.f32 %v3070, %v3431
    %v3433 = vpop.f32.mrb[0].mxu0
    %3434 = vmatprep.mubr.f32.mxu0 %v3140
    %3435 = vmatmul.mubr.f32.gmra.mrb[0].mxu0 %v3017
    %v3436 = vpop.f32.mrb[0].mxu0
    %v3437 = vadd.f32 %v3070, %v3436
    %v3438 = vpop.f32.mrb[0].mxu0
    %3439 = vmatprep.mubr.f32.mxu0 %v3142
    %3440 = vmatmul.mubr.f32.gmra.mrb[0].mxu0 %v3018
    %v3441 = vpop.f32.mrb[0].mxu0
    %v3442 = vadd.f32 %v3070, %v3441
    %v3443 = vpop.f32.mrb[0].mxu0
    %3444 = vmatprep.mubr.f32.mxu0 %v3144
    %3445 = vmatmul.mubr.f32.gmra.mrb[0].mxu0 %v3019
    %v3446 = vpop.f32.mrb[0].mxu0
    %v3447 = vadd.f32 %v3070, %v3446
    %v3448 = vpop.f32.mrb[0].mxu0
    %3449 = vmatprep.mubr.f32.mxu0 %v3146
    %3450 = vmatmul.mubr.f32.gmra.mrb[0].mxu0 %v3020
    %v3451 = vpop.f32.mrb[0].mxu0
    %v3452 = vadd.f32 %v3070, %v3451
    %v3453 = vpop.f32.mrb[0].mxu0
    %3454 = vmatprep.mubr.f32.mxu0 %v3148
    %3455 = vmatmul.mubr.f32.gmra.mrb[0].mxu0 %v3021
    %v3456 = vpop.f32.mrb[0].mxu0
    %v3457 = vadd.f32 %v3070, %v3456
    %v3458 = vpop.f32.mrb[0].mxu0
    %3459 = vmatprep.mubr.f32.mxu0 %v3150
    %3460 = vmatmul.mubr.f32.gmra.mrb[0].mxu0 %v3022
    %v3461 = vpop.f32.mrb[0].mxu0
    %v3462 = vadd.f32 %v3070, %v3461
    %v3463 = vpop.f32.mrb[0].mxu0
    %3464 = vmatprep.mubr.f32.mxu0 %v3152
    %3465 = vmatmul.mubr.f32.gmra.mrb[0].mxu0 %v3023
    %v3466 = vpop.f32.mrb[0].mxu0
    %v3467 = vadd.f32 %v3070, %v3466
    %v3468 = vpop.f32.mrb[0].mxu0
    %3469 = vmatprep.mubr.f32.mxu0 %v3154
    %3470 = vmatmul.mubr.f32.gmra.mrb[0].mxu0 %v3024
    %v3471 = vpop.f32.mrb[0].mxu0
    %v3472 = vadd.f32 %v3070, %v3471
    %v3473 = vpop.f32.mrb[0].mxu0
    %3474 = vmatprep.mubr.f32.mxu0 %v3156
    %3475 = vmatmul.mubr.f32.gmra.mrb[0].mxu0 %v3025
    %v3476 = vpop.f32.mrb[0].mxu0
    %v3477 = vadd.f32 %v3070, %v3476
    %v3478 = vpop.f32.mrb[0].mxu0
    %3479 = vmatprep.mubr.f32.mxu0 %v3158
    %3480 = vmatmul.mubr.f32.gmra.mrb[0].mxu0 %v3026
    %v3481 = vpop.f32.mrb[0].mxu0
    %v3482 = vadd.f32 %v3070, %v3481
    %v3483 = vpop.f32.mrb[0].mxu0
    %3484 = vmatprep.mubr.f32.mxu0 %v3160
    %3485 = vmatmul.mubr.f32.gmra.mrb[0].mxu0 %v3027
    %v3486 = vpop.f32.mrb[0].mxu0
    %v3487 = vadd.f32 %v3070, %v3486
    %v3488 = vpop.f32.mrb[0].mxu0
    %3489 = vmatprep.mubr.f32.mxu0 %v3162
    %3490 = vmatmul.mubr.f32.gmra.mrb[0].mxu0 %v3028
    %v3491 = vpop.f32.mrb[0].mxu0
    %v3492 = vadd.f32 %v3070, %v3491
    %v3493 = vpop.f32.mrb[0].mxu0
    %3494 = vmatprep.mubr.f32.mxu0 %v3164
    %3495 = vmatmul.mubr.f32.gmra.mrb[0].mxu0 %v3029
    %v3496 = vpop.f32.mrb[0].mxu0
    %v3497 = vadd.f32 %v3070, %v3496
    %v3498 = vpop.f32.mrb[0].mxu0
    %3499 = vmatprep.mubr.f32.mxu0 %v3166
    %3500 = vmatmul.mubr.f32.gmra.mrb[0].mxu0 %v3030
    %v3501 = vpop.f32.mrb[0].mxu0
    %v3502 = vadd.f32 %v3070, %v3501
    %v3503 = vpop.f32.mrb[0].mxu0
    %3504 = vmatprep.mubr.f32.mxu0 %v3168
    %3505 = vmatmul.mubr.f32.gmra.mrb[0].mxu0 %v3031
    %v3506 = vpop.f32.mrb[0].mxu0
    %v3507 = vadd.f32 %v3070, %v3506
    %v3508 = vpop.f32.mrb[0].mxu0
    %3509 = vmatprep.mubr.f32.mxu0 %v3170
    %3510 = vmatmul.mubr.f32.gmra.mrb[0].mxu0 %v3032
    %v3511 = vpop.f32.mrb[0].mxu0
    %v3512 = vadd.f32 %v3070, %v3511
    %v3513 = vpop.f32.mrb[0].mxu0
    %3514 = vmatprep.mubr.f32.mxu0 %v3172
    %3515 = vmatmul.mubr.f32.gmra.mrb[0].mxu0 %v3033
    %v3516 = vpop.f32.mrb[0].mxu0
    %v3517 = vadd.f32 %v3070, %v3516
    %v3518 = vpop.f32.mrb[0].mxu0
    %3519 = vmatprep.mubr.f32.mxu0 %v3174
    %3520 = vmatmul.mubr.f32.gmra.mrb[0].mxu0 %v3034
    %v3521 = vpop.f32.mrb[0].mxu0
    %v3522 = vadd.f32 %v3070, %v3521
    %v3523 = vpop.f32.mrb[0].mxu0
    %3524 = vmatprep.mubr.f32.mxu0 %v3176
    %3525 = vmatmul.mubr.f32.gmra.mrb[0].mxu0 %v3035
    %v3526 = vpop.f32.mrb[0].mxu0
    %v3527 = vadd.f32 %v3070, %v3526
    %v3528 = vpop.f32.mrb[0].mxu0
    %3529 = vmatprep.mubr.f32.mxu0 %v3178
    %3530 = vmatmul.mubr.f32.gmra.mrb[0].mxu0 %v3036
    %v3531 = vpop.f32.mrb[0].mxu0
    %v3532 = vadd.f32 %v3070, %v3531
    %v3533 = vpop.f32.mrb[0].mxu0
    %3534 = vmatprep.mubr.f32.mxu0 %v3180
    %3535 = vmatmul.mubr.f32.gmra.mrb[0].mxu0 %v3037
    %v3536 = vpop.f32.mrb[0].mxu0
    %v3537 = vadd.f32 %v3070, %v3536
    %v3538 = vpop.f32.mrb[0].mxu0
    %3539 = vmatprep.mubr.f32.mxu0 %v3182
    %3540 = vmatmul.mubr.f32.gmra.mrb[0].mxu0 %v3038
    %v3541 = vpop.f32.mrb[0].mxu0
    %v3542 = vadd.f32 %v3070, %v3541
    %v3543 = vpop.f32.mrb[0].mxu0
    %3544 = vmatprep.mubr.f32.mxu0 %v3184
    %3545 = vmatmul.mubr.f32.gmra.mrb[0].mxu0 %v3039
    %v3546 = vpop.f32.mrb[0].mxu0
    %v3547 = vadd.f32 %v3070, %v3546
    %v3548 = vpop.f32.mrb[0].mxu0
    %3549 = vmatprep.mubr.f32.mxu0 %v3186
    %3550 = vmatmul.mubr.f32.gmra.mrb[0].mxu0 %v3040
    %v3551 = vpop.f32.mrb[0].mxu0
    %v3552 = vadd.f32 %v3070, %v3551
    %v3553 = vpop.f32.mrb[0].mxu0
    %3554 = vmatprep.mubr.f32.mxu0 %v3188
    %3555 = vmatmul.mubr.f32.gmra.mrb[0].mxu0 %v3041
    %v3556 = vpop.f32.mrb[0].mxu0
    %v3557 = vadd.f32 %v3070, %v3556
    %v3558 = vpop.f32.mrb[0].mxu0
    %3559 = vmatprep.mubr.f32.mxu0 %v3190
    %3560 = vmatmul.mubr.f32.gmra.mrb[0].mxu0 %v3042
    %v3561 = vpop.f32.mrb[0].mxu0
    %v3562 = vadd.f32 %v3070, %v3561
    %v3563 = vpop.f32.mrb[0].mxu0
    %3564 = vmatprep.mubr.f32.mxu0 %v3192
    %3565 = vmatmul.mubr.f32.gmra.mrb[0].mxu0 %v3043
    %v3566 = vpop.f32.mrb[0].mxu0
    %v3567 = vadd.f32 %v3070, %v3566
    %v3568 = vpop.f32.mrb[0].mxu0
    %3569 = vmatprep.mubr.f32.mxu0 %v3194
    %3570 = vmatmul.mubr.f32.gmra.mrb[0].mxu0 %v3044
    %v3571 = vpop.f32.mrb[0].mxu0
    %v3572 = vadd.f32 %v3070, %v3571
    %v3573 = vpop.f32.mrb[0].mxu0
    %3574 = vmatprep.mubr.f32.mxu0 %v3196
    %3575 = vmatmul.mubr.f32.gmra.mrb[0].mxu0 %v3045
    %v3576 = vpop.f32.mrb[0].mxu0
    %v3577 = vadd.f32 %v3070, %v3576
    %v3578 = vpop.f32.mrb[0].mxu0
    %3579 = vmatprep.mubr.f32.mxu0 %v3198
    %3580 = vmatmul.mubr.f32.gmra.mrb[0].mxu0 %v3046
    %v3581 = vpop.f32.mrb[0].mxu0
    %v3582 = vadd.f32 %v3070, %v3581
    %v3583 = vpop.f32.mrb[0].mxu0
    %3584 = vdwg.mxu0
    %3585 = vst.msk [vmem:[%s606 + $0x1] sm:$0xff] %vm117, %v3267
    %3586 = vst.msk [vmem:[%s606 + $0x9] sm:$0xff] %vm117, %v3272
    %3587 = vst.msk [vmem:[%s606 + $0x19] sm:$0xff] %vm117, %v3277
    %3588 = vst.msk [vmem:[%s606 + $0x21] sm:$0xff] %vm117, %v3282
    %3589 = vst.msk [vmem:[%s606 + $0x31] sm:$0xff] %vm117, %v3287
    %3590 = vst.msk [vmem:[%s606 + $0x39] sm:$0xff] %vm117, %v3292
    %3591 = vst.msk [vmem:[%s606 + $0x49] sm:$0xff] %vm117, %v3297
    %3592 = vst.msk [vmem:[%s606 + $0x51] sm:$0xff] %vm117, %v3302
    %3593 = vst.msk [vmem:[%s606 + $0x61] sm:$0xff] %vm117, %v3307
    %3594 = vst.msk [vmem:[%s606 + $0x69] sm:$0xff] %vm117, %v3312
    %3595 = vst.msk [vmem:[%s606 + $0x79] sm:$0xff] %vm117, %v3317
    %3596 = vst.msk [vmem:[%s606 + $0x81] sm:$0xff] %vm117, %v3322
    %3597 = vst.msk [vmem:[%s606 + $0x91] sm:$0xff] %vm117, %v3327
    %3598 = vst.msk [vmem:[%s606 + $0x99] sm:$0xff] %vm117, %v3332
    %3599 = vst.msk [vmem:[%s606 + $0xa9] sm:$0xff] %vm117, %v3337
    %3600 = vst.msk [vmem:[%s606 + $0xb1] sm:$0xff] %vm117, %v3342
    %3601 = vst.msk [vmem:[%s606 + $0xc1] sm:$0xff] %vm117, %v3347
    %3602 = vst.msk [vmem:[%s606 + $0xc9] sm:$0xff] %vm117, %v3352
    %3603 = vst.msk [vmem:[%s606 + $0xd9] sm:$0xff] %vm117, %v3357
    %3604 = vst.msk [vmem:[%s606 + $0xe1] sm:$0xff] %vm117, %v3362
    %3605 = vst.msk [vmem:[%s606 + $0xf1] sm:$0xff] %vm117, %v3367
    %3606 = vst.msk [vmem:[%s606 + $0xf9] sm:$0xff] %vm117, %v3372
    %3607 = vst.msk [vmem:[%s606 + $0x109] sm:$0xff] %vm117, %v3377
    %3608 = vst.msk [vmem:[%s606 + $0x111] sm:$0xff] %vm117, %v3382
    %3609 = vst.msk [vmem:[%s606 + $0x121] sm:$0xff] %vm117, %v3387
    %3610 = vst.msk [vmem:[%s606 + $0x129] sm:$0xff] %vm117, %v3392
    %3611 = vst.msk [vmem:[%s606 + $0x139] sm:$0xff] %vm117, %v3397
    %3612 = vst.msk [vmem:[%s606 + $0x141] sm:$0xff] %vm117, %v3402
    %3613 = vst.msk [vmem:[%s606 + $0x151] sm:$0xff] %vm117, %v3407
    %3614 = vst.msk [vmem:[%s606 + $0x159] sm:$0xff] %vm117, %v3412
    %3615 = vst.msk [vmem:[%s606 + $0x169] sm:$0xff] %vm117, %v3417
    %3616 = vst.msk [vmem:[%s606 + $0x171] sm:$0xff] %vm117, %v3422
    %3617 = vst.msk [vmem:[%s606 + $0x1b1] sm:$0xff] %vm117, %v3427
    %3618 = vst.msk [vmem:[%s606 + $0x1b9] sm:$0xff] %vm117, %v3432
    %3619 = vst.msk [vmem:[%s606 + $0x1c9] sm:$0xff] %vm117, %v3437
    %3620 = vst.msk [vmem:[%s606 + $0x1d1] sm:$0xff] %vm117, %v3442
    %3621 = vst.msk [vmem:[%s606 + $0x1e1] sm:$0xff] %vm117, %v3447
    %3622 = vst.msk [vmem:[%s606 + $0x1e9] sm:$0xff] %vm117, %v3452
    %3623 = vst.msk [vmem:[%s606 + $0x1f9] sm:$0xff] %vm117, %v3457
    %3624 = vst.msk [vmem:[%s606 + $0x201] sm:$0xff] %vm117, %v3462
    %3625 = vst.msk [vmem:[%s606 + $0x211] sm:$0xff] %vm117, %v3467
    %3626 = vst.msk [vmem:[%s606 + $0x219] sm:$0xff] %vm117, %v3472
    %3627 = vst.msk [vmem:[%s606 + $0x229] sm:$0xff] %vm117, %v3477
    %3628 = vst.msk [vmem:[%s606 + $0x231] sm:$0xff] %vm117, %v3482
    %3629 = vst.msk [vmem:[%s606 + $0x241] sm:$0xff] %vm117, %v3487
    %3630 = vst.msk [vmem:[%s606 + $0x249] sm:$0xff] %vm117, %v3492
    %3631 = vst.msk [vmem:[%s606 + $0x259] sm:$0xff] %vm117, %v3497
    %3632 = vst.msk [vmem:[%s606 + $0x261] sm:$0xff] %vm117, %v3502
    %3633 = vst.msk [vmem:[%s606 + $0x271] sm:$0xff] %vm117, %v3507
    %3634 = vst.msk [vmem:[%s606 + $0x279] sm:$0xff] %vm117, %v3512
    %3635 = vst.msk [vmem:[%s606 + $0x289] sm:$0xff] %vm117, %v3517
    %3636 = vst.msk [vmem:[%s606 + $0x291] sm:$0xff] %vm117, %v3522
    %3637 = vst.msk [vmem:[%s606 + $0x2a1] sm:$0xff] %vm117, %v3527
    %3638 = vst.msk [vmem:[%s606 + $0x2a9] sm:$0xff] %vm117, %v3532
    %3639 = vst.msk [vmem:[%s606 + $0x2b9] sm:$0xff] %vm117, %v3537
    %3640 = vst.msk [vmem:[%s606 + $0x2c1] sm:$0xff] %vm117, %v3542
    %3641 = vst.msk [vmem:[%s606 + $0x2d1] sm:$0xff] %vm117, %v3547
    %3642 = vst.msk [vmem:[%s606 + $0x2d9] sm:$0xff] %vm117, %v3552
    %3643 = vst.msk [vmem:[%s606 + $0x2e9] sm:$0xff] %vm117, %v3557
    %3644 = vst.msk [vmem:[%s606 + $0x2f1] sm:$0xff] %vm117, %v3562
    %3645 = vst.msk [vmem:[%s606 + $0x301] sm:$0xff] %vm117, %v3567
    %3646 = vst.msk [vmem:[%s606 + $0x309] sm:$0xff] %vm117, %v3572
    %3647 = vst.msk [vmem:[%s606 + $0x319] sm:$0xff] %vm117, %v3577
    %3648 = vst.msk [vmem:[%s606 + $0x321] sm:$0xff] %vm117, %v3582
    %v3649 = vld [vmem:[#allocation2] sm:$0xff]
    %v3650 = vld [vmem:[#allocation2 + $0x8] sm:$0xff]
    %v3651 = vld [vmem:[#allocation2 + $0x10] sm:$0x3]
    %v3652 = vld [vmem:[#allocation2 + $0x18] sm:$0xff]
    %v3653 = vld [vmem:[#allocation2 + $0x20] sm:$0xff]
    %v3654 = vld [vmem:[#allocation2 + $0x28] sm:$0x3]
    %v3655 = vld [vmem:[#allocation2 + $0x30] sm:$0xff]
    %v3656 = vld [vmem:[#allocation2 + $0x38] sm:$0xff]
    %v3657 = vld [vmem:[#allocation2 + $0x40] sm:$0x3]
    %v3658 = vld [vmem:[#allocation2 + $0x48] sm:$0xff]
    %v3659 = vld [vmem:[#allocation2 + $0x50] sm:$0xff]
    %v3660 = vld [vmem:[#allocation2 + $0x58] sm:$0x3]
    %v3661 = vld [vmem:[#allocation2 + $0x60] sm:$0xff]
    %v3662 = vld [vmem:[#allocation2 + $0x68] sm:$0xff]
    %v3663 = vld [vmem:[#allocation2 + $0x70] sm:$0x3]
    %v3664 = vld [vmem:[#allocation2 + $0x78] sm:$0xff]
    %v3665 = vld [vmem:[#allocation2 + $0x80] sm:$0xff]
    %v3666 = vld [vmem:[#allocation2 + $0x88] sm:$0x3]
    %v3667 = vld [vmem:[#allocation2 + $0x90] sm:$0xff]
    %v3668 = vld [vmem:[#allocation2 + $0x98] sm:$0xff]
    %v3669 = vld [vmem:[#allocation2 + $0xa0] sm:$0x3]
    %v3670 = vld [vmem:[#allocation2 + $0xa8] sm:$0xff]
    %v3671 = vld [vmem:[#allocation2 + $0xb0] sm:$0xff]
    %v3672 = vld [vmem:[#allocation2 + $0xb8] sm:$0x3]
    %v3673 = vld [vmem:[#allocation2 + $0xc0] sm:$0xff]
    %v3674 = vld [vmem:[#allocation2 + $0xc8] sm:$0xff]
    %v3675 = vld [vmem:[#allocation2 + $0xd0] sm:$0x3]
    %v3676 = vld [vmem:[#allocation2 + $0xd8] sm:$0xff]
    %v3677 = vld [vmem:[#allocation2 + $0xe0] sm:$0xff]
    %v3678 = vld [vmem:[#allocation2 + $0xe8] sm:$0x3]
    %v3679 = vld [vmem:[#allocation2 + $0xf0] sm:$0xff]
    %v3680 = vld [vmem:[#allocation2 + $0xf8] sm:$0xff]
    %v3681 = vld [vmem:[#allocation2 + $0x100] sm:$0x3]
    %v3682 = vld [vmem:[#allocation2 + $0x108] sm:$0xff]
    %v3683 = vld [vmem:[#allocation2 + $0x110] sm:$0xff]
    %v3684 = vld [vmem:[#allocation2 + $0x118] sm:$0x3]
    %v3685 = vld [vmem:[#allocation2 + $0x120] sm:$0xff]
    %v3686 = vld [vmem:[#allocation2 + $0x128] sm:$0xff]
    %v3687 = vld [vmem:[#allocation2 + $0x130] sm:$0x3]
    %v3688 = vld [vmem:[#allocation2 + $0x138] sm:$0xff]
    %v3689 = vld [vmem:[#allocation2 + $0x140] sm:$0xff]
    %v3690 = vld [vmem:[#allocation2 + $0x148] sm:$0x3]
    %v3691 = vld [vmem:[#allocation2 + $0x150] sm:$0xff]
    %v3692 = vld [vmem:[#allocation2 + $0x158] sm:$0xff]
    %v3693 = vld [vmem:[#allocation2 + $0x160] sm:$0x3]
    %v3694 = vld [vmem:[#allocation2 + $0x168] sm:$0xff]
    %v3695 = vld [vmem:[#allocation2 + $0x170] sm:$0xff]
    %v3696 = vld [vmem:[#allocation2 + $0x178] sm:$0x3]
    %v3697 = vld [vmem:[#allocation2 + $0x180] sm:$0xff]
    %v3698 = vld [vmem:[#allocation2 + $0x188] sm:$0xff]
    %v3699 = vld [vmem:[#allocation2 + $0x190] sm:$0x3]
    %v3700 = vld [vmem:[#allocation2 + $0x198] sm:$0xff]
    %v3701 = vld [vmem:[#allocation2 + $0x1a0] sm:$0xff]
    %v3702 = vld [vmem:[#allocation2 + $0x1a8] sm:$0x3]
    %v3703 = vld [vmem:[#allocation2 + $0x1b0] sm:$0xff]
    %v3704 = vld [vmem:[#allocation2 + $0x1b8] sm:$0xff]
    %v3705 = vld [vmem:[#allocation2 + $0x1c0] sm:$0x3]
    %v3706 = vld [vmem:[#allocation2 + $0x1c8] sm:$0xff]
    %v3707 = vld [vmem:[#allocation2 + $0x1d0] sm:$0xff]
    %v3708 = vld [vmem:[#allocation2 + $0x1d8] sm:$0x3]
    %v3709 = vld [vmem:[#allocation2 + $0x1e0] sm:$0xff]
    %v3710 = vld [vmem:[#allocation2 + $0x1e8] sm:$0xff]
    %v3711 = vld [vmem:[#allocation2 + $0x1f0] sm:$0x3]
    %v3712 = vld [vmem:[#allocation2 + $0x1f8] sm:$0xff]
    %v3713 = vld [vmem:[#allocation2 + $0x200] sm:$0xff]
    %v3714 = vld [vmem:[#allocation2 + $0x208] sm:$0x3]
    %v3715 = vld [vmem:[#allocation2 + $0x210] sm:$0xff]
    %v3716 = vld [vmem:[#allocation2 + $0x218] sm:$0xff]
    %v3717 = vld [vmem:[#allocation2 + $0x220] sm:$0x3]
    %v3718 = vld [vmem:[#allocation2 + $0x228] sm:$0xff]
    %v3719 = vld [vmem:[#allocation2 + $0x230] sm:$0xff]
    %v3720 = vld [vmem:[#allocation2 + $0x238] sm:$0x3]
    %v3721 = vld [vmem:[#allocation2 + $0x240] sm:$0xff]
    %v3722 = vld [vmem:[#allocation2 + $0x248] sm:$0xff]
    %v3723 = vld [vmem:[#allocation2 + $0x250] sm:$0x3]
    %v3724 = vld [vmem:[#allocation2 + $0x258] sm:$0xff]
    %v3725 = vld [vmem:[#allocation2 + $0x260] sm:$0xff]
    %v3726 = vld [vmem:[#allocation2 + $0x268] sm:$0x3]
    %v3727 = vld [vmem:[#allocation2 + $0x270] sm:$0xff]
    %v3728 = vld [vmem:[#allocation2 + $0x278] sm:$0xff]
    %v3729 = vld [vmem:[#allocation2 + $0x280] sm:$0x3]
    %v3730 = vld [vmem:[#allocation2 + $0x288] sm:$0xff]
    %v3731 = vld [vmem:[#allocation2 + $0x290] sm:$0xff]
    %v3732 = vld [vmem:[#allocation2 + $0x298] sm:$0x3]
    %v3733 = vld [vmem:[#allocation2 + $0x2a0] sm:$0xff]
    %v3734 = vld [vmem:[#allocation2 + $0x2a8] sm:$0xff]
    %v3735 = vld [vmem:[#allocation2 + $0x2b0] sm:$0x3]
    %v3736 = vld [vmem:[#allocation2 + $0x2b8] sm:$0xff]
    %v3737 = vld [vmem:[#allocation2 + $0x2c0] sm:$0xff]
    %v3738 = vld [vmem:[#allocation2 + $0x2c8] sm:$0x3]
    %v3739 = vld [vmem:[#allocation2 + $0x2d0] sm:$0xff]
    %v3740 = vld [vmem:[#allocation2 + $0x2d8] sm:$0xff]
    %v3741 = vld [vmem:[#allocation2 + $0x2e0] sm:$0x3]
    %v3742 = vld [vmem:[#allocation2 + $0x2e8] sm:$0xff]
    %v3743 = vld [vmem:[#allocation2 + $0x2f0] sm:$0xff]
    %v3744 = vld [vmem:[#allocation2 + $0x2f8] sm:$0x3]
    %v3745 = vld [vmem:[#allocation2 + $0x300] sm:$0xff]
    %v3746 = vld [vmem:[#allocation2 + $0x308] sm:$0xff]
    %v3747 = vld [vmem:[#allocation2 + $0x310] sm:$0x3]
    %v3748 = vld [vmem:[#allocation2 + $0x318] sm:$0xff]
    %v3749 = vld [vmem:[#allocation2 + $0x320] sm:$0xff]
    %v3750 = vld [vmem:[#allocation2 + $0x328] sm:$0x3]
    %v3751 = vld [vmem:[#allocation2 + $0x330] sm:$0xff]
    %v3752 = vld [vmem:[#allocation2 + $0x338] sm:$0xff]
    %v3753 = vld [vmem:[#allocation2 + $0x340] sm:$0x3]
    %v3754 = vld [vmem:[#allocation2 + $0x348] sm:$0xff]
    %v3755 = vld [vmem:[#allocation2 + $0x350] sm:$0xff]
    %v3756 = vld [vmem:[#allocation2 + $0x358] sm:$0x3]
    %v3853 = vrot.slane %v3649, 1
    %v3854 = vrot.slane %v3650, 1
    %v3855 = vsel %vm875, %v3853, %v3854
    %v3856 = vrot.slane %v3651, 1
    %v3857 = vsel %vm875, %v3854, %v3856
    %v3858 = vrot.slane %v3652, 1
    %v3859 = vrot.slane %v3653, 1
    %v3860 = vsel %vm875, %v3858, %v3859
    %v3861 = vrot.slane %v3654, 1
    %v3862 = vsel %vm875, %v3859, %v3861
    %v3863 = vrot.slane %v3655, 1
    %v3864 = vrot.slane %v3656, 1
    %v3865 = vsel %vm875, %v3863, %v3864
    %v3866 = vrot.slane %v3657, 1
    %v3867 = vsel %vm875, %v3864, %v3866
    %v3868 = vrot.slane %v3658, 1
    %v3869 = vrot.slane %v3659, 1
    %v3870 = vsel %vm875, %v3868, %v3869
    %v3871 = vrot.slane %v3660, 1
    %v3872 = vsel %vm875, %v3869, %v3871
    %v3873 = vrot.slane %v3661, 1
    %v3874 = vrot.slane %v3662, 1
    %v3875 = vsel %vm875, %v3873, %v3874
    %v3876 = vrot.slane %v3663, 1
    %v3877 = vsel %vm875, %v3874, %v3876
    %v3878 = vrot.slane %v3664, 1
    %v3879 = vrot.slane %v3665, 1
    %v3880 = vsel %vm875, %v3878, %v3879
    %v3881 = vrot.slane %v3666, 1
    %v3882 = vsel %vm875, %v3879, %v3881
    %v3883 = vrot.slane %v3667, 1
    %v3884 = vrot.slane %v3668, 1
    %v3885 = vsel %vm875, %v3883, %v3884
    %v3886 = vrot.slane %v3669, 1
    %v3887 = vsel %vm875, %v3884, %v3886
    %v3888 = vrot.slane %v3670, 1
    %v3889 = vrot.slane %v3671, 1
    %v3890 = vsel %vm875, %v3888, %v3889
    %v3891 = vrot.slane %v3672, 1
    %v3892 = vsel %vm875, %v3889, %v3891
    %v3893 = vrot.slane %v3673, 1
    %v3894 = vrot.slane %v3674, 1
    %v3895 = vsel %vm875, %v3893, %v3894
    %v3896 = vrot.slane %v3675, 1
    %v3897 = vsel %vm875, %v3894, %v3896
    %v3898 = vrot.slane %v3676, 1
    %v3899 = vrot.slane %v3677, 1
    %v3900 = vsel %vm875, %v3898, %v3899
    %v3901 = vrot.slane %v3678, 1
    %v3902 = vsel %vm875, %v3899, %v3901
    %v3903 = vrot.slane %v3679, 1
    %v3904 = vrot.slane %v3680, 1
    %v3905 = vsel %vm875, %v3903, %v3904
    %v3906 = vrot.slane %v3681, 1
    %v3907 = vsel %vm875, %v3904, %v3906
    %v3908 = vrot.slane %v3682, 1
    %v3909 = vrot.slane %v3683, 1
    %v3910 = vsel %vm875, %v3908, %v3909
    %v3911 = vrot.slane %v3684, 1
    %v3912 = vsel %vm875, %v3909, %v3911
    %v3913 = vrot.slane %v3685, 1
    %v3914 = vrot.slane %v3686, 1
    %v3915 = vsel %vm875, %v3913, %v3914
    %v3916 = vrot.slane %v3687, 1
    %v3917 = vsel %vm875, %v3914, %v3916
    %v3918 = vrot.slane %v3688, 1
    %v3919 = vrot.slane %v3689, 1
    %v3920 = vsel %vm875, %v3918, %v3919
    %v3921 = vrot.slane %v3690, 1
    %v3922 = vsel %vm875, %v3919, %v3921
    %v3923 = vrot.slane %v3691, 1
    %v3924 = vrot.slane %v3692, 1
    %v3925 = vsel %vm875, %v3923, %v3924
    %v3926 = vrot.slane %v3693, 1
    %v3927 = vsel %vm875, %v3924, %v3926
    %v3928 = vrot.slane %v3694, 1
    %v3929 = vrot.slane %v3695, 1
    %v3930 = vsel %vm875, %v3928, %v3929
    %v3931 = vrot.slane %v3696, 1
    %v3932 = vsel %vm875, %v3929, %v3931
    %v3933 = vrot.slane %v3703, 1
    %v3934 = vrot.slane %v3704, 1
    %v3935 = vsel %vm875, %v3933, %v3934
    %v3936 = vrot.slane %v3705, 1
    %v3937 = vsel %vm875, %v3934, %v3936
    %v3938 = vrot.slane %v3706, 1
    %v3939 = vrot.slane %v3707, 1
    %v3940 = vsel %vm875, %v3938, %v3939
    %v3941 = vrot.slane %v3708, 1
    %v3942 = vsel %vm875, %v3939, %v3941
    %v3943 = vrot.slane %v3709, 1
    %v3944 = vrot.slane %v3710, 1
    %v3945 = vsel %vm875, %v3943, %v3944
    %v3946 = vrot.slane %v3711, 1
    %v3947 = vsel %vm875, %v3944, %v3946
    %v3948 = vrot.slane %v3712, 1
    %v3949 = vrot.slane %v3713, 1
    %v3950 = vsel %vm875, %v3948, %v3949
    %v3951 = vrot.slane %v3714, 1
    %v3952 = vsel %vm875, %v3949, %v3951
    %v3953 = vrot.slane %v3715, 1
    %v3954 = vrot.slane %v3716, 1
    %v3955 = vsel %vm875, %v3953, %v3954
    %v3956 = vrot.slane %v3717, 1
    %v3957 = vsel %vm875, %v3954, %v3956
    %v3958 = vrot.slane %v3718, 1
    %v3959 = vrot.slane %v3719, 1
    %v3960 = vsel %vm875, %v3958, %v3959
    %v3961 = vrot.slane %v3720, 1
    %v3962 = vsel %vm875, %v3959, %v3961
    %v3963 = vrot.slane %v3721, 1
    %v3964 = vrot.slane %v3722, 1
    %v3965 = vsel %vm875, %v3963, %v3964
    %v3966 = vrot.slane %v3723, 1
    %v3967 = vsel %vm875, %v3964, %v3966
    %v3968 = vrot.slane %v3724, 1
    %v3969 = vrot.slane %v3725, 1
    %v3970 = vsel %vm875, %v3968, %v3969
    %v3971 = vrot.slane %v3726, 1
    %v3972 = vsel %vm875, %v3969, %v3971
    %v3973 = vrot.slane %v3727, 1
    %v3974 = vrot.slane %v3728, 1
    %v3975 = vsel %vm875, %v3973, %v3974
    %v3976 = vrot.slane %v3729, 1
    %v3977 = vsel %vm875, %v3974, %v3976
    %v3978 = vrot.slane %v3730, 1
    %v3979 = vrot.slane %v3731, 1
    %v3980 = vsel %vm875, %v3978, %v3979
    %v3981 = vrot.slane %v3732, 1
    %v3982 = vsel %vm875, %v3979, %v3981
    %v3983 = vrot.slane %v3733, 1
    %v3984 = vrot.slane %v3734, 1
    %v3985 = vsel %vm875, %v3983, %v3984
    %v3986 = vrot.slane %v3735, 1
    %v3987 = vsel %vm875, %v3984, %v3986
    %v3988 = vrot.slane %v3736, 1
    %v3989 = vrot.slane %v3737, 1
    %v3990 = vsel %vm875, %v3988, %v3989
    %v3991 = vrot.slane %v3738, 1
    %v3992 = vsel %vm875, %v3989, %v3991
    %v3993 = vrot.slane %v3739, 1
    %v3994 = vrot.slane %v3740, 1
    %v3995 = vsel %vm875, %v3993, %v3994
    %v3996 = vrot.slane %v3741, 1
    %v3997 = vsel %vm875, %v3994, %v3996
    %v3998 = vrot.slane %v3742, 1
    %v3999 = vrot.slane %v3743, 1
    %v4000 = vsel %vm875, %v3998, %v3999
    %v4001 = vrot.slane %v3744, 1
    %v4002 = vsel %vm875, %v3999, %v4001
    %v4003 = vrot.slane %v3745, 1
    %v4004 = vrot.slane %v3746, 1
    %v4005 = vsel %vm875, %v4003, %v4004
    %v4006 = vrot.slane %v3747, 1
    %v4007 = vsel %vm875, %v4004, %v4006
    %v4008 = vrot.slane %v3748, 1
    %v4009 = vrot.slane %v3749, 1
    %v4010 = vsel %vm875, %v4008, %v4009
    %v4011 = vrot.slane %v3750, 1
    %v4012 = vsel %vm875, %v4009, %v4011
    %v4013 = vrot.slane %v3649, 2
    %v4014 = vrot.slane %v3650, 2
    %v4015 = vsel %vm1036, %v4013, %v4014
    %v4016 = vrot.slane %v3651, 2
    %v4017 = vsel %vm1036, %v4014, %v4016
    %v4018 = vrot.slane %v3652, 2
    %v4019 = vrot.slane %v3653, 2
    %v4020 = vsel %vm1036, %v4018, %v4019
    %v4021 = vrot.slane %v3654, 2
    %v4022 = vsel %vm1036, %v4019, %v4021
    %v4023 = vrot.slane %v3655, 2
    %v4024 = vrot.slane %v3656, 2
    %v4025 = vsel %vm1036, %v4023, %v4024
    %v4026 = vrot.slane %v3657, 2
    %v4027 = vsel %vm1036, %v4024, %v4026
    %v4028 = vrot.slane %v3658, 2
    %v4029 = vrot.slane %v3659, 2
    %v4030 = vsel %vm1036, %v4028, %v4029
    %v4031 = vrot.slane %v3660, 2
    %v4032 = vsel %vm1036, %v4029, %v4031
    %v4033 = vrot.slane %v3661, 2
    %v4034 = vrot.slane %v3662, 2
    %v4035 = vsel %vm1036, %v4033, %v4034
    %v4036 = vrot.slane %v3663, 2
    %v4037 = vsel %vm1036, %v4034, %v4036
    %v4038 = vrot.slane %v3664, 2
    %v4039 = vrot.slane %v3665, 2
    %v4040 = vsel %vm1036, %v4038, %v4039
    %v4041 = vrot.slane %v3666, 2
    %v4042 = vsel %vm1036, %v4039, %v4041
    %v4043 = vrot.slane %v3667, 2
    %v4044 = vrot.slane %v3668, 2
    %v4045 = vsel %vm1036, %v4043, %v4044
    %v4046 = vrot.slane %v3669, 2
    %v4047 = vsel %vm1036, %v4044, %v4046
    %v4048 = vrot.slane %v3670, 2
    %v4049 = vrot.slane %v3671, 2
    %v4050 = vsel %vm1036, %v4048, %v4049
    %v4051 = vrot.slane %v3672, 2
    %v4052 = vsel %vm1036, %v4049, %v4051
    %v4053 = vrot.slane %v3673, 2
    %v4054 = vrot.slane %v3674, 2
    %v4055 = vsel %vm1036, %v4053, %v4054
    %v4056 = vrot.slane %v3675, 2
    %v4057 = vsel %vm1036, %v4054, %v4056
    %v4058 = vrot.slane %v3676, 2
    %v4059 = vrot.slane %v3677, 2
    %v4060 = vsel %vm1036, %v4058, %v4059
    %v4061 = vrot.slane %v3678, 2
    %v4062 = vsel %vm1036, %v4059, %v4061
    %v4063 = vrot.slane %v3679, 2
    %v4064 = vrot.slane %v3680, 2
    %v4065 = vsel %vm1036, %v4063, %v4064
    %v4066 = vrot.slane %v3681, 2
    %v4067 = vsel %vm1036, %v4064, %v4066
    %v4068 = vrot.slane %v3682, 2
    %v4069 = vrot.slane %v3683, 2
    %v4070 = vsel %vm1036, %v4068, %v4069
    %v4071 = vrot.slane %v3684, 2
    %v4072 = vsel %vm1036, %v4069, %v4071
    %v4073 = vrot.slane %v3685, 2
    %v4074 = vrot.slane %v3686, 2
    %v4075 = vsel %vm1036, %v4073, %v4074
    %v4076 = vrot.slane %v3687, 2
    %v4077 = vsel %vm1036, %v4074, %v4076
    %v4078 = vrot.slane %v3688, 2
    %v4079 = vrot.slane %v3689, 2
    %v4080 = vsel %vm1036, %v4078, %v4079
    %v4081 = vrot.slane %v3690, 2
    %v4082 = vsel %vm1036, %v4079, %v4081
    %v4083 = vrot.slane %v3691, 2
    %v4084 = vrot.slane %v3692, 2
    %v4085 = vsel %vm1036, %v4083, %v4084
    %v4086 = vrot.slane %v3693, 2
    %v4087 = vsel %vm1036, %v4084, %v4086
    %v4088 = vrot.slane %v3694, 2
    %v4089 = vrot.slane %v3695, 2
    %v4090 = vsel %vm1036, %v4088, %v4089
    %v4091 = vrot.slane %v3696, 2
    %v4092 = vsel %vm1036, %v4089, %v4091
    %v4093 = vrot.slane %v3703, 2
    %v4094 = vrot.slane %v3704, 2
    %v4095 = vsel %vm1036, %v4093, %v4094
    %v4096 = vrot.slane %v3705, 2
    %v4097 = vsel %vm1036, %v4094, %v4096
    %v4098 = vrot.slane %v3706, 2
    %v4099 = vrot.slane %v3707, 2
    %v4100 = vsel %vm1036, %v4098, %v4099
    %v4101 = vrot.slane %v3708, 2
    %v4102 = vsel %vm1036, %v4099, %v4101
    %v4103 = vrot.slane %v3709, 2
    %v4104 = vrot.slane %v3710, 2
    %v4105 = vsel %vm1036, %v4103, %v4104
    %v4106 = vrot.slane %v3711, 2
    %v4107 = vsel %vm1036, %v4104, %v4106
    %v4108 = vrot.slane %v3712, 2
    %v4109 = vrot.slane %v3713, 2
    %v4110 = vsel %vm1036, %v4108, %v4109
    %v4111 = vrot.slane %v3714, 2
    %v4112 = vsel %vm1036, %v4109, %v4111
    %v4113 = vrot.slane %v3715, 2
    %v4114 = vrot.slane %v3716, 2
    %v4115 = vsel %vm1036, %v4113, %v4114
    %v4116 = vrot.slane %v3717, 2
    %v4117 = vsel %vm1036, %v4114, %v4116
    %v4118 = vrot.slane %v3718, 2
    %v4119 = vrot.slane %v3719, 2
    %v4120 = vsel %vm1036, %v4118, %v4119
    %v4121 = vrot.slane %v3720, 2
    %v4122 = vsel %vm1036, %v4119, %v4121
    %v4123 = vrot.slane %v3721, 2
    %v4124 = vrot.slane %v3722, 2
    %v4125 = vsel %vm1036, %v4123, %v4124
    %v4126 = vrot.slane %v3723, 2
    %v4127 = vsel %vm1036, %v4124, %v4126
    %v4128 = vrot.slane %v3724, 2
    %v4129 = vrot.slane %v3725, 2
    %v4130 = vsel %vm1036, %v4128, %v4129
    %v4131 = vrot.slane %v3726, 2
    %v4132 = vsel %vm1036, %v4129, %v4131
    %v4133 = vrot.slane %v3727, 2
    %v4134 = vrot.slane %v3728, 2
    %v4135 = vsel %vm1036, %v4133, %v4134
    %v4136 = vrot.slane %v3729, 2
    %v4137 = vsel %vm1036, %v4134, %v4136
    %v4138 = vrot.slane %v3730, 2
    %v4139 = vrot.slane %v3731, 2
    %v4140 = vsel %vm1036, %v4138, %v4139
    %v4141 = vrot.slane %v3732, 2
    %v4142 = vsel %vm1036, %v4139, %v4141
    %v4143 = vrot.slane %v3733, 2
    %v4144 = vrot.slane %v3734, 2
    %v4145 = vsel %vm1036, %v4143, %v4144
    %v4146 = vrot.slane %v3735, 2
    %v4147 = vsel %vm1036, %v4144, %v4146
    %v4148 = vrot.slane %v3736, 2
    %v4149 = vrot.slane %v3737, 2
    %v4150 = vsel %vm1036, %v4148, %v4149
    %v4151 = vrot.slane %v3738, 2
    %v4152 = vsel %vm1036, %v4149, %v4151
    %v4153 = vrot.slane %v3739, 2
    %v4154 = vrot.slane %v3740, 2
    %v4155 = vsel %vm1036, %v4153, %v4154
    %v4156 = vrot.slane %v3741, 2
    %v4157 = vsel %vm1036, %v4154, %v4156
    %v4158 = vrot.slane %v3742, 2
    %v4159 = vrot.slane %v3743, 2
    %v4160 = vsel %vm1036, %v4158, %v4159
    %v4161 = vrot.slane %v3744, 2
    %v4162 = vsel %vm1036, %v4159, %v4161
    %v4163 = vrot.slane %v3745, 2
    %v4164 = vrot.slane %v3746, 2
    %v4165 = vsel %vm1036, %v4163, %v4164
    %v4166 = vrot.slane %v3747, 2
    %v4167 = vsel %vm1036, %v4164, %v4166
    %v4168 = vrot.slane %v3748, 2
    %v4169 = vrot.slane %v3749, 2
    %v4170 = vsel %vm1036, %v4168, %v4169
    %v4171 = vrot.slane %v3750, 2
    %v4172 = vsel %vm1036, %v4169, %v4171
    %v4179 = vrot.slane %v3697, 1
    %v4180 = vrot.slane %v3698, 1
    %v4181 = vsel %vm875, %v4179, %v4180
    %v4182 = vrot.slane %v3699, 1
    %v4183 = vsel %vm875, %v4180, %v4182
    %v4184 = vrot.slane %v3751, 1
    %v4185 = vrot.slane %v3752, 1
    %v4186 = vsel %vm875, %v4184, %v4185
    %v4187 = vrot.slane %v3753, 1
    %v4188 = vsel %vm875, %v4185, %v4187
    %v4189 = vrot.slane %v3697, 2
    %v4190 = vrot.slane %v3698, 2
    %v4191 = vsel %vm1036, %v4189, %v4190
    %v4192 = vrot.slane %v3699, 2
    %v4193 = vsel %vm1036, %v4190, %v4192
    %v4194 = vrot.slane %v3751, 2
    %v4195 = vrot.slane %v3752, 2
    %v4196 = vsel %vm1036, %v4194, %v4195
    %v4197 = vrot.slane %v3753, 2
    %v4198 = vsel %vm1036, %v4195, %v4197
    %v4205 = vrot.slane %v3700, 1
    %v4206 = vrot.slane %v3701, 1
    %v4207 = vsel %vm875, %v4205, %v4206
    %v4208 = vrot.slane %v3702, 1
    %v4209 = vsel %vm875, %v4206, %v4208
    %v4210 = vrot.slane %v3754, 1
    %v4211 = vrot.slane %v3755, 1
    %v4212 = vsel %vm875, %v4210, %v4211
    %v4213 = vrot.slane %v3756, 1
    %v4214 = vsel %vm875, %v4211, %v4213
    %v4215 = vrot.slane %v3700, 2
    %v4216 = vrot.slane %v3701, 2
    %v4217 = vsel %vm1036, %v4215, %v4216
    %v4218 = vrot.slane %v3702, 2
    %v4219 = vsel %vm1036, %v4216, %v4218
    %v4220 = vrot.slane %v3754, 2
    %v4221 = vrot.slane %v3755, 2
    %v4222 = vsel %vm1036, %v4220, %v4221
    %v4223 = vrot.slane %v3756, 2
    %v4224 = vsel %vm1036, %v4221, %v4223
    %4225 = vrot.lane.b32.xlu0 %v3855, 16
    %v4226 = vpop.permute.xlu0 %4225
    %4227 = vrot.lane.b32.xlu0 %v3857, 16
    %v4228 = vpop.permute.xlu0 %4227
    %4229 = vrot.lane.b32.xlu0 %v3860, 16
    %v4230 = vpop.permute.xlu0 %4229
    %4231 = vrot.lane.b32.xlu0 %v3862, 16
    %v4232 = vpop.permute.xlu0 %4231
    %4233 = vrot.lane.b32.xlu0 %v3865, 16
    %v4234 = vpop.permute.xlu0 %4233
    %4235 = vrot.lane.b32.xlu0 %v3867, 16
    %v4236 = vpop.permute.xlu0 %4235
    %4237 = vrot.lane.b32.xlu0 %v3870, 16
    %v4238 = vpop.permute.xlu0 %4237
    %4239 = vrot.lane.b32.xlu0 %v3872, 16
    %v4240 = vpop.permute.xlu0 %4239
    %4241 = vrot.lane.b32.xlu0 %v3875, 16
    %v4242 = vpop.permute.xlu0 %4241
    %4243 = vrot.lane.b32.xlu0 %v3877, 16
    %v4244 = vpop.permute.xlu0 %4243
    %4245 = vrot.lane.b32.xlu0 %v3880, 16
    %v4246 = vpop.permute.xlu0 %4245
    %4247 = vrot.lane.b32.xlu0 %v3882, 16
    %v4248 = vpop.permute.xlu0 %4247
    %4249 = vrot.lane.b32.xlu0 %v3885, 16
    %v4250 = vpop.permute.xlu0 %4249
    %4251 = vrot.lane.b32.xlu0 %v3887, 16
    %v4252 = vpop.permute.xlu0 %4251
    %4253 = vrot.lane.b32.xlu0 %v3890, 16
    %v4254 = vpop.permute.xlu0 %4253
    %4255 = vrot.lane.b32.xlu0 %v3892, 16
    %v4256 = vpop.permute.xlu0 %4255
    %4257 = vrot.lane.b32.xlu0 %v3895, 16
    %v4258 = vpop.permute.xlu0 %4257
    %4259 = vrot.lane.b32.xlu0 %v3897, 16
    %v4260 = vpop.permute.xlu0 %4259
    %4261 = vrot.lane.b32.xlu0 %v3900, 16
    %v4262 = vpop.permute.xlu0 %4261
    %4263 = vrot.lane.b32.xlu0 %v3902, 16
    %v4264 = vpop.permute.xlu0 %4263
    %4265 = vrot.lane.b32.xlu0 %v3905, 16
    %v4266 = vpop.permute.xlu0 %4265
    %4267 = vrot.lane.b32.xlu0 %v3907, 16
    %v4268 = vpop.permute.xlu0 %4267
    %4269 = vrot.lane.b32.xlu0 %v3910, 16
    %v4270 = vpop.permute.xlu0 %4269
    %4271 = vrot.lane.b32.xlu0 %v3912, 16
    %v4272 = vpop.permute.xlu0 %4271
    %4273 = vrot.lane.b32.xlu0 %v3915, 16
    %v4274 = vpop.permute.xlu0 %4273
    %4275 = vrot.lane.b32.xlu0 %v3917, 16
    %v4276 = vpop.permute.xlu0 %4275
    %4277 = vrot.lane.b32.xlu0 %v3920, 16
    %v4278 = vpop.permute.xlu0 %4277
    %4279 = vrot.lane.b32.xlu0 %v3922, 16
    %v4280 = vpop.permute.xlu0 %4279
    %4281 = vrot.lane.b32.xlu0 %v3925, 16
    %v4282 = vpop.permute.xlu0 %4281
    %4283 = vrot.lane.b32.xlu0 %v3927, 16
    %v4284 = vpop.permute.xlu0 %4283
    %4285 = vrot.lane.b32.xlu0 %v3930, 16
    %v4286 = vpop.permute.xlu0 %4285
    %4287 = vrot.lane.b32.xlu0 %v3932, 16
    %v4288 = vpop.permute.xlu0 %4287
    %4289 = vrot.lane.b32.xlu0 %v3935, 16
    %v4290 = vpop.permute.xlu0 %4289
    %4291 = vrot.lane.b32.xlu0 %v3937, 16
    %v4292 = vpop.permute.xlu0 %4291
    %4293 = vrot.lane.b32.xlu0 %v3940, 16
    %v4294 = vpop.permute.xlu0 %4293
    %4295 = vrot.lane.b32.xlu0 %v3942, 16
    %v4296 = vpop.permute.xlu0 %4295
    %4297 = vrot.lane.b32.xlu0 %v3945, 16
    %v4298 = vpop.permute.xlu0 %4297
    %4299 = vrot.lane.b32.xlu0 %v3947, 16
    %v4300 = vpop.permute.xlu0 %4299
    %4301 = vrot.lane.b32.xlu0 %v3950, 16
    %v4302 = vpop.permute.xlu0 %4301
    %4303 = vrot.lane.b32.xlu0 %v3952, 16
    %v4304 = vpop.permute.xlu0 %4303
    %4305 = vrot.lane.b32.xlu0 %v3955, 16
    %v4306 = vpop.permute.xlu0 %4305
    %4307 = vrot.lane.b32.xlu0 %v3957, 16
    %v4308 = vpop.permute.xlu0 %4307
    %4309 = vrot.lane.b32.xlu0 %v3960, 16
    %v4310 = vpop.permute.xlu0 %4309
    %4311 = vrot.lane.b32.xlu0 %v3962, 16
    %v4312 = vpop.permute.xlu0 %4311
    %4313 = vrot.lane.b32.xlu0 %v3965, 16
    %v4314 = vpop.permute.xlu0 %4313
    %4315 = vrot.lane.b32.xlu0 %v3967, 16
    %v4316 = vpop.permute.xlu0 %4315
    %4317 = vrot.lane.b32.xlu0 %v3970, 16
    %v4318 = vpop.permute.xlu0 %4317
    %4319 = vrot.lane.b32.xlu0 %v3972, 16
    %v4320 = vpop.permute.xlu0 %4319
    %4321 = vrot.lane.b32.xlu0 %v3975, 16
    %v4322 = vpop.permute.xlu0 %4321
    %4323 = vrot.lane.b32.xlu0 %v3977, 16
    %v4324 = vpop.permute.xlu0 %4323
    %4325 = vrot.lane.b32.xlu0 %v3980, 16
    %v4326 = vpop.permute.xlu0 %4325
    %4327 = vrot.lane.b32.xlu0 %v3982, 16
    %v4328 = vpop.permute.xlu0 %4327
    %4329 = vrot.lane.b32.xlu0 %v3985, 16
    %v4330 = vpop.permute.xlu0 %4329
    %4331 = vrot.lane.b32.xlu0 %v3987, 16
    %v4332 = vpop.permute.xlu0 %4331
    %4333 = vrot.lane.b32.xlu0 %v3990, 16
    %v4334 = vpop.permute.xlu0 %4333
    %4335 = vrot.lane.b32.xlu0 %v3992, 16
    %v4336 = vpop.permute.xlu0 %4335
    %4337 = vrot.lane.b32.xlu0 %v3995, 16
    %v4338 = vpop.permute.xlu0 %4337
    %4339 = vrot.lane.b32.xlu0 %v3997, 16
    %v4340 = vpop.permute.xlu0 %4339
    %4341 = vrot.lane.b32.xlu0 %v4000, 16
    %v4342 = vpop.permute.xlu0 %4341
    %4343 = vrot.lane.b32.xlu0 %v4002, 16
    %v4344 = vpop.permute.xlu0 %4343
    %4345 = vrot.lane.b32.xlu0 %v4005, 16
    %v4346 = vpop.permute.xlu0 %4345
    %4347 = vrot.lane.b32.xlu0 %v4007, 16
    %v4348 = vpop.permute.xlu0 %4347
    %4349 = vrot.lane.b32.xlu0 %v4010, 16
    %v4350 = vpop.permute.xlu0 %4349
    %4351 = vrot.lane.b32.xlu0 %v4012, 16
    %v4352 = vpop.permute.xlu0 %4351
    %4417 = vrot.lane.b32.xlu0 %v4015, 32
    %v4418 = vpop.permute.xlu0 %4417
    %4419 = vrot.lane.b32.xlu0 %v4017, 32
    %v4420 = vpop.permute.xlu0 %4419
    %4421 = vrot.lane.b32.xlu0 %v4020, 32
    %v4422 = vpop.permute.xlu0 %4421
    %4423 = vrot.lane.b32.xlu0 %v4022, 32
    %v4424 = vpop.permute.xlu0 %4423
    %4425 = vrot.lane.b32.xlu0 %v4025, 32
    %v4426 = vpop.permute.xlu0 %4425
    %4427 = vrot.lane.b32.xlu0 %v4027, 32
    %v4428 = vpop.permute.xlu0 %4427
    %4429 = vrot.lane.b32.xlu0 %v4030, 32
    %v4430 = vpop.permute.xlu0 %4429
    %4431 = vrot.lane.b32.xlu0 %v4032, 32
    %v4432 = vpop.permute.xlu0 %4431
    %4433 = vrot.lane.b32.xlu0 %v4035, 32
    %v4434 = vpop.permute.xlu0 %4433
    %4435 = vrot.lane.b32.xlu0 %v4037, 32
    %v4436 = vpop.permute.xlu0 %4435
    %4437 = vrot.lane.b32.xlu0 %v4040, 32
    %v4438 = vpop.permute.xlu0 %4437
    %4439 = vrot.lane.b32.xlu0 %v4042, 32
    %v4440 = vpop.permute.xlu0 %4439
    %4441 = vrot.lane.b32.xlu0 %v4045, 32
    %v4442 = vpop.permute.xlu0 %4441
    %4443 = vrot.lane.b32.xlu0 %v4047, 32
    %v4444 = vpop.permute.xlu0 %4443
    %4445 = vrot.lane.b32.xlu0 %v4050, 32
    %v4446 = vpop.permute.xlu0 %4445
    %4447 = vrot.lane.b32.xlu0 %v4052, 32
    %v4448 = vpop.permute.xlu0 %4447
    %4449 = vrot.lane.b32.xlu0 %v4055, 32
    %v4450 = vpop.permute.xlu0 %4449
    %4451 = vrot.lane.b32.xlu0 %v4057, 32
    %v4452 = vpop.permute.xlu0 %4451
    %4453 = vrot.lane.b32.xlu0 %v4060, 32
    %v4454 = vpop.permute.xlu0 %4453
    %4455 = vrot.lane.b32.xlu0 %v4062, 32
    %v4456 = vpop.permute.xlu0 %4455
    %4457 = vrot.lane.b32.xlu0 %v4065, 32
    %v4458 = vpop.permute.xlu0 %4457
    %4459 = vrot.lane.b32.xlu0 %v4067, 32
    %v4460 = vpop.permute.xlu0 %4459
    %4461 = vrot.lane.b32.xlu0 %v4070, 32
    %v4462 = vpop.permute.xlu0 %4461
    %4463 = vrot.lane.b32.xlu0 %v4072, 32
    %v4464 = vpop.permute.xlu0 %4463
    %4465 = vrot.lane.b32.xlu0 %v4075, 32
    %v4466 = vpop.permute.xlu0 %4465
    %4467 = vrot.lane.b32.xlu0 %v4077, 32
    %v4468 = vpop.permute.xlu0 %4467
    %4469 = vrot.lane.b32.xlu0 %v4080, 32
    %v4470 = vpop.permute.xlu0 %4469
    %4471 = vrot.lane.b32.xlu0 %v4082, 32
    %v4472 = vpop.permute.xlu0 %4471
    %4473 = vrot.lane.b32.xlu0 %v4085, 32
    %v4474 = vpop.permute.xlu0 %4473
    %4475 = vrot.lane.b32.xlu0 %v4087, 32
    %v4476 = vpop.permute.xlu0 %4475
    %4477 = vrot.lane.b32.xlu0 %v4090, 32
    %v4478 = vpop.permute.xlu0 %4477
    %4479 = vrot.lane.b32.xlu0 %v4092, 32
    %v4480 = vpop.permute.xlu0 %4479
    %4481 = vrot.lane.b32.xlu0 %v4095, 32
    %v4482 = vpop.permute.xlu0 %4481
    %4483 = vrot.lane.b32.xlu0 %v4097, 32
    %v4484 = vpop.permute.xlu0 %4483
    %4485 = vrot.lane.b32.xlu0 %v4100, 32
    %v4486 = vpop.permute.xlu0 %4485
    %4487 = vrot.lane.b32.xlu0 %v4102, 32
    %v4488 = vpop.permute.xlu0 %4487
    %4489 = vrot.lane.b32.xlu0 %v4105, 32
    %v4490 = vpop.permute.xlu0 %4489
    %4491 = vrot.lane.b32.xlu0 %v4107, 32
    %v4492 = vpop.permute.xlu0 %4491
    %4493 = vrot.lane.b32.xlu0 %v4110, 32
    %v4494 = vpop.permute.xlu0 %4493
    %4495 = vrot.lane.b32.xlu0 %v4112, 32
    %v4496 = vpop.permute.xlu0 %4495
    %4497 = vrot.lane.b32.xlu0 %v4115, 32
    %v4498 = vpop.permute.xlu0 %4497
    %4499 = vrot.lane.b32.xlu0 %v4117, 32
    %v4500 = vpop.permute.xlu0 %4499
    %4501 = vrot.lane.b32.xlu0 %v4120, 32
    %v4502 = vpop.permute.xlu0 %4501
    %4503 = vrot.lane.b32.xlu0 %v4122, 32
    %v4504 = vpop.permute.xlu0 %4503
    %4505 = vrot.lane.b32.xlu0 %v4125, 32
    %v4506 = vpop.permute.xlu0 %4505
    %4507 = vrot.lane.b32.xlu0 %v4127, 32
    %v4508 = vpop.permute.xlu0 %4507
    %4509 = vrot.lane.b32.xlu0 %v4130, 32
    %v4510 = vpop.permute.xlu0 %4509
    %4511 = vrot.lane.b32.xlu0 %v4132, 32
    %v4512 = vpop.permute.xlu0 %4511
    %4513 = vrot.lane.b32.xlu0 %v4135, 32
    %v4514 = vpop.permute.xlu0 %4513
    %4515 = vrot.lane.b32.xlu0 %v4137, 32
    %v4516 = vpop.permute.xlu0 %4515
    %4517 = vrot.lane.b32.xlu0 %v4140, 32
    %v4518 = vpop.permute.xlu0 %4517
    %4519 = vrot.lane.b32.xlu0 %v4142, 32
    %v4520 = vpop.permute.xlu0 %4519
    %4521 = vrot.lane.b32.xlu0 %v4145, 32
    %v4522 = vpop.permute.xlu0 %4521
    %4523 = vrot.lane.b32.xlu0 %v4147, 32
    %v4524 = vpop.permute.xlu0 %4523
    %4525 = vrot.lane.b32.xlu0 %v4150, 32
    %v4526 = vpop.permute.xlu0 %4525
    %4527 = vrot.lane.b32.xlu0 %v4152, 32
    %v4528 = vpop.permute.xlu0 %4527
    %4529 = vrot.lane.b32.xlu0 %v4155, 32
    %v4530 = vpop.permute.xlu0 %4529
    %4531 = vrot.lane.b32.xlu0 %v4157, 32
    %v4532 = vpop.permute.xlu0 %4531
    %4533 = vrot.lane.b32.xlu0 %v4160, 32
    %v4534 = vpop.permute.xlu0 %4533
    %4535 = vrot.lane.b32.xlu0 %v4162, 32
    %v4536 = vpop.permute.xlu0 %4535
    %4537 = vrot.lane.b32.xlu0 %v4165, 32
    %v4538 = vpop.permute.xlu0 %4537
    %4539 = vrot.lane.b32.xlu0 %v4167, 32
    %v4540 = vpop.permute.xlu0 %4539
    %4541 = vrot.lane.b32.xlu0 %v4170, 32
    %v4542 = vpop.permute.xlu0 %4541
    %4543 = vrot.lane.b32.xlu0 %v4172, 32
    %v4544 = vpop.permute.xlu0 %4543
    %4609 = vrot.lane.b32.xlu0 %v3652, 48
    %v4610 = vpop.permute.xlu0 %4609
    %4611 = vrot.lane.b32.xlu0 %v3653, 48
    %v4612 = vpop.permute.xlu0 %4611
    %4613 = vrot.lane.b32.xlu0 %v3655, 48
    %v4614 = vpop.permute.xlu0 %4613
    %4615 = vrot.lane.b32.xlu0 %v3656, 48
    %v4616 = vpop.permute.xlu0 %4615
    %4617 = vrot.lane.b32.xlu0 %v3658, 48
    %v4618 = vpop.permute.xlu0 %4617
    %4619 = vrot.lane.b32.xlu0 %v3659, 48
    %v4620 = vpop.permute.xlu0 %4619
    %4621 = vrot.lane.b32.xlu0 %v3661, 48
    %v4622 = vpop.permute.xlu0 %4621
    %4623 = vrot.lane.b32.xlu0 %v3662, 48
    %v4624 = vpop.permute.xlu0 %4623
    %4625 = vrot.lane.b32.xlu0 %v3664, 48
    %v4626 = vpop.permute.xlu0 %4625
    %4627 = vrot.lane.b32.xlu0 %v3665, 48
    %v4628 = vpop.permute.xlu0 %4627
    %4629 = vrot.lane.b32.xlu0 %v3667, 48
    %v4630 = vpop.permute.xlu0 %4629
    %4631 = vrot.lane.b32.xlu0 %v3668, 48
    %v4632 = vpop.permute.xlu0 %4631
    %4633 = vrot.lane.b32.xlu0 %v3670, 48
    %v4634 = vpop.permute.xlu0 %4633
    %4635 = vrot.lane.b32.xlu0 %v3671, 48
    %v4636 = vpop.permute.xlu0 %4635
    %4637 = vrot.lane.b32.xlu0 %v3673, 48
    %v4638 = vpop.permute.xlu0 %4637
    %4639 = vrot.lane.b32.xlu0 %v3674, 48
    %v4640 = vpop.permute.xlu0 %4639
    %4641 = vrot.lane.b32.xlu0 %v3676, 48
    %v4642 = vpop.permute.xlu0 %4641
    %4643 = vrot.lane.b32.xlu0 %v3677, 48
    %v4644 = vpop.permute.xlu0 %4643
    %4645 = vrot.lane.b32.xlu0 %v3679, 48
    %v4646 = vpop.permute.xlu0 %4645
    %4647 = vrot.lane.b32.xlu0 %v3680, 48
    %v4648 = vpop.permute.xlu0 %4647
    %4649 = vrot.lane.b32.xlu0 %v3682, 48
    %v4650 = vpop.permute.xlu0 %4649
    %4651 = vrot.lane.b32.xlu0 %v3683, 48
    %v4652 = vpop.permute.xlu0 %4651
    %4653 = vrot.lane.b32.xlu0 %v3685, 48
    %v4654 = vpop.permute.xlu0 %4653
    %4655 = vrot.lane.b32.xlu0 %v3686, 48
    %v4656 = vpop.permute.xlu0 %4655
    %4657 = vrot.lane.b32.xlu0 %v3688, 48
    %v4658 = vpop.permute.xlu0 %4657
    %4659 = vrot.lane.b32.xlu0 %v3689, 48
    %v4660 = vpop.permute.xlu0 %4659
    %4661 = vrot.lane.b32.xlu0 %v3691, 48
    %v4662 = vpop.permute.xlu0 %4661
    %4663 = vrot.lane.b32.xlu0 %v3692, 48
    %v4664 = vpop.permute.xlu0 %4663
    %4665 = vrot.lane.b32.xlu0 %v3694, 48
    %v4666 = vpop.permute.xlu0 %4665
    %4667 = vrot.lane.b32.xlu0 %v3695, 48
    %v4668 = vpop.permute.xlu0 %4667
    %4669 = vrot.lane.b32.xlu0 %v3697, 48
    %v4670 = vpop.permute.xlu0 %4669
    %4671 = vrot.lane.b32.xlu0 %v3698, 48
    %v4672 = vpop.permute.xlu0 %4671
    %4673 = vrot.lane.b32.xlu0 %v3706, 48
    %v4674 = vpop.permute.xlu0 %4673
    %4675 = vrot.lane.b32.xlu0 %v3707, 48
    %v4676 = vpop.permute.xlu0 %4675
    %4677 = vrot.lane.b32.xlu0 %v3709, 48
    %v4678 = vpop.permute.xlu0 %4677
    %4679 = vrot.lane.b32.xlu0 %v3710, 48
    %v4680 = vpop.permute.xlu0 %4679
    %4681 = vrot.lane.b32.xlu0 %v3712, 48
    %v4682 = vpop.permute.xlu0 %4681
    %4683 = vrot.lane.b32.xlu0 %v3713, 48
    %v4684 = vpop.permute.xlu0 %4683
    %4685 = vrot.lane.b32.xlu0 %v3715, 48
    %v4686 = vpop.permute.xlu0 %4685
    %4687 = vrot.lane.b32.xlu0 %v3716, 48
    %v4688 = vpop.permute.xlu0 %4687
    %4689 = vrot.lane.b32.xlu0 %v3718, 48
    %v4690 = vpop.permute.xlu0 %4689
    %4691 = vrot.lane.b32.xlu0 %v3719, 48
    %v4692 = vpop.permute.xlu0 %4691
    %4693 = vrot.lane.b32.xlu0 %v3721, 48
    %v4694 = vpop.permute.xlu0 %4693
    %4695 = vrot.lane.b32.xlu0 %v3722, 48
    %v4696 = vpop.permute.xlu0 %4695
    %4697 = vrot.lane.b32.xlu0 %v3724, 48
    %v4698 = vpop.permute.xlu0 %4697
    %4699 = vrot.lane.b32.xlu0 %v3725, 48
    %v4700 = vpop.permute.xlu0 %4699
    %4701 = vrot.lane.b32.xlu0 %v3727, 48
    %v4702 = vpop.permute.xlu0 %4701
    %4703 = vrot.lane.b32.xlu0 %v3728, 48
    %v4704 = vpop.permute.xlu0 %4703
    %4705 = vrot.lane.b32.xlu0 %v3730, 48
    %v4706 = vpop.permute.xlu0 %4705
    %4707 = vrot.lane.b32.xlu0 %v3731, 48
    %v4708 = vpop.permute.xlu0 %4707
    %4709 = vrot.lane.b32.xlu0 %v3733, 48
    %v4710 = vpop.permute.xlu0 %4709
    %4711 = vrot.lane.b32.xlu0 %v3734, 48
    %v4712 = vpop.permute.xlu0 %4711
    %4713 = vrot.lane.b32.xlu0 %v3736, 48
    %v4714 = vpop.permute.xlu0 %4713
    %4715 = vrot.lane.b32.xlu0 %v3737, 48
    %v4716 = vpop.permute.xlu0 %4715
    %4717 = vrot.lane.b32.xlu0 %v3739, 48
    %v4718 = vpop.permute.xlu0 %4717
    %4719 = vrot.lane.b32.xlu0 %v3740, 48
    %v4720 = vpop.permute.xlu0 %4719
    %4721 = vrot.lane.b32.xlu0 %v3742, 48
    %v4722 = vpop.permute.xlu0 %4721
    %4723 = vrot.lane.b32.xlu0 %v3743, 48
    %v4724 = vpop.permute.xlu0 %4723
    %4725 = vrot.lane.b32.xlu0 %v3745, 48
    %v4726 = vpop.permute.xlu0 %4725
    %4727 = vrot.lane.b32.xlu0 %v3746, 48
    %v4728 = vpop.permute.xlu0 %4727
    %4729 = vrot.lane.b32.xlu0 %v3748, 48
    %v4730 = vpop.permute.xlu0 %4729
    %4731 = vrot.lane.b32.xlu0 %v3749, 48
    %v4732 = vpop.permute.xlu0 %4731
    %4733 = vrot.lane.b32.xlu0 %v3751, 48
    %v4734 = vpop.permute.xlu0 %4733
    %4735 = vrot.lane.b32.xlu0 %v3752, 48
    %v4736 = vpop.permute.xlu0 %4735
    %4801 = vrot.lane.b32.xlu0 %v3860, 64
    %v4802 = vpop.permute.xlu0 %4801
    %4803 = vrot.lane.b32.xlu0 %v3862, 64
    %v4804 = vpop.permute.xlu0 %4803
    %4805 = vrot.lane.b32.xlu0 %v3865, 64
    %v4806 = vpop.permute.xlu0 %4805
    %4807 = vrot.lane.b32.xlu0 %v3867, 64
    %v4808 = vpop.permute.xlu0 %4807
    %4809 = vrot.lane.b32.xlu0 %v3870, 64
    %v4810 = vpop.permute.xlu0 %4809
    %4811 = vrot.lane.b32.xlu0 %v3872, 64
    %v4812 = vpop.permute.xlu0 %4811
    %4813 = vrot.lane.b32.xlu0 %v3875, 64
    %v4814 = vpop.permute.xlu0 %4813
    %4815 = vrot.lane.b32.xlu0 %v3877, 64
    %v4816 = vpop.permute.xlu0 %4815
    %4817 = vrot.lane.b32.xlu0 %v3880, 64
    %v4818 = vpop.permute.xlu0 %4817
    %4819 = vrot.lane.b32.xlu0 %v3882, 64
    %v4820 = vpop.permute.xlu0 %4819
    %4821 = vrot.lane.b32.xlu0 %v3885, 64
    %v4822 = vpop.permute.xlu0 %4821
    %4823 = vrot.lane.b32.xlu0 %v3887, 64
    %v4824 = vpop.permute.xlu0 %4823
    %4825 = vrot.lane.b32.xlu0 %v3890, 64
    %v4826 = vpop.permute.xlu0 %4825
    %4827 = vrot.lane.b32.xlu0 %v3892, 64
    %v4828 = vpop.permute.xlu0 %4827
    %4829 = vrot.lane.b32.xlu0 %v3895, 64
    %v4830 = vpop.permute.xlu0 %4829
    %4831 = vrot.lane.b32.xlu0 %v3897, 64
    %v4832 = vpop.permute.xlu0 %4831
    %4833 = vrot.lane.b32.xlu0 %v3900, 64
    %v4834 = vpop.permute.xlu0 %4833
    %4835 = vrot.lane.b32.xlu0 %v3902, 64
    %v4836 = vpop.permute.xlu0 %4835
    %4837 = vrot.lane.b32.xlu0 %v3905, 64
    %v4838 = vpop.permute.xlu0 %4837
    %4839 = vrot.lane.b32.xlu0 %v3907, 64
    %v4840 = vpop.permute.xlu0 %4839
    %4841 = vrot.lane.b32.xlu0 %v3910, 64
    %v4842 = vpop.permute.xlu0 %4841
    %4843 = vrot.lane.b32.xlu0 %v3912, 64
    %v4844 = vpop.permute.xlu0 %4843
    %4845 = vrot.lane.b32.xlu0 %v3915, 64
    %v4846 = vpop.permute.xlu0 %4845
    %4847 = vrot.lane.b32.xlu0 %v3917, 64
    %v4848 = vpop.permute.xlu0 %4847
    %4849 = vrot.lane.b32.xlu0 %v3920, 64
    %v4850 = vpop.permute.xlu0 %4849
    %4851 = vrot.lane.b32.xlu0 %v3922, 64
    %v4852 = vpop.permute.xlu0 %4851
    %4853 = vrot.lane.b32.xlu0 %v3925, 64
    %v4854 = vpop.permute.xlu0 %4853
    %4855 = vrot.lane.b32.xlu0 %v3927, 64
    %v4856 = vpop.permute.xlu0 %4855
    %4857 = vrot.lane.b32.xlu0 %v3930, 64
    %v4858 = vpop.permute.xlu0 %4857
    %4859 = vrot.lane.b32.xlu0 %v3932, 64
    %v4860 = vpop.permute.xlu0 %4859
    %4861 = vrot.lane.b32.xlu0 %v4181, 64
    %v4862 = vpop.permute.xlu0 %4861
    %4863 = vrot.lane.b32.xlu0 %v4183, 64
    %v4864 = vpop.permute.xlu0 %4863
    %4865 = vrot.lane.b32.xlu0 %v3940, 64
    %v4866 = vpop.permute.xlu0 %4865
    %4867 = vrot.lane.b32.xlu0 %v3942, 64
    %v4868 = vpop.permute.xlu0 %4867
    %4869 = vrot.lane.b32.xlu0 %v3945, 64
    %v4870 = vpop.permute.xlu0 %4869
    %4871 = vrot.lane.b32.xlu0 %v3947, 64
    %v4872 = vpop.permute.xlu0 %4871
    %4873 = vrot.lane.b32.xlu0 %v3950, 64
    %v4874 = vpop.permute.xlu0 %4873
    %4875 = vrot.lane.b32.xlu0 %v3952, 64
    %v4876 = vpop.permute.xlu0 %4875
    %4877 = vrot.lane.b32.xlu0 %v3955, 64
    %v4878 = vpop.permute.xlu0 %4877
    %4879 = vrot.lane.b32.xlu0 %v3957, 64
    %v4880 = vpop.permute.xlu0 %4879
    %4881 = vrot.lane.b32.xlu0 %v3960, 64
    %v4882 = vpop.permute.xlu0 %4881
    %4883 = vrot.lane.b32.xlu0 %v3962, 64
    %v4884 = vpop.permute.xlu0 %4883
    %4885 = vrot.lane.b32.xlu0 %v3965, 64
    %v4886 = vpop.permute.xlu0 %4885
    %4887 = vrot.lane.b32.xlu0 %v3967, 64
    %v4888 = vpop.permute.xlu0 %4887
    %4889 = vrot.lane.b32.xlu0 %v3970, 64
    %v4890 = vpop.permute.xlu0 %4889
    %4891 = vrot.lane.b32.xlu0 %v3972, 64
    %v4892 = vpop.permute.xlu0 %4891
    %4893 = vrot.lane.b32.xlu0 %v3975, 64
    %v4894 = vpop.permute.xlu0 %4893
    %4895 = vrot.lane.b32.xlu0 %v3977, 64
    %v4896 = vpop.permute.xlu0 %4895
    %4897 = vrot.lane.b32.xlu0 %v3980, 64
    %v4898 = vpop.permute.xlu0 %4897
    %4899 = vrot.lane.b32.xlu0 %v3982, 64
    %v4900 = vpop.permute.xlu0 %4899
    %4901 = vrot.lane.b32.xlu0 %v3985, 64
    %v4902 = vpop.permute.xlu0 %4901
    %4903 = vrot.lane.b32.xlu0 %v3987, 64
    %v4904 = vpop.permute.xlu0 %4903
    %4905 = vrot.lane.b32.xlu0 %v3990, 64
    %v4906 = vpop.permute.xlu0 %4905
    %4907 = vrot.lane.b32.xlu0 %v3992, 64
    %v4908 = vpop.permute.xlu0 %4907
    %4909 = vrot.lane.b32.xlu0 %v3995, 64
    %v4910 = vpop.permute.xlu0 %4909
    %4911 = vrot.lane.b32.xlu0 %v3997, 64
    %v4912 = vpop.permute.xlu0 %4911
    %4913 = vrot.lane.b32.xlu0 %v4000, 64
    %v4914 = vpop.permute.xlu0 %4913
    %4915 = vrot.lane.b32.xlu0 %v4002, 64
    %v4916 = vpop.permute.xlu0 %4915
    %4917 = vrot.lane.b32.xlu0 %v4005, 64
    %v4918 = vpop.permute.xlu0 %4917
    %4919 = vrot.lane.b32.xlu0 %v4007, 64
    %v4920 = vpop.permute.xlu0 %4919
    %4921 = vrot.lane.b32.xlu0 %v4010, 64
    %v4922 = vpop.permute.xlu0 %4921
    %4923 = vrot.lane.b32.xlu0 %v4012, 64
    %v4924 = vpop.permute.xlu0 %4923
    %4925 = vrot.lane.b32.xlu0 %v4186, 64
    %v4926 = vpop.permute.xlu0 %4925
    %4927 = vrot.lane.b32.xlu0 %v4188, 64
    %v4928 = vpop.permute.xlu0 %4927
    %4993 = vrot.lane.b32.xlu0 %v4020, 80
    %v4994 = vpop.permute.xlu0 %4993
    %4995 = vrot.lane.b32.xlu0 %v4022, 80
    %v4996 = vpop.permute.xlu0 %4995
    %4997 = vrot.lane.b32.xlu0 %v4025, 80
    %v4998 = vpop.permute.xlu0 %4997
    %4999 = vrot.lane.b32.xlu0 %v4027, 80
    %v5000 = vpop.permute.xlu0 %4999
    %5001 = vrot.lane.b32.xlu0 %v4030, 80
    %v5002 = vpop.permute.xlu0 %5001
    %5003 = vrot.lane.b32.xlu0 %v4032, 80
    %v5004 = vpop.permute.xlu0 %5003
    %5005 = vrot.lane.b32.xlu0 %v4035, 80
    %v5006 = vpop.permute.xlu0 %5005
    %5007 = vrot.lane.b32.xlu0 %v4037, 80
    %v5008 = vpop.permute.xlu0 %5007
    %5009 = vrot.lane.b32.xlu0 %v4040, 80
    %v5010 = vpop.permute.xlu0 %5009
    %5011 = vrot.lane.b32.xlu0 %v4042, 80
    %v5012 = vpop.permute.xlu0 %5011
    %5013 = vrot.lane.b32.xlu0 %v4045, 80
    %v5014 = vpop.permute.xlu0 %5013
    %5015 = vrot.lane.b32.xlu0 %v4047, 80
    %v5016 = vpop.permute.xlu0 %5015
    %5017 = vrot.lane.b32.xlu0 %v4050, 80
    %v5018 = vpop.permute.xlu0 %5017
    %5019 = vrot.lane.b32.xlu0 %v4052, 80
    %v5020 = vpop.permute.xlu0 %5019
    %5021 = vrot.lane.b32.xlu0 %v4055, 80
    %v5022 = vpop.permute.xlu0 %5021
    %5023 = vrot.lane.b32.xlu0 %v4057, 80
    %v5024 = vpop.permute.xlu0 %5023
    %5025 = vrot.lane.b32.xlu0 %v4060, 80
    %v5026 = vpop.permute.xlu0 %5025
    %5027 = vrot.lane.b32.xlu0 %v4062, 80
    %v5028 = vpop.permute.xlu0 %5027
    %5029 = vrot.lane.b32.xlu0 %v4065, 80
    %v5030 = vpop.permute.xlu0 %5029
    %5031 = vrot.lane.b32.xlu0 %v4067, 80
    %v5032 = vpop.permute.xlu0 %5031
    %5033 = vrot.lane.b32.xlu0 %v4070, 80
    %v5034 = vpop.permute.xlu0 %5033
    %5035 = vrot.lane.b32.xlu0 %v4072, 80
    %v5036 = vpop.permute.xlu0 %5035
    %5037 = vrot.lane.b32.xlu0 %v4075, 80
    %v5038 = vpop.permute.xlu0 %5037
    %5039 = vrot.lane.b32.xlu0 %v4077, 80
    %v5040 = vpop.permute.xlu0 %5039
    %5041 = vrot.lane.b32.xlu0 %v4080, 80
    %v5042 = vpop.permute.xlu0 %5041
    %5043 = vrot.lane.b32.xlu0 %v4082, 80
    %v5044 = vpop.permute.xlu0 %5043
    %5045 = vrot.lane.b32.xlu0 %v4085, 80
    %v5046 = vpop.permute.xlu0 %5045
    %5047 = vrot.lane.b32.xlu0 %v4087, 80
    %v5048 = vpop.permute.xlu0 %5047
    %5049 = vrot.lane.b32.xlu0 %v4090, 80
    %v5050 = vpop.permute.xlu0 %5049
    %5051 = vrot.lane.b32.xlu0 %v4092, 80
    %v5052 = vpop.permute.xlu0 %5051
    %5053 = vrot.lane.b32.xlu0 %v4191, 80
    %v5054 = vpop.permute.xlu0 %5053
    %5055 = vrot.lane.b32.xlu0 %v4193, 80
    %v5056 = vpop.permute.xlu0 %5055
    %5057 = vrot.lane.b32.xlu0 %v4100, 80
    %v5058 = vpop.permute.xlu0 %5057
    %5059 = vrot.lane.b32.xlu0 %v4102, 80
    %v5060 = vpop.permute.xlu0 %5059
    %5061 = vrot.lane.b32.xlu0 %v4105, 80
    %v5062 = vpop.permute.xlu0 %5061
    %5063 = vrot.lane.b32.xlu0 %v4107, 80
    %v5064 = vpop.permute.xlu0 %5063
    %5065 = vrot.lane.b32.xlu0 %v4110, 80
    %v5066 = vpop.permute.xlu0 %5065
    %5067 = vrot.lane.b32.xlu0 %v4112, 80
    %v5068 = vpop.permute.xlu0 %5067
    %5069 = vrot.lane.b32.xlu0 %v4115, 80
    %v5070 = vpop.permute.xlu0 %5069
    %5071 = vrot.lane.b32.xlu0 %v4117, 80
    %v5072 = vpop.permute.xlu0 %5071
    %5073 = vrot.lane.b32.xlu0 %v4120, 80
    %v5074 = vpop.permute.xlu0 %5073
    %5075 = vrot.lane.b32.xlu0 %v4122, 80
    %v5076 = vpop.permute.xlu0 %5075
    %5077 = vrot.lane.b32.xlu0 %v4125, 80
    %v5078 = vpop.permute.xlu0 %5077
    %5079 = vrot.lane.b32.xlu0 %v4127, 80
    %v5080 = vpop.permute.xlu0 %5079
    %5081 = vrot.lane.b32.xlu0 %v4130, 80
    %v5082 = vpop.permute.xlu0 %5081
    %5083 = vrot.lane.b32.xlu0 %v4132, 80
    %v5084 = vpop.permute.xlu0 %5083
    %5085 = vrot.lane.b32.xlu0 %v4135, 80
    %v5086 = vpop.permute.xlu0 %5085
    %5087 = vrot.lane.b32.xlu0 %v4137, 80
    %v5088 = vpop.permute.xlu0 %5087
    %5089 = vrot.lane.b32.xlu0 %v4140, 80
    %v5090 = vpop.permute.xlu0 %5089
    %5091 = vrot.lane.b32.xlu0 %v4142, 80
    %v5092 = vpop.permute.xlu0 %5091
    %5093 = vrot.lane.b32.xlu0 %v4145, 80
    %v5094 = vpop.permute.xlu0 %5093
    %5095 = vrot.lane.b32.xlu0 %v4147, 80
    %v5096 = vpop.permute.xlu0 %5095
    %5097 = vrot.lane.b32.xlu0 %v4150, 80
    %v5098 = vpop.permute.xlu0 %5097
    %5099 = vrot.lane.b32.xlu0 %v4152, 80
    %v5100 = vpop.permute.xlu0 %5099
    %5101 = vrot.lane.b32.xlu0 %v4155, 80
    %v5102 = vpop.permute.xlu0 %5101
    %5103 = vrot.lane.b32.xlu0 %v4157, 80
    %v5104 = vpop.permute.xlu0 %5103
    %5105 = vrot.lane.b32.xlu0 %v4160, 80
    %v5106 = vpop.permute.xlu0 %5105
    %5107 = vrot.lane.b32.xlu0 %v4162, 80
    %v5108 = vpop.permute.xlu0 %5107
    %5109 = vrot.lane.b32.xlu0 %v4165, 80
    %v5110 = vpop.permute.xlu0 %5109
    %5111 = vrot.lane.b32.xlu0 %v4167, 80
    %v5112 = vpop.permute.xlu0 %5111
    %5113 = vrot.lane.b32.xlu0 %v4170, 80
    %v5114 = vpop.permute.xlu0 %5113
    %5115 = vrot.lane.b32.xlu0 %v4172, 80
    %v5116 = vpop.permute.xlu0 %5115
    %5117 = vrot.lane.b32.xlu0 %v4196, 80
    %v5118 = vpop.permute.xlu0 %5117
    %5119 = vrot.lane.b32.xlu0 %v4198, 80
    %v5120 = vpop.permute.xlu0 %5119
    %5185 = vrot.lane.b32.xlu0 %v3655, 96
    %v5186 = vpop.permute.xlu0 %5185
    %5187 = vrot.lane.b32.xlu0 %v3656, 96
    %v5188 = vpop.permute.xlu0 %5187
    %5189 = vrot.lane.b32.xlu0 %v3658, 96
    %v5190 = vpop.permute.xlu0 %5189
    %5191 = vrot.lane.b32.xlu0 %v3659, 96
    %v5192 = vpop.permute.xlu0 %5191
    %5193 = vrot.lane.b32.xlu0 %v3661, 96
    %v5194 = vpop.permute.xlu0 %5193
    %5195 = vrot.lane.b32.xlu0 %v3662, 96
    %v5196 = vpop.permute.xlu0 %5195
    %5197 = vrot.lane.b32.xlu0 %v3664, 96
    %v5198 = vpop.permute.xlu0 %5197
    %5199 = vrot.lane.b32.xlu0 %v3665, 96
    %v5200 = vpop.permute.xlu0 %5199
    %5201 = vrot.lane.b32.xlu0 %v3667, 96
    %v5202 = vpop.permute.xlu0 %5201
    %5203 = vrot.lane.b32.xlu0 %v3668, 96
    %v5204 = vpop.permute.xlu0 %5203
    %5205 = vrot.lane.b32.xlu0 %v3670, 96
    %v5206 = vpop.permute.xlu0 %5205
    %5207 = vrot.lane.b32.xlu0 %v3671, 96
    %v5208 = vpop.permute.xlu0 %5207
    %5209 = vrot.lane.b32.xlu0 %v3673, 96
    %v5210 = vpop.permute.xlu0 %5209
    %5211 = vrot.lane.b32.xlu0 %v3674, 96
    %v5212 = vpop.permute.xlu0 %5211
    %5213 = vrot.lane.b32.xlu0 %v3676, 96
    %v5214 = vpop.permute.xlu0 %5213
    %5215 = vrot.lane.b32.xlu0 %v3677, 96
    %v5216 = vpop.permute.xlu0 %5215
    %5217 = vrot.lane.b32.xlu0 %v3679, 96
    %v5218 = vpop.permute.xlu0 %5217
    %5219 = vrot.lane.b32.xlu0 %v3680, 96
    %v5220 = vpop.permute.xlu0 %5219
    %5221 = vrot.lane.b32.xlu0 %v3682, 96
    %v5222 = vpop.permute.xlu0 %5221
    %5223 = vrot.lane.b32.xlu0 %v3683, 96
    %v5224 = vpop.permute.xlu0 %5223
    %5225 = vrot.lane.b32.xlu0 %v3685, 96
    %v5226 = vpop.permute.xlu0 %5225
    %5227 = vrot.lane.b32.xlu0 %v3686, 96
    %v5228 = vpop.permute.xlu0 %5227
    %5229 = vrot.lane.b32.xlu0 %v3688, 96
    %v5230 = vpop.permute.xlu0 %5229
    %5231 = vrot.lane.b32.xlu0 %v3689, 96
    %v5232 = vpop.permute.xlu0 %5231
    %5233 = vrot.lane.b32.xlu0 %v3691, 96
    %v5234 = vpop.permute.xlu0 %5233
    %5235 = vrot.lane.b32.xlu0 %v3692, 96
    %v5236 = vpop.permute.xlu0 %5235
    %5237 = vrot.lane.b32.xlu0 %v3694, 96
    %v5238 = vpop.permute.xlu0 %5237
    %5239 = vrot.lane.b32.xlu0 %v3695, 96
    %v5240 = vpop.permute.xlu0 %5239
    %5241 = vrot.lane.b32.xlu0 %v3697, 96
    %v5242 = vpop.permute.xlu0 %5241
    %5243 = vrot.lane.b32.xlu0 %v3698, 96
    %v5244 = vpop.permute.xlu0 %5243
    %5245 = vrot.lane.b32.xlu0 %v3700, 96
    %v5246 = vpop.permute.xlu0 %5245
    %5247 = vrot.lane.b32.xlu0 %v3701, 96
    %v5248 = vpop.permute.xlu0 %5247
    %5249 = vrot.lane.b32.xlu0 %v3709, 96
    %v5250 = vpop.permute.xlu0 %5249
    %5251 = vrot.lane.b32.xlu0 %v3710, 96
    %v5252 = vpop.permute.xlu0 %5251
    %5253 = vrot.lane.b32.xlu0 %v3712, 96
    %v5254 = vpop.permute.xlu0 %5253
    %5255 = vrot.lane.b32.xlu0 %v3713, 96
    %v5256 = vpop.permute.xlu0 %5255
    %5257 = vrot.lane.b32.xlu0 %v3715, 96
    %v5258 = vpop.permute.xlu0 %5257
    %5259 = vrot.lane.b32.xlu0 %v3716, 96
    %v5260 = vpop.permute.xlu0 %5259
    %5261 = vrot.lane.b32.xlu0 %v3718, 96
    %v5262 = vpop.permute.xlu0 %5261
    %5263 = vrot.lane.b32.xlu0 %v3719, 96
    %v5264 = vpop.permute.xlu0 %5263
    %5265 = vrot.lane.b32.xlu0 %v3721, 96
    %v5266 = vpop.permute.xlu0 %5265
    %5267 = vrot.lane.b32.xlu0 %v3722, 96
    %v5268 = vpop.permute.xlu0 %5267
    %5269 = vrot.lane.b32.xlu0 %v3724, 96
    %v5270 = vpop.permute.xlu0 %5269
    %5271 = vrot.lane.b32.xlu0 %v3725, 96
    %v5272 = vpop.permute.xlu0 %5271
    %5273 = vrot.lane.b32.xlu0 %v3727, 96
    %v5274 = vpop.permute.xlu0 %5273
    %5275 = vrot.lane.b32.xlu0 %v3728, 96
    %v5276 = vpop.permute.xlu0 %5275
    %5277 = vrot.lane.b32.xlu0 %v3730, 96
    %v5278 = vpop.permute.xlu0 %5277
    %5279 = vrot.lane.b32.xlu0 %v3731, 96
    %v5280 = vpop.permute.xlu0 %5279
    %5281 = vrot.lane.b32.xlu0 %v3733, 96
    %v5282 = vpop.permute.xlu0 %5281
    %5283 = vrot.lane.b32.xlu0 %v3734, 96
    %v5284 = vpop.permute.xlu0 %5283
    %5285 = vrot.lane.b32.xlu0 %v3736, 96
    %v5286 = vpop.permute.xlu0 %5285
    %5287 = vrot.lane.b32.xlu0 %v3737, 96
    %v5288 = vpop.permute.xlu0 %5287
    %5289 = vrot.lane.b32.xlu0 %v3739, 96
    %v5290 = vpop.permute.xlu0 %5289
    %5291 = vrot.lane.b32.xlu0 %v3740, 96
    %v5292 = vpop.permute.xlu0 %5291
    %5293 = vrot.lane.b32.xlu0 %v3742, 96
    %v5294 = vpop.permute.xlu0 %5293
    %5295 = vrot.lane.b32.xlu0 %v3743, 96
    %v5296 = vpop.permute.xlu0 %5295
    %5297 = vrot.lane.b32.xlu0 %v3745, 96
    %v5298 = vpop.permute.xlu0 %5297
    %5299 = vrot.lane.b32.xlu0 %v3746, 96
    %v5300 = vpop.permute.xlu0 %5299
    %5301 = vrot.lane.b32.xlu0 %v3748, 96
    %v5302 = vpop.permute.xlu0 %5301
    %5303 = vrot.lane.b32.xlu0 %v3749, 96
    %v5304 = vpop.permute.xlu0 %5303
    %5305 = vrot.lane.b32.xlu0 %v3751, 96
    %v5306 = vpop.permute.xlu0 %5305
    %5307 = vrot.lane.b32.xlu0 %v3752, 96
    %v5308 = vpop.permute.xlu0 %5307
    %5309 = vrot.lane.b32.xlu0 %v3754, 96
    %v5310 = vpop.permute.xlu0 %5309
    %5311 = vrot.lane.b32.xlu0 %v3755, 96
    %v5312 = vpop.permute.xlu0 %5311
    %5377 = vrot.lane.b32.xlu0 %v3865, 112
    %v5378 = vpop.permute.xlu0 %5377
    %5379 = vrot.lane.b32.xlu0 %v3867, 112
    %v5380 = vpop.permute.xlu0 %5379
    %5381 = vrot.lane.b32.xlu0 %v3870, 112
    %v5382 = vpop.permute.xlu0 %5381
    %5383 = vrot.lane.b32.xlu0 %v3872, 112
    %v5384 = vpop.permute.xlu0 %5383
    %5385 = vrot.lane.b32.xlu0 %v3875, 112
    %v5386 = vpop.permute.xlu0 %5385
    %5387 = vrot.lane.b32.xlu0 %v3877, 112
    %v5388 = vpop.permute.xlu0 %5387
    %5389 = vrot.lane.b32.xlu0 %v3880, 112
    %v5390 = vpop.permute.xlu0 %5389
    %5391 = vrot.lane.b32.xlu0 %v3882, 112
    %v5392 = vpop.permute.xlu0 %5391
    %5393 = vrot.lane.b32.xlu0 %v3885, 112
    %v5394 = vpop.permute.xlu0 %5393
    %5395 = vrot.lane.b32.xlu0 %v3887, 112
    %v5396 = vpop.permute.xlu0 %5395
    %5397 = vrot.lane.b32.xlu0 %v3890, 112
    %v5398 = vpop.permute.xlu0 %5397
    %5399 = vrot.lane.b32.xlu0 %v3892, 112
    %v5400 = vpop.permute.xlu0 %5399
    %5401 = vrot.lane.b32.xlu0 %v3895, 112
    %v5402 = vpop.permute.xlu0 %5401
    %5403 = vrot.lane.b32.xlu0 %v3897, 112
    %v5404 = vpop.permute.xlu0 %5403
    %5405 = vrot.lane.b32.xlu0 %v3900, 112
    %v5406 = vpop.permute.xlu0 %5405
    %5407 = vrot.lane.b32.xlu0 %v3902, 112
    %v5408 = vpop.permute.xlu0 %5407
    %5409 = vrot.lane.b32.xlu0 %v3905, 112
    %v5410 = vpop.permute.xlu0 %5409
    %5411 = vrot.lane.b32.xlu0 %v3907, 112
    %v5412 = vpop.permute.xlu0 %5411
    %5413 = vrot.lane.b32.xlu0 %v3910, 112
    %v5414 = vpop.permute.xlu0 %5413
    %5415 = vrot.lane.b32.xlu0 %v3912, 112
    %v5416 = vpop.permute.xlu0 %5415
    %5417 = vrot.lane.b32.xlu0 %v3915, 112
    %v5418 = vpop.permute.xlu0 %5417
    %5419 = vrot.lane.b32.xlu0 %v3917, 112
    %v5420 = vpop.permute.xlu0 %5419
    %5421 = vrot.lane.b32.xlu0 %v3920, 112
    %v5422 = vpop.permute.xlu0 %5421
    %5423 = vrot.lane.b32.xlu0 %v3922, 112
    %v5424 = vpop.permute.xlu0 %5423
    %5425 = vrot.lane.b32.xlu0 %v3925, 112
    %v5426 = vpop.permute.xlu0 %5425
    %5427 = vrot.lane.b32.xlu0 %v3927, 112
    %v5428 = vpop.permute.xlu0 %5427
    %5429 = vrot.lane.b32.xlu0 %v3930, 112
    %v5430 = vpop.permute.xlu0 %5429
    %5431 = vrot.lane.b32.xlu0 %v3932, 112
    %v5432 = vpop.permute.xlu0 %5431
    %5433 = vrot.lane.b32.xlu0 %v4181, 112
    %v5434 = vpop.permute.xlu0 %5433
    %5435 = vrot.lane.b32.xlu0 %v4183, 112
    %v5436 = vpop.permute.xlu0 %5435
    %5437 = vrot.lane.b32.xlu0 %v4207, 112
    %v5438 = vpop.permute.xlu0 %5437
    %5439 = vrot.lane.b32.xlu0 %v4209, 112
    %v5440 = vpop.permute.xlu0 %5439
    %5441 = vrot.lane.b32.xlu0 %v3945, 112
    %v5442 = vpop.permute.xlu0 %5441
    %5443 = vrot.lane.b32.xlu0 %v3947, 112
    %v5444 = vpop.permute.xlu0 %5443
    %5445 = vrot.lane.b32.xlu0 %v3950, 112
    %v5446 = vpop.permute.xlu0 %5445
    %5447 = vrot.lane.b32.xlu0 %v3952, 112
    %v5448 = vpop.permute.xlu0 %5447
    %5449 = vrot.lane.b32.xlu0 %v3955, 112
    %v5450 = vpop.permute.xlu0 %5449
    %5451 = vrot.lane.b32.xlu0 %v3957, 112
    %v5452 = vpop.permute.xlu0 %5451
    %5453 = vrot.lane.b32.xlu0 %v3960, 112
    %v5454 = vpop.permute.xlu0 %5453
    %5455 = vrot.lane.b32.xlu0 %v3962, 112
    %v5456 = vpop.permute.xlu0 %5455
    %5457 = vrot.lane.b32.xlu0 %v3965, 112
    %v5458 = vpop.permute.xlu0 %5457
    %5459 = vrot.lane.b32.xlu0 %v3967, 112
    %v5460 = vpop.permute.xlu0 %5459
    %5461 = vrot.lane.b32.xlu0 %v3970, 112
    %v5462 = vpop.permute.xlu0 %5461
    %5463 = vrot.lane.b32.xlu0 %v3972, 112
    %v5464 = vpop.permute.xlu0 %5463
    %5465 = vrot.lane.b32.xlu0 %v3975, 112
    %v5466 = vpop.permute.xlu0 %5465
    %5467 = vrot.lane.b32.xlu0 %v3977, 112
    %v5468 = vpop.permute.xlu0 %5467
    %5469 = vrot.lane.b32.xlu0 %v3980, 112
    %v5470 = vpop.permute.xlu0 %5469
    %5471 = vrot.lane.b32.xlu0 %v3982, 112
    %v5472 = vpop.permute.xlu0 %5471
    %5473 = vrot.lane.b32.xlu0 %v3985, 112
    %v5474 = vpop.permute.xlu0 %5473
    %5475 = vrot.lane.b32.xlu0 %v3987, 112
    %v5476 = vpop.permute.xlu0 %5475
    %5477 = vrot.lane.b32.xlu0 %v3990, 112
    %v5478 = vpop.permute.xlu0 %5477
    %5479 = vrot.lane.b32.xlu0 %v3992, 112
    %v5480 = vpop.permute.xlu0 %5479
    %5481 = vrot.lane.b32.xlu0 %v3995, 112
    %v5482 = vpop.permute.xlu0 %5481
    %5483 = vrot.lane.b32.xlu0 %v3997, 112
    %v5484 = vpop.permute.xlu0 %5483
    %5485 = vrot.lane.b32.xlu0 %v4000, 112
    %v5486 = vpop.permute.xlu0 %5485
    %5487 = vrot.lane.b32.xlu0 %v4002, 112
    %v5488 = vpop.permute.xlu0 %5487
    %5489 = vrot.lane.b32.xlu0 %v4005, 112
    %v5490 = vpop.permute.xlu0 %5489
    %5491 = vrot.lane.b32.xlu0 %v4007, 112
    %v5492 = vpop.permute.xlu0 %5491
    %5493 = vrot.lane.b32.xlu0 %v4010, 112
    %v5494 = vpop.permute.xlu0 %5493
    %5495 = vrot.lane.b32.xlu0 %v4012, 112
    %v5496 = vpop.permute.xlu0 %5495
    %5497 = vrot.lane.b32.xlu0 %v4186, 112
    %v5498 = vpop.permute.xlu0 %5497
    %5499 = vrot.lane.b32.xlu0 %v4188, 112
    %v5500 = vpop.permute.xlu0 %5499
    %5501 = vrot.lane.b32.xlu0 %v4212, 112
    %v5502 = vpop.permute.xlu0 %5501
    %5503 = vrot.lane.b32.xlu0 %v4214, 112
    %v5504 = vpop.permute.xlu0 %5503
    %v5569 = vsel %vm117, %v3649, %v4226
    %v5570 = vsel %vm117, %v3650, %v4228
    %v5571 = vsel %vm117, %v3652, %v4230
    %v5572 = vsel %vm117, %v3653, %v4232
    %v5573 = vsel %vm117, %v3655, %v4234
    %v5574 = vsel %vm117, %v3656, %v4236
    %v5575 = vsel %vm117, %v3658, %v4238
    %v5576 = vsel %vm117, %v3659, %v4240
    %v5577 = vsel %vm117, %v3661, %v4242
    %v5578 = vsel %vm117, %v3662, %v4244
    %v5579 = vsel %vm117, %v3664, %v4246
    %v5580 = vsel %vm117, %v3665, %v4248
    %v5581 = vsel %vm117, %v3667, %v4250
    %v5582 = vsel %vm117, %v3668, %v4252
    %v5583 = vsel %vm117, %v3670, %v4254
    %v5584 = vsel %vm117, %v3671, %v4256
    %v5585 = vsel %vm117, %v3673, %v4258
    %v5586 = vsel %vm117, %v3674, %v4260
    %v5587 = vsel %vm117, %v3676, %v4262
    %v5588 = vsel %vm117, %v3677, %v4264
    %v5589 = vsel %vm117, %v3679, %v4266
    %v5590 = vsel %vm117, %v3680, %v4268
    %v5591 = vsel %vm117, %v3682, %v4270
    %v5592 = vsel %vm117, %v3683, %v4272
    %v5593 = vsel %vm117, %v3685, %v4274
    %v5594 = vsel %vm117, %v3686, %v4276
    %v5595 = vsel %vm117, %v3688, %v4278
    %v5596 = vsel %vm117, %v3689, %v4280
    %v5597 = vsel %vm117, %v3691, %v4282
    %v5598 = vsel %vm117, %v3692, %v4284
    %v5599 = vsel %vm117, %v3694, %v4286
    %v5600 = vsel %vm117, %v3695, %v4288
    %v5601 = vsel %vm117, %v3703, %v4290
    %v5602 = vsel %vm117, %v3704, %v4292
    %v5603 = vsel %vm117, %v3706, %v4294
    %v5604 = vsel %vm117, %v3707, %v4296
    %v5605 = vsel %vm117, %v3709, %v4298
    %v5606 = vsel %vm117, %v3710, %v4300
    %v5607 = vsel %vm117, %v3712, %v4302
    %v5608 = vsel %vm117, %v3713, %v4304
    %v5609 = vsel %vm117, %v3715, %v4306
    %v5610 = vsel %vm117, %v3716, %v4308
    %v5611 = vsel %vm117, %v3718, %v4310
    %v5612 = vsel %vm117, %v3719, %v4312
    %v5613 = vsel %vm117, %v3721, %v4314
    %v5614 = vsel %vm117, %v3722, %v4316
    %v5615 = vsel %vm117, %v3724, %v4318
    %v5616 = vsel %vm117, %v3725, %v4320
    %v5617 = vsel %vm117, %v3727, %v4322
    %v5618 = vsel %vm117, %v3728, %v4324
    %v5619 = vsel %vm117, %v3730, %v4326
    %v5620 = vsel %vm117, %v3731, %v4328
    %v5621 = vsel %vm117, %v3733, %v4330
    %v5622 = vsel %vm117, %v3734, %v4332
    %v5623 = vsel %vm117, %v3736, %v4334
    %v5624 = vsel %vm117, %v3737, %v4336
    %v5625 = vsel %vm117, %v3739, %v4338
    %v5626 = vsel %vm117, %v3740, %v4340
    %v5627 = vsel %vm117, %v3742, %v4342
    %v5628 = vsel %vm117, %v3743, %v4344
    %v5629 = vsel %vm117, %v3745, %v4346
    %v5630 = vsel %vm117, %v3746, %v4348
    %v5631 = vsel %vm117, %v3748, %v4350
    %v5632 = vsel %vm117, %v3749, %v4352
    %v5633 = vsel %vm2657, %v5569, %v4418
    %v5634 = vsel %vm2657, %v5570, %v4420
    %v5635 = vsel %vm2657, %v5571, %v4422
    %v5636 = vsel %vm2657, %v5572, %v4424
    %v5637 = vsel %vm2657, %v5573, %v4426
    %v5638 = vsel %vm2657, %v5574, %v4428
    %v5639 = vsel %vm2657, %v5575, %v4430
    %v5640 = vsel %vm2657, %v5576, %v4432
    %v5641 = vsel %vm2657, %v5577, %v4434
    %v5642 = vsel %vm2657, %v5578, %v4436
    %v5643 = vsel %vm2657, %v5579, %v4438
    %v5644 = vsel %vm2657, %v5580, %v4440
    %v5645 = vsel %vm2657, %v5581, %v4442
    %v5646 = vsel %vm2657, %v5582, %v4444
    %v5647 = vsel %vm2657, %v5583, %v4446
    %v5648 = vsel %vm2657, %v5584, %v4448
    %v5649 = vsel %vm2657, %v5585, %v4450
    %v5650 = vsel %vm2657, %v5586, %v4452
    %v5651 = vsel %vm2657, %v5587, %v4454
    %v5652 = vsel %vm2657, %v5588, %v4456
    %v5653 = vsel %vm2657, %v5589, %v4458
    %v5654 = vsel %vm2657, %v5590, %v4460
    %v5655 = vsel %vm2657, %v5591, %v4462
    %v5656 = vsel %vm2657, %v5592, %v4464
    %v5657 = vsel %vm2657, %v5593, %v4466
    %v5658 = vsel %vm2657, %v5594, %v4468
    %v5659 = vsel %vm2657, %v5595, %v4470
    %v5660 = vsel %vm2657, %v5596, %v4472
    %v5661 = vsel %vm2657, %v5597, %v4474
    %v5662 = vsel %vm2657, %v5598, %v4476
    %v5663 = vsel %vm2657, %v5599, %v4478
    %v5664 = vsel %vm2657, %v5600, %v4480
    %v5665 = vsel %vm2657, %v5601, %v4482
    %v5666 = vsel %vm2657, %v5602, %v4484
    %v5667 = vsel %vm2657, %v5603, %v4486
    %v5668 = vsel %vm2657, %v5604, %v4488
    %v5669 = vsel %vm2657, %v5605, %v4490
    %v5670 = vsel %vm2657, %v5606, %v4492
    %v5671 = vsel %vm2657, %v5607, %v4494
    %v5672 = vsel %vm2657, %v5608, %v4496
    %v5673 = vsel %vm2657, %v5609, %v4498
    %v5674 = vsel %vm2657, %v5610, %v4500
    %v5675 = vsel %vm2657, %v5611, %v4502
    %v5676 = vsel %vm2657, %v5612, %v4504
    %v5677 = vsel %vm2657, %v5613, %v4506
    %v5678 = vsel %vm2657, %v5614, %v4508
    %v5679 = vsel %vm2657, %v5615, %v4510
    %v5680 = vsel %vm2657, %v5616, %v4512
    %v5681 = vsel %vm2657, %v5617, %v4514
    %v5682 = vsel %vm2657, %v5618, %v4516
    %v5683 = vsel %vm2657, %v5619, %v4518
    %v5684 = vsel %vm2657, %v5620, %v4520
    %v5685 = vsel %vm2657, %v5621, %v4522
    %v5686 = vsel %vm2657, %v5622, %v4524
    %v5687 = vsel %vm2657, %v5623, %v4526
    %v5688 = vsel %vm2657, %v5624, %v4528
    %v5689 = vsel %vm2657, %v5625, %v4530
    %v5690 = vsel %vm2657, %v5626, %v4532
    %v5691 = vsel %vm2657, %v5627, %v4534
    %v5692 = vsel %vm2657, %v5628, %v4536
    %v5693 = vsel %vm2657, %v5629, %v4538
    %v5694 = vsel %vm2657, %v5630, %v4540
    %v5695 = vsel %vm2657, %v5631, %v4542
    %v5696 = vsel %vm2657, %v5632, %v4544
    %v5697 = vsel %vm2722, %v5633, %v4610
    %v5698 = vsel %vm2722, %v5634, %v4612
    %v5699 = vsel %vm2722, %v5635, %v4614
    %v5700 = vsel %vm2722, %v5636, %v4616
    %v5701 = vsel %vm2722, %v5637, %v4618
    %v5702 = vsel %vm2722, %v5638, %v4620
    %v5703 = vsel %vm2722, %v5639, %v4622
    %v5704 = vsel %vm2722, %v5640, %v4624
    %v5705 = vsel %vm2722, %v5641, %v4626
    %v5706 = vsel %vm2722, %v5642, %v4628
    %v5707 = vsel %vm2722, %v5643, %v4630
    %v5708 = vsel %vm2722, %v5644, %v4632
    %v5709 = vsel %vm2722, %v5645, %v4634
    %v5710 = vsel %vm2722, %v5646, %v4636
    %v5711 = vsel %vm2722, %v5647, %v4638
    %v5712 = vsel %vm2722, %v5648, %v4640
    %v5713 = vsel %vm2722, %v5649, %v4642
    %v5714 = vsel %vm2722, %v5650, %v4644
    %v5715 = vsel %vm2722, %v5651, %v4646
    %v5716 = vsel %vm2722, %v5652, %v4648
    %v5717 = vsel %vm2722, %v5653, %v4650
    %v5718 = vsel %vm2722, %v5654, %v4652
    %v5719 = vsel %vm2722, %v5655, %v4654
    %v5720 = vsel %vm2722, %v5656, %v4656
    %v5721 = vsel %vm2722, %v5657, %v4658
    %v5722 = vsel %vm2722, %v5658, %v4660
    %v5723 = vsel %vm2722, %v5659, %v4662
    %v5724 = vsel %vm2722, %v5660, %v4664
    %v5725 = vsel %vm2722, %v5661, %v4666
    %v5726 = vsel %vm2722, %v5662, %v4668
    %v5727 = vsel %vm2722, %v5663, %v4670
    %v5728 = vsel %vm2722, %v5664, %v4672
    %v5729 = vsel %vm2722, %v5665, %v4674
    %v5730 = vsel %vm2722, %v5666, %v4676
    %v5731 = vsel %vm2722, %v5667, %v4678
    %v5732 = vsel %vm2722, %v5668, %v4680
    %v5733 = vsel %vm2722, %v5669, %v4682
    %v5734 = vsel %vm2722, %v5670, %v4684
    %v5735 = vsel %vm2722, %v5671, %v4686
    %v5736 = vsel %vm2722, %v5672, %v4688
    %v5737 = vsel %vm2722, %v5673, %v4690
    %v5738 = vsel %vm2722, %v5674, %v4692
    %v5739 = vsel %vm2722, %v5675, %v4694
    %v5740 = vsel %vm2722, %v5676, %v4696
    %v5741 = vsel %vm2722, %v5677, %v4698
    %v5742 = vsel %vm2722, %v5678, %v4700
    %v5743 = vsel %vm2722, %v5679, %v4702
    %v5744 = vsel %vm2722, %v5680, %v4704
    %v5745 = vsel %vm2722, %v5681, %v4706
    %v5746 = vsel %vm2722, %v5682, %v4708
    %v5747 = vsel %vm2722, %v5683, %v4710
    %v5748 = vsel %vm2722, %v5684, %v4712
    %v5749 = vsel %vm2722, %v5685, %v4714
    %v5750 = vsel %vm2722, %v5686, %v4716
    %v5751 = vsel %vm2722, %v5687, %v4718
    %v5752 = vsel %vm2722, %v5688, %v4720
    %v5753 = vsel %vm2722, %v5689, %v4722
    %v5754 = vsel %vm2722, %v5690, %v4724
    %v5755 = vsel %vm2722, %v5691, %v4726
    %v5756 = vsel %vm2722, %v5692, %v4728
    %v5757 = vsel %vm2722, %v5693, %v4730
    %v5758 = vsel %vm2722, %v5694, %v4732
    %v5759 = vsel %vm2722, %v5695, %v4734
    %v5760 = vsel %vm2722, %v5696, %v4736
    %v5761 = vsel %vm2787, %v5697, %v4802
    %v5762 = vsel %vm2787, %v5698, %v4804
    %v5763 = vsel %vm2787, %v5699, %v4806
    %v5764 = vsel %vm2787, %v5700, %v4808
    %v5765 = vsel %vm2787, %v5701, %v4810
    %v5766 = vsel %vm2787, %v5702, %v4812
    %v5767 = vsel %vm2787, %v5703, %v4814
    %v5768 = vsel %vm2787, %v5704, %v4816
    %v5769 = vsel %vm2787, %v5705, %v4818
    %v5770 = vsel %vm2787, %v5706, %v4820
    %v5771 = vsel %vm2787, %v5707, %v4822
    %v5772 = vsel %vm2787, %v5708, %v4824
    %v5773 = vsel %vm2787, %v5709, %v4826
    %v5774 = vsel %vm2787, %v5710, %v4828
    %v5775 = vsel %vm2787, %v5711, %v4830
    %v5776 = vsel %vm2787, %v5712, %v4832
    %v5777 = vsel %vm2787, %v5713, %v4834
    %v5778 = vsel %vm2787, %v5714, %v4836
    %v5779 = vsel %vm2787, %v5715, %v4838
    %v5780 = vsel %vm2787, %v5716, %v4840
    %v5781 = vsel %vm2787, %v5717, %v4842
    %v5782 = vsel %vm2787, %v5718, %v4844
    %v5783 = vsel %vm2787, %v5719, %v4846
    %v5784 = vsel %vm2787, %v5720, %v4848
    %v5785 = vsel %vm2787, %v5721, %v4850
    %v5786 = vsel %vm2787, %v5722, %v4852
    %v5787 = vsel %vm2787, %v5723, %v4854
    %v5788 = vsel %vm2787, %v5724, %v4856
    %v5789 = vsel %vm2787, %v5725, %v4858
    %v5790 = vsel %vm2787, %v5726, %v4860
    %v5791 = vsel %vm2787, %v5727, %v4862
    %v5792 = vsel %vm2787, %v5728, %v4864
    %v5793 = vsel %vm2787, %v5729, %v4866
    %v5794 = vsel %vm2787, %v5730, %v4868
    %v5795 = vsel %vm2787, %v5731, %v4870
    %v5796 = vsel %vm2787, %v5732, %v4872
    %v5797 = vsel %vm2787, %v5733, %v4874
    %v5798 = vsel %vm2787, %v5734, %v4876
    %v5799 = vsel %vm2787, %v5735, %v4878
    %v5800 = vsel %vm2787, %v5736, %v4880
    %v5801 = vsel %vm2787, %v5737, %v4882
    %v5802 = vsel %vm2787, %v5738, %v4884
    %v5803 = vsel %vm2787, %v5739, %v4886
    %v5804 = vsel %vm2787, %v5740, %v4888
    %v5805 = vsel %vm2787, %v5741, %v4890
    %v5806 = vsel %vm2787, %v5742, %v4892
    %v5807 = vsel %vm2787, %v5743, %v4894
    %v5808 = vsel %vm2787, %v5744, %v4896
    %v5809 = vsel %vm2787, %v5745, %v4898
    %v5810 = vsel %vm2787, %v5746, %v4900
    %v5811 = vsel %vm2787, %v5747, %v4902
    %v5812 = vsel %vm2787, %v5748, %v4904
    %v5813 = vsel %vm2787, %v5749, %v4906
    %v5814 = vsel %vm2787, %v5750, %v4908
    %v5815 = vsel %vm2787, %v5751, %v4910
    %v5816 = vsel %vm2787, %v5752, %v4912
    %v5817 = vsel %vm2787, %v5753, %v4914
    %v5818 = vsel %vm2787, %v5754, %v4916
    %v5819 = vsel %vm2787, %v5755, %v4918
    %v5820 = vsel %vm2787, %v5756, %v4920
    %v5821 = vsel %vm2787, %v5757, %v4922
    %v5822 = vsel %vm2787, %v5758, %v4924
    %v5823 = vsel %vm2787, %v5759, %v4926
    %v5824 = vsel %vm2787, %v5760, %v4928
    %v5825 = vsel %vm2852, %v5761, %v4994
    %v5826 = vsel %vm2852, %v5762, %v4996
    %v5827 = vsel %vm2852, %v5763, %v4998
    %v5828 = vsel %vm2852, %v5764, %v5000
    %v5829 = vsel %vm2852, %v5765, %v5002
    %v5830 = vsel %vm2852, %v5766, %v5004
    %v5831 = vsel %vm2852, %v5767, %v5006
    %v5832 = vsel %vm2852, %v5768, %v5008
    %v5833 = vsel %vm2852, %v5769, %v5010
    %v5834 = vsel %vm2852, %v5770, %v5012
    %v5835 = vsel %vm2852, %v5771, %v5014
    %v5836 = vsel %vm2852, %v5772, %v5016
    %v5837 = vsel %vm2852, %v5773, %v5018
    %v5838 = vsel %vm2852, %v5774, %v5020
    %v5839 = vsel %vm2852, %v5775, %v5022
    %v5840 = vsel %vm2852, %v5776, %v5024
    %v5841 = vsel %vm2852, %v5777, %v5026
    %v5842 = vsel %vm2852, %v5778, %v5028
    %v5843 = vsel %vm2852, %v5779, %v5030
    %v5844 = vsel %vm2852, %v5780, %v5032
    %v5845 = vsel %vm2852, %v5781, %v5034
    %v5846 = vsel %vm2852, %v5782, %v5036
    %v5847 = vsel %vm2852, %v5783, %v5038
    %v5848 = vsel %vm2852, %v5784, %v5040
    %v5849 = vsel %vm2852, %v5785, %v5042
    %v5850 = vsel %vm2852, %v5786, %v5044
    %v5851 = vsel %vm2852, %v5787, %v5046
    %v5852 = vsel %vm2852, %v5788, %v5048
    %v5853 = vsel %vm2852, %v5789, %v5050
    %v5854 = vsel %vm2852, %v5790, %v5052
    %v5855 = vsel %vm2852, %v5791, %v5054
    %v5856 = vsel %vm2852, %v5792, %v5056
    %v5857 = vsel %vm2852, %v5793, %v5058
    %v5858 = vsel %vm2852, %v5794, %v5060
    %v5859 = vsel %vm2852, %v5795, %v5062
    %v5860 = vsel %vm2852, %v5796, %v5064
    %v5861 = vsel %vm2852, %v5797, %v5066
    %v5862 = vsel %vm2852, %v5798, %v5068
    %v5863 = vsel %vm2852, %v5799, %v5070
    %v5864 = vsel %vm2852, %v5800, %v5072
    %v5865 = vsel %vm2852, %v5801, %v5074
    %v5866 = vsel %vm2852, %v5802, %v5076
    %v5867 = vsel %vm2852, %v5803, %v5078
    %v5868 = vsel %vm2852, %v5804, %v5080
    %v5869 = vsel %vm2852, %v5805, %v5082
    %v5870 = vsel %vm2852, %v5806, %v5084
    %v5871 = vsel %vm2852, %v5807, %v5086
    %v5872 = vsel %vm2852, %v5808, %v5088
    %v5873 = vsel %vm2852, %v5809, %v5090
    %v5874 = vsel %vm2852, %v5810, %v5092
    %v5875 = vsel %vm2852, %v5811, %v5094
    %v5876 = vsel %vm2852, %v5812, %v5096
    %v5877 = vsel %vm2852, %v5813, %v5098
    %v5878 = vsel %vm2852, %v5814, %v5100
    %v5879 = vsel %vm2852, %v5815, %v5102
    %v5880 = vsel %vm2852, %v5816, %v5104
    %v5881 = vsel %vm2852, %v5817, %v5106
    %v5882 = vsel %vm2852, %v5818, %v5108
    %v5883 = vsel %vm2852, %v5819, %v5110
    %v5884 = vsel %vm2852, %v5820, %v5112
    %v5885 = vsel %vm2852, %v5821, %v5114
    %v5886 = vsel %vm2852, %v5822, %v5116
    %v5887 = vsel %vm2852, %v5823, %v5118
    %v5888 = vsel %vm2852, %v5824, %v5120
    %v5889 = vsel %vm2917, %v5825, %v5186
    %v5890 = vsel %vm2917, %v5826, %v5188
    %v5891 = vsel %vm2917, %v5827, %v5190
    %v5892 = vsel %vm2917, %v5828, %v5192
    %v5893 = vsel %vm2917, %v5829, %v5194
    %v5894 = vsel %vm2917, %v5830, %v5196
    %v5895 = vsel %vm2917, %v5831, %v5198
    %v5896 = vsel %vm2917, %v5832, %v5200
    %v5897 = vsel %vm2917, %v5833, %v5202
    %v5898 = vsel %vm2917, %v5834, %v5204
    %v5899 = vsel %vm2917, %v5835, %v5206
    %v5900 = vsel %vm2917, %v5836, %v5208
    %v5901 = vsel %vm2917, %v5837, %v5210
    %v5902 = vsel %vm2917, %v5838, %v5212
    %v5903 = vsel %vm2917, %v5839, %v5214
    %v5904 = vsel %vm2917, %v5840, %v5216
    %v5905 = vsel %vm2917, %v5841, %v5218
    %v5906 = vsel %vm2917, %v5842, %v5220
    %v5907 = vsel %vm2917, %v5843, %v5222
    %v5908 = vsel %vm2917, %v5844, %v5224
    %v5909 = vsel %vm2917, %v5845, %v5226
    %v5910 = vsel %vm2917, %v5846, %v5228
    %v5911 = vsel %vm2917, %v5847, %v5230
    %v5912 = vsel %vm2917, %v5848, %v5232
    %v5913 = vsel %vm2917, %v5849, %v5234
    %v5914 = vsel %vm2917, %v5850, %v5236
    %v5915 = vsel %vm2917, %v5851, %v5238
    %v5916 = vsel %vm2917, %v5852, %v5240
    %v5917 = vsel %vm2917, %v5853, %v5242
    %v5918 = vsel %vm2917, %v5854, %v5244
    %v5919 = vsel %vm2917, %v5855, %v5246
    %v5920 = vsel %vm2917, %v5856, %v5248
    %v5921 = vsel %vm2917, %v5857, %v5250
    %v5922 = vsel %vm2917, %v5858, %v5252
    %v5923 = vsel %vm2917, %v5859, %v5254
    %v5924 = vsel %vm2917, %v5860, %v5256
    %v5925 = vsel %vm2917, %v5861, %v5258
    %v5926 = vsel %vm2917, %v5862, %v5260
    %v5927 = vsel %vm2917, %v5863, %v5262
    %v5928 = vsel %vm2917, %v5864, %v5264
    %v5929 = vsel %vm2917, %v5865, %v5266
    %v5930 = vsel %vm2917, %v5866, %v5268
    %v5931 = vsel %vm2917, %v5867, %v5270
    %v5932 = vsel %vm2917, %v5868, %v5272
    %v5933 = vsel %vm2917, %v5869, %v5274
    %v5934 = vsel %vm2917, %v5870, %v5276
    %v5935 = vsel %vm2917, %v5871, %v5278
    %v5936 = vsel %vm2917, %v5872, %v5280
    %v5937 = vsel %vm2917, %v5873, %v5282
    %v5938 = vsel %vm2917, %v5874, %v5284
    %v5939 = vsel %vm2917, %v5875, %v5286
    %v5940 = vsel %vm2917, %v5876, %v5288
    %v5941 = vsel %vm2917, %v5877, %v5290
    %v5942 = vsel %vm2917, %v5878, %v5292
    %v5943 = vsel %vm2917, %v5879, %v5294
    %v5944 = vsel %vm2917, %v5880, %v5296
    %v5945 = vsel %vm2917, %v5881, %v5298
    %v5946 = vsel %vm2917, %v5882, %v5300
    %v5947 = vsel %vm2917, %v5883, %v5302
    %v5948 = vsel %vm2917, %v5884, %v5304
    %v5949 = vsel %vm2917, %v5885, %v5306
    %v5950 = vsel %vm2917, %v5886, %v5308
    %v5951 = vsel %vm2917, %v5887, %v5310
    %v5952 = vsel %vm2917, %v5888, %v5312
    %v5953 = vsel %vm2982, %v5889, %v5378
    %v5954 = vsel %vm2982, %v5890, %v5380
    %v5955 = vsel %vm2982, %v5891, %v5382
    %v5956 = vsel %vm2982, %v5892, %v5384
    %v5957 = vsel %vm2982, %v5893, %v5386
    %v5958 = vsel %vm2982, %v5894, %v5388
    %v5959 = vsel %vm2982, %v5895, %v5390
    %v5960 = vsel %vm2982, %v5896, %v5392
    %v5961 = vsel %vm2982, %v5897, %v5394
    %v5962 = vsel %vm2982, %v5898, %v5396
    %v5963 = vsel %vm2982, %v5899, %v5398
    %v5964 = vsel %vm2982, %v5900, %v5400
    %v5965 = vsel %vm2982, %v5901, %v5402
    %v5966 = vsel %vm2982, %v5902, %v5404
    %v5967 = vsel %vm2982, %v5903, %v5406
    %v5968 = vsel %vm2982, %v5904, %v5408
    %v5969 = vsel %vm2982, %v5905, %v5410
    %v5970 = vsel %vm2982, %v5906, %v5412
    %v5971 = vsel %vm2982, %v5907, %v5414
    %v5972 = vsel %vm2982, %v5908, %v5416
    %v5973 = vsel %vm2982, %v5909, %v5418
    %v5974 = vsel %vm2982, %v5910, %v5420
    %v5975 = vsel %vm2982, %v5911, %v5422
    %v5976 = vsel %vm2982, %v5912, %v5424
    %v5977 = vsel %vm2982, %v5913, %v5426
    %v5978 = vsel %vm2982, %v5914, %v5428
    %v5979 = vsel %vm2982, %v5915, %v5430
    %v5980 = vsel %vm2982, %v5916, %v5432
    %v5981 = vsel %vm2982, %v5917, %v5434
    %v5982 = vsel %vm2982, %v5918, %v5436
    %v5983 = vsel %vm2982, %v5919, %v5438
    %v5984 = vsel %vm2982, %v5920, %v5440
    %v5985 = vsel %vm2982, %v5921, %v5442
    %v5986 = vsel %vm2982, %v5922, %v5444
    %v5987 = vsel %vm2982, %v5923, %v5446
    %v5988 = vsel %vm2982, %v5924, %v5448
    %v5989 = vsel %vm2982, %v5925, %v5450
    %v5990 = vsel %vm2982, %v5926, %v5452
    %v5991 = vsel %vm2982, %v5927, %v5454
    %v5992 = vsel %vm2982, %v5928, %v5456
    %v5993 = vsel %vm2982, %v5929, %v5458
    %v5994 = vsel %vm2982, %v5930, %v5460
    %v5995 = vsel %vm2982, %v5931, %v5462
    %v5996 = vsel %vm2982, %v5932, %v5464
    %v5997 = vsel %vm2982, %v5933, %v5466
    %v5998 = vsel %vm2982, %v5934, %v5468
    %v5999 = vsel %vm2982, %v5935, %v5470
    %v6000 = vsel %vm2982, %v5936, %v5472
    %v6001 = vsel %vm2982, %v5937, %v5474
    %v6002 = vsel %vm2982, %v5938, %v5476
    %v6003 = vsel %vm2982, %v5939, %v5478
    %v6004 = vsel %vm2982, %v5940, %v5480
    %v6005 = vsel %vm2982, %v5941, %v5482
    %v6006 = vsel %vm2982, %v5942, %v5484
    %v6007 = vsel %vm2982, %v5943, %v5486
    %v6008 = vsel %vm2982, %v5944, %v5488
    %v6009 = vsel %vm2982, %v5945, %v5490
    %v6010 = vsel %vm2982, %v5946, %v5492
    %v6011 = vsel %vm2982, %v5947, %v5494
    %v6012 = vsel %vm2982, %v5948, %v5496
    %v6013 = vsel %vm2982, %v5949, %v5498
    %v6014 = vsel %vm2982, %v5950, %v5500
    %v6015 = vsel %vm2982, %v5951, %v5502
    %v6016 = vsel %vm2982, %v5952, %v5504
    %v6017 = vld [vmem:[%s7] sm:$0xff]
    %v6018 = vld [vmem:[%s7 + $0x8] sm:$0xff]
    %v6019 = vld [vmem:[%s7 + $0x10] sm:$0xff]
    %v6020 = vld [vmem:[%s7 + $0x18] sm:$0xff]
    %v6021 = vld [vmem:[%s7 + $0x20] sm:$0xff]
    %v6022 = vld [vmem:[%s7 + $0x28] sm:$0xff]
    %v6023 = vld [vmem:[%s7 + $0x30] sm:$0xff]
    %v6024 = vld [vmem:[%s7 + $0x38] sm:$0xff]
    %v6025 = vld [vmem:[%s7 + $0x40] sm:$0xff]
    %v6026 = vld [vmem:[%s7 + $0x48] sm:$0xff]
    %v6027 = vld [vmem:[%s7 + $0x50] sm:$0xff]
    %v6028 = vld [vmem:[%s7 + $0x58] sm:$0xff]
    %v6029 = vld [vmem:[%s7 + $0x60] sm:$0xff]
    %v6030 = vld [vmem:[%s7 + $0x68] sm:$0xff]
    %v6031 = vld [vmem:[%s7 + $0x70] sm:$0xff]
    %v6032 = vld [vmem:[%s7 + $0x78] sm:$0xff]
    %v6033 = vld [vmem:[%s7 + $0x80] sm:$0xff]
    %v6034 = vld [vmem:[%s7 + $0x88] sm:$0xff]
    %v6035 = vld [vmem:[%s8] sm:$0x1]
    %v6037 = vlaneseq
    %v6038 = vshrl.u32 %v6037, 7
    %v6039 = vsub.s32 0, %v6038
    %v6040 = vrot.slane %v6035, %v6039
    %v6042 = vsel %vm117, %v4025, 0
    %v6044 = vsel %vm117, %v4027, 0
    %v6046 = vsel %vm117, %v4030, 0
    %v6048 = vsel %vm117, %v4032, 0
    %v6050 = vsel %vm117, %v4035, 0
    %v6052 = vsel %vm117, %v4037, 0
    %v6054 = vsel %vm117, %v4040, 0
    %v6056 = vsel %vm117, %v4042, 0
    %v6058 = vsel %vm117, %v4045, 0
    %v6060 = vsel %vm117, %v4047, 0
    %v6062 = vsel %vm117, %v4050, 0
    %v6064 = vsel %vm117, %v4052, 0
    %v6066 = vsel %vm117, %v4055, 0
    %v6068 = vsel %vm117, %v4057, 0
    %v6070 = vsel %vm117, %v4060, 0
    %v6072 = vsel %vm117, %v4062, 0
    %v6074 = vsel %vm117, %v4065, 0
    %v6076 = vsel %vm117, %v4067, 0
    %v6078 = vsel %vm117, %v4070, 0
    %v6080 = vsel %vm117, %v4072, 0
    %v6082 = vsel %vm117, %v4075, 0
    %v6084 = vsel %vm117, %v4077, 0
    %v6086 = vsel %vm117, %v4080, 0
    %v6088 = vsel %vm117, %v4082, 0
    %v6090 = vsel %vm117, %v4085, 0
    %v6092 = vsel %vm117, %v4087, 0
    %v6094 = vsel %vm117, %v4090, 0
    %v6096 = vsel %vm117, %v4092, 0
    %v6098 = vsel %vm117, %v4191, 0
    %v6100 = vsel %vm117, %v4193, 0
    %v6102 = vsel %vm117, %v4217, 0
    %v6104 = vsel %vm117, %v4219, 0
    %v6106 = vsel %vm117, %v4105, 0
    %v6108 = vsel %vm117, %v4107, 0
    %v6110 = vsel %vm117, %v4110, 0
    %v6112 = vsel %vm117, %v4112, 0
    %v6114 = vsel %vm117, %v4115, 0
    %v6116 = vsel %vm117, %v4117, 0
    %v6118 = vsel %vm117, %v4120, 0
    %v6120 = vsel %vm117, %v4122, 0
    %v6122 = vsel %vm117, %v4125, 0
    %v6124 = vsel %vm117, %v4127, 0
    %v6126 = vsel %vm117, %v4130, 0
    %v6128 = vsel %vm117, %v4132, 0
    %v6130 = vsel %vm117, %v4135, 0
    %v6132 = vsel %vm117, %v4137, 0
    %v6134 = vsel %vm117, %v4140, 0
    %v6136 = vsel %vm117, %v4142, 0
    %v6138 = vsel %vm117, %v4145, 0
    %v6140 = vsel %vm117, %v4147, 0
    %v6142 = vsel %vm117, %v4150, 0
    %v6144 = vsel %vm117, %v4152, 0
    %v6146 = vsel %vm117, %v4155, 0
    %v6148 = vsel %vm117, %v4157, 0
    %v6150 = vsel %vm117, %v4160, 0
    %v6152 = vsel %vm117, %v4162, 0
    %v6154 = vsel %vm117, %v4165, 0
    %v6156 = vsel %vm117, %v4167, 0
    %v6158 = vsel %vm117, %v4170, 0
    %v6160 = vsel %vm117, %v4172, 0
    %v6162 = vsel %vm117, %v4196, 0
    %v6164 = vsel %vm117, %v4198, 0
    %v6166 = vsel %vm117, %v4222, 0
    %v6168 = vsel %vm117, %v4224, 0
    %6170 = vmatprep.subr.mxu0 0.0
    %6171 = vmatpush1.msra.mxu0 %v6017
    %6172 = vmatprep.subr.mxu0 0.0
    %6173 = vmatpush1.msra.mxu0 %v6018
    %6174 = vmatprep.subr.mxu0 0.0
    %6175 = vmatpush1.msra.mxu0 %v6019
    %6176 = vmatprep.subr.mxu0 0.0
    %6177 = vmatpush1.msra.mxu0 %v6020
    %6178 = vmatprep.subr.mxu0 0.0
    %6179 = vmatpush1.msra.mxu0 %v6021
    %6180 = vmatprep.subr.mxu0 0.0
    %6181 = vmatpush1.msra.mxu0 %v6022
    %6182 = vmatprep.subr.mxu0 0.0
    %6183 = vmatpush1.msra.mxu0 %v6023
    %6184 = vmatprep.subr.mxu0 0.0
    %6185 = vmatpush1.msra.mxu0 %v6024
    %6186 = vmatprep.subr.mxu0 0.0
    %6187 = vmatpush1.msra.mxu0 %v6025
    %6188 = vmatprep.subr.mxu0 0.0
    %6189 = vmatpush1.msra.mxu0 %v6026
    %6190 = vmatprep.subr.mxu0 0.0
    %6191 = vmatpush1.msra.mxu0 %v6027
    %6192 = vmatprep.subr.mxu0 0.0
    %6193 = vmatpush1.msra.mxu0 %v6028
    %6194 = vmatprep.subr.mxu0 0.0
    %6195 = vmatpush1.msra.mxu0 %v6029
    %6196 = vmatprep.subr.mxu0 0.0
    %6197 = vmatpush1.msra.mxu0 %v6030
    %6198 = vmatprep.subr.mxu0 0.0
    %6199 = vmatpush1.msra.mxu0 %v6031
    %6200 = vmatprep.subr.mxu0 0.0
    %6201 = vmatpush1.msra.mxu0 %v6032
    %6202 = vmatprep.subr.mxu0 0.0
    %6203 = vmatpush1.msra.mxu0 %v6033
    %6204 = vmatprep.subr.mxu0 0.0
    %6205 = vmatpush1.msra.mxu0 %v6034
    %6206 = vmatprep.subr.mxu0 0.0
    %6207 = vmatpush1.msra.mxu0 0.0
    %6208 = vmatprep.subr.mxu0 0.0
    %6209 = vmatpush1.msra.mxu0 0.0
    %6210 = vmatprep.subr.mxu0 0.0
    %6211 = vmatpush1.msra.mxu0 0.0
    %6212 = vmatprep.subr.mxu0 0.0
    %6213 = vmatpush1.msra.mxu0 0.0
    %6214 = vmatprep.subr.mxu0 0.0
    %6215 = vmatpush1.msra.mxu0 0.0
    %6216 = vmatprep.subr.mxu0 0.0
    %6217 = vmatpush1.msra.mxu0 0.0
    %6218 = vmatprep.subr.mxu0 0.0
    %6219 = vmatpush1.msra.mxu0 0.0
    %6220 = vmatprep.subr.mxu0 0.0
    %6221 = vmatpush1.msra.mxu0 0.0
    %6222 = vmatprep.subr.mxu0 0.0
    %6223 = vmatpush1.msra.mxu0 0.0
    %6224 = vmatprep.subr.mxu0 0.0
    %6225 = vmatpush1.msra.mxu0 0.0
    %6226 = vmatprep.subr.mxu0 0.0
    %6227 = vmatpush1.msra.mxu0 0.0
    %6228 = vmatprep.subr.mxu0 0.0
    %6229 = vmatpush1.msra.mxu0 0.0
    %6230 = vmatprep.subr.mxu0 0.0
    %6231 = vmatpush1.msra.mxu0 0.0
    %6232 = vmatprep.subr.mxu0 0.0
    %6233 = vmatpush1.msra.mxu0 0.0
    %6234 = vmatprep.mubr.f32.mxu0 %v6042
    %6235 = vmatmul.mubr.f32.gmra.mrb[0].mxu0 %v5953
    %v6236 = vpop.f32.mrb[0].mxu0
    %v6237 = vadd.f32 %v6040, %v6236
    %v6238 = vpop.f32.mrb[0].mxu0
    %6239 = vmatprep.mubr.f32.mxu0 %v6044
    %6240 = vmatmul.mubr.f32.gmra.mrb[0].mxu0 %v5954
    %v6241 = vpop.f32.mrb[0].mxu0
    %v6242 = vadd.f32 %v6040, %v6241
    %v6243 = vpop.f32.mrb[0].mxu0
    %6244 = vmatprep.mubr.f32.mxu0 %v6046
    %6245 = vmatmul.mubr.f32.gmra.mrb[0].mxu0 %v5955
    %v6246 = vpop.f32.mrb[0].mxu0
    %v6247 = vadd.f32 %v6040, %v6246
    %v6248 = vpop.f32.mrb[0].mxu0
    %6249 = vmatprep.mubr.f32.mxu0 %v6048
    %6250 = vmatmul.mubr.f32.gmra.mrb[0].mxu0 %v5956
    %v6251 = vpop.f32.mrb[0].mxu0
    %v6252 = vadd.f32 %v6040, %v6251
    %v6253 = vpop.f32.mrb[0].mxu0
    %6254 = vmatprep.mubr.f32.mxu0 %v6050
    %6255 = vmatmul.mubr.f32.gmra.mrb[0].mxu0 %v5957
    %v6256 = vpop.f32.mrb[0].mxu0
    %v6257 = vadd.f32 %v6040, %v6256
    %v6258 = vpop.f32.mrb[0].mxu0
    %6259 = vmatprep.mubr.f32.mxu0 %v6052
    %6260 = vmatmul.mubr.f32.gmra.mrb[0].mxu0 %v5958
    %v6261 = vpop.f32.mrb[0].mxu0
    %v6262 = vadd.f32 %v6040, %v6261
    %v6263 = vpop.f32.mrb[0].mxu0
    %6264 = vmatprep.mubr.f32.mxu0 %v6054
    %6265 = vmatmul.mubr.f32.gmra.mrb[0].mxu0 %v5959
    %v6266 = vpop.f32.mrb[0].mxu0
    %v6267 = vadd.f32 %v6040, %v6266
    %v6268 = vpop.f32.mrb[0].mxu0
    %6269 = vmatprep.mubr.f32.mxu0 %v6056
    %6270 = vmatmul.mubr.f32.gmra.mrb[0].mxu0 %v5960
    %v6271 = vpop.f32.mrb[0].mxu0
    %v6272 = vadd.f32 %v6040, %v6271
    %v6273 = vpop.f32.mrb[0].mxu0
    %6274 = vmatprep.mubr.f32.mxu0 %v6058
    %6275 = vmatmul.mubr.f32.gmra.mrb[0].mxu0 %v5961
    %v6276 = vpop.f32.mrb[0].mxu0
    %v6277 = vadd.f32 %v6040, %v6276
    %v6278 = vpop.f32.mrb[0].mxu0
    %6279 = vmatprep.mubr.f32.mxu0 %v6060
    %6280 = vmatmul.mubr.f32.gmra.mrb[0].mxu0 %v5962
    %v6281 = vpop.f32.mrb[0].mxu0
    %v6282 = vadd.f32 %v6040, %v6281
    %v6283 = vpop.f32.mrb[0].mxu0
    %6284 = vmatprep.mubr.f32.mxu0 %v6062
    %6285 = vmatmul.mubr.f32.gmra.mrb[0].mxu0 %v5963
    %v6286 = vpop.f32.mrb[0].mxu0
    %v6287 = vadd.f32 %v6040, %v6286
    %v6288 = vpop.f32.mrb[0].mxu0
    %6289 = vmatprep.mubr.f32.mxu0 %v6064
    %6290 = vmatmul.mubr.f32.gmra.mrb[0].mxu0 %v5964
    %v6291 = vpop.f32.mrb[0].mxu0
    %v6292 = vadd.f32 %v6040, %v6291
    %v6293 = vpop.f32.mrb[0].mxu0
    %6294 = vmatprep.mubr.f32.mxu0 %v6066
    %6295 = vmatmul.mubr.f32.gmra.mrb[0].mxu0 %v5965
    %v6296 = vpop.f32.mrb[0].mxu0
    %v6297 = vadd.f32 %v6040, %v6296
    %v6298 = vpop.f32.mrb[0].mxu0
    %6299 = vmatprep.mubr.f32.mxu0 %v6068
    %6300 = vmatmul.mubr.f32.gmra.mrb[0].mxu0 %v5966
    %v6301 = vpop.f32.mrb[0].mxu0
    %v6302 = vadd.f32 %v6040, %v6301
    %v6303 = vpop.f32.mrb[0].mxu0
    %6304 = vmatprep.mubr.f32.mxu0 %v6070
    %6305 = vmatmul.mubr.f32.gmra.mrb[0].mxu0 %v5967
    %v6306 = vpop.f32.mrb[0].mxu0
    %v6307 = vadd.f32 %v6040, %v6306
    %v6308 = vpop.f32.mrb[0].mxu0
    %6309 = vmatprep.mubr.f32.mxu0 %v6072
    %6310 = vmatmul.mubr.f32.gmra.mrb[0].mxu0 %v5968
    %v6311 = vpop.f32.mrb[0].mxu0
    %v6312 = vadd.f32 %v6040, %v6311
    %v6313 = vpop.f32.mrb[0].mxu0
    %6314 = vmatprep.mubr.f32.mxu0 %v6074
    %6315 = vmatmul.mubr.f32.gmra.mrb[0].mxu0 %v5969
    %v6316 = vpop.f32.mrb[0].mxu0
    %v6317 = vadd.f32 %v6040, %v6316
    %v6318 = vpop.f32.mrb[0].mxu0
    %6319 = vmatprep.mubr.f32.mxu0 %v6076
    %6320 = vmatmul.mubr.f32.gmra.mrb[0].mxu0 %v5970
    %v6321 = vpop.f32.mrb[0].mxu0
    %v6322 = vadd.f32 %v6040, %v6321
    %v6323 = vpop.f32.mrb[0].mxu0
    %6324 = vmatprep.mubr.f32.mxu0 %v6078
    %6325 = vmatmul.mubr.f32.gmra.mrb[0].mxu0 %v5971
    %v6326 = vpop.f32.mrb[0].mxu0
    %v6327 = vadd.f32 %v6040, %v6326
    %v6328 = vpop.f32.mrb[0].mxu0
    %6329 = vmatprep.mubr.f32.mxu0 %v6080
    %6330 = vmatmul.mubr.f32.gmra.mrb[0].mxu0 %v5972
    %v6331 = vpop.f32.mrb[0].mxu0
    %v6332 = vadd.f32 %v6040, %v6331
    %v6333 = vpop.f32.mrb[0].mxu0
    %6334 = vmatprep.mubr.f32.mxu0 %v6082
    %6335 = vmatmul.mubr.f32.gmra.mrb[0].mxu0 %v5973
    %v6336 = vpop.f32.mrb[0].mxu0
    %v6337 = vadd.f32 %v6040, %v6336
    %v6338 = vpop.f32.mrb[0].mxu0
    %6339 = vmatprep.mubr.f32.mxu0 %v6084
    %6340 = vmatmul.mubr.f32.gmra.mrb[0].mxu0 %v5974
    %v6341 = vpop.f32.mrb[0].mxu0
    %v6342 = vadd.f32 %v6040, %v6341
    %v6343 = vpop.f32.mrb[0].mxu0
    %6344 = vmatprep.mubr.f32.mxu0 %v6086
    %6345 = vmatmul.mubr.f32.gmra.mrb[0].mxu0 %v5975
    %v6346 = vpop.f32.mrb[0].mxu0
    %v6347 = vadd.f32 %v6040, %v6346
    %v6348 = vpop.f32.mrb[0].mxu0
    %6349 = vmatprep.mubr.f32.mxu0 %v6088
    %6350 = vmatmul.mubr.f32.gmra.mrb[0].mxu0 %v5976
    %v6351 = vpop.f32.mrb[0].mxu0
    %v6352 = vadd.f32 %v6040, %v6351
    %v6353 = vpop.f32.mrb[0].mxu0
    %6354 = vmatprep.mubr.f32.mxu0 %v6090
    %6355 = vmatmul.mubr.f32.gmra.mrb[0].mxu0 %v5977
    %v6356 = vpop.f32.mrb[0].mxu0
    %v6357 = vadd.f32 %v6040, %v6356
    %v6358 = vpop.f32.mrb[0].mxu0
    %6359 = vmatprep.mubr.f32.mxu0 %v6092
    %6360 = vmatmul.mubr.f32.gmra.mrb[0].mxu0 %v5978
    %v6361 = vpop.f32.mrb[0].mxu0
    %v6362 = vadd.f32 %v6040, %v6361
    %v6363 = vpop.f32.mrb[0].mxu0
    %6364 = vmatprep.mubr.f32.mxu0 %v6094
    %6365 = vmatmul.mubr.f32.gmra.mrb[0].mxu0 %v5979
    %v6366 = vpop.f32.mrb[0].mxu0
    %v6367 = vadd.f32 %v6040, %v6366
    %v6368 = vpop.f32.mrb[0].mxu0
    %6369 = vmatprep.mubr.f32.mxu0 %v6096
    %6370 = vmatmul.mubr.f32.gmra.mrb[0].mxu0 %v5980
    %v6371 = vpop.f32.mrb[0].mxu0
    %v6372 = vadd.f32 %v6040, %v6371
    %v6373 = vpop.f32.mrb[0].mxu0
    %6374 = vmatprep.mubr.f32.mxu0 %v6098
    %6375 = vmatmul.mubr.f32.gmra.mrb[0].mxu0 %v5981
    %v6376 = vpop.f32.mrb[0].mxu0
    %v6377 = vadd.f32 %v6040, %v6376
    %v6378 = vpop.f32.mrb[0].mxu0
    %6379 = vmatprep.mubr.f32.mxu0 %v6100
    %6380 = vmatmul.mubr.f32.gmra.mrb[0].mxu0 %v5982
    %v6381 = vpop.f32.mrb[0].mxu0
    %v6382 = vadd.f32 %v6040, %v6381
    %v6383 = vpop.f32.mrb[0].mxu0
    %6384 = vmatprep.mubr.f32.mxu0 %v6102
    %6385 = vmatmul.mubr.f32.gmra.mrb[0].mxu0 %v5983
    %v6386 = vpop.f32.mrb[0].mxu0
    %v6387 = vadd.f32 %v6040, %v6386
    %v6388 = vpop.f32.mrb[0].mxu0
    %6389 = vmatprep.mubr.f32.mxu0 %v6104
    %6390 = vmatmul.mubr.f32.gmra.mrb[0].mxu0 %v5984
    %v6391 = vpop.f32.mrb[0].mxu0
    %v6392 = vadd.f32 %v6040, %v6391
    %v6393 = vpop.f32.mrb[0].mxu0
    %6394 = vmatprep.mubr.f32.mxu0 %v6106
    %6395 = vmatmul.mubr.f32.gmra.mrb[0].mxu0 %v5985
    %v6396 = vpop.f32.mrb[0].mxu0
    %v6397 = vadd.f32 %v6040, %v6396
    %v6398 = vpop.f32.mrb[0].mxu0
    %6399 = vmatprep.mubr.f32.mxu0 %v6108
    %6400 = vmatmul.mubr.f32.gmra.mrb[0].mxu0 %v5986
    %v6401 = vpop.f32.mrb[0].mxu0
    %v6402 = vadd.f32 %v6040, %v6401
    %v6403 = vpop.f32.mrb[0].mxu0
    %6404 = vmatprep.mubr.f32.mxu0 %v6110
    %6405 = vmatmul.mubr.f32.gmra.mrb[0].mxu0 %v5987
    %v6406 = vpop.f32.mrb[0].mxu0
    %v6407 = vadd.f32 %v6040, %v6406
    %v6408 = vpop.f32.mrb[0].mxu0
    %6409 = vmatprep.mubr.f32.mxu0 %v6112
    %6410 = vmatmul.mubr.f32.gmra.mrb[0].mxu0 %v5988
    %v6411 = vpop.f32.mrb[0].mxu0
    %v6412 = vadd.f32 %v6040, %v6411
    %v6413 = vpop.f32.mrb[0].mxu0
    %6414 = vmatprep.mubr.f32.mxu0 %v6114
    %6415 = vmatmul.mubr.f32.gmra.mrb[0].mxu0 %v5989
    %v6416 = vpop.f32.mrb[0].mxu0
    %v6417 = vadd.f32 %v6040, %v6416
    %v6418 = vpop.f32.mrb[0].mxu0
    %6419 = vmatprep.mubr.f32.mxu0 %v6116
    %6420 = vmatmul.mubr.f32.gmra.mrb[0].mxu0 %v5990
    %v6421 = vpop.f32.mrb[0].mxu0
    %v6422 = vadd.f32 %v6040, %v6421
    %v6423 = vpop.f32.mrb[0].mxu0
    %6424 = vmatprep.mubr.f32.mxu0 %v6118
    %6425 = vmatmul.mubr.f32.gmra.mrb[0].mxu0 %v5991
    %v6426 = vpop.f32.mrb[0].mxu0
    %v6427 = vadd.f32 %v6040, %v6426
    %v6428 = vpop.f32.mrb[0].mxu0
    %6429 = vmatprep.mubr.f32.mxu0 %v6120
    %6430 = vmatmul.mubr.f32.gmra.mrb[0].mxu0 %v5992
    %v6431 = vpop.f32.mrb[0].mxu0
    %v6432 = vadd.f32 %v6040, %v6431
    %v6433 = vpop.f32.mrb[0].mxu0
    %6434 = vmatprep.mubr.f32.mxu0 %v6122
    %6435 = vmatmul.mubr.f32.gmra.mrb[0].mxu0 %v5993
    %v6436 = vpop.f32.mrb[0].mxu0
    %v6437 = vadd.f32 %v6040, %v6436
    %v6438 = vpop.f32.mrb[0].mxu0
    %6439 = vmatprep.mubr.f32.mxu0 %v6124
    %6440 = vmatmul.mubr.f32.gmra.mrb[0].mxu0 %v5994
    %v6441 = vpop.f32.mrb[0].mxu0
    %v6442 = vadd.f32 %v6040, %v6441
    %v6443 = vpop.f32.mrb[0].mxu0
    %6444 = vmatprep.mubr.f32.mxu0 %v6126
    %6445 = vmatmul.mubr.f32.gmra.mrb[0].mxu0 %v5995
    %v6446 = vpop.f32.mrb[0].mxu0
    %v6447 = vadd.f32 %v6040, %v6446
    %v6448 = vpop.f32.mrb[0].mxu0
    %6449 = vmatprep.mubr.f32.mxu0 %v6128
    %6450 = vmatmul.mubr.f32.gmra.mrb[0].mxu0 %v5996
    %v6451 = vpop.f32.mrb[0].mxu0
    %v6452 = vadd.f32 %v6040, %v6451
    %v6453 = vpop.f32.mrb[0].mxu0
    %6454 = vmatprep.mubr.f32.mxu0 %v6130
    %6455 = vmatmul.mubr.f32.gmra.mrb[0].mxu0 %v5997
    %v6456 = vpop.f32.mrb[0].mxu0
    %v6457 = vadd.f32 %v6040, %v6456
    %v6458 = vpop.f32.mrb[0].mxu0
    %6459 = vmatprep.mubr.f32.mxu0 %v6132
    %6460 = vmatmul.mubr.f32.gmra.mrb[0].mxu0 %v5998
    %v6461 = vpop.f32.mrb[0].mxu0
    %v6462 = vadd.f32 %v6040, %v6461
    %v6463 = vpop.f32.mrb[0].mxu0
    %6464 = vmatprep.mubr.f32.mxu0 %v6134
    %6465 = vmatmul.mubr.f32.gmra.mrb[0].mxu0 %v5999
    %v6466 = vpop.f32.mrb[0].mxu0
    %v6467 = vadd.f32 %v6040, %v6466
    %v6468 = vpop.f32.mrb[0].mxu0
    %6469 = vmatprep.mubr.f32.mxu0 %v6136
    %6470 = vmatmul.mubr.f32.gmra.mrb[0].mxu0 %v6000
    %v6471 = vpop.f32.mrb[0].mxu0
    %v6472 = vadd.f32 %v6040, %v6471
    %v6473 = vpop.f32.mrb[0].mxu0
    %6474 = vmatprep.mubr.f32.mxu0 %v6138
    %6475 = vmatmul.mubr.f32.gmra.mrb[0].mxu0 %v6001
    %v6476 = vpop.f32.mrb[0].mxu0
    %v6477 = vadd.f32 %v6040, %v6476
    %v6478 = vpop.f32.mrb[0].mxu0
    %6479 = vmatprep.mubr.f32.mxu0 %v6140
    %6480 = vmatmul.mubr.f32.gmra.mrb[0].mxu0 %v6002
    %v6481 = vpop.f32.mrb[0].mxu0
    %v6482 = vadd.f32 %v6040, %v6481
    %v6483 = vpop.f32.mrb[0].mxu0
    %6484 = vmatprep.mubr.f32.mxu0 %v6142
    %6485 = vmatmul.mubr.f32.gmra.mrb[0].mxu0 %v6003
    %v6486 = vpop.f32.mrb[0].mxu0
    %v6487 = vadd.f32 %v6040, %v6486
    %v6488 = vpop.f32.mrb[0].mxu0
    %6489 = vmatprep.mubr.f32.mxu0 %v6144
    %6490 = vmatmul.mubr.f32.gmra.mrb[0].mxu0 %v6004
    %v6491 = vpop.f32.mrb[0].mxu0
    %v6492 = vadd.f32 %v6040, %v6491
    %v6493 = vpop.f32.mrb[0].mxu0
    %6494 = vmatprep.mubr.f32.mxu0 %v6146
    %6495 = vmatmul.mubr.f32.gmra.mrb[0].mxu0 %v6005
    %v6496 = vpop.f32.mrb[0].mxu0
    %v6497 = vadd.f32 %v6040, %v6496
    %v6498 = vpop.f32.mrb[0].mxu0
    %6499 = vmatprep.mubr.f32.mxu0 %v6148
    %6500 = vmatmul.mubr.f32.gmra.mrb[0].mxu0 %v6006
    %v6501 = vpop.f32.mrb[0].mxu0
    %v6502 = vadd.f32 %v6040, %v6501
    %v6503 = vpop.f32.mrb[0].mxu0
    %6504 = vmatprep.mubr.f32.mxu0 %v6150
    %6505 = vmatmul.mubr.f32.gmra.mrb[0].mxu0 %v6007
    %v6506 = vpop.f32.mrb[0].mxu0
    %v6507 = vadd.f32 %v6040, %v6506
    %v6508 = vpop.f32.mrb[0].mxu0
    %6509 = vmatprep.mubr.f32.mxu0 %v6152
    %6510 = vmatmul.mubr.f32.gmra.mrb[0].mxu0 %v6008
    %v6511 = vpop.f32.mrb[0].mxu0
    %v6512 = vadd.f32 %v6040, %v6511
    %v6513 = vpop.f32.mrb[0].mxu0
    %6514 = vmatprep.mubr.f32.mxu0 %v6154
    %6515 = vmatmul.mubr.f32.gmra.mrb[0].mxu0 %v6009
    %v6516 = vpop.f32.mrb[0].mxu0
    %v6517 = vadd.f32 %v6040, %v6516
    %v6518 = vpop.f32.mrb[0].mxu0
    %6519 = vmatprep.mubr.f32.mxu0 %v6156
    %6520 = vmatmul.mubr.f32.gmra.mrb[0].mxu0 %v6010
    %v6521 = vpop.f32.mrb[0].mxu0
    %v6522 = vadd.f32 %v6040, %v6521
    %v6523 = vpop.f32.mrb[0].mxu0
    %6524 = vmatprep.mubr.f32.mxu0 %v6158
    %6525 = vmatmul.mubr.f32.gmra.mrb[0].mxu0 %v6011
    %v6526 = vpop.f32.mrb[0].mxu0
    %v6527 = vadd.f32 %v6040, %v6526
    %v6528 = vpop.f32.mrb[0].mxu0
    %6529 = vmatprep.mubr.f32.mxu0 %v6160
    %6530 = vmatmul.mubr.f32.gmra.mrb[0].mxu0 %v6012
    %v6531 = vpop.f32.mrb[0].mxu0
    %v6532 = vadd.f32 %v6040, %v6531
    %v6533 = vpop.f32.mrb[0].mxu0
    %6534 = vmatprep.mubr.f32.mxu0 %v6162
    %6535 = vmatmul.mubr.f32.gmra.mrb[0].mxu0 %v6013
    %v6536 = vpop.f32.mrb[0].mxu0
    %v6537 = vadd.f32 %v6040, %v6536
    %v6538 = vpop.f32.mrb[0].mxu0
    %6539 = vmatprep.mubr.f32.mxu0 %v6164
    %6540 = vmatmul.mubr.f32.gmra.mrb[0].mxu0 %v6014
    %v6541 = vpop.f32.mrb[0].mxu0
    %v6542 = vadd.f32 %v6040, %v6541
    %v6543 = vpop.f32.mrb[0].mxu0
    %6544 = vmatprep.mubr.f32.mxu0 %v6166
    %6545 = vmatmul.mubr.f32.gmra.mrb[0].mxu0 %v6015
    %v6546 = vpop.f32.mrb[0].mxu0
    %v6547 = vadd.f32 %v6040, %v6546
    %v6548 = vpop.f32.mrb[0].mxu0
    %6549 = vmatprep.mubr.f32.mxu0 %v6168
    %6550 = vmatmul.mubr.f32.gmra.mrb[0].mxu0 %v6016
    %v6551 = vpop.f32.mrb[0].mxu0
    %v6552 = vadd.f32 %v6040, %v6551
    %v6553 = vpop.f32.mrb[0].mxu0
    %6554 = vdwg.mxu0
    %v6555 = vmax.f32 %v6237, 0.0
    %v6556 = vmax.f32 %v6242, 0.0
    %v6557 = vmax.f32 %v6247, 0.0
    %v6558 = vmax.f32 %v6252, 0.0
    %v6559 = vmax.f32 %v6257, 0.0
    %v6560 = vmax.f32 %v6262, 0.0
    %v6561 = vmax.f32 %v6267, 0.0
    %v6562 = vmax.f32 %v6272, 0.0
    %v6563 = vmax.f32 %v6277, 0.0
    %v6564 = vmax.f32 %v6282, 0.0
    %v6565 = vmax.f32 %v6287, 0.0
    %v6566 = vmax.f32 %v6292, 0.0
    %v6567 = vmax.f32 %v6297, 0.0
    %v6568 = vmax.f32 %v6302, 0.0
    %v6569 = vmax.f32 %v6307, 0.0
    %v6570 = vmax.f32 %v6312, 0.0
    %v6571 = vmax.f32 %v6317, 0.0
    %v6572 = vmax.f32 %v6322, 0.0
    %v6573 = vmax.f32 %v6327, 0.0
    %v6574 = vmax.f32 %v6332, 0.0
    %v6575 = vmax.f32 %v6337, 0.0
    %v6576 = vmax.f32 %v6342, 0.0
    %v6577 = vmax.f32 %v6347, 0.0
    %v6578 = vmax.f32 %v6352, 0.0
    %v6579 = vmax.f32 %v6357, 0.0
    %v6580 = vmax.f32 %v6362, 0.0
    %v6581 = vmax.f32 %v6367, 0.0
    %v6582 = vmax.f32 %v6372, 0.0
    %v6583 = vmax.f32 %v6377, 0.0
    %v6584 = vmax.f32 %v6382, 0.0
    %v6585 = vmax.f32 %v6387, 0.0
    %v6586 = vmax.f32 %v6392, 0.0
    %v6587 = vmax.f32 %v6397, 0.0
    %v6588 = vmax.f32 %v6402, 0.0
    %v6589 = vmax.f32 %v6407, 0.0
    %v6590 = vmax.f32 %v6412, 0.0
    %v6591 = vmax.f32 %v6417, 0.0
    %v6592 = vmax.f32 %v6422, 0.0
    %v6593 = vmax.f32 %v6427, 0.0
    %v6594 = vmax.f32 %v6432, 0.0
    %v6595 = vmax.f32 %v6437, 0.0
    %v6596 = vmax.f32 %v6442, 0.0
    %v6597 = vmax.f32 %v6447, 0.0
    %v6598 = vmax.f32 %v6452, 0.0
    %v6599 = vmax.f32 %v6457, 0.0
    %v6600 = vmax.f32 %v6462, 0.0
    %v6601 = vmax.f32 %v6467, 0.0
    %v6602 = vmax.f32 %v6472, 0.0
    %v6603 = vmax.f32 %v6477, 0.0
    %v6604 = vmax.f32 %v6482, 0.0
    %v6605 = vmax.f32 %v6487, 0.0
    %v6606 = vmax.f32 %v6492, 0.0
    %v6607 = vmax.f32 %v6497, 0.0
    %v6608 = vmax.f32 %v6502, 0.0
    %v6609 = vmax.f32 %v6507, 0.0
    %v6610 = vmax.f32 %v6512, 0.0
    %v6611 = vmax.f32 %v6517, 0.0
    %v6612 = vmax.f32 %v6522, 0.0
    %v6613 = vmax.f32 %v6527, 0.0
    %v6614 = vmax.f32 %v6532, 0.0
    %v6615 = vmax.f32 %v6537, 0.0
    %v6616 = vmax.f32 %v6542, 0.0
    %v6617 = vmax.f32 %v6547, 0.0
    %v6618 = vmax.f32 %v6552, 0.0
    %s6619 = scalar_lea.vmem [#allocation3], 24
    %6620 = vst.msk [vmem:[%s6619 + $0x1] sm:$0xff] %vm352, %v6555
    %6621 = vst.msk [vmem:[%s6619 + $0x9] sm:$0xff] %vm352, %v6556
    %6622 = vst.msk [vmem:[%s6619 + $0x19] sm:$0xff] %vm352, %v6557
    %6623 = vst.msk [vmem:[%s6619 + $0x21] sm:$0xff] %vm352, %v6558
    %6624 = vst.msk [vmem:[%s6619 + $0x31] sm:$0xff] %vm352, %v6559
    %6625 = vst.msk [vmem:[%s6619 + $0x39] sm:$0xff] %vm352, %v6560
    %6626 = vst.msk [vmem:[%s6619 + $0x49] sm:$0xff] %vm352, %v6561
    %6627 = vst.msk [vmem:[%s6619 + $0x51] sm:$0xff] %vm352, %v6562
    %6628 = vst.msk [vmem:[%s6619 + $0x61] sm:$0xff] %vm352, %v6563
    %6629 = vst.msk [vmem:[%s6619 + $0x69] sm:$0xff] %vm352, %v6564
    %6630 = vst.msk [vmem:[%s6619 + $0x79] sm:$0xff] %vm352, %v6565
    %6631 = vst.msk [vmem:[%s6619 + $0x81] sm:$0xff] %vm352, %v6566
    %6632 = vst.msk [vmem:[%s6619 + $0x91] sm:$0xff] %vm352, %v6567
    %6633 = vst.msk [vmem:[%s6619 + $0x99] sm:$0xff] %vm352, %v6568
    %6634 = vst.msk [vmem:[%s6619 + $0xa9] sm:$0xff] %vm352, %v6569
    %6635 = vst.msk [vmem:[%s6619 + $0xb1] sm:$0xff] %vm352, %v6570
    %6636 = vst.msk [vmem:[%s6619 + $0xc1] sm:$0xff] %vm352, %v6571
    %6637 = vst.msk [vmem:[%s6619 + $0xc9] sm:$0xff] %vm352, %v6572
    %6638 = vst.msk [vmem:[%s6619 + $0xd9] sm:$0xff] %vm352, %v6573
    %6639 = vst.msk [vmem:[%s6619 + $0xe1] sm:$0xff] %vm352, %v6574
    %6640 = vst.msk [vmem:[%s6619 + $0xf1] sm:$0xff] %vm352, %v6575
    %6641 = vst.msk [vmem:[%s6619 + $0xf9] sm:$0xff] %vm352, %v6576
    %6642 = vst.msk [vmem:[%s6619 + $0x109] sm:$0xff] %vm352, %v6577
    %6643 = vst.msk [vmem:[%s6619 + $0x111] sm:$0xff] %vm352, %v6578
    %6644 = vst.msk [vmem:[%s6619 + $0x121] sm:$0xff] %vm352, %v6579
    %6645 = vst.msk [vmem:[%s6619 + $0x129] sm:$0xff] %vm352, %v6580
    %6646 = vst.msk [vmem:[%s6619 + $0x139] sm:$0xff] %vm352, %v6581
    %6647 = vst.msk [vmem:[%s6619 + $0x141] sm:$0xff] %vm352, %v6582
    %6648 = vst.msk [vmem:[%s6619 + $0x151] sm:$0xff] %vm352, %v6583
    %6649 = vst.msk [vmem:[%s6619 + $0x159] sm:$0xff] %vm352, %v6584
    %6650 = vst.msk [vmem:[%s6619 + $0x169] sm:$0xff] %vm352, %v6585
    %6651 = vst.msk [vmem:[%s6619 + $0x171] sm:$0xff] %vm352, %v6586
    %6652 = vst.msk [vmem:[%s6619 + $0x1b1] sm:$0xff] %vm352, %v6587
    %6653 = vst.msk [vmem:[%s6619 + $0x1b9] sm:$0xff] %vm352, %v6588
    %6654 = vst.msk [vmem:[%s6619 + $0x1c9] sm:$0xff] %vm352, %v6589
    %6655 = vst.msk [vmem:[%s6619 + $0x1d1] sm:$0xff] %vm352, %v6590
    %6656 = vst.msk [vmem:[%s6619 + $0x1e1] sm:$0xff] %vm352, %v6591
    %6657 = vst.msk [vmem:[%s6619 + $0x1e9] sm:$0xff] %vm352, %v6592
    %6658 = vst.msk [vmem:[%s6619 + $0x1f9] sm:$0xff] %vm352, %v6593
    %6659 = vst.msk [vmem:[%s6619 + $0x201] sm:$0xff] %vm352, %v6594
    %6660 = vst.msk [vmem:[%s6619 + $0x211] sm:$0xff] %vm352, %v6595
    %6661 = vst.msk [vmem:[%s6619 + $0x219] sm:$0xff] %vm352, %v6596
    %6662 = vst.msk [vmem:[%s6619 + $0x229] sm:$0xff] %vm352, %v6597
    %6663 = vst.msk [vmem:[%s6619 + $0x231] sm:$0xff] %vm352, %v6598
    %6664 = vst.msk [vmem:[%s6619 + $0x241] sm:$0xff] %vm352, %v6599
    %6665 = vst.msk [vmem:[%s6619 + $0x249] sm:$0xff] %vm352, %v6600
    %6666 = vst.msk [vmem:[%s6619 + $0x259] sm:$0xff] %vm352, %v6601
    %6667 = vst.msk [vmem:[%s6619 + $0x261] sm:$0xff] %vm352, %v6602
    %6668 = vst.msk [vmem:[%s6619 + $0x271] sm:$0xff] %vm352, %v6603
    %6669 = vst.msk [vmem:[%s6619 + $0x279] sm:$0xff] %vm352, %v6604
    %6670 = vst.msk [vmem:[%s6619 + $0x289] sm:$0xff] %vm352, %v6605
    %6671 = vst.msk [vmem:[%s6619 + $0x291] sm:$0xff] %vm352, %v6606
    %6672 = vst.msk [vmem:[%s6619 + $0x2a1] sm:$0xff] %vm352, %v6607
    %6673 = vst.msk [vmem:[%s6619 + $0x2a9] sm:$0xff] %vm352, %v6608
    %6674 = vst.msk [vmem:[%s6619 + $0x2b9] sm:$0xff] %vm352, %v6609
    %6675 = vst.msk [vmem:[%s6619 + $0x2c1] sm:$0xff] %vm352, %v6610
    %6676 = vst.msk [vmem:[%s6619 + $0x2d1] sm:$0xff] %vm352, %v6611
    %6677 = vst.msk [vmem:[%s6619 + $0x2d9] sm:$0xff] %vm352, %v6612
    %6678 = vst.msk [vmem:[%s6619 + $0x2e9] sm:$0xff] %vm352, %v6613
    %6679 = vst.msk [vmem:[%s6619 + $0x2f1] sm:$0xff] %vm352, %v6614
    %6680 = vst.msk [vmem:[%s6619 + $0x301] sm:$0xff] %vm352, %v6615
    %6681 = vst.msk [vmem:[%s6619 + $0x309] sm:$0xff] %vm352, %v6616
    %6682 = vst.msk [vmem:[%s6619 + $0x319] sm:$0xff] %vm352, %v6617
    %6683 = vst.msk [vmem:[%s6619 + $0x321] sm:$0xff] %vm352, %v6618
    %v6684 = vld [vmem:[#allocation3] sm:$0xff]
    %v6685 = vld [vmem:[#allocation3 + $0x8] sm:$0xff]
    %v6686 = vld [vmem:[#allocation3 + $0x10] sm:$0x3]
    %v6687 = vld [vmem:[#allocation3 + $0x18] sm:$0xff]
    %v6688 = vld [vmem:[#allocation3 + $0x20] sm:$0xff]
    %v6689 = vld [vmem:[#allocation3 + $0x28] sm:$0x3]
    %v6690 = vld [vmem:[#allocation3 + $0x30] sm:$0xff]
    %v6691 = vld [vmem:[#allocation3 + $0x38] sm:$0xff]
    %v6692 = vld [vmem:[#allocation3 + $0x40] sm:$0x3]
    %v6693 = vld [vmem:[#allocation3 + $0x48] sm:$0xff]
    %v6694 = vld [vmem:[#allocation3 + $0x50] sm:$0xff]
    %v6695 = vld [vmem:[#allocation3 + $0x58] sm:$0x3]
    %v6696 = vld [vmem:[#allocation3 + $0x60] sm:$0xff]
    %v6697 = vld [vmem:[#allocation3 + $0x68] sm:$0xff]
    %v6698 = vld [vmem:[#allocation3 + $0x70] sm:$0x3]
    %v6699 = vld [vmem:[#allocation3 + $0x78] sm:$0xff]
    %v6700 = vld [vmem:[#allocation3 + $0x80] sm:$0xff]
    %v6701 = vld [vmem:[#allocation3 + $0x88] sm:$0x3]
    %v6702 = vld [vmem:[#allocation3 + $0x90] sm:$0xff]
    %v6703 = vld [vmem:[#allocation3 + $0x98] sm:$0xff]
    %v6704 = vld [vmem:[#allocation3 + $0xa0] sm:$0x3]
    %v6705 = vld [vmem:[#allocation3 + $0xa8] sm:$0xff]
    %v6706 = vld [vmem:[#allocation3 + $0xb0] sm:$0xff]
    %v6707 = vld [vmem:[#allocation3 + $0xb8] sm:$0x3]
    %v6708 = vld [vmem:[#allocation3 + $0xc0] sm:$0xff]
    %v6709 = vld [vmem:[#allocation3 + $0xc8] sm:$0xff]
    %v6710 = vld [vmem:[#allocation3 + $0xd0] sm:$0x3]
    %v6711 = vld [vmem:[#allocation3 + $0xd8] sm:$0xff]
    %v6712 = vld [vmem:[#allocation3 + $0xe0] sm:$0xff]
    %v6713 = vld [vmem:[#allocation3 + $0xe8] sm:$0x3]
    %v6714 = vld [vmem:[#allocation3 + $0xf0] sm:$0xff]
    %v6715 = vld [vmem:[#allocation3 + $0xf8] sm:$0xff]
    %v6716 = vld [vmem:[#allocation3 + $0x100] sm:$0x3]
    %v6717 = vld [vmem:[#allocation3 + $0x108] sm:$0xff]
    %v6718 = vld [vmem:[#allocation3 + $0x110] sm:$0xff]
    %v6719 = vld [vmem:[#allocation3 + $0x118] sm:$0x3]
    %v6720 = vld [vmem:[#allocation3 + $0x120] sm:$0xff]
    %v6721 = vld [vmem:[#allocation3 + $0x128] sm:$0xff]
    %v6722 = vld [vmem:[#allocation3 + $0x130] sm:$0x3]
    %v6723 = vld [vmem:[#allocation3 + $0x138] sm:$0xff]
    %v6724 = vld [vmem:[#allocation3 + $0x140] sm:$0xff]
    %v6725 = vld [vmem:[#allocation3 + $0x148] sm:$0x3]
    %v6726 = vld [vmem:[#allocation3 + $0x150] sm:$0xff]
    %v6727 = vld [vmem:[#allocation3 + $0x158] sm:$0xff]
    %v6728 = vld [vmem:[#allocation3 + $0x160] sm:$0x3]
    %v6729 = vld [vmem:[#allocation3 + $0x168] sm:$0xff]
    %v6730 = vld [vmem:[#allocation3 + $0x170] sm:$0xff]
    %v6731 = vld [vmem:[#allocation3 + $0x178] sm:$0x3]
    %v6732 = vld [vmem:[#allocation3 + $0x180] sm:$0xff]
    %v6733 = vld [vmem:[#allocation3 + $0x188] sm:$0xff]
    %v6734 = vld [vmem:[#allocation3 + $0x190] sm:$0x3]
    %v6735 = vld [vmem:[#allocation3 + $0x198] sm:$0xff]
    %v6736 = vld [vmem:[#allocation3 + $0x1a0] sm:$0xff]
    %v6737 = vld [vmem:[#allocation3 + $0x1a8] sm:$0x3]
    %v6738 = vld [vmem:[#allocation3 + $0x1b0] sm:$0xff]
    %v6739 = vld [vmem:[#allocation3 + $0x1b8] sm:$0xff]
    %v6740 = vld [vmem:[#allocation3 + $0x1c0] sm:$0x3]
    %v6741 = vld [vmem:[#allocation3 + $0x1c8] sm:$0xff]
    %v6742 = vld [vmem:[#allocation3 + $0x1d0] sm:$0xff]
    %v6743 = vld [vmem:[#allocation3 + $0x1d8] sm:$0x3]
    %v6744 = vld [vmem:[#allocation3 + $0x1e0] sm:$0xff]
    %v6745 = vld [vmem:[#allocation3 + $0x1e8] sm:$0xff]
    %v6746 = vld [vmem:[#allocation3 + $0x1f0] sm:$0x3]
    %v6747 = vld [vmem:[#allocation3 + $0x1f8] sm:$0xff]
    %v6748 = vld [vmem:[#allocation3 + $0x200] sm:$0xff]
    %v6749 = vld [vmem:[#allocation3 + $0x208] sm:$0x3]
    %v6750 = vld [vmem:[#allocation3 + $0x210] sm:$0xff]
    %v6751 = vld [vmem:[#allocation3 + $0x218] sm:$0xff]
    %v6752 = vld [vmem:[#allocation3 + $0x220] sm:$0x3]
    %v6753 = vld [vmem:[#allocation3 + $0x228] sm:$0xff]
    %v6754 = vld [vmem:[#allocation3 + $0x230] sm:$0xff]
    %v6755 = vld [vmem:[#allocation3 + $0x238] sm:$0x3]
    %v6756 = vld [vmem:[#allocation3 + $0x240] sm:$0xff]
    %v6757 = vld [vmem:[#allocation3 + $0x248] sm:$0xff]
    %v6758 = vld [vmem:[#allocation3 + $0x250] sm:$0x3]
    %v6759 = vld [vmem:[#allocation3 + $0x258] sm:$0xff]
    %v6760 = vld [vmem:[#allocation3 + $0x260] sm:$0xff]
    %v6761 = vld [vmem:[#allocation3 + $0x268] sm:$0x3]
    %v6762 = vld [vmem:[#allocation3 + $0x270] sm:$0xff]
    %v6763 = vld [vmem:[#allocation3 + $0x278] sm:$0xff]
    %v6764 = vld [vmem:[#allocation3 + $0x280] sm:$0x3]
    %v6765 = vld [vmem:[#allocation3 + $0x288] sm:$0xff]
    %v6766 = vld [vmem:[#allocation3 + $0x290] sm:$0xff]
    %v6767 = vld [vmem:[#allocation3 + $0x298] sm:$0x3]
    %v6768 = vld [vmem:[#allocation3 + $0x2a0] sm:$0xff]
    %v6769 = vld [vmem:[#allocation3 + $0x2a8] sm:$0xff]
    %v6770 = vld [vmem:[#allocation3 + $0x2b0] sm:$0x3]
    %v6771 = vld [vmem:[#allocation3 + $0x2b8] sm:$0xff]
    %v6772 = vld [vmem:[#allocation3 + $0x2c0] sm:$0xff]
    %v6773 = vld [vmem:[#allocation3 + $0x2c8] sm:$0x3]
    %v6774 = vld [vmem:[#allocation3 + $0x2d0] sm:$0xff]
    %v6775 = vld [vmem:[#allocation3 + $0x2d8] sm:$0xff]
    %v6776 = vld [vmem:[#allocation3 + $0x2e0] sm:$0x3]
    %v6777 = vld [vmem:[#allocation3 + $0x2e8] sm:$0xff]
    %v6778 = vld [vmem:[#allocation3 + $0x2f0] sm:$0xff]
    %v6779 = vld [vmem:[#allocation3 + $0x2f8] sm:$0x3]
    %v6780 = vld [vmem:[#allocation3 + $0x300] sm:$0xff]
    %v6781 = vld [vmem:[#allocation3 + $0x308] sm:$0xff]
    %v6782 = vld [vmem:[#allocation3 + $0x310] sm:$0x3]
    %v6783 = vld [vmem:[#allocation3 + $0x318] sm:$0xff]
    %v6784 = vld [vmem:[#allocation3 + $0x320] sm:$0xff]
    %v6785 = vld [vmem:[#allocation3 + $0x328] sm:$0x3]
    %v6786 = vld [vmem:[#allocation3 + $0x330] sm:$0xff]
    %v6787 = vld [vmem:[#allocation3 + $0x338] sm:$0xff]
    %v6788 = vld [vmem:[#allocation3 + $0x340] sm:$0x3]
    %v6789 = vld [vmem:[#allocation3 + $0x348] sm:$0xff]
    %v6790 = vld [vmem:[#allocation3 + $0x350] sm:$0xff]
    %v6791 = vld [vmem:[#allocation3 + $0x358] sm:$0x3]
    %v6888 = vrot.slane %v6684, 1
    %v6889 = vrot.slane %v6685, 1
    %v6890 = vsel %vm875, %v6888, %v6889
    %v6891 = vrot.slane %v6686, 1
    %v6892 = vsel %vm875, %v6889, %v6891
    %v6893 = vrot.slane %v6687, 1
    %v6894 = vrot.slane %v6688, 1
    %v6895 = vsel %vm875, %v6893, %v6894
    %v6896 = vrot.slane %v6689, 1
    %v6897 = vsel %vm875, %v6894, %v6896
    %v6898 = vrot.slane %v6690, 1
    %v6899 = vrot.slane %v6691, 1
    %v6900 = vsel %vm875, %v6898, %v6899
    %v6901 = vrot.slane %v6692, 1
    %v6902 = vsel %vm875, %v6899, %v6901
    %v6903 = vrot.slane %v6693, 1
    %v6904 = vrot.slane %v6694, 1
    %v6905 = vsel %vm875, %v6903, %v6904
    %v6906 = vrot.slane %v6695, 1
    %v6907 = vsel %vm875, %v6904, %v6906
    %v6908 = vrot.slane %v6696, 1
    %v6909 = vrot.slane %v6697, 1
    %v6910 = vsel %vm875, %v6908, %v6909
    %v6911 = vrot.slane %v6698, 1
    %v6912 = vsel %vm875, %v6909, %v6911
    %v6913 = vrot.slane %v6699, 1
    %v6914 = vrot.slane %v6700, 1
    %v6915 = vsel %vm875, %v6913, %v6914
    %v6916 = vrot.slane %v6701, 1
    %v6917 = vsel %vm875, %v6914, %v6916
    %v6918 = vrot.slane %v6702, 1
    %v6919 = vrot.slane %v6703, 1
    %v6920 = vsel %vm875, %v6918, %v6919
    %v6921 = vrot.slane %v6704, 1
    %v6922 = vsel %vm875, %v6919, %v6921
    %v6923 = vrot.slane %v6705, 1
    %v6924 = vrot.slane %v6706, 1
    %v6925 = vsel %vm875, %v6923, %v6924
    %v6926 = vrot.slane %v6707, 1
    %v6927 = vsel %vm875, %v6924, %v6926
    %v6928 = vrot.slane %v6708, 1
    %v6929 = vrot.slane %v6709, 1
    %v6930 = vsel %vm875, %v6928, %v6929
    %v6931 = vrot.slane %v6710, 1
    %v6932 = vsel %vm875, %v6929, %v6931
    %v6933 = vrot.slane %v6711, 1
    %v6934 = vrot.slane %v6712, 1
    %v6935 = vsel %vm875, %v6933, %v6934
    %v6936 = vrot.slane %v6713, 1
    %v6937 = vsel %vm875, %v6934, %v6936
    %v6938 = vrot.slane %v6714, 1
    %v6939 = vrot.slane %v6715, 1
    %v6940 = vsel %vm875, %v6938, %v6939
    %v6941 = vrot.slane %v6716, 1
    %v6942 = vsel %vm875, %v6939, %v6941
    %v6943 = vrot.slane %v6717, 1
    %v6944 = vrot.slane %v6718, 1
    %v6945 = vsel %vm875, %v6943, %v6944
    %v6946 = vrot.slane %v6719, 1
    %v6947 = vsel %vm875, %v6944, %v6946
    %v6948 = vrot.slane %v6720, 1
    %v6949 = vrot.slane %v6721, 1
    %v6950 = vsel %vm875, %v6948, %v6949
    %v6951 = vrot.slane %v6722, 1
    %v6952 = vsel %vm875, %v6949, %v6951
    %v6953 = vrot.slane %v6723, 1
    %v6954 = vrot.slane %v6724, 1
    %v6955 = vsel %vm875, %v6953, %v6954
    %v6956 = vrot.slane %v6725, 1
    %v6957 = vsel %vm875, %v6954, %v6956
    %v6958 = vrot.slane %v6726, 1
    %v6959 = vrot.slane %v6727, 1
    %v6960 = vsel %vm875, %v6958, %v6959
    %v6961 = vrot.slane %v6728, 1
    %v6962 = vsel %vm875, %v6959, %v6961
    %v6963 = vrot.slane %v6729, 1
    %v6964 = vrot.slane %v6730, 1
    %v6965 = vsel %vm875, %v6963, %v6964
    %v6966 = vrot.slane %v6731, 1
    %v6967 = vsel %vm875, %v6964, %v6966
    %v6968 = vrot.slane %v6738, 1
    %v6969 = vrot.slane %v6739, 1
    %v6970 = vsel %vm875, %v6968, %v6969
    %v6971 = vrot.slane %v6740, 1
    %v6972 = vsel %vm875, %v6969, %v6971
    %v6973 = vrot.slane %v6741, 1
    %v6974 = vrot.slane %v6742, 1
    %v6975 = vsel %vm875, %v6973, %v6974
    %v6976 = vrot.slane %v6743, 1
    %v6977 = vsel %vm875, %v6974, %v6976
    %v6978 = vrot.slane %v6744, 1
    %v6979 = vrot.slane %v6745, 1
    %v6980 = vsel %vm875, %v6978, %v6979
    %v6981 = vrot.slane %v6746, 1
    %v6982 = vsel %vm875, %v6979, %v6981
    %v6983 = vrot.slane %v6747, 1
    %v6984 = vrot.slane %v6748, 1
    %v6985 = vsel %vm875, %v6983, %v6984
    %v6986 = vrot.slane %v6749, 1
    %v6987 = vsel %vm875, %v6984, %v6986
    %v6988 = vrot.slane %v6750, 1
    %v6989 = vrot.slane %v6751, 1
    %v6990 = vsel %vm875, %v6988, %v6989
    %v6991 = vrot.slane %v6752, 1
    %v6992 = vsel %vm875, %v6989, %v6991
    %v6993 = vrot.slane %v6753, 1
    %v6994 = vrot.slane %v6754, 1
    %v6995 = vsel %vm875, %v6993, %v6994
    %v6996 = vrot.slane %v6755, 1
    %v6997 = vsel %vm875, %v6994, %v6996
    %v6998 = vrot.slane %v6756, 1
    %v6999 = vrot.slane %v6757, 1
    %v7000 = vsel %vm875, %v6998, %v6999
    %v7001 = vrot.slane %v6758, 1
    %v7002 = vsel %vm875, %v6999, %v7001
    %v7003 = vrot.slane %v6759, 1
    %v7004 = vrot.slane %v6760, 1
    %v7005 = vsel %vm875, %v7003, %v7004
    %v7006 = vrot.slane %v6761, 1
    %v7007 = vsel %vm875, %v7004, %v7006
    %v7008 = vrot.slane %v6762, 1
    %v7009 = vrot.slane %v6763, 1
    %v7010 = vsel %vm875, %v7008, %v7009
    %v7011 = vrot.slane %v6764, 1
    %v7012 = vsel %vm875, %v7009, %v7011
    %v7013 = vrot.slane %v6765, 1
    %v7014 = vrot.slane %v6766, 1
    %v7015 = vsel %vm875, %v7013, %v7014
    %v7016 = vrot.slane %v6767, 1
    %v7017 = vsel %vm875, %v7014, %v7016
    %v7018 = vrot.slane %v6768, 1
    %v7019 = vrot.slane %v6769, 1
    %v7020 = vsel %vm875, %v7018, %v7019
    %v7021 = vrot.slane %v6770, 1
    %v7022 = vsel %vm875, %v7019, %v7021
    %v7023 = vrot.slane %v6771, 1
    %v7024 = vrot.slane %v6772, 1
    %v7025 = vsel %vm875, %v7023, %v7024
    %v7026 = vrot.slane %v6773, 1
    %v7027 = vsel %vm875, %v7024, %v7026
    %v7028 = vrot.slane %v6774, 1
    %v7029 = vrot.slane %v6775, 1
    %v7030 = vsel %vm875, %v7028, %v7029
    %v7031 = vrot.slane %v6776, 1
    %v7032 = vsel %vm875, %v7029, %v7031
    %v7033 = vrot.slane %v6777, 1
    %v7034 = vrot.slane %v6778, 1
    %v7035 = vsel %vm875, %v7033, %v7034
    %v7036 = vrot.slane %v6779, 1
    %v7037 = vsel %vm875, %v7034, %v7036
    %v7038 = vrot.slane %v6780, 1
    %v7039 = vrot.slane %v6781, 1
    %v7040 = vsel %vm875, %v7038, %v7039
    %v7041 = vrot.slane %v6782, 1
    %v7042 = vsel %vm875, %v7039, %v7041
    %v7043 = vrot.slane %v6783, 1
    %v7044 = vrot.slane %v6784, 1
    %v7045 = vsel %vm875, %v7043, %v7044
    %v7046 = vrot.slane %v6785, 1
    %v7047 = vsel %vm875, %v7044, %v7046
    %v7048 = vrot.slane %v6684, 2
    %v7049 = vrot.slane %v6685, 2
    %v7050 = vsel %vm1036, %v7048, %v7049
    %v7051 = vrot.slane %v6686, 2
    %v7052 = vsel %vm1036, %v7049, %v7051
    %v7053 = vrot.slane %v6687, 2
    %v7054 = vrot.slane %v6688, 2
    %v7055 = vsel %vm1036, %v7053, %v7054
    %v7056 = vrot.slane %v6689, 2
    %v7057 = vsel %vm1036, %v7054, %v7056
    %v7058 = vrot.slane %v6690, 2
    %v7059 = vrot.slane %v6691, 2
    %v7060 = vsel %vm1036, %v7058, %v7059
    %v7061 = vrot.slane %v6692, 2
    %v7062 = vsel %vm1036, %v7059, %v7061
    %v7063 = vrot.slane %v6693, 2
    %v7064 = vrot.slane %v6694, 2
    %v7065 = vsel %vm1036, %v7063, %v7064
    %v7066 = vrot.slane %v6695, 2
    %v7067 = vsel %vm1036, %v7064, %v7066
    %v7068 = vrot.slane %v6696, 2
    %v7069 = vrot.slane %v6697, 2
    %v7070 = vsel %vm1036, %v7068, %v7069
    %v7071 = vrot.slane %v6698, 2
    %v7072 = vsel %vm1036, %v7069, %v7071
    %v7073 = vrot.slane %v6699, 2
    %v7074 = vrot.slane %v6700, 2
    %v7075 = vsel %vm1036, %v7073, %v7074
    %v7076 = vrot.slane %v6701, 2
    %v7077 = vsel %vm1036, %v7074, %v7076
    %v7078 = vrot.slane %v6702, 2
    %v7079 = vrot.slane %v6703, 2
    %v7080 = vsel %vm1036, %v7078, %v7079
    %v7081 = vrot.slane %v6704, 2
    %v7082 = vsel %vm1036, %v7079, %v7081
    %v7083 = vrot.slane %v6705, 2
    %v7084 = vrot.slane %v6706, 2
    %v7085 = vsel %vm1036, %v7083, %v7084
    %v7086 = vrot.slane %v6707, 2
    %v7087 = vsel %vm1036, %v7084, %v7086
    %v7088 = vrot.slane %v6708, 2
    %v7089 = vrot.slane %v6709, 2
    %v7090 = vsel %vm1036, %v7088, %v7089
    %v7091 = vrot.slane %v6710, 2
    %v7092 = vsel %vm1036, %v7089, %v7091
    %v7093 = vrot.slane %v6711, 2
    %v7094 = vrot.slane %v6712, 2
    %v7095 = vsel %vm1036, %v7093, %v7094
    %v7096 = vrot.slane %v6713, 2
    %v7097 = vsel %vm1036, %v7094, %v7096
    %v7098 = vrot.slane %v6714, 2
    %v7099 = vrot.slane %v6715, 2
    %v7100 = vsel %vm1036, %v7098, %v7099
    %v7101 = vrot.slane %v6716, 2
    %v7102 = vsel %vm1036, %v7099, %v7101
    %v7103 = vrot.slane %v6717, 2
    %v7104 = vrot.slane %v6718, 2
    %v7105 = vsel %vm1036, %v7103, %v7104
    %v7106 = vrot.slane %v6719, 2
    %v7107 = vsel %vm1036, %v7104, %v7106
    %v7108 = vrot.slane %v6720, 2
    %v7109 = vrot.slane %v6721, 2
    %v7110 = vsel %vm1036, %v7108, %v7109
    %v7111 = vrot.slane %v6722, 2
    %v7112 = vsel %vm1036, %v7109, %v7111
    %v7113 = vrot.slane %v6723, 2
    %v7114 = vrot.slane %v6724, 2
    %v7115 = vsel %vm1036, %v7113, %v7114
    %v7116 = vrot.slane %v6725, 2
    %v7117 = vsel %vm1036, %v7114, %v7116
    %v7118 = vrot.slane %v6726, 2
    %v7119 = vrot.slane %v6727, 2
    %v7120 = vsel %vm1036, %v7118, %v7119
    %v7121 = vrot.slane %v6728, 2
    %v7122 = vsel %vm1036, %v7119, %v7121
    %v7123 = vrot.slane %v6729, 2
    %v7124 = vrot.slane %v6730, 2
    %v7125 = vsel %vm1036, %v7123, %v7124
    %v7126 = vrot.slane %v6731, 2
    %v7127 = vsel %vm1036, %v7124, %v7126
    %v7128 = vrot.slane %v6738, 2
    %v7129 = vrot.slane %v6739, 2
    %v7130 = vsel %vm1036, %v7128, %v7129
    %v7131 = vrot.slane %v6740, 2
    %v7132 = vsel %vm1036, %v7129, %v7131
    %v7133 = vrot.slane %v6741, 2
    %v7134 = vrot.slane %v6742, 2
    %v7135 = vsel %vm1036, %v7133, %v7134
    %v7136 = vrot.slane %v6743, 2
    %v7137 = vsel %vm1036, %v7134, %v7136
    %v7138 = vrot.slane %v6744, 2
    %v7139 = vrot.slane %v6745, 2
    %v7140 = vsel %vm1036, %v7138, %v7139
    %v7141 = vrot.slane %v6746, 2
    %v7142 = vsel %vm1036, %v7139, %v7141
    %v7143 = vrot.slane %v6747, 2
    %v7144 = vrot.slane %v6748, 2
    %v7145 = vsel %vm1036, %v7143, %v7144
    %v7146 = vrot.slane %v6749, 2
    %v7147 = vsel %vm1036, %v7144, %v7146
    %v7148 = vrot.slane %v6750, 2
    %v7149 = vrot.slane %v6751, 2
    %v7150 = vsel %vm1036, %v7148, %v7149
    %v7151 = vrot.slane %v6752, 2
    %v7152 = vsel %vm1036, %v7149, %v7151
    %v7153 = vrot.slane %v6753, 2
    %v7154 = vrot.slane %v6754, 2
    %v7155 = vsel %vm1036, %v7153, %v7154
    %v7156 = vrot.slane %v6755, 2
    %v7157 = vsel %vm1036, %v7154, %v7156
    %v7158 = vrot.slane %v6756, 2
    %v7159 = vrot.slane %v6757, 2
    %v7160 = vsel %vm1036, %v7158, %v7159
    %v7161 = vrot.slane %v6758, 2
    %v7162 = vsel %vm1036, %v7159, %v7161
    %v7163 = vrot.slane %v6759, 2
    %v7164 = vrot.slane %v6760, 2
    %v7165 = vsel %vm1036, %v7163, %v7164
    %v7166 = vrot.slane %v6761, 2
    %v7167 = vsel %vm1036, %v7164, %v7166
    %v7168 = vrot.slane %v6762, 2
    %v7169 = vrot.slane %v6763, 2
    %v7170 = vsel %vm1036, %v7168, %v7169
    %v7171 = vrot.slane %v6764, 2
    %v7172 = vsel %vm1036, %v7169, %v7171
    %v7173 = vrot.slane %v6765, 2
    %v7174 = vrot.slane %v6766, 2
    %v7175 = vsel %vm1036, %v7173, %v7174
    %v7176 = vrot.slane %v6767, 2
    %v7177 = vsel %vm1036, %v7174, %v7176
    %v7178 = vrot.slane %v6768, 2
    %v7179 = vrot.slane %v6769, 2
    %v7180 = vsel %vm1036, %v7178, %v7179
    %v7181 = vrot.slane %v6770, 2
    %v7182 = vsel %vm1036, %v7179, %v7181
    %v7183 = vrot.slane %v6771, 2
    %v7184 = vrot.slane %v6772, 2
    %v7185 = vsel %vm1036, %v7183, %v7184
    %v7186 = vrot.slane %v6773, 2
    %v7187 = vsel %vm1036, %v7184, %v7186
    %v7188 = vrot.slane %v6774, 2
    %v7189 = vrot.slane %v6775, 2
    %v7190 = vsel %vm1036, %v7188, %v7189
    %v7191 = vrot.slane %v6776, 2
    %v7192 = vsel %vm1036, %v7189, %v7191
    %v7193 = vrot.slane %v6777, 2
    %v7194 = vrot.slane %v6778, 2
    %v7195 = vsel %vm1036, %v7193, %v7194
    %v7196 = vrot.slane %v6779, 2
    %v7197 = vsel %vm1036, %v7194, %v7196
    %v7198 = vrot.slane %v6780, 2
    %v7199 = vrot.slane %v6781, 2
    %v7200 = vsel %vm1036, %v7198, %v7199
    %v7201 = vrot.slane %v6782, 2
    %v7202 = vsel %vm1036, %v7199, %v7201
    %v7203 = vrot.slane %v6783, 2
    %v7204 = vrot.slane %v6784, 2
    %v7205 = vsel %vm1036, %v7203, %v7204
    %v7206 = vrot.slane %v6785, 2
    %v7207 = vsel %vm1036, %v7204, %v7206
    %v7214 = vrot.slane %v6732, 1
    %v7215 = vrot.slane %v6733, 1
    %v7216 = vsel %vm875, %v7214, %v7215
    %v7217 = vrot.slane %v6734, 1
    %v7218 = vsel %vm875, %v7215, %v7217
    %v7219 = vrot.slane %v6786, 1
    %v7220 = vrot.slane %v6787, 1
    %v7221 = vsel %vm875, %v7219, %v7220
    %v7222 = vrot.slane %v6788, 1
    %v7223 = vsel %vm875, %v7220, %v7222
    %v7224 = vrot.slane %v6732, 2
    %v7225 = vrot.slane %v6733, 2
    %v7226 = vsel %vm1036, %v7224, %v7225
    %v7227 = vrot.slane %v6734, 2
    %v7228 = vsel %vm1036, %v7225, %v7227
    %v7229 = vrot.slane %v6786, 2
    %v7230 = vrot.slane %v6787, 2
    %v7231 = vsel %vm1036, %v7229, %v7230
    %v7232 = vrot.slane %v6788, 2
    %v7233 = vsel %vm1036, %v7230, %v7232
    %v7240 = vrot.slane %v6735, 1
    %v7241 = vrot.slane %v6736, 1
    %v7242 = vsel %vm875, %v7240, %v7241
    %v7243 = vrot.slane %v6737, 1
    %v7244 = vsel %vm875, %v7241, %v7243
    %v7245 = vrot.slane %v6789, 1
    %v7246 = vrot.slane %v6790, 1
    %v7247 = vsel %vm875, %v7245, %v7246
    %v7248 = vrot.slane %v6791, 1
    %v7249 = vsel %vm875, %v7246, %v7248
    %v7250 = vrot.slane %v6735, 2
    %v7251 = vrot.slane %v6736, 2
    %v7252 = vsel %vm1036, %v7250, %v7251
    %v7253 = vrot.slane %v6737, 2
    %v7254 = vsel %vm1036, %v7251, %v7253
    %v7255 = vrot.slane %v6789, 2
    %v7256 = vrot.slane %v6790, 2
    %v7257 = vsel %vm1036, %v7255, %v7256
    %v7258 = vrot.slane %v6791, 2
    %v7259 = vsel %vm1036, %v7256, %v7258
    %7260 = vrot.lane.b32.xlu0 %v6890, 8
    %v7261 = vpop.permute.xlu0 %7260
    %7262 = vrot.lane.b32.xlu0 %v6892, 8
    %v7263 = vpop.permute.xlu0 %7262
    %7264 = vrot.lane.b32.xlu0 %v6895, 8
    %v7265 = vpop.permute.xlu0 %7264
    %7266 = vrot.lane.b32.xlu0 %v6897, 8
    %v7267 = vpop.permute.xlu0 %7266
    %7268 = vrot.lane.b32.xlu0 %v6900, 8
    %v7269 = vpop.permute.xlu0 %7268
    %7270 = vrot.lane.b32.xlu0 %v6902, 8
    %v7271 = vpop.permute.xlu0 %7270
    %7272 = vrot.lane.b32.xlu0 %v6905, 8
    %v7273 = vpop.permute.xlu0 %7272
    %7274 = vrot.lane.b32.xlu0 %v6907, 8
    %v7275 = vpop.permute.xlu0 %7274
    %7276 = vrot.lane.b32.xlu0 %v6910, 8
    %v7277 = vpop.permute.xlu0 %7276
    %7278 = vrot.lane.b32.xlu0 %v6912, 8
    %v7279 = vpop.permute.xlu0 %7278
    %7280 = vrot.lane.b32.xlu0 %v6915, 8
    %v7281 = vpop.permute.xlu0 %7280
    %7282 = vrot.lane.b32.xlu0 %v6917, 8
    %v7283 = vpop.permute.xlu0 %7282
    %7284 = vrot.lane.b32.xlu0 %v6920, 8
    %v7285 = vpop.permute.xlu0 %7284
    %7286 = vrot.lane.b32.xlu0 %v6922, 8
    %v7287 = vpop.permute.xlu0 %7286
    %7288 = vrot.lane.b32.xlu0 %v6925, 8
    %v7289 = vpop.permute.xlu0 %7288
    %7290 = vrot.lane.b32.xlu0 %v6927, 8
    %v7291 = vpop.permute.xlu0 %7290
    %7292 = vrot.lane.b32.xlu0 %v6930, 8
    %v7293 = vpop.permute.xlu0 %7292
    %7294 = vrot.lane.b32.xlu0 %v6932, 8
    %v7295 = vpop.permute.xlu0 %7294
    %7296 = vrot.lane.b32.xlu0 %v6935, 8
    %v7297 = vpop.permute.xlu0 %7296
    %7298 = vrot.lane.b32.xlu0 %v6937, 8
    %v7299 = vpop.permute.xlu0 %7298
    %7300 = vrot.lane.b32.xlu0 %v6940, 8
    %v7301 = vpop.permute.xlu0 %7300
    %7302 = vrot.lane.b32.xlu0 %v6942, 8
    %v7303 = vpop.permute.xlu0 %7302
    %7304 = vrot.lane.b32.xlu0 %v6945, 8
    %v7305 = vpop.permute.xlu0 %7304
    %7306 = vrot.lane.b32.xlu0 %v6947, 8
    %v7307 = vpop.permute.xlu0 %7306
    %7308 = vrot.lane.b32.xlu0 %v6950, 8
    %v7309 = vpop.permute.xlu0 %7308
    %7310 = vrot.lane.b32.xlu0 %v6952, 8
    %v7311 = vpop.permute.xlu0 %7310
    %7312 = vrot.lane.b32.xlu0 %v6955, 8
    %v7313 = vpop.permute.xlu0 %7312
    %7314 = vrot.lane.b32.xlu0 %v6957, 8
    %v7315 = vpop.permute.xlu0 %7314
    %7316 = vrot.lane.b32.xlu0 %v6960, 8
    %v7317 = vpop.permute.xlu0 %7316
    %7318 = vrot.lane.b32.xlu0 %v6962, 8
    %v7319 = vpop.permute.xlu0 %7318
    %7320 = vrot.lane.b32.xlu0 %v6965, 8
    %v7321 = vpop.permute.xlu0 %7320
    %7322 = vrot.lane.b32.xlu0 %v6967, 8
    %v7323 = vpop.permute.xlu0 %7322
    %7324 = vrot.lane.b32.xlu0 %v6970, 8
    %v7325 = vpop.permute.xlu0 %7324
    %7326 = vrot.lane.b32.xlu0 %v6972, 8
    %v7327 = vpop.permute.xlu0 %7326
    %7328 = vrot.lane.b32.xlu0 %v6975, 8
    %v7329 = vpop.permute.xlu0 %7328
    %7330 = vrot.lane.b32.xlu0 %v6977, 8
    %v7331 = vpop.permute.xlu0 %7330
    %7332 = vrot.lane.b32.xlu0 %v6980, 8
    %v7333 = vpop.permute.xlu0 %7332
    %7334 = vrot.lane.b32.xlu0 %v6982, 8
    %v7335 = vpop.permute.xlu0 %7334
    %7336 = vrot.lane.b32.xlu0 %v6985, 8
    %v7337 = vpop.permute.xlu0 %7336
    %7338 = vrot.lane.b32.xlu0 %v6987, 8
    %v7339 = vpop.permute.xlu0 %7338
    %7340 = vrot.lane.b32.xlu0 %v6990, 8
    %v7341 = vpop.permute.xlu0 %7340
    %7342 = vrot.lane.b32.xlu0 %v6992, 8
    %v7343 = vpop.permute.xlu0 %7342
    %7344 = vrot.lane.b32.xlu0 %v6995, 8
    %v7345 = vpop.permute.xlu0 %7344
    %7346 = vrot.lane.b32.xlu0 %v6997, 8
    %v7347 = vpop.permute.xlu0 %7346
    %7348 = vrot.lane.b32.xlu0 %v7000, 8
    %v7349 = vpop.permute.xlu0 %7348
    %7350 = vrot.lane.b32.xlu0 %v7002, 8
    %v7351 = vpop.permute.xlu0 %7350
    %7352 = vrot.lane.b32.xlu0 %v7005, 8
    %v7353 = vpop.permute.xlu0 %7352
    %7354 = vrot.lane.b32.xlu0 %v7007, 8
    %v7355 = vpop.permute.xlu0 %7354
    %7356 = vrot.lane.b32.xlu0 %v7010, 8
    %v7357 = vpop.permute.xlu0 %7356
    %7358 = vrot.lane.b32.xlu0 %v7012, 8
    %v7359 = vpop.permute.xlu0 %7358
    %7360 = vrot.lane.b32.xlu0 %v7015, 8
    %v7361 = vpop.permute.xlu0 %7360
    %7362 = vrot.lane.b32.xlu0 %v7017, 8
    %v7363 = vpop.permute.xlu0 %7362
    %7364 = vrot.lane.b32.xlu0 %v7020, 8
    %v7365 = vpop.permute.xlu0 %7364
    %7366 = vrot.lane.b32.xlu0 %v7022, 8
    %v7367 = vpop.permute.xlu0 %7366
    %7368 = vrot.lane.b32.xlu0 %v7025, 8
    %v7369 = vpop.permute.xlu0 %7368
    %7370 = vrot.lane.b32.xlu0 %v7027, 8
    %v7371 = vpop.permute.xlu0 %7370
    %7372 = vrot.lane.b32.xlu0 %v7030, 8
    %v7373 = vpop.permute.xlu0 %7372
    %7374 = vrot.lane.b32.xlu0 %v7032, 8
    %v7375 = vpop.permute.xlu0 %7374
    %7376 = vrot.lane.b32.xlu0 %v7035, 8
    %v7377 = vpop.permute.xlu0 %7376
    %7378 = vrot.lane.b32.xlu0 %v7037, 8
    %v7379 = vpop.permute.xlu0 %7378
    %7380 = vrot.lane.b32.xlu0 %v7040, 8
    %v7381 = vpop.permute.xlu0 %7380
    %7382 = vrot.lane.b32.xlu0 %v7042, 8
    %v7383 = vpop.permute.xlu0 %7382
    %7384 = vrot.lane.b32.xlu0 %v7045, 8
    %v7385 = vpop.permute.xlu0 %7384
    %7386 = vrot.lane.b32.xlu0 %v7047, 8
    %v7387 = vpop.permute.xlu0 %7386
    %7452 = vrot.lane.b32.xlu0 %v7050, 16
    %v7453 = vpop.permute.xlu0 %7452
    %7454 = vrot.lane.b32.xlu0 %v7052, 16
    %v7455 = vpop.permute.xlu0 %7454
    %7456 = vrot.lane.b32.xlu0 %v7055, 16
    %v7457 = vpop.permute.xlu0 %7456
    %7458 = vrot.lane.b32.xlu0 %v7057, 16
    %v7459 = vpop.permute.xlu0 %7458
    %7460 = vrot.lane.b32.xlu0 %v7060, 16
    %v7461 = vpop.permute.xlu0 %7460
    %7462 = vrot.lane.b32.xlu0 %v7062, 16
    %v7463 = vpop.permute.xlu0 %7462
    %7464 = vrot.lane.b32.xlu0 %v7065, 16
    %v7465 = vpop.permute.xlu0 %7464
    %7466 = vrot.lane.b32.xlu0 %v7067, 16
    %v7467 = vpop.permute.xlu0 %7466
    %7468 = vrot.lane.b32.xlu0 %v7070, 16
    %v7469 = vpop.permute.xlu0 %7468
    %7470 = vrot.lane.b32.xlu0 %v7072, 16
    %v7471 = vpop.permute.xlu0 %7470
    %7472 = vrot.lane.b32.xlu0 %v7075, 16
    %v7473 = vpop.permute.xlu0 %7472
    %7474 = vrot.lane.b32.xlu0 %v7077, 16
    %v7475 = vpop.permute.xlu0 %7474
    %7476 = vrot.lane.b32.xlu0 %v7080, 16
    %v7477 = vpop.permute.xlu0 %7476
    %7478 = vrot.lane.b32.xlu0 %v7082, 16
    %v7479 = vpop.permute.xlu0 %7478
    %7480 = vrot.lane.b32.xlu0 %v7085, 16
    %v7481 = vpop.permute.xlu0 %7480
    %7482 = vrot.lane.b32.xlu0 %v7087, 16
    %v7483 = vpop.permute.xlu0 %7482
    %7484 = vrot.lane.b32.xlu0 %v7090, 16
    %v7485 = vpop.permute.xlu0 %7484
    %7486 = vrot.lane.b32.xlu0 %v7092, 16
    %v7487 = vpop.permute.xlu0 %7486
    %7488 = vrot.lane.b32.xlu0 %v7095, 16
    %v7489 = vpop.permute.xlu0 %7488
    %7490 = vrot.lane.b32.xlu0 %v7097, 16
    %v7491 = vpop.permute.xlu0 %7490
    %7492 = vrot.lane.b32.xlu0 %v7100, 16
    %v7493 = vpop.permute.xlu0 %7492
    %7494 = vrot.lane.b32.xlu0 %v7102, 16
    %v7495 = vpop.permute.xlu0 %7494
    %7496 = vrot.lane.b32.xlu0 %v7105, 16
    %v7497 = vpop.permute.xlu0 %7496
    %7498 = vrot.lane.b32.xlu0 %v7107, 16
    %v7499 = vpop.permute.xlu0 %7498
    %7500 = vrot.lane.b32.xlu0 %v7110, 16
    %v7501 = vpop.permute.xlu0 %7500
    %7502 = vrot.lane.b32.xlu0 %v7112, 16
    %v7503 = vpop.permute.xlu0 %7502
    %7504 = vrot.lane.b32.xlu0 %v7115, 16
    %v7505 = vpop.permute.xlu0 %7504
    %7506 = vrot.lane.b32.xlu0 %v7117, 16
    %v7507 = vpop.permute.xlu0 %7506
    %7508 = vrot.lane.b32.xlu0 %v7120, 16
    %v7509 = vpop.permute.xlu0 %7508
    %7510 = vrot.lane.b32.xlu0 %v7122, 16
    %v7511 = vpop.permute.xlu0 %7510
    %7512 = vrot.lane.b32.xlu0 %v7125, 16
    %v7513 = vpop.permute.xlu0 %7512
    %7514 = vrot.lane.b32.xlu0 %v7127, 16
    %v7515 = vpop.permute.xlu0 %7514
    %7516 = vrot.lane.b32.xlu0 %v7130, 16
    %v7517 = vpop.permute.xlu0 %7516
    %7518 = vrot.lane.b32.xlu0 %v7132, 16
    %v7519 = vpop.permute.xlu0 %7518
    %7520 = vrot.lane.b32.xlu0 %v7135, 16
    %v7521 = vpop.permute.xlu0 %7520
    %7522 = vrot.lane.b32.xlu0 %v7137, 16
    %v7523 = vpop.permute.xlu0 %7522
    %7524 = vrot.lane.b32.xlu0 %v7140, 16
    %v7525 = vpop.permute.xlu0 %7524
    %7526 = vrot.lane.b32.xlu0 %v7142, 16
    %v7527 = vpop.permute.xlu0 %7526
    %7528 = vrot.lane.b32.xlu0 %v7145, 16
    %v7529 = vpop.permute.xlu0 %7528
    %7530 = vrot.lane.b32.xlu0 %v7147, 16
    %v7531 = vpop.permute.xlu0 %7530
    %7532 = vrot.lane.b32.xlu0 %v7150, 16
    %v7533 = vpop.permute.xlu0 %7532
    %7534 = vrot.lane.b32.xlu0 %v7152, 16
    %v7535 = vpop.permute.xlu0 %7534
    %7536 = vrot.lane.b32.xlu0 %v7155, 16
    %v7537 = vpop.permute.xlu0 %7536
    %7538 = vrot.lane.b32.xlu0 %v7157, 16
    %v7539 = vpop.permute.xlu0 %7538
    %7540 = vrot.lane.b32.xlu0 %v7160, 16
    %v7541 = vpop.permute.xlu0 %7540
    %7542 = vrot.lane.b32.xlu0 %v7162, 16
    %v7543 = vpop.permute.xlu0 %7542
    %7544 = vrot.lane.b32.xlu0 %v7165, 16
    %v7545 = vpop.permute.xlu0 %7544
    %7546 = vrot.lane.b32.xlu0 %v7167, 16
    %v7547 = vpop.permute.xlu0 %7546
    %7548 = vrot.lane.b32.xlu0 %v7170, 16
    %v7549 = vpop.permute.xlu0 %7548
    %7550 = vrot.lane.b32.xlu0 %v7172, 16
    %v7551 = vpop.permute.xlu0 %7550
    %7552 = vrot.lane.b32.xlu0 %v7175, 16
    %v7553 = vpop.permute.xlu0 %7552
    %7554 = vrot.lane.b32.xlu0 %v7177, 16
    %v7555 = vpop.permute.xlu0 %7554
    %7556 = vrot.lane.b32.xlu0 %v7180, 16
    %v7557 = vpop.permute.xlu0 %7556
    %7558 = vrot.lane.b32.xlu0 %v7182, 16
    %v7559 = vpop.permute.xlu0 %7558
    %7560 = vrot.lane.b32.xlu0 %v7185, 16
    %v7561 = vpop.permute.xlu0 %7560
    %7562 = vrot.lane.b32.xlu0 %v7187, 16
    %v7563 = vpop.permute.xlu0 %7562
    %7564 = vrot.lane.b32.xlu0 %v7190, 16
    %v7565 = vpop.permute.xlu0 %7564
    %7566 = vrot.lane.b32.xlu0 %v7192, 16
    %v7567 = vpop.permute.xlu0 %7566
    %7568 = vrot.lane.b32.xlu0 %v7195, 16
    %v7569 = vpop.permute.xlu0 %7568
    %7570 = vrot.lane.b32.xlu0 %v7197, 16
    %v7571 = vpop.permute.xlu0 %7570
    %7572 = vrot.lane.b32.xlu0 %v7200, 16
    %v7573 = vpop.permute.xlu0 %7572
    %7574 = vrot.lane.b32.xlu0 %v7202, 16
    %v7575 = vpop.permute.xlu0 %7574
    %7576 = vrot.lane.b32.xlu0 %v7205, 16
    %v7577 = vpop.permute.xlu0 %7576
    %7578 = vrot.lane.b32.xlu0 %v7207, 16
    %v7579 = vpop.permute.xlu0 %7578
    %7644 = vrot.lane.b32.xlu0 %v6687, 24
    %v7645 = vpop.permute.xlu0 %7644
    %7646 = vrot.lane.b32.xlu0 %v6688, 24
    %v7647 = vpop.permute.xlu0 %7646
    %7648 = vrot.lane.b32.xlu0 %v6690, 24
    %v7649 = vpop.permute.xlu0 %7648
    %7650 = vrot.lane.b32.xlu0 %v6691, 24
    %v7651 = vpop.permute.xlu0 %7650
    %7652 = vrot.lane.b32.xlu0 %v6693, 24
    %v7653 = vpop.permute.xlu0 %7652
    %7654 = vrot.lane.b32.xlu0 %v6694, 24
    %v7655 = vpop.permute.xlu0 %7654
    %7656 = vrot.lane.b32.xlu0 %v6696, 24
    %v7657 = vpop.permute.xlu0 %7656
    %7658 = vrot.lane.b32.xlu0 %v6697, 24
    %v7659 = vpop.permute.xlu0 %7658
    %7660 = vrot.lane.b32.xlu0 %v6699, 24
    %v7661 = vpop.permute.xlu0 %7660
    %7662 = vrot.lane.b32.xlu0 %v6700, 24
    %v7663 = vpop.permute.xlu0 %7662
    %7664 = vrot.lane.b32.xlu0 %v6702, 24
    %v7665 = vpop.permute.xlu0 %7664
    %7666 = vrot.lane.b32.xlu0 %v6703, 24
    %v7667 = vpop.permute.xlu0 %7666
    %7668 = vrot.lane.b32.xlu0 %v6705, 24
    %v7669 = vpop.permute.xlu0 %7668
    %7670 = vrot.lane.b32.xlu0 %v6706, 24
    %v7671 = vpop.permute.xlu0 %7670
    %7672 = vrot.lane.b32.xlu0 %v6708, 24
    %v7673 = vpop.permute.xlu0 %7672
    %7674 = vrot.lane.b32.xlu0 %v6709, 24
    %v7675 = vpop.permute.xlu0 %7674
    %7676 = vrot.lane.b32.xlu0 %v6711, 24
    %v7677 = vpop.permute.xlu0 %7676
    %7678 = vrot.lane.b32.xlu0 %v6712, 24
    %v7679 = vpop.permute.xlu0 %7678
    %7680 = vrot.lane.b32.xlu0 %v6714, 24
    %v7681 = vpop.permute.xlu0 %7680
    %7682 = vrot.lane.b32.xlu0 %v6715, 24
    %v7683 = vpop.permute.xlu0 %7682
    %7684 = vrot.lane.b32.xlu0 %v6717, 24
    %v7685 = vpop.permute.xlu0 %7684
    %7686 = vrot.lane.b32.xlu0 %v6718, 24
    %v7687 = vpop.permute.xlu0 %7686
    %7688 = vrot.lane.b32.xlu0 %v6720, 24
    %v7689 = vpop.permute.xlu0 %7688
    %7690 = vrot.lane.b32.xlu0 %v6721, 24
    %v7691 = vpop.permute.xlu0 %7690
    %7692 = vrot.lane.b32.xlu0 %v6723, 24
    %v7693 = vpop.permute.xlu0 %7692
    %7694 = vrot.lane.b32.xlu0 %v6724, 24
    %v7695 = vpop.permute.xlu0 %7694
    %7696 = vrot.lane.b32.xlu0 %v6726, 24
    %v7697 = vpop.permute.xlu0 %7696
    %7698 = vrot.lane.b32.xlu0 %v6727, 24
    %v7699 = vpop.permute.xlu0 %7698
    %7700 = vrot.lane.b32.xlu0 %v6729, 24
    %v7701 = vpop.permute.xlu0 %7700
    %7702 = vrot.lane.b32.xlu0 %v6730, 24
    %v7703 = vpop.permute.xlu0 %7702
    %7704 = vrot.lane.b32.xlu0 %v6732, 24
    %v7705 = vpop.permute.xlu0 %7704
    %7706 = vrot.lane.b32.xlu0 %v6733, 24
    %v7707 = vpop.permute.xlu0 %7706
    %7708 = vrot.lane.b32.xlu0 %v6741, 24
    %v7709 = vpop.permute.xlu0 %7708
    %7710 = vrot.lane.b32.xlu0 %v6742, 24
    %v7711 = vpop.permute.xlu0 %7710
    %7712 = vrot.lane.b32.xlu0 %v6744, 24
    %v7713 = vpop.permute.xlu0 %7712
    %7714 = vrot.lane.b32.xlu0 %v6745, 24
    %v7715 = vpop.permute.xlu0 %7714
    %7716 = vrot.lane.b32.xlu0 %v6747, 24
    %v7717 = vpop.permute.xlu0 %7716
    %7718 = vrot.lane.b32.xlu0 %v6748, 24
    %v7719 = vpop.permute.xlu0 %7718
    %7720 = vrot.lane.b32.xlu0 %v6750, 24
    %v7721 = vpop.permute.xlu0 %7720
    %7722 = vrot.lane.b32.xlu0 %v6751, 24
    %v7723 = vpop.permute.xlu0 %7722
    %7724 = vrot.lane.b32.xlu0 %v6753, 24
    %v7725 = vpop.permute.xlu0 %7724
    %7726 = vrot.lane.b32.xlu0 %v6754, 24
    %v7727 = vpop.permute.xlu0 %7726
    %7728 = vrot.lane.b32.xlu0 %v6756, 24
    %v7729 = vpop.permute.xlu0 %7728
    %7730 = vrot.lane.b32.xlu0 %v6757, 24
    %v7731 = vpop.permute.xlu0 %7730
    %7732 = vrot.lane.b32.xlu0 %v6759, 24
    %v7733 = vpop.permute.xlu0 %7732
    %7734 = vrot.lane.b32.xlu0 %v6760, 24
    %v7735 = vpop.permute.xlu0 %7734
    %7736 = vrot.lane.b32.xlu0 %v6762, 24
    %v7737 = vpop.permute.xlu0 %7736
    %7738 = vrot.lane.b32.xlu0 %v6763, 24
    %v7739 = vpop.permute.xlu0 %7738
    %7740 = vrot.lane.b32.xlu0 %v6765, 24
    %v7741 = vpop.permute.xlu0 %7740
    %7742 = vrot.lane.b32.xlu0 %v6766, 24
    %v7743 = vpop.permute.xlu0 %7742
    %7744 = vrot.lane.b32.xlu0 %v6768, 24
    %v7745 = vpop.permute.xlu0 %7744
    %7746 = vrot.lane.b32.xlu0 %v6769, 24
    %v7747 = vpop.permute.xlu0 %7746
    %7748 = vrot.lane.b32.xlu0 %v6771, 24
    %v7749 = vpop.permute.xlu0 %7748
    %7750 = vrot.lane.b32.xlu0 %v6772, 24
    %v7751 = vpop.permute.xlu0 %7750
    %7752 = vrot.lane.b32.xlu0 %v6774, 24
    %v7753 = vpop.permute.xlu0 %7752
    %7754 = vrot.lane.b32.xlu0 %v6775, 24
    %v7755 = vpop.permute.xlu0 %7754
    %7756 = vrot.lane.b32.xlu0 %v6777, 24
    %v7757 = vpop.permute.xlu0 %7756
    %7758 = vrot.lane.b32.xlu0 %v6778, 24
    %v7759 = vpop.permute.xlu0 %7758
    %7760 = vrot.lane.b32.xlu0 %v6780, 24
    %v7761 = vpop.permute.xlu0 %7760
    %7762 = vrot.lane.b32.xlu0 %v6781, 24
    %v7763 = vpop.permute.xlu0 %7762
    %7764 = vrot.lane.b32.xlu0 %v6783, 24
    %v7765 = vpop.permute.xlu0 %7764
    %7766 = vrot.lane.b32.xlu0 %v6784, 24
    %v7767 = vpop.permute.xlu0 %7766
    %7768 = vrot.lane.b32.xlu0 %v6786, 24
    %v7769 = vpop.permute.xlu0 %7768
    %7770 = vrot.lane.b32.xlu0 %v6787, 24
    %v7771 = vpop.permute.xlu0 %7770
    %7836 = vrot.lane.b32.xlu0 %v6895, 32
    %v7837 = vpop.permute.xlu0 %7836
    %7838 = vrot.lane.b32.xlu0 %v6897, 32
    %v7839 = vpop.permute.xlu0 %7838
    %7840 = vrot.lane.b32.xlu0 %v6900, 32
    %v7841 = vpop.permute.xlu0 %7840
    %7842 = vrot.lane.b32.xlu0 %v6902, 32
    %v7843 = vpop.permute.xlu0 %7842
    %7844 = vrot.lane.b32.xlu0 %v6905, 32
    %v7845 = vpop.permute.xlu0 %7844
    %7846 = vrot.lane.b32.xlu0 %v6907, 32
    %v7847 = vpop.permute.xlu0 %7846
    %7848 = vrot.lane.b32.xlu0 %v6910, 32
    %v7849 = vpop.permute.xlu0 %7848
    %7850 = vrot.lane.b32.xlu0 %v6912, 32
    %v7851 = vpop.permute.xlu0 %7850
    %7852 = vrot.lane.b32.xlu0 %v6915, 32
    %v7853 = vpop.permute.xlu0 %7852
    %7854 = vrot.lane.b32.xlu0 %v6917, 32
    %v7855 = vpop.permute.xlu0 %7854
    %7856 = vrot.lane.b32.xlu0 %v6920, 32
    %v7857 = vpop.permute.xlu0 %7856
    %7858 = vrot.lane.b32.xlu0 %v6922, 32
    %v7859 = vpop.permute.xlu0 %7858
    %7860 = vrot.lane.b32.xlu0 %v6925, 32
    %v7861 = vpop.permute.xlu0 %7860
    %7862 = vrot.lane.b32.xlu0 %v6927, 32
    %v7863 = vpop.permute.xlu0 %7862
    %7864 = vrot.lane.b32.xlu0 %v6930, 32
    %v7865 = vpop.permute.xlu0 %7864
    %7866 = vrot.lane.b32.xlu0 %v6932, 32
    %v7867 = vpop.permute.xlu0 %7866
    %7868 = vrot.lane.b32.xlu0 %v6935, 32
    %v7869 = vpop.permute.xlu0 %7868
    %7870 = vrot.lane.b32.xlu0 %v6937, 32
    %v7871 = vpop.permute.xlu0 %7870
    %7872 = vrot.lane.b32.xlu0 %v6940, 32
    %v7873 = vpop.permute.xlu0 %7872
    %7874 = vrot.lane.b32.xlu0 %v6942, 32
    %v7875 = vpop.permute.xlu0 %7874
    %7876 = vrot.lane.b32.xlu0 %v6945, 32
    %v7877 = vpop.permute.xlu0 %7876
    %7878 = vrot.lane.b32.xlu0 %v6947, 32
    %v7879 = vpop.permute.xlu0 %7878
    %7880 = vrot.lane.b32.xlu0 %v6950, 32
    %v7881 = vpop.permute.xlu0 %7880
    %7882 = vrot.lane.b32.xlu0 %v6952, 32
    %v7883 = vpop.permute.xlu0 %7882
    %7884 = vrot.lane.b32.xlu0 %v6955, 32
    %v7885 = vpop.permute.xlu0 %7884
    %7886 = vrot.lane.b32.xlu0 %v6957, 32
    %v7887 = vpop.permute.xlu0 %7886
    %7888 = vrot.lane.b32.xlu0 %v6960, 32
    %v7889 = vpop.permute.xlu0 %7888
    %7890 = vrot.lane.b32.xlu0 %v6962, 32
    %v7891 = vpop.permute.xlu0 %7890
    %7892 = vrot.lane.b32.xlu0 %v6965, 32
    %v7893 = vpop.permute.xlu0 %7892
    %7894 = vrot.lane.b32.xlu0 %v6967, 32
    %v7895 = vpop.permute.xlu0 %7894
    %7896 = vrot.lane.b32.xlu0 %v7216, 32
    %v7897 = vpop.permute.xlu0 %7896
    %7898 = vrot.lane.b32.xlu0 %v7218, 32
    %v7899 = vpop.permute.xlu0 %7898
    %7900 = vrot.lane.b32.xlu0 %v6975, 32
    %v7901 = vpop.permute.xlu0 %7900
    %7902 = vrot.lane.b32.xlu0 %v6977, 32
    %v7903 = vpop.permute.xlu0 %7902
    %7904 = vrot.lane.b32.xlu0 %v6980, 32
    %v7905 = vpop.permute.xlu0 %7904
    %7906 = vrot.lane.b32.xlu0 %v6982, 32
    %v7907 = vpop.permute.xlu0 %7906
    %7908 = vrot.lane.b32.xlu0 %v6985, 32
    %v7909 = vpop.permute.xlu0 %7908
    %7910 = vrot.lane.b32.xlu0 %v6987, 32
    %v7911 = vpop.permute.xlu0 %7910
    %7912 = vrot.lane.b32.xlu0 %v6990, 32
    %v7913 = vpop.permute.xlu0 %7912
    %7914 = vrot.lane.b32.xlu0 %v6992, 32
    %v7915 = vpop.permute.xlu0 %7914
    %7916 = vrot.lane.b32.xlu0 %v6995, 32
    %v7917 = vpop.permute.xlu0 %7916
    %7918 = vrot.lane.b32.xlu0 %v6997, 32
    %v7919 = vpop.permute.xlu0 %7918
    %7920 = vrot.lane.b32.xlu0 %v7000, 32
    %v7921 = vpop.permute.xlu0 %7920
    %7922 = vrot.lane.b32.xlu0 %v7002, 32
    %v7923 = vpop.permute.xlu0 %7922
    %7924 = vrot.lane.b32.xlu0 %v7005, 32
    %v7925 = vpop.permute.xlu0 %7924
    %7926 = vrot.lane.b32.xlu0 %v7007, 32
    %v7927 = vpop.permute.xlu0 %7926
    %7928 = vrot.lane.b32.xlu0 %v7010, 32
    %v7929 = vpop.permute.xlu0 %7928
    %7930 = vrot.lane.b32.xlu0 %v7012, 32
    %v7931 = vpop.permute.xlu0 %7930
    %7932 = vrot.lane.b32.xlu0 %v7015, 32
    %v7933 = vpop.permute.xlu0 %7932
    %7934 = vrot.lane.b32.xlu0 %v7017, 32
    %v7935 = vpop.permute.xlu0 %7934
    %7936 = vrot.lane.b32.xlu0 %v7020, 32
    %v7937 = vpop.permute.xlu0 %7936
    %7938 = vrot.lane.b32.xlu0 %v7022, 32
    %v7939 = vpop.permute.xlu0 %7938
    %7940 = vrot.lane.b32.xlu0 %v7025, 32
    %v7941 = vpop.permute.xlu0 %7940
    %7942 = vrot.lane.b32.xlu0 %v7027, 32
    %v7943 = vpop.permute.xlu0 %7942
    %7944 = vrot.lane.b32.xlu0 %v7030, 32
    %v7945 = vpop.permute.xlu0 %7944
    %7946 = vrot.lane.b32.xlu0 %v7032, 32
    %v7947 = vpop.permute.xlu0 %7946
    %7948 = vrot.lane.b32.xlu0 %v7035, 32
    %v7949 = vpop.permute.xlu0 %7948
    %7950 = vrot.lane.b32.xlu0 %v7037, 32
    %v7951 = vpop.permute.xlu0 %7950
    %7952 = vrot.lane.b32.xlu0 %v7040, 32
    %v7953 = vpop.permute.xlu0 %7952
    %7954 = vrot.lane.b32.xlu0 %v7042, 32
    %v7955 = vpop.permute.xlu0 %7954
    %7956 = vrot.lane.b32.xlu0 %v7045, 32
    %v7957 = vpop.permute.xlu0 %7956
    %7958 = vrot.lane.b32.xlu0 %v7047, 32
    %v7959 = vpop.permute.xlu0 %7958
    %7960 = vrot.lane.b32.xlu0 %v7221, 32
    %v7961 = vpop.permute.xlu0 %7960
    %7962 = vrot.lane.b32.xlu0 %v7223, 32
    %v7963 = vpop.permute.xlu0 %7962
    %8028 = vrot.lane.b32.xlu0 %v7055, 40
    %v8029 = vpop.permute.xlu0 %8028
    %8030 = vrot.lane.b32.xlu0 %v7057, 40
    %v8031 = vpop.permute.xlu0 %8030
    %8032 = vrot.lane.b32.xlu0 %v7060, 40
    %v8033 = vpop.permute.xlu0 %8032
    %8034 = vrot.lane.b32.xlu0 %v7062, 40
    %v8035 = vpop.permute.xlu0 %8034
    %8036 = vrot.lane.b32.xlu0 %v7065, 40
    %v8037 = vpop.permute.xlu0 %8036
    %8038 = vrot.lane.b32.xlu0 %v7067, 40
    %v8039 = vpop.permute.xlu0 %8038
    %8040 = vrot.lane.b32.xlu0 %v7070, 40
    %v8041 = vpop.permute.xlu0 %8040
    %8042 = vrot.lane.b32.xlu0 %v7072, 40
    %v8043 = vpop.permute.xlu0 %8042
    %8044 = vrot.lane.b32.xlu0 %v7075, 40
    %v8045 = vpop.permute.xlu0 %8044
    %8046 = vrot.lane.b32.xlu0 %v7077, 40
    %v8047 = vpop.permute.xlu0 %8046
    %8048 = vrot.lane.b32.xlu0 %v7080, 40
    %v8049 = vpop.permute.xlu0 %8048
    %8050 = vrot.lane.b32.xlu0 %v7082, 40
    %v8051 = vpop.permute.xlu0 %8050
    %8052 = vrot.lane.b32.xlu0 %v7085, 40
    %v8053 = vpop.permute.xlu0 %8052
    %8054 = vrot.lane.b32.xlu0 %v7087, 40
    %v8055 = vpop.permute.xlu0 %8054
    %8056 = vrot.lane.b32.xlu0 %v7090, 40
    %v8057 = vpop.permute.xlu0 %8056
    %8058 = vrot.lane.b32.xlu0 %v7092, 40
    %v8059 = vpop.permute.xlu0 %8058
    %8060 = vrot.lane.b32.xlu0 %v7095, 40
    %v8061 = vpop.permute.xlu0 %8060
    %8062 = vrot.lane.b32.xlu0 %v7097, 40
    %v8063 = vpop.permute.xlu0 %8062
    %8064 = vrot.lane.b32.xlu0 %v7100, 40
    %v8065 = vpop.permute.xlu0 %8064
    %8066 = vrot.lane.b32.xlu0 %v7102, 40
    %v8067 = vpop.permute.xlu0 %8066
    %8068 = vrot.lane.b32.xlu0 %v7105, 40
    %v8069 = vpop.permute.xlu0 %8068
    %8070 = vrot.lane.b32.xlu0 %v7107, 40
    %v8071 = vpop.permute.xlu0 %8070
    %8072 = vrot.lane.b32.xlu0 %v7110, 40
    %v8073 = vpop.permute.xlu0 %8072
    %8074 = vrot.lane.b32.xlu0 %v7112, 40
    %v8075 = vpop.permute.xlu0 %8074
    %8076 = vrot.lane.b32.xlu0 %v7115, 40
    %v8077 = vpop.permute.xlu0 %8076
    %8078 = vrot.lane.b32.xlu0 %v7117, 40
    %v8079 = vpop.permute.xlu0 %8078
    %8080 = vrot.lane.b32.xlu0 %v7120, 40
    %v8081 = vpop.permute.xlu0 %8080
    %8082 = vrot.lane.b32.xlu0 %v7122, 40
    %v8083 = vpop.permute.xlu0 %8082
    %8084 = vrot.lane.b32.xlu0 %v7125, 40
    %v8085 = vpop.permute.xlu0 %8084
    %8086 = vrot.lane.b32.xlu0 %v7127, 40
    %v8087 = vpop.permute.xlu0 %8086
    %8088 = vrot.lane.b32.xlu0 %v7226, 40
    %v8089 = vpop.permute.xlu0 %8088
    %8090 = vrot.lane.b32.xlu0 %v7228, 40
    %v8091 = vpop.permute.xlu0 %8090
    %8092 = vrot.lane.b32.xlu0 %v7135, 40
    %v8093 = vpop.permute.xlu0 %8092
    %8094 = vrot.lane.b32.xlu0 %v7137, 40
    %v8095 = vpop.permute.xlu0 %8094
    %8096 = vrot.lane.b32.xlu0 %v7140, 40
    %v8097 = vpop.permute.xlu0 %8096
    %8098 = vrot.lane.b32.xlu0 %v7142, 40
    %v8099 = vpop.permute.xlu0 %8098
    %8100 = vrot.lane.b32.xlu0 %v7145, 40
    %v8101 = vpop.permute.xlu0 %8100
    %8102 = vrot.lane.b32.xlu0 %v7147, 40
    %v8103 = vpop.permute.xlu0 %8102
    %8104 = vrot.lane.b32.xlu0 %v7150, 40
    %v8105 = vpop.permute.xlu0 %8104
    %8106 = vrot.lane.b32.xlu0 %v7152, 40
    %v8107 = vpop.permute.xlu0 %8106
    %8108 = vrot.lane.b32.xlu0 %v7155, 40
    %v8109 = vpop.permute.xlu0 %8108
    %8110 = vrot.lane.b32.xlu0 %v7157, 40
    %v8111 = vpop.permute.xlu0 %8110
    %8112 = vrot.lane.b32.xlu0 %v7160, 40
    %v8113 = vpop.permute.xlu0 %8112
    %8114 = vrot.lane.b32.xlu0 %v7162, 40
    %v8115 = vpop.permute.xlu0 %8114
    %8116 = vrot.lane.b32.xlu0 %v7165, 40
    %v8117 = vpop.permute.xlu0 %8116
    %8118 = vrot.lane.b32.xlu0 %v7167, 40
    %v8119 = vpop.permute.xlu0 %8118
    %8120 = vrot.lane.b32.xlu0 %v7170, 40
    %v8121 = vpop.permute.xlu0 %8120
    %8122 = vrot.lane.b32.xlu0 %v7172, 40
    %v8123 = vpop.permute.xlu0 %8122
    %8124 = vrot.lane.b32.xlu0 %v7175, 40
    %v8125 = vpop.permute.xlu0 %8124
    %8126 = vrot.lane.b32.xlu0 %v7177, 40
    %v8127 = vpop.permute.xlu0 %8126
    %8128 = vrot.lane.b32.xlu0 %v7180, 40
    %v8129 = vpop.permute.xlu0 %8128
    %8130 = vrot.lane.b32.xlu0 %v7182, 40
    %v8131 = vpop.permute.xlu0 %8130
    %8132 = vrot.lane.b32.xlu0 %v7185, 40
    %v8133 = vpop.permute.xlu0 %8132
    %8134 = vrot.lane.b32.xlu0 %v7187, 40
    %v8135 = vpop.permute.xlu0 %8134
    %8136 = vrot.lane.b32.xlu0 %v7190, 40
    %v8137 = vpop.permute.xlu0 %8136
    %8138 = vrot.lane.b32.xlu0 %v7192, 40
    %v8139 = vpop.permute.xlu0 %8138
    %8140 = vrot.lane.b32.xlu0 %v7195, 40
    %v8141 = vpop.permute.xlu0 %8140
    %8142 = vrot.lane.b32.xlu0 %v7197, 40
    %v8143 = vpop.permute.xlu0 %8142
    %8144 = vrot.lane.b32.xlu0 %v7200, 40
    %v8145 = vpop.permute.xlu0 %8144
    %8146 = vrot.lane.b32.xlu0 %v7202, 40
    %v8147 = vpop.permute.xlu0 %8146
    %8148 = vrot.lane.b32.xlu0 %v7205, 40
    %v8149 = vpop.permute.xlu0 %8148
    %8150 = vrot.lane.b32.xlu0 %v7207, 40
    %v8151 = vpop.permute.xlu0 %8150
    %8152 = vrot.lane.b32.xlu0 %v7231, 40
    %v8153 = vpop.permute.xlu0 %8152
    %8154 = vrot.lane.b32.xlu0 %v7233, 40
    %v8155 = vpop.permute.xlu0 %8154
    %8220 = vrot.lane.b32.xlu0 %v6690, 48
    %v8221 = vpop.permute.xlu0 %8220
    %8222 = vrot.lane.b32.xlu0 %v6691, 48
    %v8223 = vpop.permute.xlu0 %8222
    %8224 = vrot.lane.b32.xlu0 %v6693, 48
    %v8225 = vpop.permute.xlu0 %8224
    %8226 = vrot.lane.b32.xlu0 %v6694, 48
    %v8227 = vpop.permute.xlu0 %8226
    %8228 = vrot.lane.b32.xlu0 %v6696, 48
    %v8229 = vpop.permute.xlu0 %8228
    %8230 = vrot.lane.b32.xlu0 %v6697, 48
    %v8231 = vpop.permute.xlu0 %8230
    %8232 = vrot.lane.b32.xlu0 %v6699, 48
    %v8233 = vpop.permute.xlu0 %8232
    %8234 = vrot.lane.b32.xlu0 %v6700, 48
    %v8235 = vpop.permute.xlu0 %8234
    %8236 = vrot.lane.b32.xlu0 %v6702, 48
    %v8237 = vpop.permute.xlu0 %8236
    %8238 = vrot.lane.b32.xlu0 %v6703, 48
    %v8239 = vpop.permute.xlu0 %8238
    %8240 = vrot.lane.b32.xlu0 %v6705, 48
    %v8241 = vpop.permute.xlu0 %8240
    %8242 = vrot.lane.b32.xlu0 %v6706, 48
    %v8243 = vpop.permute.xlu0 %8242
    %8244 = vrot.lane.b32.xlu0 %v6708, 48
    %v8245 = vpop.permute.xlu0 %8244
    %8246 = vrot.lane.b32.xlu0 %v6709, 48
    %v8247 = vpop.permute.xlu0 %8246
    %8248 = vrot.lane.b32.xlu0 %v6711, 48
    %v8249 = vpop.permute.xlu0 %8248
    %8250 = vrot.lane.b32.xlu0 %v6712, 48
    %v8251 = vpop.permute.xlu0 %8250
    %8252 = vrot.lane.b32.xlu0 %v6714, 48
    %v8253 = vpop.permute.xlu0 %8252
    %8254 = vrot.lane.b32.xlu0 %v6715, 48
    %v8255 = vpop.permute.xlu0 %8254
    %8256 = vrot.lane.b32.xlu0 %v6717, 48
    %v8257 = vpop.permute.xlu0 %8256
    %8258 = vrot.lane.b32.xlu0 %v6718, 48
    %v8259 = vpop.permute.xlu0 %8258
    %8260 = vrot.lane.b32.xlu0 %v6720, 48
    %v8261 = vpop.permute.xlu0 %8260
    %8262 = vrot.lane.b32.xlu0 %v6721, 48
    %v8263 = vpop.permute.xlu0 %8262
    %8264 = vrot.lane.b32.xlu0 %v6723, 48
    %v8265 = vpop.permute.xlu0 %8264
    %8266 = vrot.lane.b32.xlu0 %v6724, 48
    %v8267 = vpop.permute.xlu0 %8266
    %8268 = vrot.lane.b32.xlu0 %v6726, 48
    %v8269 = vpop.permute.xlu0 %8268
    %8270 = vrot.lane.b32.xlu0 %v6727, 48
    %v8271 = vpop.permute.xlu0 %8270
    %8272 = vrot.lane.b32.xlu0 %v6729, 48
    %v8273 = vpop.permute.xlu0 %8272
    %8274 = vrot.lane.b32.xlu0 %v6730, 48
    %v8275 = vpop.permute.xlu0 %8274
    %8276 = vrot.lane.b32.xlu0 %v6732, 48
    %v8277 = vpop.permute.xlu0 %8276
    %8278 = vrot.lane.b32.xlu0 %v6733, 48
    %v8279 = vpop.permute.xlu0 %8278
    %8280 = vrot.lane.b32.xlu0 %v6735, 48
    %v8281 = vpop.permute.xlu0 %8280
    %8282 = vrot.lane.b32.xlu0 %v6736, 48
    %v8283 = vpop.permute.xlu0 %8282
    %8284 = vrot.lane.b32.xlu0 %v6744, 48
    %v8285 = vpop.permute.xlu0 %8284
    %8286 = vrot.lane.b32.xlu0 %v6745, 48
    %v8287 = vpop.permute.xlu0 %8286
    %8288 = vrot.lane.b32.xlu0 %v6747, 48
    %v8289 = vpop.permute.xlu0 %8288
    %8290 = vrot.lane.b32.xlu0 %v6748, 48
    %v8291 = vpop.permute.xlu0 %8290
    %8292 = vrot.lane.b32.xlu0 %v6750, 48
    %v8293 = vpop.permute.xlu0 %8292
    %8294 = vrot.lane.b32.xlu0 %v6751, 48
    %v8295 = vpop.permute.xlu0 %8294
    %8296 = vrot.lane.b32.xlu0 %v6753, 48
    %v8297 = vpop.permute.xlu0 %8296
    %8298 = vrot.lane.b32.xlu0 %v6754, 48
    %v8299 = vpop.permute.xlu0 %8298
    %8300 = vrot.lane.b32.xlu0 %v6756, 48
    %v8301 = vpop.permute.xlu0 %8300
    %8302 = vrot.lane.b32.xlu0 %v6757, 48
    %v8303 = vpop.permute.xlu0 %8302
    %8304 = vrot.lane.b32.xlu0 %v6759, 48
    %v8305 = vpop.permute.xlu0 %8304
    %8306 = vrot.lane.b32.xlu0 %v6760, 48
    %v8307 = vpop.permute.xlu0 %8306
    %8308 = vrot.lane.b32.xlu0 %v6762, 48
    %v8309 = vpop.permute.xlu0 %8308
    %8310 = vrot.lane.b32.xlu0 %v6763, 48
    %v8311 = vpop.permute.xlu0 %8310
    %8312 = vrot.lane.b32.xlu0 %v6765, 48
    %v8313 = vpop.permute.xlu0 %8312
    %8314 = vrot.lane.b32.xlu0 %v6766, 48
    %v8315 = vpop.permute.xlu0 %8314
    %8316 = vrot.lane.b32.xlu0 %v6768, 48
    %v8317 = vpop.permute.xlu0 %8316
    %8318 = vrot.lane.b32.xlu0 %v6769, 48
    %v8319 = vpop.permute.xlu0 %8318
    %8320 = vrot.lane.b32.xlu0 %v6771, 48
    %v8321 = vpop.permute.xlu0 %8320
    %8322 = vrot.lane.b32.xlu0 %v6772, 48
    %v8323 = vpop.permute.xlu0 %8322
    %8324 = vrot.lane.b32.xlu0 %v6774, 48
    %v8325 = vpop.permute.xlu0 %8324
    %8326 = vrot.lane.b32.xlu0 %v6775, 48
    %v8327 = vpop.permute.xlu0 %8326
    %8328 = vrot.lane.b32.xlu0 %v6777, 48
    %v8329 = vpop.permute.xlu0 %8328
    %8330 = vrot.lane.b32.xlu0 %v6778, 48
    %v8331 = vpop.permute.xlu0 %8330
    %8332 = vrot.lane.b32.xlu0 %v6780, 48
    %v8333 = vpop.permute.xlu0 %8332
    %8334 = vrot.lane.b32.xlu0 %v6781, 48
    %v8335 = vpop.permute.xlu0 %8334
    %8336 = vrot.lane.b32.xlu0 %v6783, 48
    %v8337 = vpop.permute.xlu0 %8336
    %8338 = vrot.lane.b32.xlu0 %v6784, 48
    %v8339 = vpop.permute.xlu0 %8338
    %8340 = vrot.lane.b32.xlu0 %v6786, 48
    %v8341 = vpop.permute.xlu0 %8340
    %8342 = vrot.lane.b32.xlu0 %v6787, 48
    %v8343 = vpop.permute.xlu0 %8342
    %8344 = vrot.lane.b32.xlu0 %v6789, 48
    %v8345 = vpop.permute.xlu0 %8344
    %8346 = vrot.lane.b32.xlu0 %v6790, 48
    %v8347 = vpop.permute.xlu0 %8346
    %8412 = vrot.lane.b32.xlu0 %v6900, 56
    %v8413 = vpop.permute.xlu0 %8412
    %8414 = vrot.lane.b32.xlu0 %v6902, 56
    %v8415 = vpop.permute.xlu0 %8414
    %8416 = vrot.lane.b32.xlu0 %v6905, 56
    %v8417 = vpop.permute.xlu0 %8416
    %8418 = vrot.lane.b32.xlu0 %v6907, 56
    %v8419 = vpop.permute.xlu0 %8418
    %8420 = vrot.lane.b32.xlu0 %v6910, 56
    %v8421 = vpop.permute.xlu0 %8420
    %8422 = vrot.lane.b32.xlu0 %v6912, 56
    %v8423 = vpop.permute.xlu0 %8422
    %8424 = vrot.lane.b32.xlu0 %v6915, 56
    %v8425 = vpop.permute.xlu0 %8424
    %8426 = vrot.lane.b32.xlu0 %v6917, 56
    %v8427 = vpop.permute.xlu0 %8426
    %8428 = vrot.lane.b32.xlu0 %v6920, 56
    %v8429 = vpop.permute.xlu0 %8428
    %8430 = vrot.lane.b32.xlu0 %v6922, 56
    %v8431 = vpop.permute.xlu0 %8430
    %8432 = vrot.lane.b32.xlu0 %v6925, 56
    %v8433 = vpop.permute.xlu0 %8432
    %8434 = vrot.lane.b32.xlu0 %v6927, 56
    %v8435 = vpop.permute.xlu0 %8434
    %8436 = vrot.lane.b32.xlu0 %v6930, 56
    %v8437 = vpop.permute.xlu0 %8436
    %8438 = vrot.lane.b32.xlu0 %v6932, 56
    %v8439 = vpop.permute.xlu0 %8438
    %8440 = vrot.lane.b32.xlu0 %v6935, 56
    %v8441 = vpop.permute.xlu0 %8440
    %8442 = vrot.lane.b32.xlu0 %v6937, 56
    %v8443 = vpop.permute.xlu0 %8442
    %8444 = vrot.lane.b32.xlu0 %v6940, 56
    %v8445 = vpop.permute.xlu0 %8444
    %8446 = vrot.lane.b32.xlu0 %v6942, 56
    %v8447 = vpop.permute.xlu0 %8446
    %8448 = vrot.lane.b32.xlu0 %v6945, 56
    %v8449 = vpop.permute.xlu0 %8448
    %8450 = vrot.lane.b32.xlu0 %v6947, 56
    %v8451 = vpop.permute.xlu0 %8450
    %8452 = vrot.lane.b32.xlu0 %v6950, 56
    %v8453 = vpop.permute.xlu0 %8452
    %8454 = vrot.lane.b32.xlu0 %v6952, 56
    %v8455 = vpop.permute.xlu0 %8454
    %8456 = vrot.lane.b32.xlu0 %v6955, 56
    %v8457 = vpop.permute.xlu0 %8456
    %8458 = vrot.lane.b32.xlu0 %v6957, 56
    %v8459 = vpop.permute.xlu0 %8458
    %8460 = vrot.lane.b32.xlu0 %v6960, 56
    %v8461 = vpop.permute.xlu0 %8460
    %8462 = vrot.lane.b32.xlu0 %v6962, 56
    %v8463 = vpop.permute.xlu0 %8462
    %8464 = vrot.lane.b32.xlu0 %v6965, 56
    %v8465 = vpop.permute.xlu0 %8464
    %8466 = vrot.lane.b32.xlu0 %v6967, 56
    %v8467 = vpop.permute.xlu0 %8466
    %8468 = vrot.lane.b32.xlu0 %v7216, 56
    %v8469 = vpop.permute.xlu0 %8468
    %8470 = vrot.lane.b32.xlu0 %v7218, 56
    %v8471 = vpop.permute.xlu0 %8470
    %8472 = vrot.lane.b32.xlu0 %v7242, 56
    %v8473 = vpop.permute.xlu0 %8472
    %8474 = vrot.lane.b32.xlu0 %v7244, 56
    %v8475 = vpop.permute.xlu0 %8474
    %8476 = vrot.lane.b32.xlu0 %v6980, 56
    %v8477 = vpop.permute.xlu0 %8476
    %8478 = vrot.lane.b32.xlu0 %v6982, 56
    %v8479 = vpop.permute.xlu0 %8478
    %8480 = vrot.lane.b32.xlu0 %v6985, 56
    %v8481 = vpop.permute.xlu0 %8480
    %8482 = vrot.lane.b32.xlu0 %v6987, 56
    %v8483 = vpop.permute.xlu0 %8482
    %8484 = vrot.lane.b32.xlu0 %v6990, 56
    %v8485 = vpop.permute.xlu0 %8484
    %8486 = vrot.lane.b32.xlu0 %v6992, 56
    %v8487 = vpop.permute.xlu0 %8486
    %8488 = vrot.lane.b32.xlu0 %v6995, 56
    %v8489 = vpop.permute.xlu0 %8488
    %8490 = vrot.lane.b32.xlu0 %v6997, 56
    %v8491 = vpop.permute.xlu0 %8490
    %8492 = vrot.lane.b32.xlu0 %v7000, 56
    %v8493 = vpop.permute.xlu0 %8492
    %8494 = vrot.lane.b32.xlu0 %v7002, 56
    %v8495 = vpop.permute.xlu0 %8494
    %8496 = vrot.lane.b32.xlu0 %v7005, 56
    %v8497 = vpop.permute.xlu0 %8496
    %8498 = vrot.lane.b32.xlu0 %v7007, 56
    %v8499 = vpop.permute.xlu0 %8498
    %8500 = vrot.lane.b32.xlu0 %v7010, 56
    %v8501 = vpop.permute.xlu0 %8500
    %8502 = vrot.lane.b32.xlu0 %v7012, 56
    %v8503 = vpop.permute.xlu0 %8502
    %8504 = vrot.lane.b32.xlu0 %v7015, 56
    %v8505 = vpop.permute.xlu0 %8504
    %8506 = vrot.lane.b32.xlu0 %v7017, 56
    %v8507 = vpop.permute.xlu0 %8506
    %8508 = vrot.lane.b32.xlu0 %v7020, 56
    %v8509 = vpop.permute.xlu0 %8508
    %8510 = vrot.lane.b32.xlu0 %v7022, 56
    %v8511 = vpop.permute.xlu0 %8510
    %8512 = vrot.lane.b32.xlu0 %v7025, 56
    %v8513 = vpop.permute.xlu0 %8512
    %8514 = vrot.lane.b32.xlu0 %v7027, 56
    %v8515 = vpop.permute.xlu0 %8514
    %8516 = vrot.lane.b32.xlu0 %v7030, 56
    %v8517 = vpop.permute.xlu0 %8516
    %8518 = vrot.lane.b32.xlu0 %v7032, 56
    %v8519 = vpop.permute.xlu0 %8518
    %8520 = vrot.lane.b32.xlu0 %v7035, 56
    %v8521 = vpop.permute.xlu0 %8520
    %8522 = vrot.lane.b32.xlu0 %v7037, 56
    %v8523 = vpop.permute.xlu0 %8522
    %8524 = vrot.lane.b32.xlu0 %v7040, 56
    %v8525 = vpop.permute.xlu0 %8524
    %8526 = vrot.lane.b32.xlu0 %v7042, 56
    %v8527 = vpop.permute.xlu0 %8526
    %8528 = vrot.lane.b32.xlu0 %v7045, 56
    %v8529 = vpop.permute.xlu0 %8528
    %8530 = vrot.lane.b32.xlu0 %v7047, 56
    %v8531 = vpop.permute.xlu0 %8530
    %8532 = vrot.lane.b32.xlu0 %v7221, 56
    %v8533 = vpop.permute.xlu0 %8532
    %8534 = vrot.lane.b32.xlu0 %v7223, 56
    %v8535 = vpop.permute.xlu0 %8534
    %8536 = vrot.lane.b32.xlu0 %v7247, 56
    %v8537 = vpop.permute.xlu0 %8536
    %8538 = vrot.lane.b32.xlu0 %v7249, 56
    %v8539 = vpop.permute.xlu0 %8538
    %8604 = vrot.lane.b32.xlu0 %v7060, 64
    %v8605 = vpop.permute.xlu0 %8604
    %8606 = vrot.lane.b32.xlu0 %v7062, 64
    %v8607 = vpop.permute.xlu0 %8606
    %8608 = vrot.lane.b32.xlu0 %v7065, 64
    %v8609 = vpop.permute.xlu0 %8608
    %8610 = vrot.lane.b32.xlu0 %v7067, 64
    %v8611 = vpop.permute.xlu0 %8610
    %8612 = vrot.lane.b32.xlu0 %v7070, 64
    %v8613 = vpop.permute.xlu0 %8612
    %8614 = vrot.lane.b32.xlu0 %v7072, 64
    %v8615 = vpop.permute.xlu0 %8614
    %8616 = vrot.lane.b32.xlu0 %v7075, 64
    %v8617 = vpop.permute.xlu0 %8616
    %8618 = vrot.lane.b32.xlu0 %v7077, 64
    %v8619 = vpop.permute.xlu0 %8618
    %8620 = vrot.lane.b32.xlu0 %v7080, 64
    %v8621 = vpop.permute.xlu0 %8620
    %8622 = vrot.lane.b32.xlu0 %v7082, 64
    %v8623 = vpop.permute.xlu0 %8622
    %8624 = vrot.lane.b32.xlu0 %v7085, 64
    %v8625 = vpop.permute.xlu0 %8624
    %8626 = vrot.lane.b32.xlu0 %v7087, 64
    %v8627 = vpop.permute.xlu0 %8626
    %8628 = vrot.lane.b32.xlu0 %v7090, 64
    %v8629 = vpop.permute.xlu0 %8628
    %8630 = vrot.lane.b32.xlu0 %v7092, 64
    %v8631 = vpop.permute.xlu0 %8630
    %8632 = vrot.lane.b32.xlu0 %v7095, 64
    %v8633 = vpop.permute.xlu0 %8632
    %8634 = vrot.lane.b32.xlu0 %v7097, 64
    %v8635 = vpop.permute.xlu0 %8634
    %8636 = vrot.lane.b32.xlu0 %v7100, 64
    %v8637 = vpop.permute.xlu0 %8636
    %8638 = vrot.lane.b32.xlu0 %v7102, 64
    %v8639 = vpop.permute.xlu0 %8638
    %8640 = vrot.lane.b32.xlu0 %v7105, 64
    %v8641 = vpop.permute.xlu0 %8640
    %8642 = vrot.lane.b32.xlu0 %v7107, 64
    %v8643 = vpop.permute.xlu0 %8642
    %8644 = vrot.lane.b32.xlu0 %v7110, 64
    %v8645 = vpop.permute.xlu0 %8644
    %8646 = vrot.lane.b32.xlu0 %v7112, 64
    %v8647 = vpop.permute.xlu0 %8646
    %8648 = vrot.lane.b32.xlu0 %v7115, 64
    %v8649 = vpop.permute.xlu0 %8648
    %8650 = vrot.lane.b32.xlu0 %v7117, 64
    %v8651 = vpop.permute.xlu0 %8650
    %8652 = vrot.lane.b32.xlu0 %v7120, 64
    %v8653 = vpop.permute.xlu0 %8652
    %8654 = vrot.lane.b32.xlu0 %v7122, 64
    %v8655 = vpop.permute.xlu0 %8654
    %8656 = vrot.lane.b32.xlu0 %v7125, 64
    %v8657 = vpop.permute.xlu0 %8656
    %8658 = vrot.lane.b32.xlu0 %v7127, 64
    %v8659 = vpop.permute.xlu0 %8658
    %8660 = vrot.lane.b32.xlu0 %v7226, 64
    %v8661 = vpop.permute.xlu0 %8660
    %8662 = vrot.lane.b32.xlu0 %v7228, 64
    %v8663 = vpop.permute.xlu0 %8662
    %8664 = vrot.lane.b32.xlu0 %v7252, 64
    %v8665 = vpop.permute.xlu0 %8664
    %8666 = vrot.lane.b32.xlu0 %v7254, 64
    %v8667 = vpop.permute.xlu0 %8666
    %8668 = vrot.lane.b32.xlu0 %v7140, 64
    %v8669 = vpop.permute.xlu0 %8668
    %8670 = vrot.lane.b32.xlu0 %v7142, 64
    %v8671 = vpop.permute.xlu0 %8670
    %8672 = vrot.lane.b32.xlu0 %v7145, 64
    %v8673 = vpop.permute.xlu0 %8672
    %8674 = vrot.lane.b32.xlu0 %v7147, 64
    %v8675 = vpop.permute.xlu0 %8674
    %8676 = vrot.lane.b32.xlu0 %v7150, 64
    %v8677 = vpop.permute.xlu0 %8676
    %8678 = vrot.lane.b32.xlu0 %v7152, 64
    %v8679 = vpop.permute.xlu0 %8678
    %8680 = vrot.lane.b32.xlu0 %v7155, 64
    %v8681 = vpop.permute.xlu0 %8680
    %8682 = vrot.lane.b32.xlu0 %v7157, 64
    %v8683 = vpop.permute.xlu0 %8682
    %8684 = vrot.lane.b32.xlu0 %v7160, 64
    %v8685 = vpop.permute.xlu0 %8684
    %8686 = vrot.lane.b32.xlu0 %v7162, 64
    %v8687 = vpop.permute.xlu0 %8686
    %8688 = vrot.lane.b32.xlu0 %v7165, 64
    %v8689 = vpop.permute.xlu0 %8688
    %8690 = vrot.lane.b32.xlu0 %v7167, 64
    %v8691 = vpop.permute.xlu0 %8690
    %8692 = vrot.lane.b32.xlu0 %v7170, 64
    %v8693 = vpop.permute.xlu0 %8692
    %8694 = vrot.lane.b32.xlu0 %v7172, 64
    %v8695 = vpop.permute.xlu0 %8694
    %8696 = vrot.lane.b32.xlu0 %v7175, 64
    %v8697 = vpop.permute.xlu0 %8696
    %8698 = vrot.lane.b32.xlu0 %v7177, 64
    %v8699 = vpop.permute.xlu0 %8698
    %8700 = vrot.lane.b32.xlu0 %v7180, 64
    %v8701 = vpop.permute.xlu0 %8700
    %8702 = vrot.lane.b32.xlu0 %v7182, 64
    %v8703 = vpop.permute.xlu0 %8702
    %8704 = vrot.lane.b32.xlu0 %v7185, 64
    %v8705 = vpop.permute.xlu0 %8704
    %8706 = vrot.lane.b32.xlu0 %v7187, 64
    %v8707 = vpop.permute.xlu0 %8706
    %8708 = vrot.lane.b32.xlu0 %v7190, 64
    %v8709 = vpop.permute.xlu0 %8708
    %8710 = vrot.lane.b32.xlu0 %v7192, 64
    %v8711 = vpop.permute.xlu0 %8710
    %8712 = vrot.lane.b32.xlu0 %v7195, 64
    %v8713 = vpop.permute.xlu0 %8712
    %8714 = vrot.lane.b32.xlu0 %v7197, 64
    %v8715 = vpop.permute.xlu0 %8714
    %8716 = vrot.lane.b32.xlu0 %v7200, 64
    %v8717 = vpop.permute.xlu0 %8716
    %8718 = vrot.lane.b32.xlu0 %v7202, 64
    %v8719 = vpop.permute.xlu0 %8718
    %8720 = vrot.lane.b32.xlu0 %v7205, 64
    %v8721 = vpop.permute.xlu0 %8720
    %8722 = vrot.lane.b32.xlu0 %v7207, 64
    %v8723 = vpop.permute.xlu0 %8722
    %8724 = vrot.lane.b32.xlu0 %v7231, 64
    %v8725 = vpop.permute.xlu0 %8724
    %8726 = vrot.lane.b32.xlu0 %v7233, 64
    %v8727 = vpop.permute.xlu0 %8726
    %8728 = vrot.lane.b32.xlu0 %v7257, 64
    %v8729 = vpop.permute.xlu0 %8728
    %8730 = vrot.lane.b32.xlu0 %v7259, 64
    %v8731 = vpop.permute.xlu0 %8730
    %v8796 = vsel %vm352, %v6684, %v7261
    %v8797 = vsel %vm352, %v6685, %v7263
    %v8798 = vsel %vm352, %v6687, %v7265
    %v8799 = vsel %vm352, %v6688, %v7267
    %v8800 = vsel %vm352, %v6690, %v7269
    %v8801 = vsel %vm352, %v6691, %v7271
    %v8802 = vsel %vm352, %v6693, %v7273
    %v8803 = vsel %vm352, %v6694, %v7275
    %v8804 = vsel %vm352, %v6696, %v7277
    %v8805 = vsel %vm352, %v6697, %v7279
    %v8806 = vsel %vm352, %v6699, %v7281
    %v8807 = vsel %vm352, %v6700, %v7283
    %v8808 = vsel %vm352, %v6702, %v7285
    %v8809 = vsel %vm352, %v6703, %v7287
    %v8810 = vsel %vm352, %v6705, %v7289
    %v8811 = vsel %vm352, %v6706, %v7291
    %v8812 = vsel %vm352, %v6708, %v7293
    %v8813 = vsel %vm352, %v6709, %v7295
    %v8814 = vsel %vm352, %v6711, %v7297
    %v8815 = vsel %vm352, %v6712, %v7299
    %v8816 = vsel %vm352, %v6714, %v7301
    %v8817 = vsel %vm352, %v6715, %v7303
    %v8818 = vsel %vm352, %v6717, %v7305
    %v8819 = vsel %vm352, %v6718, %v7307
    %v8820 = vsel %vm352, %v6720, %v7309
    %v8821 = vsel %vm352, %v6721, %v7311
    %v8822 = vsel %vm352, %v6723, %v7313
    %v8823 = vsel %vm352, %v6724, %v7315
    %v8824 = vsel %vm352, %v6726, %v7317
    %v8825 = vsel %vm352, %v6727, %v7319
    %v8826 = vsel %vm352, %v6729, %v7321
    %v8827 = vsel %vm352, %v6730, %v7323
    %v8828 = vsel %vm352, %v6738, %v7325
    %v8829 = vsel %vm352, %v6739, %v7327
    %v8830 = vsel %vm352, %v6741, %v7329
    %v8831 = vsel %vm352, %v6742, %v7331
    %v8832 = vsel %vm352, %v6744, %v7333
    %v8833 = vsel %vm352, %v6745, %v7335
    %v8834 = vsel %vm352, %v6747, %v7337
    %v8835 = vsel %vm352, %v6748, %v7339
    %v8836 = vsel %vm352, %v6750, %v7341
    %v8837 = vsel %vm352, %v6751, %v7343
    %v8838 = vsel %vm352, %v6753, %v7345
    %v8839 = vsel %vm352, %v6754, %v7347
    %v8840 = vsel %vm352, %v6756, %v7349
    %v8841 = vsel %vm352, %v6757, %v7351
    %v8842 = vsel %vm352, %v6759, %v7353
    %v8843 = vsel %vm352, %v6760, %v7355
    %v8844 = vsel %vm352, %v6762, %v7357
    %v8845 = vsel %vm352, %v6763, %v7359
    %v8846 = vsel %vm352, %v6765, %v7361
    %v8847 = vsel %vm352, %v6766, %v7363
    %v8848 = vsel %vm352, %v6768, %v7365
    %v8849 = vsel %vm352, %v6769, %v7367
    %v8850 = vsel %vm352, %v6771, %v7369
    %v8851 = vsel %vm352, %v6772, %v7371
    %v8852 = vsel %vm352, %v6774, %v7373
    %v8853 = vsel %vm352, %v6775, %v7375
    %v8854 = vsel %vm352, %v6777, %v7377
    %v8855 = vsel %vm352, %v6778, %v7379
    %v8856 = vsel %vm352, %v6780, %v7381
    %v8857 = vsel %vm352, %v6781, %v7383
    %v8858 = vsel %vm352, %v6783, %v7385
    %v8859 = vsel %vm352, %v6784, %v7387
    %v8860 = vsel %vm117, %v8796, %v7453
    %v8861 = vsel %vm117, %v8797, %v7455
    %v8862 = vsel %vm117, %v8798, %v7457
    %v8863 = vsel %vm117, %v8799, %v7459
    %v8864 = vsel %vm117, %v8800, %v7461
    %v8865 = vsel %vm117, %v8801, %v7463
    %v8866 = vsel %vm117, %v8802, %v7465
    %v8867 = vsel %vm117, %v8803, %v7467
    %v8868 = vsel %vm117, %v8804, %v7469
    %v8869 = vsel %vm117, %v8805, %v7471
    %v8870 = vsel %vm117, %v8806, %v7473
    %v8871 = vsel %vm117, %v8807, %v7475
    %v8872 = vsel %vm117, %v8808, %v7477
    %v8873 = vsel %vm117, %v8809, %v7479
    %v8874 = vsel %vm117, %v8810, %v7481
    %v8875 = vsel %vm117, %v8811, %v7483
    %v8876 = vsel %vm117, %v8812, %v7485
    %v8877 = vsel %vm117, %v8813, %v7487
    %v8878 = vsel %vm117, %v8814, %v7489
    %v8879 = vsel %vm117, %v8815, %v7491
    %v8880 = vsel %vm117, %v8816, %v7493
    %v8881 = vsel %vm117, %v8817, %v7495
    %v8882 = vsel %vm117, %v8818, %v7497
    %v8883 = vsel %vm117, %v8819, %v7499
    %v8884 = vsel %vm117, %v8820, %v7501
    %v8885 = vsel %vm117, %v8821, %v7503
    %v8886 = vsel %vm117, %v8822, %v7505
    %v8887 = vsel %vm117, %v8823, %v7507
    %v8888 = vsel %vm117, %v8824, %v7509
    %v8889 = vsel %vm117, %v8825, %v7511
    %v8890 = vsel %vm117, %v8826, %v7513
    %v8891 = vsel %vm117, %v8827, %v7515
    %v8892 = vsel %vm117, %v8828, %v7517
    %v8893 = vsel %vm117, %v8829, %v7519
    %v8894 = vsel %vm117, %v8830, %v7521
    %v8895 = vsel %vm117, %v8831, %v7523
    %v8896 = vsel %vm117, %v8832, %v7525
    %v8897 = vsel %vm117, %v8833, %v7527
    %v8898 = vsel %vm117, %v8834, %v7529
    %v8899 = vsel %vm117, %v8835, %v7531
    %v8900 = vsel %vm117, %v8836, %v7533
    %v8901 = vsel %vm117, %v8837, %v7535
    %v8902 = vsel %vm117, %v8838, %v7537
    %v8903 = vsel %vm117, %v8839, %v7539
    %v8904 = vsel %vm117, %v8840, %v7541
    %v8905 = vsel %vm117, %v8841, %v7543
    %v8906 = vsel %vm117, %v8842, %v7545
    %v8907 = vsel %vm117, %v8843, %v7547
    %v8908 = vsel %vm117, %v8844, %v7549
    %v8909 = vsel %vm117, %v8845, %v7551
    %v8910 = vsel %vm117, %v8846, %v7553
    %v8911 = vsel %vm117, %v8847, %v7555
    %v8912 = vsel %vm117, %v8848, %v7557
    %v8913 = vsel %vm117, %v8849, %v7559
    %v8914 = vsel %vm117, %v8850, %v7561
    %v8915 = vsel %vm117, %v8851, %v7563
    %v8916 = vsel %vm117, %v8852, %v7565
    %v8917 = vsel %vm117, %v8853, %v7567
    %v8918 = vsel %vm117, %v8854, %v7569
    %v8919 = vsel %vm117, %v8855, %v7571
    %v8920 = vsel %vm117, %v8856, %v7573
    %v8921 = vsel %vm117, %v8857, %v7575
    %v8922 = vsel %vm117, %v8858, %v7577
    %v8923 = vsel %vm117, %v8859, %v7579
    %vm8924 = vcmask 195584
    %v8925 = vsel %vm8924, %v8860, %v7645
    %v8926 = vsel %vm8924, %v8861, %v7647
    %v8927 = vsel %vm8924, %v8862, %v7649
    %v8928 = vsel %vm8924, %v8863, %v7651
    %v8929 = vsel %vm8924, %v8864, %v7653
    %v8930 = vsel %vm8924, %v8865, %v7655
    %v8931 = vsel %vm8924, %v8866, %v7657
    %v8932 = vsel %vm8924, %v8867, %v7659
    %v8933 = vsel %vm8924, %v8868, %v7661
    %v8934 = vsel %vm8924, %v8869, %v7663
    %v8935 = vsel %vm8924, %v8870, %v7665
    %v8936 = vsel %vm8924, %v8871, %v7667
    %v8937 = vsel %vm8924, %v8872, %v7669
    %v8938 = vsel %vm8924, %v8873, %v7671
    %v8939 = vsel %vm8924, %v8874, %v7673
    %v8940 = vsel %vm8924, %v8875, %v7675
    %v8941 = vsel %vm8924, %v8876, %v7677
    %v8942 = vsel %vm8924, %v8877, %v7679
    %v8943 = vsel %vm8924, %v8878, %v7681
    %v8944 = vsel %vm8924, %v8879, %v7683
    %v8945 = vsel %vm8924, %v8880, %v7685
    %v8946 = vsel %vm8924, %v8881, %v7687
    %v8947 = vsel %vm8924, %v8882, %v7689
    %v8948 = vsel %vm8924, %v8883, %v7691
    %v8949 = vsel %vm8924, %v8884, %v7693
    %v8950 = vsel %vm8924, %v8885, %v7695
    %v8951 = vsel %vm8924, %v8886, %v7697
    %v8952 = vsel %vm8924, %v8887, %v7699
    %v8953 = vsel %vm8924, %v8888, %v7701
    %v8954 = vsel %vm8924, %v8889, %v7703
    %v8955 = vsel %vm8924, %v8890, %v7705
    %v8956 = vsel %vm8924, %v8891, %v7707
    %v8957 = vsel %vm8924, %v8892, %v7709
    %v8958 = vsel %vm8924, %v8893, %v7711
    %v8959 = vsel %vm8924, %v8894, %v7713
    %v8960 = vsel %vm8924, %v8895, %v7715
    %v8961 = vsel %vm8924, %v8896, %v7717
    %v8962 = vsel %vm8924, %v8897, %v7719
    %v8963 = vsel %vm8924, %v8898, %v7721
    %v8964 = vsel %vm8924, %v8899, %v7723
    %v8965 = vsel %vm8924, %v8900, %v7725
    %v8966 = vsel %vm8924, %v8901, %v7727
    %v8967 = vsel %vm8924, %v8902, %v7729
    %v8968 = vsel %vm8924, %v8903, %v7731
    %v8969 = vsel %vm8924, %v8904, %v7733
    %v8970 = vsel %vm8924, %v8905, %v7735
    %v8971 = vsel %vm8924, %v8906, %v7737
    %v8972 = vsel %vm8924, %v8907, %v7739
    %v8973 = vsel %vm8924, %v8908, %v7741
    %v8974 = vsel %vm8924, %v8909, %v7743
    %v8975 = vsel %vm8924, %v8910, %v7745
    %v8976 = vsel %vm8924, %v8911, %v7747
    %v8977 = vsel %vm8924, %v8912, %v7749
    %v8978 = vsel %vm8924, %v8913, %v7751
    %v8979 = vsel %vm8924, %v8914, %v7753
    %v8980 = vsel %vm8924, %v8915, %v7755
    %v8981 = vsel %vm8924, %v8916, %v7757
    %v8982 = vsel %vm8924, %v8917, %v7759
    %v8983 = vsel %vm8924, %v8918, %v7761
    %v8984 = vsel %vm8924, %v8919, %v7763
    %v8985 = vsel %vm8924, %v8920, %v7765
    %v8986 = vsel %vm8924, %v8921, %v7767
    %v8987 = vsel %vm8924, %v8922, %v7769
    %v8988 = vsel %vm8924, %v8923, %v7771
    %v8989 = vsel %vm2657, %v8925, %v7837
    %v8990 = vsel %vm2657, %v8926, %v7839
    %v8991 = vsel %vm2657, %v8927, %v7841
    %v8992 = vsel %vm2657, %v8928, %v7843
    %v8993 = vsel %vm2657, %v8929, %v7845
    %v8994 = vsel %vm2657, %v8930, %v7847
    %v8995 = vsel %vm2657, %v8931, %v7849
    %v8996 = vsel %vm2657, %v8932, %v7851
    %v8997 = vsel %vm2657, %v8933, %v7853
    %v8998 = vsel %vm2657, %v8934, %v7855
    %v8999 = vsel %vm2657, %v8935, %v7857
    %v9000 = vsel %vm2657, %v8936, %v7859
    %v9001 = vsel %vm2657, %v8937, %v7861
    %v9002 = vsel %vm2657, %v8938, %v7863
    %v9003 = vsel %vm2657, %v8939, %v7865
    %v9004 = vsel %vm2657, %v8940, %v7867
    %v9005 = vsel %vm2657, %v8941, %v7869
    %v9006 = vsel %vm2657, %v8942, %v7871
    %v9007 = vsel %vm2657, %v8943, %v7873
    %v9008 = vsel %vm2657, %v8944, %v7875
    %v9009 = vsel %vm2657, %v8945, %v7877
    %v9010 = vsel %vm2657, %v8946, %v7879
    %v9011 = vsel %vm2657, %v8947, %v7881
    %v9012 = vsel %vm2657, %v8948, %v7883
    %v9013 = vsel %vm2657, %v8949, %v7885
    %v9014 = vsel %vm2657, %v8950, %v7887
    %v9015 = vsel %vm2657, %v8951, %v7889
    %v9016 = vsel %vm2657, %v8952, %v7891
    %v9017 = vsel %vm2657, %v8953, %v7893
    %v9018 = vsel %vm2657, %v8954, %v7895
    %v9019 = vsel %vm2657, %v8955, %v7897
    %v9020 = vsel %vm2657, %v8956, %v7899
    %v9021 = vsel %vm2657, %v8957, %v7901
    %v9022 = vsel %vm2657, %v8958, %v7903
    %v9023 = vsel %vm2657, %v8959, %v7905
    %v9024 = vsel %vm2657, %v8960, %v7907
    %v9025 = vsel %vm2657, %v8961, %v7909
    %v9026 = vsel %vm2657, %v8962, %v7911
    %v9027 = vsel %vm2657, %v8963, %v7913
    %v9028 = vsel %vm2657, %v8964, %v7915
    %v9029 = vsel %vm2657, %v8965, %v7917
    %v9030 = vsel %vm2657, %v8966, %v7919
    %v9031 = vsel %vm2657, %v8967, %v7921
    %v9032 = vsel %vm2657, %v8968, %v7923
    %v9033 = vsel %vm2657, %v8969, %v7925
    %v9034 = vsel %vm2657, %v8970, %v7927
    %v9035 = vsel %vm2657, %v8971, %v7929
    %v9036 = vsel %vm2657, %v8972, %v7931
    %v9037 = vsel %vm2657, %v8973, %v7933
    %v9038 = vsel %vm2657, %v8974, %v7935
    %v9039 = vsel %vm2657, %v8975, %v7937
    %v9040 = vsel %vm2657, %v8976, %v7939
    %v9041 = vsel %vm2657, %v8977, %v7941
    %v9042 = vsel %vm2657, %v8978, %v7943
    %v9043 = vsel %vm2657, %v8979, %v7945
    %v9044 = vsel %vm2657, %v8980, %v7947
    %v9045 = vsel %vm2657, %v8981, %v7949
    %v9046 = vsel %vm2657, %v8982, %v7951
    %v9047 = vsel %vm2657, %v8983, %v7953
    %v9048 = vsel %vm2657, %v8984, %v7955
    %v9049 = vsel %vm2657, %v8985, %v7957
    %v9050 = vsel %vm2657, %v8986, %v7959
    %v9051 = vsel %vm2657, %v8987, %v7961
    %v9052 = vsel %vm2657, %v8988, %v7963
    %vm9053 = vcmask 326656
    %v9054 = vsel %vm9053, %v8989, %v8029
    %v9055 = vsel %vm9053, %v8990, %v8031
    %v9056 = vsel %vm9053, %v8991, %v8033
    %v9057 = vsel %vm9053, %v8992, %v8035
    %v9058 = vsel %vm9053, %v8993, %v8037
    %v9059 = vsel %vm9053, %v8994, %v8039
    %v9060 = vsel %vm9053, %v8995, %v8041
    %v9061 = vsel %vm9053, %v8996, %v8043
    %v9062 = vsel %vm9053, %v8997, %v8045
    %v9063 = vsel %vm9053, %v8998, %v8047
    %v9064 = vsel %vm9053, %v8999, %v8049
    %v9065 = vsel %vm9053, %v9000, %v8051
    %v9066 = vsel %vm9053, %v9001, %v8053
    %v9067 = vsel %vm9053, %v9002, %v8055
    %v9068 = vsel %vm9053, %v9003, %v8057
    %v9069 = vsel %vm9053, %v9004, %v8059
    %v9070 = vsel %vm9053, %v9005, %v8061
    %v9071 = vsel %vm9053, %v9006, %v8063
    %v9072 = vsel %vm9053, %v9007, %v8065
    %v9073 = vsel %vm9053, %v9008, %v8067
    %v9074 = vsel %vm9053, %v9009, %v8069
    %v9075 = vsel %vm9053, %v9010, %v8071
    %v9076 = vsel %vm9053, %v9011, %v8073
    %v9077 = vsel %vm9053, %v9012, %v8075
    %v9078 = vsel %vm9053, %v9013, %v8077
    %v9079 = vsel %vm9053, %v9014, %v8079
    %v9080 = vsel %vm9053, %v9015, %v8081
    %v9081 = vsel %vm9053, %v9016, %v8083
    %v9082 = vsel %vm9053, %v9017, %v8085
    %v9083 = vsel %vm9053, %v9018, %v8087
    %v9084 = vsel %vm9053, %v9019, %v8089
    %v9085 = vsel %vm9053, %v9020, %v8091
    %v9086 = vsel %vm9053, %v9021, %v8093
    %v9087 = vsel %vm9053, %v9022, %v8095
    %v9088 = vsel %vm9053, %v9023, %v8097
    %v9089 = vsel %vm9053, %v9024, %v8099
    %v9090 = vsel %vm9053, %v9025, %v8101
    %v9091 = vsel %vm9053, %v9026, %v8103
    %v9092 = vsel %vm9053, %v9027, %v8105
    %v9093 = vsel %vm9053, %v9028, %v8107
    %v9094 = vsel %vm9053, %v9029, %v8109
    %v9095 = vsel %vm9053, %v9030, %v8111
    %v9096 = vsel %vm9053, %v9031, %v8113
    %v9097 = vsel %vm9053, %v9032, %v8115
    %v9098 = vsel %vm9053, %v9033, %v8117
    %v9099 = vsel %vm9053, %v9034, %v8119
    %v9100 = vsel %vm9053, %v9035, %v8121
    %v9101 = vsel %vm9053, %v9036, %v8123
    %v9102 = vsel %vm9053, %v9037, %v8125
    %v9103 = vsel %vm9053, %v9038, %v8127
    %v9104 = vsel %vm9053, %v9039, %v8129
    %v9105 = vsel %vm9053, %v9040, %v8131
    %v9106 = vsel %vm9053, %v9041, %v8133
    %v9107 = vsel %vm9053, %v9042, %v8135
    %v9108 = vsel %vm9053, %v9043, %v8137
    %v9109 = vsel %vm9053, %v9044, %v8139
    %v9110 = vsel %vm9053, %v9045, %v8141
    %v9111 = vsel %vm9053, %v9046, %v8143
    %v9112 = vsel %vm9053, %v9047, %v8145
    %v9113 = vsel %vm9053, %v9048, %v8147
    %v9114 = vsel %vm9053, %v9049, %v8149
    %v9115 = vsel %vm9053, %v9050, %v8151
    %v9116 = vsel %vm9053, %v9051, %v8153
    %v9117 = vsel %vm9053, %v9052, %v8155
    %v9118 = vsel %vm2722, %v9054, %v8221
    %v9119 = vsel %vm2722, %v9055, %v8223
    %v9120 = vsel %vm2722, %v9056, %v8225
    %v9121 = vsel %vm2722, %v9057, %v8227
    %v9122 = vsel %vm2722, %v9058, %v8229
    %v9123 = vsel %vm2722, %v9059, %v8231
    %v9124 = vsel %vm2722, %v9060, %v8233
    %v9125 = vsel %vm2722, %v9061, %v8235
    %v9126 = vsel %vm2722, %v9062, %v8237
    %v9127 = vsel %vm2722, %v9063, %v8239
    %v9128 = vsel %vm2722, %v9064, %v8241
    %v9129 = vsel %vm2722, %v9065, %v8243
    %v9130 = vsel %vm2722, %v9066, %v8245
    %v9131 = vsel %vm2722, %v9067, %v8247
    %v9132 = vsel %vm2722, %v9068, %v8249
    %v9133 = vsel %vm2722, %v9069, %v8251
    %v9134 = vsel %vm2722, %v9070, %v8253
    %v9135 = vsel %vm2722, %v9071, %v8255
    %v9136 = vsel %vm2722, %v9072, %v8257
    %v9137 = vsel %vm2722, %v9073, %v8259
    %v9138 = vsel %vm2722, %v9074, %v8261
    %v9139 = vsel %vm2722, %v9075, %v8263
    %v9140 = vsel %vm2722, %v9076, %v8265
    %v9141 = vsel %vm2722, %v9077, %v8267
    %v9142 = vsel %vm2722, %v9078, %v8269
    %v9143 = vsel %vm2722, %v9079, %v8271
    %v9144 = vsel %vm2722, %v9080, %v8273
    %v9145 = vsel %vm2722, %v9081, %v8275
    %v9146 = vsel %vm2722, %v9082, %v8277
    %v9147 = vsel %vm2722, %v9083, %v8279
    %v9148 = vsel %vm2722, %v9084, %v8281
    %v9149 = vsel %vm2722, %v9085, %v8283
    %v9150 = vsel %vm2722, %v9086, %v8285
    %v9151 = vsel %vm2722, %v9087, %v8287
    %v9152 = vsel %vm2722, %v9088, %v8289
    %v9153 = vsel %vm2722, %v9089, %v8291
    %v9154 = vsel %vm2722, %v9090, %v8293
    %v9155 = vsel %vm2722, %v9091, %v8295
    %v9156 = vsel %vm2722, %v9092, %v8297
    %v9157 = vsel %vm2722, %v9093, %v8299
    %v9158 = vsel %vm2722, %v9094, %v8301
    %v9159 = vsel %vm2722, %v9095, %v8303
    %v9160 = vsel %vm2722, %v9096, %v8305
    %v9161 = vsel %vm2722, %v9097, %v8307
    %v9162 = vsel %vm2722, %v9098, %v8309
    %v9163 = vsel %vm2722, %v9099, %v8311
    %v9164 = vsel %vm2722, %v9100, %v8313
    %v9165 = vsel %vm2722, %v9101, %v8315
    %v9166 = vsel %vm2722, %v9102, %v8317
    %v9167 = vsel %vm2722, %v9103, %v8319
    %v9168 = vsel %vm2722, %v9104, %v8321
    %v9169 = vsel %vm2722, %v9105, %v8323
    %v9170 = vsel %vm2722, %v9106, %v8325
    %v9171 = vsel %vm2722, %v9107, %v8327
    %v9172 = vsel %vm2722, %v9108, %v8329
    %v9173 = vsel %vm2722, %v9109, %v8331
    %v9174 = vsel %vm2722, %v9110, %v8333
    %v9175 = vsel %vm2722, %v9111, %v8335
    %v9176 = vsel %vm2722, %v9112, %v8337
    %v9177 = vsel %vm2722, %v9113, %v8339
    %v9178 = vsel %vm2722, %v9114, %v8341
    %v9179 = vsel %vm2722, %v9115, %v8343
    %v9180 = vsel %vm2722, %v9116, %v8345
    %v9181 = vsel %vm2722, %v9117, %v8347
    %vm9182 = vcmask 457728
    %v9183 = vsel %vm9182, %v9118, %v8413
    %v9184 = vsel %vm9182, %v9119, %v8415
    %v9185 = vsel %vm9182, %v9120, %v8417
    %v9186 = vsel %vm9182, %v9121, %v8419
    %v9187 = vsel %vm9182, %v9122, %v8421
    %v9188 = vsel %vm9182, %v9123, %v8423
    %v9189 = vsel %vm9182, %v9124, %v8425
    %v9190 = vsel %vm9182, %v9125, %v8427
    %v9191 = vsel %vm9182, %v9126, %v8429
    %v9192 = vsel %vm9182, %v9127, %v8431
    %v9193 = vsel %vm9182, %v9128, %v8433
    %v9194 = vsel %vm9182, %v9129, %v8435
    %v9195 = vsel %vm9182, %v9130, %v8437
    %v9196 = vsel %vm9182, %v9131, %v8439
    %v9197 = vsel %vm9182, %v9132, %v8441
    %v9198 = vsel %vm9182, %v9133, %v8443
    %v9199 = vsel %vm9182, %v9134, %v8445
    %v9200 = vsel %vm9182, %v9135, %v8447
    %v9201 = vsel %vm9182, %v9136, %v8449
    %v9202 = vsel %vm9182, %v9137, %v8451
    %v9203 = vsel %vm9182, %v9138, %v8453
    %v9204 = vsel %vm9182, %v9139, %v8455
    %v9205 = vsel %vm9182, %v9140, %v8457
    %v9206 = vsel %vm9182, %v9141, %v8459
    %v9207 = vsel %vm9182, %v9142, %v8461
    %v9208 = vsel %vm9182, %v9143, %v8463
    %v9209 = vsel %vm9182, %v9144, %v8465
    %v9210 = vsel %vm9182, %v9145, %v8467
    %v9211 = vsel %vm9182, %v9146, %v8469
    %v9212 = vsel %vm9182, %v9147, %v8471
    %v9213 = vsel %vm9182, %v9148, %v8473
    %v9214 = vsel %vm9182, %v9149, %v8475
    %v9215 = vsel %vm9182, %v9150, %v8477
    %v9216 = vsel %vm9182, %v9151, %v8479
    %v9217 = vsel %vm9182, %v9152, %v8481
    %v9218 = vsel %vm9182, %v9153, %v8483
    %v9219 = vsel %vm9182, %v9154, %v8485
    %v9220 = vsel %vm9182, %v9155, %v8487
    %v9221 = vsel %vm9182, %v9156, %v8489
    %v9222 = vsel %vm9182, %v9157, %v8491
    %v9223 = vsel %vm9182, %v9158, %v8493
    %v9224 = vsel %vm9182, %v9159, %v8495
    %v9225 = vsel %vm9182, %v9160, %v8497
    %v9226 = vsel %vm9182, %v9161, %v8499
    %v9227 = vsel %vm9182, %v9162, %v8501
    %v9228 = vsel %vm9182, %v9163, %v8503
    %v9229 = vsel %vm9182, %v9164, %v8505
    %v9230 = vsel %vm9182, %v9165, %v8507
    %v9231 = vsel %vm9182, %v9166, %v8509
    %v9232 = vsel %vm9182, %v9167, %v8511
    %v9233 = vsel %vm9182, %v9168, %v8513
    %v9234 = vsel %vm9182, %v9169, %v8515
    %v9235 = vsel %vm9182, %v9170, %v8517
    %v9236 = vsel %vm9182, %v9171, %v8519
    %v9237 = vsel %vm9182, %v9172, %v8521
    %v9238 = vsel %vm9182, %v9173, %v8523
    %v9239 = vsel %vm9182, %v9174, %v8525
    %v9240 = vsel %vm9182, %v9175, %v8527
    %v9241 = vsel %vm9182, %v9176, %v8529
    %v9242 = vsel %vm9182, %v9177, %v8531
    %v9243 = vsel %vm9182, %v9178, %v8533
    %v9244 = vsel %vm9182, %v9179, %v8535
    %v9245 = vsel %vm9182, %v9180, %v8537
    %v9246 = vsel %vm9182, %v9181, %v8539
    %v9247 = vsel %vm2787, %v9183, %v8605
    %v9248 = vsel %vm2787, %v9184, %v8607
    %v9249 = vsel %vm2787, %v9185, %v8609
    %v9250 = vsel %vm2787, %v9186, %v8611
    %v9251 = vsel %vm2787, %v9187, %v8613
    %v9252 = vsel %vm2787, %v9188, %v8615
    %v9253 = vsel %vm2787, %v9189, %v8617
    %v9254 = vsel %vm2787, %v9190, %v8619
    %v9255 = vsel %vm2787, %v9191, %v8621
    %v9256 = vsel %vm2787, %v9192, %v8623
    %v9257 = vsel %vm2787, %v9193, %v8625
    %v9258 = vsel %vm2787, %v9194, %v8627
    %v9259 = vsel %vm2787, %v9195, %v8629
    %v9260 = vsel %vm2787, %v9196, %v8631
    %v9261 = vsel %vm2787, %v9197, %v8633
    %v9262 = vsel %vm2787, %v9198, %v8635
    %v9263 = vsel %vm2787, %v9199, %v8637
    %v9264 = vsel %vm2787, %v9200, %v8639
    %v9265 = vsel %vm2787, %v9201, %v8641
    %v9266 = vsel %vm2787, %v9202, %v8643
    %v9267 = vsel %vm2787, %v9203, %v8645
    %v9268 = vsel %vm2787, %v9204, %v8647
    %v9269 = vsel %vm2787, %v9205, %v8649
    %v9270 = vsel %vm2787, %v9206, %v8651
    %v9271 = vsel %vm2787, %v9207, %v8653
    %v9272 = vsel %vm2787, %v9208, %v8655
    %v9273 = vsel %vm2787, %v9209, %v8657
    %v9274 = vsel %vm2787, %v9210, %v8659
    %v9275 = vsel %vm2787, %v9211, %v8661
    %v9276 = vsel %vm2787, %v9212, %v8663
    %v9277 = vsel %vm2787, %v9213, %v8665
    %v9278 = vsel %vm2787, %v9214, %v8667
    %v9279 = vsel %vm2787, %v9215, %v8669
    %v9280 = vsel %vm2787, %v9216, %v8671
    %v9281 = vsel %vm2787, %v9217, %v8673
    %v9282 = vsel %vm2787, %v9218, %v8675
    %v9283 = vsel %vm2787, %v9219, %v8677
    %v9284 = vsel %vm2787, %v9220, %v8679
    %v9285 = vsel %vm2787, %v9221, %v8681
    %v9286 = vsel %vm2787, %v9222, %v8683
    %v9287 = vsel %vm2787, %v9223, %v8685
    %v9288 = vsel %vm2787, %v9224, %v8687
    %v9289 = vsel %vm2787, %v9225, %v8689
    %v9290 = vsel %vm2787, %v9226, %v8691
    %v9291 = vsel %vm2787, %v9227, %v8693
    %v9292 = vsel %vm2787, %v9228, %v8695
    %v9293 = vsel %vm2787, %v9229, %v8697
    %v9294 = vsel %vm2787, %v9230, %v8699
    %v9295 = vsel %vm2787, %v9231, %v8701
    %v9296 = vsel %vm2787, %v9232, %v8703
    %v9297 = vsel %vm2787, %v9233, %v8705
    %v9298 = vsel %vm2787, %v9234, %v8707
    %v9299 = vsel %vm2787, %v9235, %v8709
    %v9300 = vsel %vm2787, %v9236, %v8711
    %v9301 = vsel %vm2787, %v9237, %v8713
    %v9302 = vsel %vm2787, %v9238, %v8715
    %v9303 = vsel %vm2787, %v9239, %v8717
    %v9304 = vsel %vm2787, %v9240, %v8719
    %v9305 = vsel %vm2787, %v9241, %v8721
    %v9306 = vsel %vm2787, %v9242, %v8723
    %v9307 = vsel %vm2787, %v9243, %v8725
    %v9308 = vsel %vm2787, %v9244, %v8727
    %v9309 = vsel %vm2787, %v9245, %v8729
    %v9310 = vsel %vm2787, %v9246, %v8731
    %v9311 = vld [vmem:[%s9] sm:$0xff]
    %v9312 = vld [vmem:[%s9 + $0x8] sm:$0xff]
    %v9313 = vld [vmem:[%s9 + $0x10] sm:$0xff]
    %v9314 = vld [vmem:[%s9 + $0x18] sm:$0xff]
    %v9315 = vld [vmem:[%s9 + $0x20] sm:$0xff]
    %v9316 = vld [vmem:[%s9 + $0x28] sm:$0xff]
    %v9317 = vld [vmem:[%s9 + $0x30] sm:$0xff]
    %v9318 = vld [vmem:[%s9 + $0x38] sm:$0xff]
    %v9319 = vld [vmem:[%s9 + $0x40] sm:$0xff]
    %v9320 = vld [vmem:[%s10] sm:$0x1]
    %v9322 = vlaneseq
    %v9323 = vshrl.u32 %v9322, 7
    %v9324 = vsub.s32 0, %v9323
    %v9325 = vrot.slane %v9320, %v9324
    %vm9327 = vcmask 588800
    %v9329 = vsel %vm9327, %v9247, 0
    %v9332 = vsel %vm9327, %v9248, 0
    %v9335 = vsel %vm9327, %v9249, 0
    %v9338 = vsel %vm9327, %v9250, 0
    %v9341 = vsel %vm9327, %v9251, 0
    %v9344 = vsel %vm9327, %v9252, 0
    %v9347 = vsel %vm9327, %v9253, 0
    %v9350 = vsel %vm9327, %v9254, 0
    %v9353 = vsel %vm9327, %v9255, 0
    %v9356 = vsel %vm9327, %v9256, 0
    %v9359 = vsel %vm9327, %v9257, 0
    %v9362 = vsel %vm9327, %v9258, 0
    %v9365 = vsel %vm9327, %v9259, 0
    %v9368 = vsel %vm9327, %v9260, 0
    %v9371 = vsel %vm9327, %v9261, 0
    %v9374 = vsel %vm9327, %v9262, 0
    %v9377 = vsel %vm9327, %v9263, 0
    %v9380 = vsel %vm9327, %v9264, 0
    %v9383 = vsel %vm9327, %v9265, 0
    %v9386 = vsel %vm9327, %v9266, 0
    %v9389 = vsel %vm9327, %v9267, 0
    %v9392 = vsel %vm9327, %v9268, 0
    %v9395 = vsel %vm9327, %v9269, 0
    %v9398 = vsel %vm9327, %v9270, 0
    %v9401 = vsel %vm9327, %v9271, 0
    %v9404 = vsel %vm9327, %v9272, 0
    %v9407 = vsel %vm9327, %v9273, 0
    %v9410 = vsel %vm9327, %v9274, 0
    %v9413 = vsel %vm9327, %v9275, 0
    %v9416 = vsel %vm9327, %v9276, 0
    %v9419 = vsel %vm9327, %v9277, 0
    %v9422 = vsel %vm9327, %v9278, 0
    %v9425 = vsel %vm9327, %v9279, 0
    %v9428 = vsel %vm9327, %v9280, 0
    %v9431 = vsel %vm9327, %v9281, 0
    %v9434 = vsel %vm9327, %v9282, 0
    %v9437 = vsel %vm9327, %v9283, 0
    %v9440 = vsel %vm9327, %v9284, 0
    %v9443 = vsel %vm9327, %v9285, 0
    %v9446 = vsel %vm9327, %v9286, 0
    %v9449 = vsel %vm9327, %v9287, 0
    %v9452 = vsel %vm9327, %v9288, 0
    %v9455 = vsel %vm9327, %v9289, 0
    %v9458 = vsel %vm9327, %v9290, 0
    %v9461 = vsel %vm9327, %v9291, 0
    %v9464 = vsel %vm9327, %v9292, 0
    %v9467 = vsel %vm9327, %v9293, 0
    %v9470 = vsel %vm9327, %v9294, 0
    %v9473 = vsel %vm9327, %v9295, 0
    %v9476 = vsel %vm9327, %v9296, 0
    %v9479 = vsel %vm9327, %v9297, 0
    %v9482 = vsel %vm9327, %v9298, 0
    %v9485 = vsel %vm9327, %v9299, 0
    %v9488 = vsel %vm9327, %v9300, 0
    %v9491 = vsel %vm9327, %v9301, 0
    %v9494 = vsel %vm9327, %v9302, 0
    %v9497 = vsel %vm9327, %v9303, 0
    %v9500 = vsel %vm9327, %v9304, 0
    %v9503 = vsel %vm9327, %v9305, 0
    %v9506 = vsel %vm9327, %v9306, 0
    %v9509 = vsel %vm9327, %v9307, 0
    %v9512 = vsel %vm9327, %v9308, 0
    %v9515 = vsel %vm9327, %v9309, 0
    %v9518 = vsel %vm9327, %v9310, 0
    %9520 = vmatprep.subr.mxu0 0.0
    %9521 = vmatpush1.msra.mxu0 %v9311
    %9522 = vmatprep.subr.mxu0 0.0
    %9523 = vmatpush1.msra.mxu0 %v9312
    %9524 = vmatprep.subr.mxu0 0.0
    %9525 = vmatpush1.msra.mxu0 %v9313
    %9526 = vmatprep.subr.mxu0 0.0
    %9527 = vmatpush1.msra.mxu0 %v9314
    %9528 = vmatprep.subr.mxu0 0.0
    %9529 = vmatpush1.msra.mxu0 %v9315
    %9530 = vmatprep.subr.mxu0 0.0
    %9531 = vmatpush1.msra.mxu0 %v9316
    %9532 = vmatprep.subr.mxu0 0.0
    %9533 = vmatpush1.msra.mxu0 %v9317
    %9534 = vmatprep.subr.mxu0 0.0
    %9535 = vmatpush1.msra.mxu0 %v9318
    %9536 = vmatprep.subr.mxu0 0.0
    %9537 = vmatpush1.msra.mxu0 %v9319
    %9538 = vmatprep.subr.mxu0 0.0
    %9539 = vmatpush1.msra.mxu0 0.0
    %9540 = vmatprep.subr.mxu0 0.0
    %9541 = vmatpush1.msra.mxu0 0.0
    %9542 = vmatprep.subr.mxu0 0.0
    %9543 = vmatpush1.msra.mxu0 0.0
    %9544 = vmatprep.subr.mxu0 0.0
    %9545 = vmatpush1.msra.mxu0 0.0
    %9546 = vmatprep.subr.mxu0 0.0
    %9547 = vmatpush1.msra.mxu0 0.0
    %9548 = vmatprep.subr.mxu0 0.0
    %9549 = vmatpush1.msra.mxu0 0.0
    %9550 = vmatprep.subr.mxu0 0.0
    %9551 = vmatpush1.msra.mxu0 0.0
    %9552 = vmatprep.subr.mxu0 0.0
    %9553 = vmatpush1.msra.mxu0 0.0
    %9554 = vmatprep.subr.mxu0 0.0
    %9555 = vmatpush1.msra.mxu0 0.0
    %9556 = vmatprep.subr.mxu0 0.0
    %9557 = vmatpush1.msra.mxu0 0.0
    %9558 = vmatprep.subr.mxu0 0.0
    %9559 = vmatpush1.msra.mxu0 0.0
    %9560 = vmatprep.subr.mxu0 0.0
    %9561 = vmatpush1.msra.mxu0 0.0
    %9562 = vmatprep.subr.mxu0 0.0
    %9563 = vmatpush1.msra.mxu0 0.0
    %9564 = vmatprep.subr.mxu0 0.0
    %9565 = vmatpush1.msra.mxu0 0.0
    %9566 = vmatprep.subr.mxu0 0.0
    %9567 = vmatpush1.msra.mxu0 0.0
    %9568 = vmatprep.subr.mxu0 0.0
    %9569 = vmatpush1.msra.mxu0 0.0
    %9570 = vmatprep.subr.mxu0 0.0
    %9571 = vmatpush1.msra.mxu0 0.0
    %9572 = vmatprep.subr.mxu0 0.0
    %9573 = vmatpush1.msra.mxu0 0.0
    %9574 = vmatprep.subr.mxu0 0.0
    %9575 = vmatpush1.msra.mxu0 0.0
    %9576 = vmatprep.subr.mxu0 0.0
    %9577 = vmatpush1.msra.mxu0 0.0
    %9578 = vmatprep.subr.mxu0 0.0
    %9579 = vmatpush1.msra.mxu0 0.0
    %9580 = vmatprep.subr.mxu0 0.0
    %9581 = vmatpush1.msra.mxu0 0.0
    %9582 = vmatprep.subr.mxu0 0.0
    %9583 = vmatpush1.msra.mxu0 0.0
    %9584 = vmatprep.mubr.f32.mxu0 0.0
    %9585 = vmatmul.mubr.f32.gmra.mrb[0].mxu0 %v9329
    %v9586 = vpop.f32.mrb[0].mxu0
    %v9587 = vadd.f32 %v9325, %v9586
    %v9588 = vpop.f32.mrb[0].mxu0
    %9589 = vmatprep.mubr.f32.mxu0 0.0
    %9590 = vmatmul.mubr.f32.gmra.mrb[0].mxu0 %v9332
    %v9591 = vpop.f32.mrb[0].mxu0
    %v9592 = vadd.f32 %v9325, %v9591
    %v9593 = vpop.f32.mrb[0].mxu0
    %9594 = vmatprep.mubr.f32.mxu0 0.0
    %9595 = vmatmul.mubr.f32.gmra.mrb[0].mxu0 %v9335
    %v9596 = vpop.f32.mrb[0].mxu0
    %v9597 = vadd.f32 %v9325, %v9596
    %v9598 = vpop.f32.mrb[0].mxu0
    %9599 = vmatprep.mubr.f32.mxu0 0.0
    %9600 = vmatmul.mubr.f32.gmra.mrb[0].mxu0 %v9338
    %v9601 = vpop.f32.mrb[0].mxu0
    %v9602 = vadd.f32 %v9325, %v9601
    %v9603 = vpop.f32.mrb[0].mxu0
    %9604 = vmatprep.mubr.f32.mxu0 0.0
    %9605 = vmatmul.mubr.f32.gmra.mrb[0].mxu0 %v9341
    %v9606 = vpop.f32.mrb[0].mxu0
    %v9607 = vadd.f32 %v9325, %v9606
    %v9608 = vpop.f32.mrb[0].mxu0
    %9609 = vmatprep.mubr.f32.mxu0 0.0
    %9610 = vmatmul.mubr.f32.gmra.mrb[0].mxu0 %v9344
    %v9611 = vpop.f32.mrb[0].mxu0
    %v9612 = vadd.f32 %v9325, %v9611
    %v9613 = vpop.f32.mrb[0].mxu0
    %9614 = vmatprep.mubr.f32.mxu0 0.0
    %9615 = vmatmul.mubr.f32.gmra.mrb[0].mxu0 %v9347
    %v9616 = vpop.f32.mrb[0].mxu0
    %v9617 = vadd.f32 %v9325, %v9616
    %v9618 = vpop.f32.mrb[0].mxu0
    %9619 = vmatprep.mubr.f32.mxu0 0.0
    %9620 = vmatmul.mubr.f32.gmra.mrb[0].mxu0 %v9350
    %v9621 = vpop.f32.mrb[0].mxu0
    %v9622 = vadd.f32 %v9325, %v9621
    %v9623 = vpop.f32.mrb[0].mxu0
    %9624 = vmatprep.mubr.f32.mxu0 0.0
    %9625 = vmatmul.mubr.f32.gmra.mrb[0].mxu0 %v9353
    %v9626 = vpop.f32.mrb[0].mxu0
    %v9627 = vadd.f32 %v9325, %v9626
    %v9628 = vpop.f32.mrb[0].mxu0
    %9629 = vmatprep.mubr.f32.mxu0 0.0
    %9630 = vmatmul.mubr.f32.gmra.mrb[0].mxu0 %v9356
    %v9631 = vpop.f32.mrb[0].mxu0
    %v9632 = vadd.f32 %v9325, %v9631
    %v9633 = vpop.f32.mrb[0].mxu0
    %9634 = vmatprep.mubr.f32.mxu0 0.0
    %9635 = vmatmul.mubr.f32.gmra.mrb[0].mxu0 %v9359
    %v9636 = vpop.f32.mrb[0].mxu0
    %v9637 = vadd.f32 %v9325, %v9636
    %v9638 = vpop.f32.mrb[0].mxu0
    %9639 = vmatprep.mubr.f32.mxu0 0.0
    %9640 = vmatmul.mubr.f32.gmra.mrb[0].mxu0 %v9362
    %v9641 = vpop.f32.mrb[0].mxu0
    %v9642 = vadd.f32 %v9325, %v9641
    %v9643 = vpop.f32.mrb[0].mxu0
    %9644 = vmatprep.mubr.f32.mxu0 0.0
    %9645 = vmatmul.mubr.f32.gmra.mrb[0].mxu0 %v9365
    %v9646 = vpop.f32.mrb[0].mxu0
    %v9647 = vadd.f32 %v9325, %v9646
    %v9648 = vpop.f32.mrb[0].mxu0
    %9649 = vmatprep.mubr.f32.mxu0 0.0
    %9650 = vmatmul.mubr.f32.gmra.mrb[0].mxu0 %v9368
    %v9651 = vpop.f32.mrb[0].mxu0
    %v9652 = vadd.f32 %v9325, %v9651
    %v9653 = vpop.f32.mrb[0].mxu0
    %9654 = vmatprep.mubr.f32.mxu0 0.0
    %9655 = vmatmul.mubr.f32.gmra.mrb[0].mxu0 %v9371
    %v9656 = vpop.f32.mrb[0].mxu0
    %v9657 = vadd.f32 %v9325, %v9656
    %v9658 = vpop.f32.mrb[0].mxu0
    %9659 = vmatprep.mubr.f32.mxu0 0.0
    %9660 = vmatmul.mubr.f32.gmra.mrb[0].mxu0 %v9374
    %v9661 = vpop.f32.mrb[0].mxu0
    %v9662 = vadd.f32 %v9325, %v9661
    %v9663 = vpop.f32.mrb[0].mxu0
    %9664 = vmatprep.mubr.f32.mxu0 0.0
    %9665 = vmatmul.mubr.f32.gmra.mrb[0].mxu0 %v9377
    %v9666 = vpop.f32.mrb[0].mxu0
    %v9667 = vadd.f32 %v9325, %v9666
    %v9668 = vpop.f32.mrb[0].mxu0
    %9669 = vmatprep.mubr.f32.mxu0 0.0
    %9670 = vmatmul.mubr.f32.gmra.mrb[0].mxu0 %v9380
    %v9671 = vpop.f32.mrb[0].mxu0
    %v9672 = vadd.f32 %v9325, %v9671
    %v9673 = vpop.f32.mrb[0].mxu0
    %9674 = vmatprep.mubr.f32.mxu0 0.0
    %9675 = vmatmul.mubr.f32.gmra.mrb[0].mxu0 %v9383
    %v9676 = vpop.f32.mrb[0].mxu0
    %v9677 = vadd.f32 %v9325, %v9676
    %v9678 = vpop.f32.mrb[0].mxu0
    %9679 = vmatprep.mubr.f32.mxu0 0.0
    %9680 = vmatmul.mubr.f32.gmra.mrb[0].mxu0 %v9386
    %v9681 = vpop.f32.mrb[0].mxu0
    %v9682 = vadd.f32 %v9325, %v9681
    %v9683 = vpop.f32.mrb[0].mxu0
    %9684 = vmatprep.mubr.f32.mxu0 0.0
    %9685 = vmatmul.mubr.f32.gmra.mrb[0].mxu0 %v9389
    %v9686 = vpop.f32.mrb[0].mxu0
    %v9687 = vadd.f32 %v9325, %v9686
    %v9688 = vpop.f32.mrb[0].mxu0
    %9689 = vmatprep.mubr.f32.mxu0 0.0
    %9690 = vmatmul.mubr.f32.gmra.mrb[0].mxu0 %v9392
    %v9691 = vpop.f32.mrb[0].mxu0
    %v9692 = vadd.f32 %v9325, %v9691
    %v9693 = vpop.f32.mrb[0].mxu0
    %9694 = vmatprep.mubr.f32.mxu0 0.0
    %9695 = vmatmul.mubr.f32.gmra.mrb[0].mxu0 %v9395
    %v9696 = vpop.f32.mrb[0].mxu0
    %v9697 = vadd.f32 %v9325, %v9696
    %v9698 = vpop.f32.mrb[0].mxu0
    %9699 = vmatprep.mubr.f32.mxu0 0.0
    %9700 = vmatmul.mubr.f32.gmra.mrb[0].mxu0 %v9398
    %v9701 = vpop.f32.mrb[0].mxu0
    %v9702 = vadd.f32 %v9325, %v9701
    %v9703 = vpop.f32.mrb[0].mxu0
    %9704 = vmatprep.mubr.f32.mxu0 0.0
    %9705 = vmatmul.mubr.f32.gmra.mrb[0].mxu0 %v9401
    %v9706 = vpop.f32.mrb[0].mxu0
    %v9707 = vadd.f32 %v9325, %v9706
    %v9708 = vpop.f32.mrb[0].mxu0
    %9709 = vmatprep.mubr.f32.mxu0 0.0
    %9710 = vmatmul.mubr.f32.gmra.mrb[0].mxu0 %v9404
    %v9711 = vpop.f32.mrb[0].mxu0
    %v9712 = vadd.f32 %v9325, %v9711
    %v9713 = vpop.f32.mrb[0].mxu0
    %9714 = vmatprep.mubr.f32.mxu0 0.0
    %9715 = vmatmul.mubr.f32.gmra.mrb[0].mxu0 %v9407
    %v9716 = vpop.f32.mrb[0].mxu0
    %v9717 = vadd.f32 %v9325, %v9716
    %v9718 = vpop.f32.mrb[0].mxu0
    %9719 = vmatprep.mubr.f32.mxu0 0.0
    %9720 = vmatmul.mubr.f32.gmra.mrb[0].mxu0 %v9410
    %v9721 = vpop.f32.mrb[0].mxu0
    %v9722 = vadd.f32 %v9325, %v9721
    %v9723 = vpop.f32.mrb[0].mxu0
    %9724 = vmatprep.mubr.f32.mxu0 0.0
    %9725 = vmatmul.mubr.f32.gmra.mrb[0].mxu0 %v9413
    %v9726 = vpop.f32.mrb[0].mxu0
    %v9727 = vadd.f32 %v9325, %v9726
    %v9728 = vpop.f32.mrb[0].mxu0
    %9729 = vmatprep.mubr.f32.mxu0 0.0
    %9730 = vmatmul.mubr.f32.gmra.mrb[0].mxu0 %v9416
    %v9731 = vpop.f32.mrb[0].mxu0
    %v9732 = vadd.f32 %v9325, %v9731
    %v9733 = vpop.f32.mrb[0].mxu0
    %9734 = vmatprep.mubr.f32.mxu0 0.0
    %9735 = vmatmul.mubr.f32.gmra.mrb[0].mxu0 %v9419
    %v9736 = vpop.f32.mrb[0].mxu0
    %v9737 = vadd.f32 %v9325, %v9736
    %v9738 = vpop.f32.mrb[0].mxu0
    %9739 = vmatprep.mubr.f32.mxu0 0.0
    %9740 = vmatmul.mubr.f32.gmra.mrb[0].mxu0 %v9422
    %v9741 = vpop.f32.mrb[0].mxu0
    %v9742 = vadd.f32 %v9325, %v9741
    %v9743 = vpop.f32.mrb[0].mxu0
    %9744 = vmatprep.mubr.f32.mxu0 0.0
    %9745 = vmatmul.mubr.f32.gmra.mrb[0].mxu0 %v9425
    %v9746 = vpop.f32.mrb[0].mxu0
    %v9747 = vadd.f32 %v9325, %v9746
    %v9748 = vpop.f32.mrb[0].mxu0
    %9749 = vmatprep.mubr.f32.mxu0 0.0
    %9750 = vmatmul.mubr.f32.gmra.mrb[0].mxu0 %v9428
    %v9751 = vpop.f32.mrb[0].mxu0
    %v9752 = vadd.f32 %v9325, %v9751
    %v9753 = vpop.f32.mrb[0].mxu0
    %9754 = vmatprep.mubr.f32.mxu0 0.0
    %9755 = vmatmul.mubr.f32.gmra.mrb[0].mxu0 %v9431
    %v9756 = vpop.f32.mrb[0].mxu0
    %v9757 = vadd.f32 %v9325, %v9756
    %v9758 = vpop.f32.mrb[0].mxu0
    %9759 = vmatprep.mubr.f32.mxu0 0.0
    %9760 = vmatmul.mubr.f32.gmra.mrb[0].mxu0 %v9434
    %v9761 = vpop.f32.mrb[0].mxu0
    %v9762 = vadd.f32 %v9325, %v9761
    %v9763 = vpop.f32.mrb[0].mxu0
    %9764 = vmatprep.mubr.f32.mxu0 0.0
    %9765 = vmatmul.mubr.f32.gmra.mrb[0].mxu0 %v9437
    %v9766 = vpop.f32.mrb[0].mxu0
    %v9767 = vadd.f32 %v9325, %v9766
    %v9768 = vpop.f32.mrb[0].mxu0
    %9769 = vmatprep.mubr.f32.mxu0 0.0
    %9770 = vmatmul.mubr.f32.gmra.mrb[0].mxu0 %v9440
    %v9771 = vpop.f32.mrb[0].mxu0
    %v9772 = vadd.f32 %v9325, %v9771
    %v9773 = vpop.f32.mrb[0].mxu0
    %9774 = vmatprep.mubr.f32.mxu0 0.0
    %9775 = vmatmul.mubr.f32.gmra.mrb[0].mxu0 %v9443
    %v9776 = vpop.f32.mrb[0].mxu0
    %v9777 = vadd.f32 %v9325, %v9776
    %v9778 = vpop.f32.mrb[0].mxu0
    %9779 = vmatprep.mubr.f32.mxu0 0.0
    %9780 = vmatmul.mubr.f32.gmra.mrb[0].mxu0 %v9446
    %v9781 = vpop.f32.mrb[0].mxu0
    %v9782 = vadd.f32 %v9325, %v9781
    %v9783 = vpop.f32.mrb[0].mxu0
    %9784 = vmatprep.mubr.f32.mxu0 0.0
    %9785 = vmatmul.mubr.f32.gmra.mrb[0].mxu0 %v9449
    %v9786 = vpop.f32.mrb[0].mxu0
    %v9787 = vadd.f32 %v9325, %v9786
    %v9788 = vpop.f32.mrb[0].mxu0
    %9789 = vmatprep.mubr.f32.mxu0 0.0
    %9790 = vmatmul.mubr.f32.gmra.mrb[0].mxu0 %v9452
    %v9791 = vpop.f32.mrb[0].mxu0
    %v9792 = vadd.f32 %v9325, %v9791
    %v9793 = vpop.f32.mrb[0].mxu0
    %9794 = vmatprep.mubr.f32.mxu0 0.0
    %9795 = vmatmul.mubr.f32.gmra.mrb[0].mxu0 %v9455
    %v9796 = vpop.f32.mrb[0].mxu0
    %v9797 = vadd.f32 %v9325, %v9796
    %v9798 = vpop.f32.mrb[0].mxu0
    %9799 = vmatprep.mubr.f32.mxu0 0.0
    %9800 = vmatmul.mubr.f32.gmra.mrb[0].mxu0 %v9458
    %v9801 = vpop.f32.mrb[0].mxu0
    %v9802 = vadd.f32 %v9325, %v9801
    %v9803 = vpop.f32.mrb[0].mxu0
    %9804 = vmatprep.mubr.f32.mxu0 0.0
    %9805 = vmatmul.mubr.f32.gmra.mrb[0].mxu0 %v9461
    %v9806 = vpop.f32.mrb[0].mxu0
    %v9807 = vadd.f32 %v9325, %v9806
    %v9808 = vpop.f32.mrb[0].mxu0
    %9809 = vmatprep.mubr.f32.mxu0 0.0
    %9810 = vmatmul.mubr.f32.gmra.mrb[0].mxu0 %v9464
    %v9811 = vpop.f32.mrb[0].mxu0
    %v9812 = vadd.f32 %v9325, %v9811
    %v9813 = vpop.f32.mrb[0].mxu0
    %9814 = vmatprep.mubr.f32.mxu0 0.0
    %9815 = vmatmul.mubr.f32.gmra.mrb[0].mxu0 %v9467
    %v9816 = vpop.f32.mrb[0].mxu0
    %v9817 = vadd.f32 %v9325, %v9816
    %v9818 = vpop.f32.mrb[0].mxu0
    %9819 = vmatprep.mubr.f32.mxu0 0.0
    %9820 = vmatmul.mubr.f32.gmra.mrb[0].mxu0 %v9470
    %v9821 = vpop.f32.mrb[0].mxu0
    %v9822 = vadd.f32 %v9325, %v9821
    %v9823 = vpop.f32.mrb[0].mxu0
    %9824 = vmatprep.mubr.f32.mxu0 0.0
    %9825 = vmatmul.mubr.f32.gmra.mrb[0].mxu0 %v9473
    %v9826 = vpop.f32.mrb[0].mxu0
    %v9827 = vadd.f32 %v9325, %v9826
    %v9828 = vpop.f32.mrb[0].mxu0
    %9829 = vmatprep.mubr.f32.mxu0 0.0
    %9830 = vmatmul.mubr.f32.gmra.mrb[0].mxu0 %v9476
    %v9831 = vpop.f32.mrb[0].mxu0
    %v9832 = vadd.f32 %v9325, %v9831
    %v9833 = vpop.f32.mrb[0].mxu0
    %9834 = vmatprep.mubr.f32.mxu0 0.0
    %9835 = vmatmul.mubr.f32.gmra.mrb[0].mxu0 %v9479
    %v9836 = vpop.f32.mrb[0].mxu0
    %v9837 = vadd.f32 %v9325, %v9836
    %v9838 = vpop.f32.mrb[0].mxu0
    %9839 = vmatprep.mubr.f32.mxu0 0.0
    %9840 = vmatmul.mubr.f32.gmra.mrb[0].mxu0 %v9482
    %v9841 = vpop.f32.mrb[0].mxu0
    %v9842 = vadd.f32 %v9325, %v9841
    %v9843 = vpop.f32.mrb[0].mxu0
    %9844 = vmatprep.mubr.f32.mxu0 0.0
    %9845 = vmatmul.mubr.f32.gmra.mrb[0].mxu0 %v9485
    %v9846 = vpop.f32.mrb[0].mxu0
    %v9847 = vadd.f32 %v9325, %v9846
    %v9848 = vpop.f32.mrb[0].mxu0
    %9849 = vmatprep.mubr.f32.mxu0 0.0
    %9850 = vmatmul.mubr.f32.gmra.mrb[0].mxu0 %v9488
    %v9851 = vpop.f32.mrb[0].mxu0
    %v9852 = vadd.f32 %v9325, %v9851
    %v9853 = vpop.f32.mrb[0].mxu0
    %9854 = vmatprep.mubr.f32.mxu0 0.0
    %9855 = vmatmul.mubr.f32.gmra.mrb[0].mxu0 %v9491
    %v9856 = vpop.f32.mrb[0].mxu0
    %v9857 = vadd.f32 %v9325, %v9856
    %v9858 = vpop.f32.mrb[0].mxu0
    %9859 = vmatprep.mubr.f32.mxu0 0.0
    %9860 = vmatmul.mubr.f32.gmra.mrb[0].mxu0 %v9494
    %v9861 = vpop.f32.mrb[0].mxu0
    %v9862 = vadd.f32 %v9325, %v9861
    %v9863 = vpop.f32.mrb[0].mxu0
    %9864 = vmatprep.mubr.f32.mxu0 0.0
    %9865 = vmatmul.mubr.f32.gmra.mrb[0].mxu0 %v9497
    %v9866 = vpop.f32.mrb[0].mxu0
    %v9867 = vadd.f32 %v9325, %v9866
    %v9868 = vpop.f32.mrb[0].mxu0
    %9869 = vmatprep.mubr.f32.mxu0 0.0
    %9870 = vmatmul.mubr.f32.gmra.mrb[0].mxu0 %v9500
    %v9871 = vpop.f32.mrb[0].mxu0
    %v9872 = vadd.f32 %v9325, %v9871
    %v9873 = vpop.f32.mrb[0].mxu0
    %9874 = vmatprep.mubr.f32.mxu0 0.0
    %9875 = vmatmul.mubr.f32.gmra.mrb[0].mxu0 %v9503
    %v9876 = vpop.f32.mrb[0].mxu0
    %v9877 = vadd.f32 %v9325, %v9876
    %v9878 = vpop.f32.mrb[0].mxu0
    %9879 = vmatprep.mubr.f32.mxu0 0.0
    %9880 = vmatmul.mubr.f32.gmra.mrb[0].mxu0 %v9506
    %v9881 = vpop.f32.mrb[0].mxu0
    %v9882 = vadd.f32 %v9325, %v9881
    %v9883 = vpop.f32.mrb[0].mxu0
    %9884 = vmatprep.mubr.f32.mxu0 0.0
    %9885 = vmatmul.mubr.f32.gmra.mrb[0].mxu0 %v9509
    %v9886 = vpop.f32.mrb[0].mxu0
    %v9887 = vadd.f32 %v9325, %v9886
    %v9888 = vpop.f32.mrb[0].mxu0
    %9889 = vmatprep.mubr.f32.mxu0 0.0
    %9890 = vmatmul.mubr.f32.gmra.mrb[0].mxu0 %v9512
    %v9891 = vpop.f32.mrb[0].mxu0
    %v9892 = vadd.f32 %v9325, %v9891
    %v9893 = vpop.f32.mrb[0].mxu0
    %9894 = vmatprep.mubr.f32.mxu0 0.0
    %9895 = vmatmul.mubr.f32.gmra.mrb[0].mxu0 %v9515
    %v9896 = vpop.f32.mrb[0].mxu0
    %v9897 = vadd.f32 %v9325, %v9896
    %v9898 = vpop.f32.mrb[0].mxu0
    %9899 = vmatprep.mubr.f32.mxu0 0.0
    %9900 = vmatmul.mubr.f32.gmra.mrb[0].mxu0 %v9518
    %v9901 = vpop.f32.mrb[0].mxu0
    %v9902 = vadd.f32 %v9325, %v9901
    %v9903 = vpop.f32.mrb[0].mxu0
    %9904 = vdwg.mxu0
    %v9905 = vxor.u32 %v9587, 2147483648
    %v9906 = vxor.u32 %v9592, 2147483648
    %v9907 = vxor.u32 %v9597, 2147483648
    %v9908 = vxor.u32 %v9602, 2147483648
    %v9909 = vxor.u32 %v9607, 2147483648
    %v9910 = vxor.u32 %v9612, 2147483648
    %v9911 = vxor.u32 %v9617, 2147483648
    %v9912 = vxor.u32 %v9622, 2147483648
    %v9913 = vxor.u32 %v9627, 2147483648
    %v9914 = vxor.u32 %v9632, 2147483648
    %v9915 = vxor.u32 %v9637, 2147483648
    %v9916 = vxor.u32 %v9642, 2147483648
    %v9917 = vxor.u32 %v9647, 2147483648
    %v9918 = vxor.u32 %v9652, 2147483648
    %v9919 = vxor.u32 %v9657, 2147483648
    %v9920 = vxor.u32 %v9662, 2147483648
    %v9921 = vxor.u32 %v9667, 2147483648
    %v9922 = vxor.u32 %v9672, 2147483648
    %v9923 = vxor.u32 %v9677, 2147483648
    %v9924 = vxor.u32 %v9682, 2147483648
    %v9925 = vxor.u32 %v9687, 2147483648
    %v9926 = vxor.u32 %v9692, 2147483648
    %v9927 = vxor.u32 %v9697, 2147483648
    %v9928 = vxor.u32 %v9702, 2147483648
    %v9929 = vxor.u32 %v9707, 2147483648
    %v9930 = vxor.u32 %v9712, 2147483648
    %v9931 = vxor.u32 %v9717, 2147483648
    %v9932 = vxor.u32 %v9722, 2147483648
    %v9933 = vxor.u32 %v9727, 2147483648
    %v9934 = vxor.u32 %v9732, 2147483648
    %v9935 = vxor.u32 %v9737, 2147483648
    %v9936 = vxor.u32 %v9742, 2147483648
    %v9937 = vxor.u32 %v9747, 2147483648
    %v9938 = vxor.u32 %v9752, 2147483648
    %v9939 = vxor.u32 %v9757, 2147483648
    %v9940 = vxor.u32 %v9762, 2147483648
    %v9941 = vxor.u32 %v9767, 2147483648
    %v9942 = vxor.u32 %v9772, 2147483648
    %v9943 = vxor.u32 %v9777, 2147483648
    %v9944 = vxor.u32 %v9782, 2147483648
    %v9945 = vxor.u32 %v9787, 2147483648
    %v9946 = vxor.u32 %v9792, 2147483648
    %v9947 = vxor.u32 %v9797, 2147483648
    %v9948 = vxor.u32 %v9802, 2147483648
    %v9949 = vxor.u32 %v9807, 2147483648
    %v9950 = vxor.u32 %v9812, 2147483648
    %v9951 = vxor.u32 %v9817, 2147483648
    %v9952 = vxor.u32 %v9822, 2147483648
    %v9953 = vxor.u32 %v9827, 2147483648
    %v9954 = vxor.u32 %v9832, 2147483648
    %v9955 = vxor.u32 %v9837, 2147483648
    %v9956 = vxor.u32 %v9842, 2147483648
    %v9957 = vxor.u32 %v9847, 2147483648
    %v9958 = vxor.u32 %v9852, 2147483648
    %v9959 = vxor.u32 %v9857, 2147483648
    %v9960 = vxor.u32 %v9862, 2147483648
    %v9961 = vxor.u32 %v9867, 2147483648
    %v9962 = vxor.u32 %v9872, 2147483648
    %v9963 = vxor.u32 %v9877, 2147483648
    %v9964 = vxor.u32 %v9882, 2147483648
    %v9965 = vxor.u32 %v9887, 2147483648
    %v9966 = vxor.u32 %v9892, 2147483648
    %v9967 = vxor.u32 %v9897, 2147483648
    %v9968 = vxor.u32 %v9902, 2147483648
    %v9969 = vmul.f32 %v9905, 1.442695
    %v9970 = vpow.pop %v9969
    %v9971 = vmul.f32 %v9906, 1.442695
    %v9972 = vpow.pop %v9971
    %v9973 = vmul.f32 %v9907, 1.442695
    %v9974 = vpow.pop %v9973
    %v9975 = vmul.f32 %v9908, 1.442695
    %v9976 = vpow.pop %v9975
    %v9977 = vmul.f32 %v9909, 1.442695
    %v9978 = vpow.pop %v9977
    %v9979 = vmul.f32 %v9910, 1.442695
    %v9980 = vpow.pop %v9979
    %v9981 = vmul.f32 %v9911, 1.442695
    %v9982 = vpow.pop %v9981
    %v9983 = vmul.f32 %v9912, 1.442695
    %v9984 = vpow.pop %v9983
    %v9985 = vmul.f32 %v9913, 1.442695
    %v9986 = vpow.pop %v9985
    %v9987 = vmul.f32 %v9914, 1.442695
    %v9988 = vpow.pop %v9987
    %v9989 = vmul.f32 %v9915, 1.442695
    %v9990 = vpow.pop %v9989
    %v9991 = vmul.f32 %v9916, 1.442695
    %v9992 = vpow.pop %v9991
    %v9993 = vmul.f32 %v9917, 1.442695
    %v9994 = vpow.pop %v9993
    %v9995 = vmul.f32 %v9918, 1.442695
    %v9996 = vpow.pop %v9995
    %v9997 = vmul.f32 %v9919, 1.442695
    %v9998 = vpow.pop %v9997
    %v9999 = vmul.f32 %v9920, 1.442695
    %v10000 = vpow.pop %v9999
    %v10001 = vmul.f32 %v9921, 1.442695
    %v10002 = vpow.pop %v10001
    %v10003 = vmul.f32 %v9922, 1.442695
    %v10004 = vpow.pop %v10003
    %v10005 = vmul.f32 %v9923, 1.442695
    %v10006 = vpow.pop %v10005
    %v10007 = vmul.f32 %v9924, 1.442695
    %v10008 = vpow.pop %v10007
    %v10009 = vmul.f32 %v9925, 1.442695
    %v10010 = vpow.pop %v10009
    %v10011 = vmul.f32 %v9926, 1.442695
    %v10012 = vpow.pop %v10011
    %v10013 = vmul.f32 %v9927, 1.442695
    %v10014 = vpow.pop %v10013
    %v10015 = vmul.f32 %v9928, 1.442695
    %v10016 = vpow.pop %v10015
    %v10017 = vmul.f32 %v9929, 1.442695
    %v10018 = vpow.pop %v10017
    %v10019 = vmul.f32 %v9930, 1.442695
    %v10020 = vpow.pop %v10019
    %v10021 = vmul.f32 %v9931, 1.442695
    %v10022 = vpow.pop %v10021
    %v10023 = vmul.f32 %v9932, 1.442695
    %v10024 = vpow.pop %v10023
    %v10025 = vmul.f32 %v9933, 1.442695
    %v10026 = vpow.pop %v10025
    %v10027 = vmul.f32 %v9934, 1.442695
    %v10028 = vpow.pop %v10027
    %v10029 = vmul.f32 %v9935, 1.442695
    %v10030 = vpow.pop %v10029
    %v10031 = vmul.f32 %v9936, 1.442695
    %v10032 = vpow.pop %v10031
    %v10033 = vmul.f32 %v9937, 1.442695
    %v10034 = vpow.pop %v10033
    %v10035 = vmul.f32 %v9938, 1.442695
    %v10036 = vpow.pop %v10035
    %v10037 = vmul.f32 %v9939, 1.442695
    %v10038 = vpow.pop %v10037
    %v10039 = vmul.f32 %v9940, 1.442695
    %v10040 = vpow.pop %v10039
    %v10041 = vmul.f32 %v9941, 1.442695
    %v10042 = vpow.pop %v10041
    %v10043 = vmul.f32 %v9942, 1.442695
    %v10044 = vpow.pop %v10043
    %v10045 = vmul.f32 %v9943, 1.442695
    %v10046 = vpow.pop %v10045
    %v10047 = vmul.f32 %v9944, 1.442695
    %v10048 = vpow.pop %v10047
    %v10049 = vmul.f32 %v9945, 1.442695
    %v10050 = vpow.pop %v10049
    %v10051 = vmul.f32 %v9946, 1.442695
    %v10052 = vpow.pop %v10051
    %v10053 = vmul.f32 %v9947, 1.442695
    %v10054 = vpow.pop %v10053
    %v10055 = vmul.f32 %v9948, 1.442695
    %v10056 = vpow.pop %v10055
    %v10057 = vmul.f32 %v9949, 1.442695
    %v10058 = vpow.pop %v10057
    %v10059 = vmul.f32 %v9950, 1.442695
    %v10060 = vpow.pop %v10059
    %v10061 = vmul.f32 %v9951, 1.442695
    %v10062 = vpow.pop %v10061
    %v10063 = vmul.f32 %v9952, 1.442695
    %v10064 = vpow.pop %v10063
    %v10065 = vmul.f32 %v9953, 1.442695
    %v10066 = vpow.pop %v10065
    %v10067 = vmul.f32 %v9954, 1.442695
    %v10068 = vpow.pop %v10067
    %v10069 = vmul.f32 %v9955, 1.442695
    %v10070 = vpow.pop %v10069
    %v10071 = vmul.f32 %v9956, 1.442695
    %v10072 = vpow.pop %v10071
    %v10073 = vmul.f32 %v9957, 1.442695
    %v10074 = vpow.pop %v10073
    %v10075 = vmul.f32 %v9958, 1.442695
    %v10076 = vpow.pop %v10075
    %v10077 = vmul.f32 %v9959, 1.442695
    %v10078 = vpow.pop %v10077
    %v10079 = vmul.f32 %v9960, 1.442695
    %v10080 = vpow.pop %v10079
    %v10081 = vmul.f32 %v9961, 1.442695
    %v10082 = vpow.pop %v10081
    %v10083 = vmul.f32 %v9962, 1.442695
    %v10084 = vpow.pop %v10083
    %v10085 = vmul.f32 %v9963, 1.442695
    %v10086 = vpow.pop %v10085
    %v10087 = vmul.f32 %v9964, 1.442695
    %v10088 = vpow.pop %v10087
    %v10089 = vmul.f32 %v9965, 1.442695
    %v10090 = vpow.pop %v10089
    %v10091 = vmul.f32 %v9966, 1.442695
    %v10092 = vpow.pop %v10091
    %v10093 = vmul.f32 %v9967, 1.442695
    %v10094 = vpow.pop %v10093
    %v10095 = vmul.f32 %v9968, 1.442695
    %v10096 = vpow.pop %v10095
    %v10097 = vadd.f32 %v9970, 1.0
    %v10098 = vadd.f32 %v9972, 1.0
    %v10099 = vadd.f32 %v9974, 1.0
    %v10100 = vadd.f32 %v9976, 1.0
    %v10101 = vadd.f32 %v9978, 1.0
    %v10102 = vadd.f32 %v9980, 1.0
    %v10103 = vadd.f32 %v9982, 1.0
    %v10104 = vadd.f32 %v9984, 1.0
    %v10105 = vadd.f32 %v9986, 1.0
    %v10106 = vadd.f32 %v9988, 1.0
    %v10107 = vadd.f32 %v9990, 1.0
    %v10108 = vadd.f32 %v9992, 1.0
    %v10109 = vadd.f32 %v9994, 1.0
    %v10110 = vadd.f32 %v9996, 1.0
    %v10111 = vadd.f32 %v9998, 1.0
    %v10112 = vadd.f32 %v10000, 1.0
    %v10113 = vadd.f32 %v10002, 1.0
    %v10114 = vadd.f32 %v10004, 1.0
    %v10115 = vadd.f32 %v10006, 1.0
    %v10116 = vadd.f32 %v10008, 1.0
    %v10117 = vadd.f32 %v10010, 1.0
    %v10118 = vadd.f32 %v10012, 1.0
    %v10119 = vadd.f32 %v10014, 1.0
    %v10120 = vadd.f32 %v10016, 1.0
    %v10121 = vadd.f32 %v10018, 1.0
    %v10122 = vadd.f32 %v10020, 1.0
    %v10123 = vadd.f32 %v10022, 1.0
    %v10124 = vadd.f32 %v10024, 1.0
    %v10125 = vadd.f32 %v10026, 1.0
    %v10126 = vadd.f32 %v10028, 1.0
    %v10127 = vadd.f32 %v10030, 1.0
    %v10128 = vadd.f32 %v10032, 1.0
    %v10129 = vadd.f32 %v10034, 1.0
    %v10130 = vadd.f32 %v10036, 1.0
    %v10131 = vadd.f32 %v10038, 1.0
    %v10132 = vadd.f32 %v10040, 1.0
    %v10133 = vadd.f32 %v10042, 1.0
    %v10134 = vadd.f32 %v10044, 1.0
    %v10135 = vadd.f32 %v10046, 1.0
    %v10136 = vadd.f32 %v10048, 1.0
    %v10137 = vadd.f32 %v10050, 1.0
    %v10138 = vadd.f32 %v10052, 1.0
    %v10139 = vadd.f32 %v10054, 1.0
    %v10140 = vadd.f32 %v10056, 1.0
    %v10141 = vadd.f32 %v10058, 1.0
    %v10142 = vadd.f32 %v10060, 1.0
    %v10143 = vadd.f32 %v10062, 1.0
    %v10144 = vadd.f32 %v10064, 1.0
    %v10145 = vadd.f32 %v10066, 1.0
    %v10146 = vadd.f32 %v10068, 1.0
    %v10147 = vadd.f32 %v10070, 1.0
    %v10148 = vadd.f32 %v10072, 1.0
    %v10149 = vadd.f32 %v10074, 1.0
    %v10150 = vadd.f32 %v10076, 1.0
    %v10151 = vadd.f32 %v10078, 1.0
    %v10152 = vadd.f32 %v10080, 1.0
    %v10153 = vadd.f32 %v10082, 1.0
    %v10154 = vadd.f32 %v10084, 1.0
    %v10155 = vadd.f32 %v10086, 1.0
    %v10156 = vadd.f32 %v10088, 1.0
    %v10157 = vadd.f32 %v10090, 1.0
    %v10158 = vadd.f32 %v10092, 1.0
    %v10159 = vadd.f32 %v10094, 1.0
    %v10160 = vadd.f32 %v10096, 1.0
    %v10161 = vrcp.pop %v10097
    %v10162 = vmul.f32 1.0, %v10161
    %v10163 = vrcp.pop %v10098
    %v10164 = vmul.f32 1.0, %v10163
    %v10165 = vrcp.pop %v10099
    %v10166 = vmul.f32 1.0, %v10165
    %v10167 = vrcp.pop %v10100
    %v10168 = vmul.f32 1.0, %v10167
    %v10169 = vrcp.pop %v10101
    %v10170 = vmul.f32 1.0, %v10169
    %v10171 = vrcp.pop %v10102
    %v10172 = vmul.f32 1.0, %v10171
    %v10173 = vrcp.pop %v10103
    %v10174 = vmul.f32 1.0, %v10173
    %v10175 = vrcp.pop %v10104
    %v10176 = vmul.f32 1.0, %v10175
    %v10177 = vrcp.pop %v10105
    %v10178 = vmul.f32 1.0, %v10177
    %v10179 = vrcp.pop %v10106
    %v10180 = vmul.f32 1.0, %v10179
    %v10181 = vrcp.pop %v10107
    %v10182 = vmul.f32 1.0, %v10181
    %v10183 = vrcp.pop %v10108
    %v10184 = vmul.f32 1.0, %v10183
    %v10185 = vrcp.pop %v10109
    %v10186 = vmul.f32 1.0, %v10185
    %v10187 = vrcp.pop %v10110
    %v10188 = vmul.f32 1.0, %v10187
    %v10189 = vrcp.pop %v10111
    %v10190 = vmul.f32 1.0, %v10189
    %v10191 = vrcp.pop %v10112
    %v10192 = vmul.f32 1.0, %v10191
    %v10193 = vrcp.pop %v10113
    %v10194 = vmul.f32 1.0, %v10193
    %v10195 = vrcp.pop %v10114
    %v10196 = vmul.f32 1.0, %v10195
    %v10197 = vrcp.pop %v10115
    %v10198 = vmul.f32 1.0, %v10197
    %v10199 = vrcp.pop %v10116
    %v10200 = vmul.f32 1.0, %v10199
    %v10201 = vrcp.pop %v10117
    %v10202 = vmul.f32 1.0, %v10201
    %v10203 = vrcp.pop %v10118
    %v10204 = vmul.f32 1.0, %v10203
    %v10205 = vrcp.pop %v10119
    %v10206 = vmul.f32 1.0, %v10205
    %v10207 = vrcp.pop %v10120
    %v10208 = vmul.f32 1.0, %v10207
    %v10209 = vrcp.pop %v10121
    %v10210 = vmul.f32 1.0, %v10209
    %v10211 = vrcp.pop %v10122
    %v10212 = vmul.f32 1.0, %v10211
    %v10213 = vrcp.pop %v10123
    %v10214 = vmul.f32 1.0, %v10213
    %v10215 = vrcp.pop %v10124
    %v10216 = vmul.f32 1.0, %v10215
    %v10217 = vrcp.pop %v10125
    %v10218 = vmul.f32 1.0, %v10217
    %v10219 = vrcp.pop %v10126
    %v10220 = vmul.f32 1.0, %v10219
    %v10221 = vrcp.pop %v10127
    %v10222 = vmul.f32 1.0, %v10221
    %v10223 = vrcp.pop %v10128
    %v10224 = vmul.f32 1.0, %v10223
    %v10225 = vrcp.pop %v10129
    %v10226 = vmul.f32 1.0, %v10225
    %v10227 = vrcp.pop %v10130
    %v10228 = vmul.f32 1.0, %v10227
    %v10229 = vrcp.pop %v10131
    %v10230 = vmul.f32 1.0, %v10229
    %v10231 = vrcp.pop %v10132
    %v10232 = vmul.f32 1.0, %v10231
    %v10233 = vrcp.pop %v10133
    %v10234 = vmul.f32 1.0, %v10233
    %v10235 = vrcp.pop %v10134
    %v10236 = vmul.f32 1.0, %v10235
    %v10237 = vrcp.pop %v10135
    %v10238 = vmul.f32 1.0, %v10237
    %v10239 = vrcp.pop %v10136
    %v10240 = vmul.f32 1.0, %v10239
    %v10241 = vrcp.pop %v10137
    %v10242 = vmul.f32 1.0, %v10241
    %v10243 = vrcp.pop %v10138
    %v10244 = vmul.f32 1.0, %v10243
    %v10245 = vrcp.pop %v10139
    %v10246 = vmul.f32 1.0, %v10245
    %v10247 = vrcp.pop %v10140
    %v10248 = vmul.f32 1.0, %v10247
    %v10249 = vrcp.pop %v10141
    %v10250 = vmul.f32 1.0, %v10249
    %v10251 = vrcp.pop %v10142
    %v10252 = vmul.f32 1.0, %v10251
    %v10253 = vrcp.pop %v10143
    %v10254 = vmul.f32 1.0, %v10253
    %v10255 = vrcp.pop %v10144
    %v10256 = vmul.f32 1.0, %v10255
    %v10257 = vrcp.pop %v10145
    %v10258 = vmul.f32 1.0, %v10257
    %v10259 = vrcp.pop %v10146
    %v10260 = vmul.f32 1.0, %v10259
    %v10261 = vrcp.pop %v10147
    %v10262 = vmul.f32 1.0, %v10261
    %v10263 = vrcp.pop %v10148
    %v10264 = vmul.f32 1.0, %v10263
    %v10265 = vrcp.pop %v10149
    %v10266 = vmul.f32 1.0, %v10265
    %v10267 = vrcp.pop %v10150
    %v10268 = vmul.f32 1.0, %v10267
    %v10269 = vrcp.pop %v10151
    %v10270 = vmul.f32 1.0, %v10269
    %v10271 = vrcp.pop %v10152
    %v10272 = vmul.f32 1.0, %v10271
    %v10273 = vrcp.pop %v10153
    %v10274 = vmul.f32 1.0, %v10273
    %v10275 = vrcp.pop %v10154
    %v10276 = vmul.f32 1.0, %v10275
    %v10277 = vrcp.pop %v10155
    %v10278 = vmul.f32 1.0, %v10277
    %v10279 = vrcp.pop %v10156
    %v10280 = vmul.f32 1.0, %v10279
    %v10281 = vrcp.pop %v10157
    %v10282 = vmul.f32 1.0, %v10281
    %v10283 = vrcp.pop %v10158
    %v10284 = vmul.f32 1.0, %v10283
    %v10285 = vrcp.pop %v10159
    %v10286 = vmul.f32 1.0, %v10285
    %v10287 = vrcp.pop %v10160
    %v10288 = vmul.f32 1.0, %v10287
    %v10289 = vsub.f32 1.0, %v10162
    %v10290 = vsub.f32 1.0, %v10164
    %v10291 = vsub.f32 1.0, %v10166
    %v10292 = vsub.f32 1.0, %v10168
    %v10293 = vsub.f32 1.0, %v10170
    %v10294 = vsub.f32 1.0, %v10172
    %v10295 = vsub.f32 1.0, %v10174
    %v10296 = vsub.f32 1.0, %v10176
    %v10297 = vsub.f32 1.0, %v10178
    %v10298 = vsub.f32 1.0, %v10180
    %v10299 = vsub.f32 1.0, %v10182
    %v10300 = vsub.f32 1.0, %v10184
    %v10301 = vsub.f32 1.0, %v10186
    %v10302 = vsub.f32 1.0, %v10188
    %v10303 = vsub.f32 1.0, %v10190
    %v10304 = vsub.f32 1.0, %v10192
    %v10305 = vsub.f32 1.0, %v10194
    %v10306 = vsub.f32 1.0, %v10196
    %v10307 = vsub.f32 1.0, %v10198
    %v10308 = vsub.f32 1.0, %v10200
    %v10309 = vsub.f32 1.0, %v10202
    %v10310 = vsub.f32 1.0, %v10204
    %v10311 = vsub.f32 1.0, %v10206
    %v10312 = vsub.f32 1.0, %v10208
    %v10313 = vsub.f32 1.0, %v10210
    %v10314 = vsub.f32 1.0, %v10212
    %v10315 = vsub.f32 1.0, %v10214
    %v10316 = vsub.f32 1.0, %v10216
    %v10317 = vsub.f32 1.0, %v10218
    %v10318 = vsub.f32 1.0, %v10220
    %v10319 = vsub.f32 1.0, %v10222
    %v10320 = vsub.f32 1.0, %v10224
    %v10321 = vsub.f32 1.0, %v10226
    %v10322 = vsub.f32 1.0, %v10228
    %v10323 = vsub.f32 1.0, %v10230
    %v10324 = vsub.f32 1.0, %v10232
    %v10325 = vsub.f32 1.0, %v10234
    %v10326 = vsub.f32 1.0, %v10236
    %v10327 = vsub.f32 1.0, %v10238
    %v10328 = vsub.f32 1.0, %v10240
    %v10329 = vsub.f32 1.0, %v10242
    %v10330 = vsub.f32 1.0, %v10244
    %v10331 = vsub.f32 1.0, %v10246
    %v10332 = vsub.f32 1.0, %v10248
    %v10333 = vsub.f32 1.0, %v10250
    %v10334 = vsub.f32 1.0, %v10252
    %v10335 = vsub.f32 1.0, %v10254
    %v10336 = vsub.f32 1.0, %v10256
    %v10337 = vsub.f32 1.0, %v10258
    %v10338 = vsub.f32 1.0, %v10260
    %v10339 = vsub.f32 1.0, %v10262
    %v10340 = vsub.f32 1.0, %v10264
    %v10341 = vsub.f32 1.0, %v10266
    %v10342 = vsub.f32 1.0, %v10268
    %v10343 = vsub.f32 1.0, %v10270
    %v10344 = vsub.f32 1.0, %v10272
    %v10345 = vsub.f32 1.0, %v10274
    %v10346 = vsub.f32 1.0, %v10276
    %v10347 = vsub.f32 1.0, %v10278
    %v10348 = vsub.f32 1.0, %v10280
    %v10349 = vsub.f32 1.0, %v10282
    %v10350 = vsub.f32 1.0, %v10284
    %v10351 = vsub.f32 1.0, %v10286
    %v10352 = vsub.f32 1.0, %v10288
    %v10355 = vunpack.c.l.s4 1966171168
    %v10356 = vunpack.c.0.s8 %v10355
    %v10357 = vlaneseq
    %v10358 = vshrl.u32 %v10357, 7
    %v10359 = vsub.s32 %v10356, %v10358
    %v10360 = vrot.slane %v431, %v10359
    %v10361 = vcombine.high %v10360, %v10360
    %v10363 = vunpack.c.l.s4 1966171168
    %v10364 = vunpack.c.0.s8 %v10363
    %v10365 = vlaneseq
    %v10366 = vshrl.u32 %v10365, 7
    %v10367 = vsub.s32 %v10364, %v10366
    %v10368 = vrot.slane %v10360, %v10367
    %v10370 = vunpack.c.l.s4 1966171168
    %v10371 = vunpack.c.0.s8 %v10370
    %v10372 = vlaneseq
    %v10373 = vshrl.u32 %v10372, 7
    %v10374 = vsub.s32 %v10371, %v10373
    %v10375 = vrot.slane %v10361, %v10374
    %v10376 = vlaneseq
    %v10377 = vshrl.u32 %v10376, 7
    %v10378 = vsub.s32 0, %v10377
    %v10379 = vrot.slane %v10368, %v10378
    %v10380 = vlaneseq
    %v10381 = vshrl.u32 %v10380, 7
    %v10382 = vsub.s32 0, %v10381
    %v10383 = vrot.slane %v10375, %v10382
    %v10386 = vmul.f32 %v10289, %v10379
    %v10387 = vmul.f32 %v10290, %v10379
    %v10388 = vmul.f32 %v10291, %v10379
    %v10389 = vmul.f32 %v10292, %v10379
    %v10390 = vmul.f32 %v10293, %v10379
    %v10391 = vmul.f32 %v10294, %v10379
    %v10392 = vmul.f32 %v10295, %v10379
    %v10393 = vmul.f32 %v10296, %v10379
    %v10394 = vmul.f32 %v10297, %v10379
    %v10395 = vmul.f32 %v10298, %v10379
    %v10396 = vmul.f32 %v10299, %v10379
    %v10397 = vmul.f32 %v10300, %v10379
    %v10398 = vmul.f32 %v10301, %v10379
    %v10399 = vmul.f32 %v10302, %v10379
    %v10400 = vmul.f32 %v10303, %v10379
    %v10401 = vmul.f32 %v10304, %v10379
    %v10402 = vmul.f32 %v10305, %v10379
    %v10403 = vmul.f32 %v10306, %v10379
    %v10404 = vmul.f32 %v10307, %v10379
    %v10405 = vmul.f32 %v10308, %v10379
    %v10406 = vmul.f32 %v10309, %v10379
    %v10407 = vmul.f32 %v10310, %v10379
    %v10408 = vmul.f32 %v10311, %v10379
    %v10409 = vmul.f32 %v10312, %v10379
    %v10410 = vmul.f32 %v10313, %v10379
    %v10411 = vmul.f32 %v10314, %v10379
    %v10412 = vmul.f32 %v10315, %v10379
    %v10413 = vmul.f32 %v10316, %v10379
    %v10414 = vmul.f32 %v10317, %v10379
    %v10415 = vmul.f32 %v10318, %v10379
    %v10416 = vmul.f32 %v10319, %v10379
    %v10417 = vmul.f32 %v10320, %v10379
    %v10418 = vmul.f32 %v10321, %v10383
    %v10419 = vmul.f32 %v10322, %v10383
    %v10420 = vmul.f32 %v10323, %v10383
    %v10421 = vmul.f32 %v10324, %v10383
    %v10422 = vmul.f32 %v10325, %v10383
    %v10423 = vmul.f32 %v10326, %v10383
    %v10424 = vmul.f32 %v10327, %v10383
    %v10425 = vmul.f32 %v10328, %v10383
    %v10426 = vmul.f32 %v10329, %v10383
    %v10427 = vmul.f32 %v10330, %v10383
    %v10428 = vmul.f32 %v10331, %v10383
    %v10429 = vmul.f32 %v10332, %v10383
    %v10430 = vmul.f32 %v10333, %v10383
    %v10431 = vmul.f32 %v10334, %v10383
    %v10432 = vmul.f32 %v10335, %v10383
    %v10433 = vmul.f32 %v10336, %v10383
    %v10434 = vmul.f32 %v10337, %v10383
    %v10435 = vmul.f32 %v10338, %v10383
    %v10436 = vmul.f32 %v10339, %v10383
    %v10437 = vmul.f32 %v10340, %v10383
    %v10438 = vmul.f32 %v10341, %v10383
    %v10439 = vmul.f32 %v10342, %v10383
    %v10440 = vmul.f32 %v10343, %v10383
    %v10441 = vmul.f32 %v10344, %v10383
    %v10442 = vmul.f32 %v10345, %v10383
    %v10443 = vmul.f32 %v10346, %v10383
    %v10444 = vmul.f32 %v10347, %v10383
    %v10445 = vmul.f32 %v10348, %v10383
    %v10446 = vmul.f32 %v10349, %v10383
    %v10447 = vmul.f32 %v10350, %v10383
    %v10448 = vmul.f32 %v10351, %v10383
    %v10449 = vmul.f32 %v10352, %v10383
    %v10450 = vmul.f32 %v10162, %v53
    %v10451 = vmul.f32 %v10164, %v54
    %v10452 = vmul.f32 %v10166, %v55
    %v10453 = vmul.f32 %v10168, %v56
    %v10454 = vmul.f32 %v10170, %v57
    %v10455 = vmul.f32 %v10172, %v58
    %v10456 = vmul.f32 %v10174, %v59
    %v10457 = vmul.f32 %v10176, %v60
    %v10458 = vmul.f32 %v10178, %v61
    %v10459 = vmul.f32 %v10180, %v62
    %v10460 = vmul.f32 %v10182, %v63
    %v10461 = vmul.f32 %v10184, %v64
    %v10462 = vmul.f32 %v10186, %v65
    %v10463 = vmul.f32 %v10188, %v66
    %v10464 = vmul.f32 %v10190, %v67
    %v10465 = vmul.f32 %v10192, %v68
    %v10466 = vmul.f32 %v10194, %v69
    %v10467 = vmul.f32 %v10196, %v70
    %v10468 = vmul.f32 %v10198, %v71
    %v10469 = vmul.f32 %v10200, %v72
    %v10470 = vmul.f32 %v10202, %v73
    %v10471 = vmul.f32 %v10204, %v74
    %v10472 = vmul.f32 %v10206, %v75
    %v10473 = vmul.f32 %v10208, %v76
    %v10474 = vmul.f32 %v10210, %v77
    %v10475 = vmul.f32 %v10212, %v78
    %v10476 = vmul.f32 %v10214, %v79
    %v10477 = vmul.f32 %v10216, %v80
    %v10478 = vmul.f32 %v10218, %v81
    %v10479 = vmul.f32 %v10220, %v82
    %v10480 = vmul.f32 %v10222, %v83
    %v10481 = vmul.f32 %v10224, %v84
    %v10482 = vmul.f32 %v10226, %v85
    %v10483 = vmul.f32 %v10228, %v86
    %v10484 = vmul.f32 %v10230, %v87
    %v10485 = vmul.f32 %v10232, %v88
    %v10486 = vmul.f32 %v10234, %v89
    %v10487 = vmul.f32 %v10236, %v90
    %v10488 = vmul.f32 %v10238, %v91
    %v10489 = vmul.f32 %v10240, %v92
    %v10490 = vmul.f32 %v10242, %v93
    %v10491 = vmul.f32 %v10244, %v94
    %v10492 = vmul.f32 %v10246, %v95
    %v10493 = vmul.f32 %v10248, %v96
    %v10494 = vmul.f32 %v10250, %v97
    %v10495 = vmul.f32 %v10252, %v98
    %v10496 = vmul.f32 %v10254, %v99
    %v10497 = vmul.f32 %v10256, %v100
    %v10498 = vmul.f32 %v10258, %v101
    %v10499 = vmul.f32 %v10260, %v102
    %v10500 = vmul.f32 %v10262, %v103
    %v10501 = vmul.f32 %v10264, %v104
    %v10502 = vmul.f32 %v10266, %v105
    %v10503 = vmul.f32 %v10268, %v106
    %v10504 = vmul.f32 %v10270, %v107
    %v10505 = vmul.f32 %v10272, %v108
    %v10506 = vmul.f32 %v10274, %v109
    %v10507 = vmul.f32 %v10276, %v110
    %v10508 = vmul.f32 %v10278, %v111
    %v10509 = vmul.f32 %v10280, %v112
    %v10510 = vmul.f32 %v10282, %v113
    %v10511 = vmul.f32 %v10284, %v114
    %v10512 = vmul.f32 %v10286, %v115
    %v10513 = vmul.f32 %v10288, %v116
    %v10514 = vadd.f32 %v10386, %v10450
    %v10515 = vadd.f32 %v10387, %v10451
    %v10516 = vadd.f32 %v10388, %v10452
    %v10517 = vadd.f32 %v10389, %v10453
    %v10518 = vadd.f32 %v10390, %v10454
    %v10519 = vadd.f32 %v10391, %v10455
    %v10520 = vadd.f32 %v10392, %v10456
    %v10521 = vadd.f32 %v10393, %v10457
    %v10522 = vadd.f32 %v10394, %v10458
    %v10523 = vadd.f32 %v10395, %v10459
    %v10524 = vadd.f32 %v10396, %v10460
    %v10525 = vadd.f32 %v10397, %v10461
    %v10526 = vadd.f32 %v10398, %v10462
    %v10527 = vadd.f32 %v10399, %v10463
    %v10528 = vadd.f32 %v10400, %v10464
    %v10529 = vadd.f32 %v10401, %v10465
    %v10530 = vadd.f32 %v10402, %v10466
    %v10531 = vadd.f32 %v10403, %v10467
    %v10532 = vadd.f32 %v10404, %v10468
    %v10533 = vadd.f32 %v10405, %v10469
    %v10534 = vadd.f32 %v10406, %v10470
    %v10535 = vadd.f32 %v10407, %v10471
    %v10536 = vadd.f32 %v10408, %v10472
    %v10537 = vadd.f32 %v10409, %v10473
    %v10538 = vadd.f32 %v10410, %v10474
    %v10539 = vadd.f32 %v10411, %v10475
    %v10540 = vadd.f32 %v10412, %v10476
    %v10541 = vadd.f32 %v10413, %v10477
    %v10542 = vadd.f32 %v10414, %v10478
    %v10543 = vadd.f32 %v10415, %v10479
    %v10544 = vadd.f32 %v10416, %v10480
    %v10545 = vadd.f32 %v10417, %v10481
    %v10546 = vadd.f32 %v10418, %v10482
    %v10547 = vadd.f32 %v10419, %v10483
    %v10548 = vadd.f32 %v10420, %v10484
    %v10549 = vadd.f32 %v10421, %v10485
    %v10550 = vadd.f32 %v10422, %v10486
    %v10551 = vadd.f32 %v10423, %v10487
    %v10552 = vadd.f32 %v10424, %v10488
    %v10553 = vadd.f32 %v10425, %v10489
    %v10554 = vadd.f32 %v10426, %v10490
    %v10555 = vadd.f32 %v10427, %v10491
    %v10556 = vadd.f32 %v10428, %v10492
    %v10557 = vadd.f32 %v10429, %v10493
    %v10558 = vadd.f32 %v10430, %v10494
    %v10559 = vadd.f32 %v10431, %v10495
    %v10560 = vadd.f32 %v10432, %v10496
    %v10561 = vadd.f32 %v10433, %v10497
    %v10562 = vadd.f32 %v10434, %v10498
    %v10563 = vadd.f32 %v10435, %v10499
    %v10564 = vadd.f32 %v10436, %v10500
    %v10565 = vadd.f32 %v10437, %v10501
    %v10566 = vadd.f32 %v10438, %v10502
    %v10567 = vadd.f32 %v10439, %v10503
    %v10568 = vadd.f32 %v10440, %v10504
    %v10569 = vadd.f32 %v10441, %v10505
    %v10570 = vadd.f32 %v10442, %v10506
    %v10571 = vadd.f32 %v10443, %v10507
    %v10572 = vadd.f32 %v10444, %v10508
    %v10573 = vadd.f32 %v10445, %v10509
    %v10574 = vadd.f32 %v10446, %v10510
    %v10575 = vadd.f32 %v10447, %v10511
    %v10576 = vadd.f32 %v10448, %v10512
    %v10577 = vadd.f32 %v10449, %v10513
    %10578 = vst.msk [vmem:[#allocation7] sm:$0xff] %vm117, %v10514
    %10579 = vst.msk [vmem:[#allocation7 + $0x8] sm:$0xff] %vm117, %v10515
    %10580 = vst.msk [vmem:[#allocation7 + $0x10] sm:$0xff] %vm117, %v10516
    %10581 = vst.msk [vmem:[#allocation7 + $0x18] sm:$0xff] %vm117, %v10517
    %10582 = vst.msk [vmem:[#allocation7 + $0x20] sm:$0xff] %vm117, %v10518
    %10583 = vst.msk [vmem:[#allocation7 + $0x28] sm:$0xff] %vm117, %v10519
    %10584 = vst.msk [vmem:[#allocation7 + $0x30] sm:$0xff] %vm117, %v10520
    %10585 = vst.msk [vmem:[#allocation7 + $0x38] sm:$0xff] %vm117, %v10521
    %10586 = vst.msk [vmem:[#allocation7 + $0x40] sm:$0xff] %vm117, %v10522
    %10587 = vst.msk [vmem:[#allocation7 + $0x48] sm:$0xff] %vm117, %v10523
    %10588 = vst.msk [vmem:[#allocation7 + $0x50] sm:$0xff] %vm117, %v10524
    %10589 = vst.msk [vmem:[#allocation7 + $0x58] sm:$0xff] %vm117, %v10525
    %10590 = vst.msk [vmem:[#allocation7 + $0x60] sm:$0xff] %vm117, %v10526
    %10591 = vst.msk [vmem:[#allocation7 + $0x68] sm:$0xff] %vm117, %v10527
    %10592 = vst.msk [vmem:[#allocation7 + $0x70] sm:$0xff] %vm117, %v10528
    %10593 = vst.msk [vmem:[#allocation7 + $0x78] sm:$0xff] %vm117, %v10529
    %10594 = vst.msk [vmem:[#allocation7 + $0x80] sm:$0xff] %vm117, %v10530
    %10595 = vst.msk [vmem:[#allocation7 + $0x88] sm:$0xff] %vm117, %v10531
    %10596 = vst.msk [vmem:[#allocation7 + $0x90] sm:$0xff] %vm117, %v10532
    %10597 = vst.msk [vmem:[#allocation7 + $0x98] sm:$0xff] %vm117, %v10533
    %10598 = vst.msk [vmem:[#allocation7 + $0xa0] sm:$0xff] %vm117, %v10534
    %10599 = vst.msk [vmem:[#allocation7 + $0xa8] sm:$0xff] %vm117, %v10535
    %10600 = vst.msk [vmem:[#allocation7 + $0xb0] sm:$0xff] %vm117, %v10536
    %10601 = vst.msk [vmem:[#allocation7 + $0xb8] sm:$0xff] %vm117, %v10537
    %10602 = vst.msk [vmem:[#allocation7 + $0xc0] sm:$0xff] %vm117, %v10538
    %10603 = vst.msk [vmem:[#allocation7 + $0xc8] sm:$0xff] %vm117, %v10539
    %10604 = vst.msk [vmem:[#allocation7 + $0xd0] sm:$0xff] %vm117, %v10540
    %10605 = vst.msk [vmem:[#allocation7 + $0xd8] sm:$0xff] %vm117, %v10541
    %10606 = vst.msk [vmem:[#allocation7 + $0xe0] sm:$0xff] %vm117, %v10542
    %10607 = vst.msk [vmem:[#allocation7 + $0xe8] sm:$0xff] %vm117, %v10543
    %10608 = vst.msk [vmem:[#allocation7 + $0xf0] sm:$0xff] %vm117, %v10544
    %10609 = vst.msk [vmem:[#allocation7 + $0xf8] sm:$0xff] %vm117, %v10545
    %10610 = vst.msk [vmem:[#allocation7 + $0x100] sm:$0xff] %vm117, %v10546
    %10611 = vst.msk [vmem:[#allocation7 + $0x108] sm:$0xff] %vm117, %v10547
    %10612 = vst.msk [vmem:[#allocation7 + $0x110] sm:$0xff] %vm117, %v10548
    %10613 = vst.msk [vmem:[#allocation7 + $0x118] sm:$0xff] %vm117, %v10549
    %10614 = vst.msk [vmem:[#allocation7 + $0x120] sm:$0xff] %vm117, %v10550
    %10615 = vst.msk [vmem:[#allocation7 + $0x128] sm:$0xff] %vm117, %v10551
    %10616 = vst.msk [vmem:[#allocation7 + $0x130] sm:$0xff] %vm117, %v10552
    %10617 = vst.msk [vmem:[#allocation7 + $0x138] sm:$0xff] %vm117, %v10553
    %10618 = vst.msk [vmem:[#allocation7 + $0x140] sm:$0xff] %vm117, %v10554
    %10619 = vst.msk [vmem:[#allocation7 + $0x148] sm:$0xff] %vm117, %v10555
    %10620 = vst.msk [vmem:[#allocation7 + $0x150] sm:$0xff] %vm117, %v10556
    %10621 = vst.msk [vmem:[#allocation7 + $0x158] sm:$0xff] %vm117, %v10557
    %10622 = vst.msk [vmem:[#allocation7 + $0x160] sm:$0xff] %vm117, %v10558
    %10623 = vst.msk [vmem:[#allocation7 + $0x168] sm:$0xff] %vm117, %v10559
    %10624 = vst.msk [vmem:[#allocation7 + $0x170] sm:$0xff] %vm117, %v10560
    %10625 = vst.msk [vmem:[#allocation7 + $0x178] sm:$0xff] %vm117, %v10561
    %10626 = vst.msk [vmem:[#allocation7 + $0x180] sm:$0xff] %vm117, %v10562
    %10627 = vst.msk [vmem:[#allocation7 + $0x188] sm:$0xff] %vm117, %v10563
    %10628 = vst.msk [vmem:[#allocation7 + $0x190] sm:$0xff] %vm117, %v10564
    %10629 = vst.msk [vmem:[#allocation7 + $0x198] sm:$0xff] %vm117, %v10565
    %10630 = vst.msk [vmem:[#allocation7 + $0x1a0] sm:$0xff] %vm117, %v10566
    %10631 = vst.msk [vmem:[#allocation7 + $0x1a8] sm:$0xff] %vm117, %v10567
    %10632 = vst.msk [vmem:[#allocation7 + $0x1b0] sm:$0xff] %vm117, %v10568
    %10633 = vst.msk [vmem:[#allocation7 + $0x1b8] sm:$0xff] %vm117, %v10569
    %10634 = vst.msk [vmem:[#allocation7 + $0x1c0] sm:$0xff] %vm117, %v10570
    %10635 = vst.msk [vmem:[#allocation7 + $0x1c8] sm:$0xff] %vm117, %v10571
    %10636 = vst.msk [vmem:[#allocation7 + $0x1d0] sm:$0xff] %vm117, %v10572
    %10637 = vst.msk [vmem:[#allocation7 + $0x1d8] sm:$0xff] %vm117, %v10573
    %10638 = vst.msk [vmem:[#allocation7 + $0x1e0] sm:$0xff] %vm117, %v10574
    %10639 = vst.msk [vmem:[#allocation7 + $0x1e8] sm:$0xff] %vm117, %v10575
    %10640 = vst.msk [vmem:[#allocation7 + $0x1f0] sm:$0xff] %vm117, %v10576
    %10641 = vst.msk [vmem:[#allocation7 + $0x1f8] sm:$0xff] %vm117, %v10577
    // Predicated region
    $region50: #{tpu_custom_call.1} parent=1 // pred_check
      _
    $region51: #{tpu_custom_call.1} parent=1 // pred_check_branch
      %10643 = sbr.rel (0) target = $region53
    $region52: #{tpu_custom_call.1} parent=1 // pred_region
      %s10645 = ssub.s32 8192, 8192
      %10646 = vsyncadd [#allocation6], %s10645
      %s10647 = sshll.u32 [#allocation7], 4
      %s10648 = int_to_ptr.vmem [resolvable:$true] %s10647
      %10653 = dma.vmem_to_hbm [thread:$0]  %s10648, 8192, %s11, [#allocation6], 128, 128, 8
    $region53: #{tpu_custom_call.1} parent=1 // pred_fallthru
      _
    // Predicated region
    $region54: #{tpu_custom_call.1} parent=1 // pred_check
      _
    $region55: #{tpu_custom_call.1} parent=1 // pred_check_branch
      %10655 = sbr.rel (0) target = $region57
    $region56: #{tpu_custom_call.1} parent=1 // pred_region
      %10656 = dma.done [#allocation6], 8192
    $region57: #{tpu_custom_call.1} parent=1 // pred_fallthru
      _
    %10657 = vsyncpa [#allocation5], 1
    %10658 = vsyncpa [#allocation6], 1

</llo_original>
